<compile_context>
chip_gen: v7x
topology: tpu7x:2x2x1
jax: 0.10.0
libtpu: 0.0.40
codegen_flags: <defaults>
</compile_context>

<pallas_src>
import functools

import jax
import jax.numpy as jnp
from jax.experimental import pallas as pl
from jax.experimental.pallas import tpu as pltpu

EPS = 0.8  # nn.BatchNorm2d(in_features, eps=0.8)


def residual_block_kernel(xpad_ref, xres_ref,
                          w1_ref, b1_ref, g1_ref, bt1_ref,
                          w2_ref, b2_ref, g2_ref, bt2_ref,
                          o_ref, *, n, c, h, w):
    hw = h * w
    pad1 = w + 1              # halo needed by one 3x3 conv on the flat row
    w1len = hw + 2 * pad1     # width of the conv1 accumulator / padded y1
    pad2 = 2 * pad1           # halo needed by two chained 3x3 convs
    inv_cnt = 1.0 / float(n * hw)

    taps = [(di, dj) for di in (-1, 0, 1) for dj in (-1, 0, 1)]

    # ---- hoist every SMEM scalar read out of the compute loops ----
    w1v = [w1_ref[i] for i in range(c * c * 9)]
    w2v = [w2_ref[i] for i in range(c * c * 9)]
    b1v = [b1_ref[i] for i in range(c)]
    b2v = [b2_ref[i] for i in range(c)]
    g1v = [g1_ref[i] for i in range(c)]
    g2v = [g2_ref[i] for i in range(c)]
    bt1v = [bt1_ref[i] for i in range(c)]
    bt2v = [bt2_ref[i] for i in range(c)]

    # ---- lane masks, built once from 2-D iotas (w is a power of two) ----
    io1 = jax.lax.broadcasted_iota(jnp.int32, (n, w1len), 1)
    io2 = jax.lax.broadcasted_iota(jnp.int32, (n, hw), 1)
    col1 = (io1 + ((-pad1) % w)) & (w - 1)   # spatial column j of each lane
    col2 = io2 & (w - 1)
    valid1 = (io1 >= pad1) & (io1 < pad1 + hw)
    mask1 = {0: None, 1: col1 != (w - 1), -1: col1 != 0}
    mask2 = {0: None, 1: col2 != (w - 1), -1: col2 != 0}

    def conv(load_row, width_out, wv, bv, mask):
        # Flat-layout 3x3 conv: each tap = static lane slice + column mask,
        # vectorised over batch (sublanes) and the full spatial extent (lanes).
        acc = [jnp.full((n, width_out), bv[co], dtype=jnp.float32)
               for co in range(c)]
        for ci in range(c):
            row = load_row(ci)                       # (n, width_out + 2*pad1)
            for di, dj in taps:
                k = di * w + dj
                p = row[:, pad1 + k: pad1 + k + width_out]
                m = mask[dj]
                if m is not None:
                    p = jnp.where(m, p, 0.0)
                for co in range(c):
                    widx = ((co * c + ci) * 3 + (di + 1)) * 3 + (dj + 1)
                    acc[co] = acc[co] + p * wv[widx]
        return acc

    def batchnorm(acc, gv, btv, valid, relu, zero_pad):
        # Single-pass training-mode batch stats over (N, H, W) per channel.
        out = []
        for co in range(c):
            a = acc[co]
            sel = a if valid is None else jnp.where(valid, a, 0.0)
            tot = jnp.sum(sel)
            ssq = jnp.sum(sel * sel)
            mean = tot * inv_cnt
            var = ssq * inv_cnt - mean * mean        # E[x^2] - mean^2
            scale = gv[co] * jax.lax.rsqrt(var + EPS)
            y = (a - mean) * scale + btv[co]
            if relu:
                y = jnp.maximum(y, 0.0)
            if zero_pad:
                y = jnp.where(valid, y, 0.0)         # re-zero the halo lanes
            out.append(y)
        return out

    # ---- conv1 + BN1 + ReLU (output kept halo-padded, in registers) ----
    acc1 = conv(lambda ci: xpad_ref[ci * n:(ci + 1) * n, :],
                w1len, w1v, b1v, mask1)
    y1 = batchnorm(acc1, g1v, bt1v, valid1, relu=True, zero_pad=True)

    # ---- conv2 + BN2 (reads y1 straight from registers) ----
    acc2 = conv(lambda ci: y1[ci], hw, w2v, b2v, mask2)
    y2 = batchnorm(acc2, g2v, bt2v, None, relu=False, zero_pad=False)

    # ---- residual add from the aligned input; lane-dense stores ----
    for co in range(c):
        o_ref[co * n:(co + 1) * n, :] = (
            xres_ref[co * n:(co + 1) * n, :] + y2[co])


@jax.jit
def residual_block(x, w1, b1, g1, bt1, w2, b2, g2, bt2):
    N, C, H, W = x.shape
    assert (W & (W - 1)) == 0, "kernel assumes W is a power of two"
    HW = H * W
    pad2 = 2 * (W + 1)
    # channel-major, lane-dense flat layout: row (c*N + n) holds image (n, c)
    xf = jnp.transpose(x, (1, 0, 2, 3)).reshape(C * N, HW)
    xpad = jnp.pad(xf, ((0, 0), (pad2, pad2)))

    vmem = pl.BlockSpec(memory_space=pltpu.MemorySpace.VMEM)
    smem = pl.BlockSpec(memory_space=pltpu.MemorySpace.SMEM)
    kern = functools.partial(residual_block_kernel, n=N, c=C, h=H, w=W)

    out = pl.pallas_call(
        kern,
        out_shape=jax.ShapeDtypeStruct((C * N, HW), jnp.float32),
        in_specs=[vmem, vmem] + [smem] * 8,
        out_specs=vmem,
    )(xpad, xf, w1.reshape(-1), b1, g1, bt1, w2.reshape(-1), b2, g2, bt2)

    return jnp.transpose(out.reshape(C, N, H, W), (1, 0, 2, 3))


def reference_forward(x, w1, b1, g1, bt1, w2, b2, g2, bt2):
    """Pure-JAX reference mirroring the PyTorch module (training-mode BN)."""
    def conv(h, w, b):
        y = jax.lax.conv_general_dilated(
            h, w, window_strides=(1, 1), padding="SAME",
            dimension_numbers=("NCHW", "OIHW", "NCHW"))
        return y + b[None, :, None, None]

    def bn(h, g, bt):
        mean = h.mean(axis=(0, 2, 3), keepdims=True)
        var = ((h - mean) ** 2).mean(axis=(0, 2, 3), keepdims=True)
        return ((h - mean) * jax.lax.rsqrt(var + EPS)
                * g[None, :, None, None] + bt[None, :, None, None])

    h = bn(conv(x, w1, b1), g1, bt1)
    h = jnp.maximum(h, 0.0)
    h = bn(conv(h, w2, b2), g2, bt2)
    return x + h


if __name__ == "__main__":
    N, C, H, W = 2, 4, 16, 16
    key = jax.random.PRNGKey(0)
    ks = jax.random.split(key, 9)

    x = jax.random.normal(ks[0], (N, C, H, W), dtype=jnp.float32)

    # Deterministic synthetic parameters (shapes from nn.Conv2d / nn.BatchNorm2d).
    w1 = 0.1 * jax.random.normal(ks[1], (C, C, 3, 3), dtype=jnp.float32)   # OIHW
    b1 = 0.1 * jax.random.normal(ks[2], (C,), dtype=jnp.float32)
    g1 = 1.0 + 0.1 * jax.random.normal(ks[3], (C,), dtype=jnp.float32)
    bt1 = 0.1 * jax.random.normal(ks[4], (C,), dtype=jnp.float32)
    w2 = 0.1 * jax.random.normal(ks[5], (C, C, 3, 3), dtype=jnp.float32)
    b2 = 0.1 * jax.random.normal(ks[6], (C,), dtype=jnp.float32)
    g2 = 1.0 + 0.1 * jax.random.normal(ks[7], (C,), dtype=jnp.float32)
    bt2 = 0.1 * jax.random.normal(ks[8], (C,), dtype=jnp.float32)

    out = residual_block(x, w1, b1, g1, bt1, w2, b2, g2, bt2)
    out = jax.block_until_ready(out)

    ref = reference_forward(x, w1, b1, g1, bt1, w2, b2, g2, bt2)
    ref = jax.block_until_ready(ref)

    assert out.shape == (N, C, H, W)
    assert jnp.allclose(out, ref, atol=1e-3, rtol=1e-3), (
        float(jnp.max(jnp.abs(out - ref))))
    print("KERNEL_OK")
</pallas_src>

<mosaic_0001>
module attributes {stable_mosaic.version = 11 : i64} {
  func.func @residual_block_kernel(%arg0: memref<8x324xf32, #tpu.memory_space<vmem>>, %arg1: memref<8x256xf32, #tpu.memory_space<vmem>>, %arg2: memref<144xf32, #tpu.memory_space<smem>>, %arg3: memref<4xf32, #tpu.memory_space<smem>>, %arg4: memref<4xf32, #tpu.memory_space<smem>>, %arg5: memref<4xf32, #tpu.memory_space<smem>>, %arg6: memref<144xf32, #tpu.memory_space<smem>>, %arg7: memref<4xf32, #tpu.memory_space<smem>>, %arg8: memref<4xf32, #tpu.memory_space<smem>>, %arg9: memref<4xf32, #tpu.memory_space<smem>>, %arg10: memref<8x256xf32, #tpu.memory_space<vmem>>) attributes {dimension_semantics = [], scalar_prefetch = 0 : i64, scratch_operands = 0 : i64, tpu.core_type = #tpu.core_type<tc>} {
    %c0 = arith.constant 0 : index
    %0 = memref.load %arg2[%c0] : memref<144xf32, #tpu.memory_space<smem>>
    %c1 = arith.constant 1 : index
    %1 = memref.load %arg2[%c1] : memref<144xf32, #tpu.memory_space<smem>>
    %c2 = arith.constant 2 : index
    %2 = memref.load %arg2[%c2] : memref<144xf32, #tpu.memory_space<smem>>
    %c3 = arith.constant 3 : index
    %3 = memref.load %arg2[%c3] : memref<144xf32, #tpu.memory_space<smem>>
    %c4 = arith.constant 4 : index
    %4 = memref.load %arg2[%c4] : memref<144xf32, #tpu.memory_space<smem>>
    %c5 = arith.constant 5 : index
    %5 = memref.load %arg2[%c5] : memref<144xf32, #tpu.memory_space<smem>>
    %c6 = arith.constant 6 : index
    %6 = memref.load %arg2[%c6] : memref<144xf32, #tpu.memory_space<smem>>
    %c7 = arith.constant 7 : index
    %7 = memref.load %arg2[%c7] : memref<144xf32, #tpu.memory_space<smem>>
    %c8 = arith.constant 8 : index
    %8 = memref.load %arg2[%c8] : memref<144xf32, #tpu.memory_space<smem>>
    %c9 = arith.constant 9 : index
    %9 = memref.load %arg2[%c9] : memref<144xf32, #tpu.memory_space<smem>>
    %c10 = arith.constant 10 : index
    %10 = memref.load %arg2[%c10] : memref<144xf32, #tpu.memory_space<smem>>
    %c11 = arith.constant 11 : index
    %11 = memref.load %arg2[%c11] : memref<144xf32, #tpu.memory_space<smem>>
    %c12 = arith.constant 12 : index
    %12 = memref.load %arg2[%c12] : memref<144xf32, #tpu.memory_space<smem>>
    %c13 = arith.constant 13 : index
    %13 = memref.load %arg2[%c13] : memref<144xf32, #tpu.memory_space<smem>>
    %c14 = arith.constant 14 : index
    %14 = memref.load %arg2[%c14] : memref<144xf32, #tpu.memory_space<smem>>
    %c15 = arith.constant 15 : index
    %15 = memref.load %arg2[%c15] : memref<144xf32, #tpu.memory_space<smem>>
    %c16 = arith.constant 16 : index
    %16 = memref.load %arg2[%c16] : memref<144xf32, #tpu.memory_space<smem>>
    %c17 = arith.constant 17 : index
    %17 = memref.load %arg2[%c17] : memref<144xf32, #tpu.memory_space<smem>>
    %c18 = arith.constant 18 : index
    %18 = memref.load %arg2[%c18] : memref<144xf32, #tpu.memory_space<smem>>
    %c19 = arith.constant 19 : index
    %19 = memref.load %arg2[%c19] : memref<144xf32, #tpu.memory_space<smem>>
    %c20 = arith.constant 20 : index
    %20 = memref.load %arg2[%c20] : memref<144xf32, #tpu.memory_space<smem>>
    %c21 = arith.constant 21 : index
    %21 = memref.load %arg2[%c21] : memref<144xf32, #tpu.memory_space<smem>>
    %c22 = arith.constant 22 : index
    %22 = memref.load %arg2[%c22] : memref<144xf32, #tpu.memory_space<smem>>
    %c23 = arith.constant 23 : index
    %23 = memref.load %arg2[%c23] : memref<144xf32, #tpu.memory_space<smem>>
    %c24 = arith.constant 24 : index
    %24 = memref.load %arg2[%c24] : memref<144xf32, #tpu.memory_space<smem>>
    %c25 = arith.constant 25 : index
    %25 = memref.load %arg2[%c25] : memref<144xf32, #tpu.memory_space<smem>>
    %c26 = arith.constant 26 : index
    %26 = memref.load %arg2[%c26] : memref<144xf32, #tpu.memory_space<smem>>
    %c27 = arith.constant 27 : index
    %27 = memref.load %arg2[%c27] : memref<144xf32, #tpu.memory_space<smem>>
    %c28 = arith.constant 28 : index
    %28 = memref.load %arg2[%c28] : memref<144xf32, #tpu.memory_space<smem>>
    %c29 = arith.constant 29 : index
    %29 = memref.load %arg2[%c29] : memref<144xf32, #tpu.memory_space<smem>>
    %c30 = arith.constant 30 : index
    %30 = memref.load %arg2[%c30] : memref<144xf32, #tpu.memory_space<smem>>
    %c31 = arith.constant 31 : index
    %31 = memref.load %arg2[%c31] : memref<144xf32, #tpu.memory_space<smem>>
    %c32 = arith.constant 32 : index
    %32 = memref.load %arg2[%c32] : memref<144xf32, #tpu.memory_space<smem>>
    %c33 = arith.constant 33 : index
    %33 = memref.load %arg2[%c33] : memref<144xf32, #tpu.memory_space<smem>>
    %c34 = arith.constant 34 : index
    %34 = memref.load %arg2[%c34] : memref<144xf32, #tpu.memory_space<smem>>
    %c35 = arith.constant 35 : index
    %35 = memref.load %arg2[%c35] : memref<144xf32, #tpu.memory_space<smem>>
    %c36 = arith.constant 36 : index
    %36 = memref.load %arg2[%c36] : memref<144xf32, #tpu.memory_space<smem>>
    %c37 = arith.constant 37 : index
    %37 = memref.load %arg2[%c37] : memref<144xf32, #tpu.memory_space<smem>>
    %c38 = arith.constant 38 : index
    %38 = memref.load %arg2[%c38] : memref<144xf32, #tpu.memory_space<smem>>
    %c39 = arith.constant 39 : index
    %39 = memref.load %arg2[%c39] : memref<144xf32, #tpu.memory_space<smem>>
    %c40 = arith.constant 40 : index
    %40 = memref.load %arg2[%c40] : memref<144xf32, #tpu.memory_space<smem>>
    %c41 = arith.constant 41 : index
    %41 = memref.load %arg2[%c41] : memref<144xf32, #tpu.memory_space<smem>>
    %c42 = arith.constant 42 : index
    %42 = memref.load %arg2[%c42] : memref<144xf32, #tpu.memory_space<smem>>
    %c43 = arith.constant 43 : index
    %43 = memref.load %arg2[%c43] : memref<144xf32, #tpu.memory_space<smem>>
    %c44 = arith.constant 44 : index
    %44 = memref.load %arg2[%c44] : memref<144xf32, #tpu.memory_space<smem>>
    %c45 = arith.constant 45 : index
    %45 = memref.load %arg2[%c45] : memref<144xf32, #tpu.memory_space<smem>>
    %c46 = arith.constant 46 : index
    %46 = memref.load %arg2[%c46] : memref<144xf32, #tpu.memory_space<smem>>
    %c47 = arith.constant 47 : index
    %47 = memref.load %arg2[%c47] : memref<144xf32, #tpu.memory_space<smem>>
    %c48 = arith.constant 48 : index
    %48 = memref.load %arg2[%c48] : memref<144xf32, #tpu.memory_space<smem>>
    %c49 = arith.constant 49 : index
    %49 = memref.load %arg2[%c49] : memref<144xf32, #tpu.memory_space<smem>>
    %c50 = arith.constant 50 : index
    %50 = memref.load %arg2[%c50] : memref<144xf32, #tpu.memory_space<smem>>
    %c51 = arith.constant 51 : index
    %51 = memref.load %arg2[%c51] : memref<144xf32, #tpu.memory_space<smem>>
    %c52 = arith.constant 52 : index
    %52 = memref.load %arg2[%c52] : memref<144xf32, #tpu.memory_space<smem>>
    %c53 = arith.constant 53 : index
    %53 = memref.load %arg2[%c53] : memref<144xf32, #tpu.memory_space<smem>>
    %c54 = arith.constant 54 : index
    %54 = memref.load %arg2[%c54] : memref<144xf32, #tpu.memory_space<smem>>
    %c55 = arith.constant 55 : index
    %55 = memref.load %arg2[%c55] : memref<144xf32, #tpu.memory_space<smem>>
    %c56 = arith.constant 56 : index
    %56 = memref.load %arg2[%c56] : memref<144xf32, #tpu.memory_space<smem>>
    %c57 = arith.constant 57 : index
    %57 = memref.load %arg2[%c57] : memref<144xf32, #tpu.memory_space<smem>>
    %c58 = arith.constant 58 : index
    %58 = memref.load %arg2[%c58] : memref<144xf32, #tpu.memory_space<smem>>
    %c59 = arith.constant 59 : index
    %59 = memref.load %arg2[%c59] : memref<144xf32, #tpu.memory_space<smem>>
    %c60 = arith.constant 60 : index
    %60 = memref.load %arg2[%c60] : memref<144xf32, #tpu.memory_space<smem>>
    %c61 = arith.constant 61 : index
    %61 = memref.load %arg2[%c61] : memref<144xf32, #tpu.memory_space<smem>>
    %c62 = arith.constant 62 : index
    %62 = memref.load %arg2[%c62] : memref<144xf32, #tpu.memory_space<smem>>
    %c63 = arith.constant 63 : index
    %63 = memref.load %arg2[%c63] : memref<144xf32, #tpu.memory_space<smem>>
    %c64 = arith.constant 64 : index
    %64 = memref.load %arg2[%c64] : memref<144xf32, #tpu.memory_space<smem>>
    %c65 = arith.constant 65 : index
    %65 = memref.load %arg2[%c65] : memref<144xf32, #tpu.memory_space<smem>>
    %c66 = arith.constant 66 : index
    %66 = memref.load %arg2[%c66] : memref<144xf32, #tpu.memory_space<smem>>
    %c67 = arith.constant 67 : index
    %67 = memref.load %arg2[%c67] : memref<144xf32, #tpu.memory_space<smem>>
    %c68 = arith.constant 68 : index
    %68 = memref.load %arg2[%c68] : memref<144xf32, #tpu.memory_space<smem>>
    %c69 = arith.constant 69 : index
    %69 = memref.load %arg2[%c69] : memref<144xf32, #tpu.memory_space<smem>>
    %c70 = arith.constant 70 : index
    %70 = memref.load %arg2[%c70] : memref<144xf32, #tpu.memory_space<smem>>
    %c71 = arith.constant 71 : index
    %71 = memref.load %arg2[%c71] : memref<144xf32, #tpu.memory_space<smem>>
    %c72 = arith.constant 72 : index
    %72 = memref.load %arg2[%c72] : memref<144xf32, #tpu.memory_space<smem>>
    %c73 = arith.constant 73 : index
    %73 = memref.load %arg2[%c73] : memref<144xf32, #tpu.memory_space<smem>>
    %c74 = arith.constant 74 : index
    %74 = memref.load %arg2[%c74] : memref<144xf32, #tpu.memory_space<smem>>
    %c75 = arith.constant 75 : index
    %75 = memref.load %arg2[%c75] : memref<144xf32, #tpu.memory_space<smem>>
    %c76 = arith.constant 76 : index
    %76 = memref.load %arg2[%c76] : memref<144xf32, #tpu.memory_space<smem>>
    %c77 = arith.constant 77 : index
    %77 = memref.load %arg2[%c77] : memref<144xf32, #tpu.memory_space<smem>>
    %c78 = arith.constant 78 : index
    %78 = memref.load %arg2[%c78] : memref<144xf32, #tpu.memory_space<smem>>
    %c79 = arith.constant 79 : index
    %79 = memref.load %arg2[%c79] : memref<144xf32, #tpu.memory_space<smem>>
    %c80 = arith.constant 80 : index
    %80 = memref.load %arg2[%c80] : memref<144xf32, #tpu.memory_space<smem>>
    %c81 = arith.constant 81 : index
    %81 = memref.load %arg2[%c81] : memref<144xf32, #tpu.memory_space<smem>>
    %c82 = arith.constant 82 : index
    %82 = memref.load %arg2[%c82] : memref<144xf32, #tpu.memory_space<smem>>
    %c83 = arith.constant 83 : index
    %83 = memref.load %arg2[%c83] : memref<144xf32, #tpu.memory_space<smem>>
    %c84 = arith.constant 84 : index
    %84 = memref.load %arg2[%c84] : memref<144xf32, #tpu.memory_space<smem>>
    %c85 = arith.constant 85 : index
    %85 = memref.load %arg2[%c85] : memref<144xf32, #tpu.memory_space<smem>>
    %c86 = arith.constant 86 : index
    %86 = memref.load %arg2[%c86] : memref<144xf32, #tpu.memory_space<smem>>
    %c87 = arith.constant 87 : index
    %87 = memref.load %arg2[%c87] : memref<144xf32, #tpu.memory_space<smem>>
    %c88 = arith.constant 88 : index
    %88 = memref.load %arg2[%c88] : memref<144xf32, #tpu.memory_space<smem>>
    %c89 = arith.constant 89 : index
    %89 = memref.load %arg2[%c89] : memref<144xf32, #tpu.memory_space<smem>>
    %c90 = arith.constant 90 : index
    %90 = memref.load %arg2[%c90] : memref<144xf32, #tpu.memory_space<smem>>
    %c91 = arith.constant 91 : index
    %91 = memref.load %arg2[%c91] : memref<144xf32, #tpu.memory_space<smem>>
    %c92 = arith.constant 92 : index
    %92 = memref.load %arg2[%c92] : memref<144xf32, #tpu.memory_space<smem>>
    %c93 = arith.constant 93 : index
    %93 = memref.load %arg2[%c93] : memref<144xf32, #tpu.memory_space<smem>>
    %c94 = arith.constant 94 : index
    %94 = memref.load %arg2[%c94] : memref<144xf32, #tpu.memory_space<smem>>
    %c95 = arith.constant 95 : index
    %95 = memref.load %arg2[%c95] : memref<144xf32, #tpu.memory_space<smem>>
    %c96 = arith.constant 96 : index
    %96 = memref.load %arg2[%c96] : memref<144xf32, #tpu.memory_space<smem>>
    %c97 = arith.constant 97 : index
    %97 = memref.load %arg2[%c97] : memref<144xf32, #tpu.memory_space<smem>>
    %c98 = arith.constant 98 : index
    %98 = memref.load %arg2[%c98] : memref<144xf32, #tpu.memory_space<smem>>
    %c99 = arith.constant 99 : index
    %99 = memref.load %arg2[%c99] : memref<144xf32, #tpu.memory_space<smem>>
    %c100 = arith.constant 100 : index
    %100 = memref.load %arg2[%c100] : memref<144xf32, #tpu.memory_space<smem>>
    %c101 = arith.constant 101 : index
    %101 = memref.load %arg2[%c101] : memref<144xf32, #tpu.memory_space<smem>>
    %c102 = arith.constant 102 : index
    %102 = memref.load %arg2[%c102] : memref<144xf32, #tpu.memory_space<smem>>
    %c103 = arith.constant 103 : index
    %103 = memref.load %arg2[%c103] : memref<144xf32, #tpu.memory_space<smem>>
    %c104 = arith.constant 104 : index
    %104 = memref.load %arg2[%c104] : memref<144xf32, #tpu.memory_space<smem>>
    %c105 = arith.constant 105 : index
    %105 = memref.load %arg2[%c105] : memref<144xf32, #tpu.memory_space<smem>>
    %c106 = arith.constant 106 : index
    %106 = memref.load %arg2[%c106] : memref<144xf32, #tpu.memory_space<smem>>
    %c107 = arith.constant 107 : index
    %107 = memref.load %arg2[%c107] : memref<144xf32, #tpu.memory_space<smem>>
    %c108 = arith.constant 108 : index
    %108 = memref.load %arg2[%c108] : memref<144xf32, #tpu.memory_space<smem>>
    %c109 = arith.constant 109 : index
    %109 = memref.load %arg2[%c109] : memref<144xf32, #tpu.memory_space<smem>>
    %c110 = arith.constant 110 : index
    %110 = memref.load %arg2[%c110] : memref<144xf32, #tpu.memory_space<smem>>
    %c111 = arith.constant 111 : index
    %111 = memref.load %arg2[%c111] : memref<144xf32, #tpu.memory_space<smem>>
    %c112 = arith.constant 112 : index
    %112 = memref.load %arg2[%c112] : memref<144xf32, #tpu.memory_space<smem>>
    %c113 = arith.constant 113 : index
    %113 = memref.load %arg2[%c113] : memref<144xf32, #tpu.memory_space<smem>>
    %c114 = arith.constant 114 : index
    %114 = memref.load %arg2[%c114] : memref<144xf32, #tpu.memory_space<smem>>
    %c115 = arith.constant 115 : index
    %115 = memref.load %arg2[%c115] : memref<144xf32, #tpu.memory_space<smem>>
    %c116 = arith.constant 116 : index
    %116 = memref.load %arg2[%c116] : memref<144xf32, #tpu.memory_space<smem>>
    %c117 = arith.constant 117 : index
    %117 = memref.load %arg2[%c117] : memref<144xf32, #tpu.memory_space<smem>>
    %c118 = arith.constant 118 : index
    %118 = memref.load %arg2[%c118] : memref<144xf32, #tpu.memory_space<smem>>
    %c119 = arith.constant 119 : index
    %119 = memref.load %arg2[%c119] : memref<144xf32, #tpu.memory_space<smem>>
    %c120 = arith.constant 120 : index
    %120 = memref.load %arg2[%c120] : memref<144xf32, #tpu.memory_space<smem>>
    %c121 = arith.constant 121 : index
    %121 = memref.load %arg2[%c121] : memref<144xf32, #tpu.memory_space<smem>>
    %c122 = arith.constant 122 : index
    %122 = memref.load %arg2[%c122] : memref<144xf32, #tpu.memory_space<smem>>
    %c123 = arith.constant 123 : index
    %123 = memref.load %arg2[%c123] : memref<144xf32, #tpu.memory_space<smem>>
    %c124 = arith.constant 124 : index
    %124 = memref.load %arg2[%c124] : memref<144xf32, #tpu.memory_space<smem>>
    %c125 = arith.constant 125 : index
    %125 = memref.load %arg2[%c125] : memref<144xf32, #tpu.memory_space<smem>>
    %c126 = arith.constant 126 : index
    %126 = memref.load %arg2[%c126] : memref<144xf32, #tpu.memory_space<smem>>
    %c127 = arith.constant 127 : index
    %127 = memref.load %arg2[%c127] : memref<144xf32, #tpu.memory_space<smem>>
    %c128 = arith.constant 128 : index
    %128 = memref.load %arg2[%c128] : memref<144xf32, #tpu.memory_space<smem>>
    %c129 = arith.constant 129 : index
    %129 = memref.load %arg2[%c129] : memref<144xf32, #tpu.memory_space<smem>>
    %c130 = arith.constant 130 : index
    %130 = memref.load %arg2[%c130] : memref<144xf32, #tpu.memory_space<smem>>
    %c131 = arith.constant 131 : index
    %131 = memref.load %arg2[%c131] : memref<144xf32, #tpu.memory_space<smem>>
    %c132 = arith.constant 132 : index
    %132 = memref.load %arg2[%c132] : memref<144xf32, #tpu.memory_space<smem>>
    %c133 = arith.constant 133 : index
    %133 = memref.load %arg2[%c133] : memref<144xf32, #tpu.memory_space<smem>>
    %c134 = arith.constant 134 : index
    %134 = memref.load %arg2[%c134] : memref<144xf32, #tpu.memory_space<smem>>
    %c135 = arith.constant 135 : index
    %135 = memref.load %arg2[%c135] : memref<144xf32, #tpu.memory_space<smem>>
    %c136 = arith.constant 136 : index
    %136 = memref.load %arg2[%c136] : memref<144xf32, #tpu.memory_space<smem>>
    %c137 = arith.constant 137 : index
    %137 = memref.load %arg2[%c137] : memref<144xf32, #tpu.memory_space<smem>>
    %c138 = arith.constant 138 : index
    %138 = memref.load %arg2[%c138] : memref<144xf32, #tpu.memory_space<smem>>
    %c139 = arith.constant 139 : index
    %139 = memref.load %arg2[%c139] : memref<144xf32, #tpu.memory_space<smem>>
    %c140 = arith.constant 140 : index
    %140 = memref.load %arg2[%c140] : memref<144xf32, #tpu.memory_space<smem>>
    %c141 = arith.constant 141 : index
    %141 = memref.load %arg2[%c141] : memref<144xf32, #tpu.memory_space<smem>>
    %c142 = arith.constant 142 : index
    %142 = memref.load %arg2[%c142] : memref<144xf32, #tpu.memory_space<smem>>
    %c143 = arith.constant 143 : index
    %143 = memref.load %arg2[%c143] : memref<144xf32, #tpu.memory_space<smem>>
    %c0_0 = arith.constant 0 : index
    %144 = memref.load %arg6[%c0_0] : memref<144xf32, #tpu.memory_space<smem>>
    %c1_1 = arith.constant 1 : index
    %145 = memref.load %arg6[%c1_1] : memref<144xf32, #tpu.memory_space<smem>>
    %c2_2 = arith.constant 2 : index
    %146 = memref.load %arg6[%c2_2] : memref<144xf32, #tpu.memory_space<smem>>
    %c3_3 = arith.constant 3 : index
    %147 = memref.load %arg6[%c3_3] : memref<144xf32, #tpu.memory_space<smem>>
    %c4_4 = arith.constant 4 : index
    %148 = memref.load %arg6[%c4_4] : memref<144xf32, #tpu.memory_space<smem>>
    %c5_5 = arith.constant 5 : index
    %149 = memref.load %arg6[%c5_5] : memref<144xf32, #tpu.memory_space<smem>>
    %c6_6 = arith.constant 6 : index
    %150 = memref.load %arg6[%c6_6] : memref<144xf32, #tpu.memory_space<smem>>
    %c7_7 = arith.constant 7 : index
    %151 = memref.load %arg6[%c7_7] : memref<144xf32, #tpu.memory_space<smem>>
    %c8_8 = arith.constant 8 : index
    %152 = memref.load %arg6[%c8_8] : memref<144xf32, #tpu.memory_space<smem>>
    %c9_9 = arith.constant 9 : index
    %153 = memref.load %arg6[%c9_9] : memref<144xf32, #tpu.memory_space<smem>>
    %c10_10 = arith.constant 10 : index
    %154 = memref.load %arg6[%c10_10] : memref<144xf32, #tpu.memory_space<smem>>
    %c11_11 = arith.constant 11 : index
    %155 = memref.load %arg6[%c11_11] : memref<144xf32, #tpu.memory_space<smem>>
    %c12_12 = arith.constant 12 : index
    %156 = memref.load %arg6[%c12_12] : memref<144xf32, #tpu.memory_space<smem>>
    %c13_13 = arith.constant 13 : index
    %157 = memref.load %arg6[%c13_13] : memref<144xf32, #tpu.memory_space<smem>>
    %c14_14 = arith.constant 14 : index
    %158 = memref.load %arg6[%c14_14] : memref<144xf32, #tpu.memory_space<smem>>
    %c15_15 = arith.constant 15 : index
    %159 = memref.load %arg6[%c15_15] : memref<144xf32, #tpu.memory_space<smem>>
    %c16_16 = arith.constant 16 : index
    %160 = memref.load %arg6[%c16_16] : memref<144xf32, #tpu.memory_space<smem>>
    %c17_17 = arith.constant 17 : index
    %161 = memref.load %arg6[%c17_17] : memref<144xf32, #tpu.memory_space<smem>>
    %c18_18 = arith.constant 18 : index
    %162 = memref.load %arg6[%c18_18] : memref<144xf32, #tpu.memory_space<smem>>
    %c19_19 = arith.constant 19 : index
    %163 = memref.load %arg6[%c19_19] : memref<144xf32, #tpu.memory_space<smem>>
    %c20_20 = arith.constant 20 : index
    %164 = memref.load %arg6[%c20_20] : memref<144xf32, #tpu.memory_space<smem>>
    %c21_21 = arith.constant 21 : index
    %165 = memref.load %arg6[%c21_21] : memref<144xf32, #tpu.memory_space<smem>>
    %c22_22 = arith.constant 22 : index
    %166 = memref.load %arg6[%c22_22] : memref<144xf32, #tpu.memory_space<smem>>
    %c23_23 = arith.constant 23 : index
    %167 = memref.load %arg6[%c23_23] : memref<144xf32, #tpu.memory_space<smem>>
    %c24_24 = arith.constant 24 : index
    %168 = memref.load %arg6[%c24_24] : memref<144xf32, #tpu.memory_space<smem>>
    %c25_25 = arith.constant 25 : index
    %169 = memref.load %arg6[%c25_25] : memref<144xf32, #tpu.memory_space<smem>>
    %c26_26 = arith.constant 26 : index
    %170 = memref.load %arg6[%c26_26] : memref<144xf32, #tpu.memory_space<smem>>
    %c27_27 = arith.constant 27 : index
    %171 = memref.load %arg6[%c27_27] : memref<144xf32, #tpu.memory_space<smem>>
    %c28_28 = arith.constant 28 : index
    %172 = memref.load %arg6[%c28_28] : memref<144xf32, #tpu.memory_space<smem>>
    %c29_29 = arith.constant 29 : index
    %173 = memref.load %arg6[%c29_29] : memref<144xf32, #tpu.memory_space<smem>>
    %c30_30 = arith.constant 30 : index
    %174 = memref.load %arg6[%c30_30] : memref<144xf32, #tpu.memory_space<smem>>
    %c31_31 = arith.constant 31 : index
    %175 = memref.load %arg6[%c31_31] : memref<144xf32, #tpu.memory_space<smem>>
    %c32_32 = arith.constant 32 : index
    %176 = memref.load %arg6[%c32_32] : memref<144xf32, #tpu.memory_space<smem>>
    %c33_33 = arith.constant 33 : index
    %177 = memref.load %arg6[%c33_33] : memref<144xf32, #tpu.memory_space<smem>>
    %c34_34 = arith.constant 34 : index
    %178 = memref.load %arg6[%c34_34] : memref<144xf32, #tpu.memory_space<smem>>
    %c35_35 = arith.constant 35 : index
    %179 = memref.load %arg6[%c35_35] : memref<144xf32, #tpu.memory_space<smem>>
    %c36_36 = arith.constant 36 : index
    %180 = memref.load %arg6[%c36_36] : memref<144xf32, #tpu.memory_space<smem>>
    %c37_37 = arith.constant 37 : index
    %181 = memref.load %arg6[%c37_37] : memref<144xf32, #tpu.memory_space<smem>>
    %c38_38 = arith.constant 38 : index
    %182 = memref.load %arg6[%c38_38] : memref<144xf32, #tpu.memory_space<smem>>
    %c39_39 = arith.constant 39 : index
    %183 = memref.load %arg6[%c39_39] : memref<144xf32, #tpu.memory_space<smem>>
    %c40_40 = arith.constant 40 : index
    %184 = memref.load %arg6[%c40_40] : memref<144xf32, #tpu.memory_space<smem>>
    %c41_41 = arith.constant 41 : index
    %185 = memref.load %arg6[%c41_41] : memref<144xf32, #tpu.memory_space<smem>>
    %c42_42 = arith.constant 42 : index
    %186 = memref.load %arg6[%c42_42] : memref<144xf32, #tpu.memory_space<smem>>
    %c43_43 = arith.constant 43 : index
    %187 = memref.load %arg6[%c43_43] : memref<144xf32, #tpu.memory_space<smem>>
    %c44_44 = arith.constant 44 : index
    %188 = memref.load %arg6[%c44_44] : memref<144xf32, #tpu.memory_space<smem>>
    %c45_45 = arith.constant 45 : index
    %189 = memref.load %arg6[%c45_45] : memref<144xf32, #tpu.memory_space<smem>>
    %c46_46 = arith.constant 46 : index
    %190 = memref.load %arg6[%c46_46] : memref<144xf32, #tpu.memory_space<smem>>
    %c47_47 = arith.constant 47 : index
    %191 = memref.load %arg6[%c47_47] : memref<144xf32, #tpu.memory_space<smem>>
    %c48_48 = arith.constant 48 : index
    %192 = memref.load %arg6[%c48_48] : memref<144xf32, #tpu.memory_space<smem>>
    %c49_49 = arith.constant 49 : index
    %193 = memref.load %arg6[%c49_49] : memref<144xf32, #tpu.memory_space<smem>>
    %c50_50 = arith.constant 50 : index
    %194 = memref.load %arg6[%c50_50] : memref<144xf32, #tpu.memory_space<smem>>
    %c51_51 = arith.constant 51 : index
    %195 = memref.load %arg6[%c51_51] : memref<144xf32, #tpu.memory_space<smem>>
    %c52_52 = arith.constant 52 : index
    %196 = memref.load %arg6[%c52_52] : memref<144xf32, #tpu.memory_space<smem>>
    %c53_53 = arith.constant 53 : index
    %197 = memref.load %arg6[%c53_53] : memref<144xf32, #tpu.memory_space<smem>>
    %c54_54 = arith.constant 54 : index
    %198 = memref.load %arg6[%c54_54] : memref<144xf32, #tpu.memory_space<smem>>
    %c55_55 = arith.constant 55 : index
    %199 = memref.load %arg6[%c55_55] : memref<144xf32, #tpu.memory_space<smem>>
    %c56_56 = arith.constant 56 : index
    %200 = memref.load %arg6[%c56_56] : memref<144xf32, #tpu.memory_space<smem>>
    %c57_57 = arith.constant 57 : index
    %201 = memref.load %arg6[%c57_57] : memref<144xf32, #tpu.memory_space<smem>>
    %c58_58 = arith.constant 58 : index
    %202 = memref.load %arg6[%c58_58] : memref<144xf32, #tpu.memory_space<smem>>
    %c59_59 = arith.constant 59 : index
    %203 = memref.load %arg6[%c59_59] : memref<144xf32, #tpu.memory_space<smem>>
    %c60_60 = arith.constant 60 : index
    %204 = memref.load %arg6[%c60_60] : memref<144xf32, #tpu.memory_space<smem>>
    %c61_61 = arith.constant 61 : index
    %205 = memref.load %arg6[%c61_61] : memref<144xf32, #tpu.memory_space<smem>>
    %c62_62 = arith.constant 62 : index
    %206 = memref.load %arg6[%c62_62] : memref<144xf32, #tpu.memory_space<smem>>
    %c63_63 = arith.constant 63 : index
    %207 = memref.load %arg6[%c63_63] : memref<144xf32, #tpu.memory_space<smem>>
    %c64_64 = arith.constant 64 : index
    %208 = memref.load %arg6[%c64_64] : memref<144xf32, #tpu.memory_space<smem>>
    %c65_65 = arith.constant 65 : index
    %209 = memref.load %arg6[%c65_65] : memref<144xf32, #tpu.memory_space<smem>>
    %c66_66 = arith.constant 66 : index
    %210 = memref.load %arg6[%c66_66] : memref<144xf32, #tpu.memory_space<smem>>
    %c67_67 = arith.constant 67 : index
    %211 = memref.load %arg6[%c67_67] : memref<144xf32, #tpu.memory_space<smem>>
    %c68_68 = arith.constant 68 : index
    %212 = memref.load %arg6[%c68_68] : memref<144xf32, #tpu.memory_space<smem>>
    %c69_69 = arith.constant 69 : index
    %213 = memref.load %arg6[%c69_69] : memref<144xf32, #tpu.memory_space<smem>>
    %c70_70 = arith.constant 70 : index
    %214 = memref.load %arg6[%c70_70] : memref<144xf32, #tpu.memory_space<smem>>
    %c71_71 = arith.constant 71 : index
    %215 = memref.load %arg6[%c71_71] : memref<144xf32, #tpu.memory_space<smem>>
    %c72_72 = arith.constant 72 : index
    %216 = memref.load %arg6[%c72_72] : memref<144xf32, #tpu.memory_space<smem>>
    %c73_73 = arith.constant 73 : index
    %217 = memref.load %arg6[%c73_73] : memref<144xf32, #tpu.memory_space<smem>>
    %c74_74 = arith.constant 74 : index
    %218 = memref.load %arg6[%c74_74] : memref<144xf32, #tpu.memory_space<smem>>
    %c75_75 = arith.constant 75 : index
    %219 = memref.load %arg6[%c75_75] : memref<144xf32, #tpu.memory_space<smem>>
    %c76_76 = arith.constant 76 : index
    %220 = memref.load %arg6[%c76_76] : memref<144xf32, #tpu.memory_space<smem>>
    %c77_77 = arith.constant 77 : index
    %221 = memref.load %arg6[%c77_77] : memref<144xf32, #tpu.memory_space<smem>>
    %c78_78 = arith.constant 78 : index
    %222 = memref.load %arg6[%c78_78] : memref<144xf32, #tpu.memory_space<smem>>
    %c79_79 = arith.constant 79 : index
    %223 = memref.load %arg6[%c79_79] : memref<144xf32, #tpu.memory_space<smem>>
    %c80_80 = arith.constant 80 : index
    %224 = memref.load %arg6[%c80_80] : memref<144xf32, #tpu.memory_space<smem>>
    %c81_81 = arith.constant 81 : index
    %225 = memref.load %arg6[%c81_81] : memref<144xf32, #tpu.memory_space<smem>>
    %c82_82 = arith.constant 82 : index
    %226 = memref.load %arg6[%c82_82] : memref<144xf32, #tpu.memory_space<smem>>
    %c83_83 = arith.constant 83 : index
    %227 = memref.load %arg6[%c83_83] : memref<144xf32, #tpu.memory_space<smem>>
    %c84_84 = arith.constant 84 : index
    %228 = memref.load %arg6[%c84_84] : memref<144xf32, #tpu.memory_space<smem>>
    %c85_85 = arith.constant 85 : index
    %229 = memref.load %arg6[%c85_85] : memref<144xf32, #tpu.memory_space<smem>>
    %c86_86 = arith.constant 86 : index
    %230 = memref.load %arg6[%c86_86] : memref<144xf32, #tpu.memory_space<smem>>
    %c87_87 = arith.constant 87 : index
    %231 = memref.load %arg6[%c87_87] : memref<144xf32, #tpu.memory_space<smem>>
    %c88_88 = arith.constant 88 : index
    %232 = memref.load %arg6[%c88_88] : memref<144xf32, #tpu.memory_space<smem>>
    %c89_89 = arith.constant 89 : index
    %233 = memref.load %arg6[%c89_89] : memref<144xf32, #tpu.memory_space<smem>>
    %c90_90 = arith.constant 90 : index
    %234 = memref.load %arg6[%c90_90] : memref<144xf32, #tpu.memory_space<smem>>
    %c91_91 = arith.constant 91 : index
    %235 = memref.load %arg6[%c91_91] : memref<144xf32, #tpu.memory_space<smem>>
    %c92_92 = arith.constant 92 : index
    %236 = memref.load %arg6[%c92_92] : memref<144xf32, #tpu.memory_space<smem>>
    %c93_93 = arith.constant 93 : index
    %237 = memref.load %arg6[%c93_93] : memref<144xf32, #tpu.memory_space<smem>>
    %c94_94 = arith.constant 94 : index
    %238 = memref.load %arg6[%c94_94] : memref<144xf32, #tpu.memory_space<smem>>
    %c95_95 = arith.constant 95 : index
    %239 = memref.load %arg6[%c95_95] : memref<144xf32, #tpu.memory_space<smem>>
    %c96_96 = arith.constant 96 : index
    %240 = memref.load %arg6[%c96_96] : memref<144xf32, #tpu.memory_space<smem>>
    %c97_97 = arith.constant 97 : index
    %241 = memref.load %arg6[%c97_97] : memref<144xf32, #tpu.memory_space<smem>>
    %c98_98 = arith.constant 98 : index
    %242 = memref.load %arg6[%c98_98] : memref<144xf32, #tpu.memory_space<smem>>
    %c99_99 = arith.constant 99 : index
    %243 = memref.load %arg6[%c99_99] : memref<144xf32, #tpu.memory_space<smem>>
    %c100_100 = arith.constant 100 : index
    %244 = memref.load %arg6[%c100_100] : memref<144xf32, #tpu.memory_space<smem>>
    %c101_101 = arith.constant 101 : index
    %245 = memref.load %arg6[%c101_101] : memref<144xf32, #tpu.memory_space<smem>>
    %c102_102 = arith.constant 102 : index
    %246 = memref.load %arg6[%c102_102] : memref<144xf32, #tpu.memory_space<smem>>
    %c103_103 = arith.constant 103 : index
    %247 = memref.load %arg6[%c103_103] : memref<144xf32, #tpu.memory_space<smem>>
    %c104_104 = arith.constant 104 : index
    %248 = memref.load %arg6[%c104_104] : memref<144xf32, #tpu.memory_space<smem>>
    %c105_105 = arith.constant 105 : index
    %249 = memref.load %arg6[%c105_105] : memref<144xf32, #tpu.memory_space<smem>>
    %c106_106 = arith.constant 106 : index
    %250 = memref.load %arg6[%c106_106] : memref<144xf32, #tpu.memory_space<smem>>
    %c107_107 = arith.constant 107 : index
    %251 = memref.load %arg6[%c107_107] : memref<144xf32, #tpu.memory_space<smem>>
    %c108_108 = arith.constant 108 : index
    %252 = memref.load %arg6[%c108_108] : memref<144xf32, #tpu.memory_space<smem>>
    %c109_109 = arith.constant 109 : index
    %253 = memref.load %arg6[%c109_109] : memref<144xf32, #tpu.memory_space<smem>>
    %c110_110 = arith.constant 110 : index
    %254 = memref.load %arg6[%c110_110] : memref<144xf32, #tpu.memory_space<smem>>
    %c111_111 = arith.constant 111 : index
    %255 = memref.load %arg6[%c111_111] : memref<144xf32, #tpu.memory_space<smem>>
    %c112_112 = arith.constant 112 : index
    %256 = memref.load %arg6[%c112_112] : memref<144xf32, #tpu.memory_space<smem>>
    %c113_113 = arith.constant 113 : index
    %257 = memref.load %arg6[%c113_113] : memref<144xf32, #tpu.memory_space<smem>>
    %c114_114 = arith.constant 114 : index
    %258 = memref.load %arg6[%c114_114] : memref<144xf32, #tpu.memory_space<smem>>
    %c115_115 = arith.constant 115 : index
    %259 = memref.load %arg6[%c115_115] : memref<144xf32, #tpu.memory_space<smem>>
    %c116_116 = arith.constant 116 : index
    %260 = memref.load %arg6[%c116_116] : memref<144xf32, #tpu.memory_space<smem>>
    %c117_117 = arith.constant 117 : index
    %261 = memref.load %arg6[%c117_117] : memref<144xf32, #tpu.memory_space<smem>>
    %c118_118 = arith.constant 118 : index
    %262 = memref.load %arg6[%c118_118] : memref<144xf32, #tpu.memory_space<smem>>
    %c119_119 = arith.constant 119 : index
    %263 = memref.load %arg6[%c119_119] : memref<144xf32, #tpu.memory_space<smem>>
    %c120_120 = arith.constant 120 : index
    %264 = memref.load %arg6[%c120_120] : memref<144xf32, #tpu.memory_space<smem>>
    %c121_121 = arith.constant 121 : index
    %265 = memref.load %arg6[%c121_121] : memref<144xf32, #tpu.memory_space<smem>>
    %c122_122 = arith.constant 122 : index
    %266 = memref.load %arg6[%c122_122] : memref<144xf32, #tpu.memory_space<smem>>
    %c123_123 = arith.constant 123 : index
    %267 = memref.load %arg6[%c123_123] : memref<144xf32, #tpu.memory_space<smem>>
    %c124_124 = arith.constant 124 : index
    %268 = memref.load %arg6[%c124_124] : memref<144xf32, #tpu.memory_space<smem>>
    %c125_125 = arith.constant 125 : index
    %269 = memref.load %arg6[%c125_125] : memref<144xf32, #tpu.memory_space<smem>>
    %c126_126 = arith.constant 126 : index
    %270 = memref.load %arg6[%c126_126] : memref<144xf32, #tpu.memory_space<smem>>
    %c127_127 = arith.constant 127 : index
    %271 = memref.load %arg6[%c127_127] : memref<144xf32, #tpu.memory_space<smem>>
    %c128_128 = arith.constant 128 : index
    %272 = memref.load %arg6[%c128_128] : memref<144xf32, #tpu.memory_space<smem>>
    %c129_129 = arith.constant 129 : index
    %273 = memref.load %arg6[%c129_129] : memref<144xf32, #tpu.memory_space<smem>>
    %c130_130 = arith.constant 130 : index
    %274 = memref.load %arg6[%c130_130] : memref<144xf32, #tpu.memory_space<smem>>
    %c131_131 = arith.constant 131 : index
    %275 = memref.load %arg6[%c131_131] : memref<144xf32, #tpu.memory_space<smem>>
    %c132_132 = arith.constant 132 : index
    %276 = memref.load %arg6[%c132_132] : memref<144xf32, #tpu.memory_space<smem>>
    %c133_133 = arith.constant 133 : index
    %277 = memref.load %arg6[%c133_133] : memref<144xf32, #tpu.memory_space<smem>>
    %c134_134 = arith.constant 134 : index
    %278 = memref.load %arg6[%c134_134] : memref<144xf32, #tpu.memory_space<smem>>
    %c135_135 = arith.constant 135 : index
    %279 = memref.load %arg6[%c135_135] : memref<144xf32, #tpu.memory_space<smem>>
    %c136_136 = arith.constant 136 : index
    %280 = memref.load %arg6[%c136_136] : memref<144xf32, #tpu.memory_space<smem>>
    %c137_137 = arith.constant 137 : index
    %281 = memref.load %arg6[%c137_137] : memref<144xf32, #tpu.memory_space<smem>>
    %c138_138 = arith.constant 138 : index
    %282 = memref.load %arg6[%c138_138] : memref<144xf32, #tpu.memory_space<smem>>
    %c139_139 = arith.constant 139 : index
    %283 = memref.load %arg6[%c139_139] : memref<144xf32, #tpu.memory_space<smem>>
    %c140_140 = arith.constant 140 : index
    %284 = memref.load %arg6[%c140_140] : memref<144xf32, #tpu.memory_space<smem>>
    %c141_141 = arith.constant 141 : index
    %285 = memref.load %arg6[%c141_141] : memref<144xf32, #tpu.memory_space<smem>>
    %c142_142 = arith.constant 142 : index
    %286 = memref.load %arg6[%c142_142] : memref<144xf32, #tpu.memory_space<smem>>
    %c143_143 = arith.constant 143 : index
    %287 = memref.load %arg6[%c143_143] : memref<144xf32, #tpu.memory_space<smem>>
    %c0_144 = arith.constant 0 : index
    %288 = memref.load %arg3[%c0_144] : memref<4xf32, #tpu.memory_space<smem>>
    %c1_145 = arith.constant 1 : index
    %289 = memref.load %arg3[%c1_145] : memref<4xf32, #tpu.memory_space<smem>>
    %c2_146 = arith.constant 2 : index
    %290 = memref.load %arg3[%c2_146] : memref<4xf32, #tpu.memory_space<smem>>
    %c3_147 = arith.constant 3 : index
    %291 = memref.load %arg3[%c3_147] : memref<4xf32, #tpu.memory_space<smem>>
    %c0_148 = arith.constant 0 : index
    %292 = memref.load %arg7[%c0_148] : memref<4xf32, #tpu.memory_space<smem>>
    %c1_149 = arith.constant 1 : index
    %293 = memref.load %arg7[%c1_149] : memref<4xf32, #tpu.memory_space<smem>>
    %c2_150 = arith.constant 2 : index
    %294 = memref.load %arg7[%c2_150] : memref<4xf32, #tpu.memory_space<smem>>
    %c3_151 = arith.constant 3 : index
    %295 = memref.load %arg7[%c3_151] : memref<4xf32, #tpu.memory_space<smem>>
    %c0_152 = arith.constant 0 : index
    %296 = memref.load %arg4[%c0_152] : memref<4xf32, #tpu.memory_space<smem>>
    %c1_153 = arith.constant 1 : index
    %297 = memref.load %arg4[%c1_153] : memref<4xf32, #tpu.memory_space<smem>>
    %c2_154 = arith.constant 2 : index
    %298 = memref.load %arg4[%c2_154] : memref<4xf32, #tpu.memory_space<smem>>
    %c3_155 = arith.constant 3 : index
    %299 = memref.load %arg4[%c3_155] : memref<4xf32, #tpu.memory_space<smem>>
    %c0_156 = arith.constant 0 : index
    %300 = memref.load %arg8[%c0_156] : memref<4xf32, #tpu.memory_space<smem>>
    %c1_157 = arith.constant 1 : index
    %301 = memref.load %arg8[%c1_157] : memref<4xf32, #tpu.memory_space<smem>>
    %c2_158 = arith.constant 2 : index
    %302 = memref.load %arg8[%c2_158] : memref<4xf32, #tpu.memory_space<smem>>
    %c3_159 = arith.constant 3 : index
    %303 = memref.load %arg8[%c3_159] : memref<4xf32, #tpu.memory_space<smem>>
    %c0_160 = arith.constant 0 : index
    %304 = memref.load %arg5[%c0_160] : memref<4xf32, #tpu.memory_space<smem>>
    %c1_161 = arith.constant 1 : index
    %305 = memref.load %arg5[%c1_161] : memref<4xf32, #tpu.memory_space<smem>>
    %c2_162 = arith.constant 2 : index
    %306 = memref.load %arg5[%c2_162] : memref<4xf32, #tpu.memory_space<smem>>
    %c3_163 = arith.constant 3 : index
    %307 = memref.load %arg5[%c3_163] : memref<4xf32, #tpu.memory_space<smem>>
    %c0_164 = arith.constant 0 : index
    %308 = memref.load %arg9[%c0_164] : memref<4xf32, #tpu.memory_space<smem>>
    %c1_165 = arith.constant 1 : index
    %309 = memref.load %arg9[%c1_165] : memref<4xf32, #tpu.memory_space<smem>>
    %c2_166 = arith.constant 2 : index
    %310 = memref.load %arg9[%c2_166] : memref<4xf32, #tpu.memory_space<smem>>
    %c3_167 = arith.constant 3 : index
    %311 = memref.load %arg9[%c3_167] : memref<4xf32, #tpu.memory_space<smem>>
    %312 = tpu.iota {dimensions = array<i32: 1>} : vector<2x290xi32>
    %313 = tpu.iota {dimensions = array<i32: 1>} : vector<2x256xi32>
    %c15_i32 = arith.constant 15 : i32
    %314 = vector.broadcast %c15_i32 : i32 to vector<2x290xi32>
    %315 = arith.addi %312, %314 : vector<2x290xi32>
    %c15_i32_168 = arith.constant 15 : i32
    %316 = vector.broadcast %c15_i32_168 : i32 to vector<2x290xi32>
    %317 = arith.andi %315, %316 : vector<2x290xi32>
    %c15_i32_169 = arith.constant 15 : i32
    %318 = vector.broadcast %c15_i32_169 : i32 to vector<2x256xi32>
    %319 = arith.andi %313, %318 : vector<2x256xi32>
    %c17_i32 = arith.constant 17 : i32
    %320 = vector.broadcast %c17_i32 : i32 to vector<2x290xi32>
    %321 = arith.cmpi sge, %312, %320 : vector<2x290xi32>
    %c273_i32 = arith.constant 273 : i32
    %322 = vector.broadcast %c273_i32 : i32 to vector<2x290xi32>
    %323 = arith.cmpi slt, %312, %322 : vector<2x290xi32>
    %324 = arith.andi %321, %323 : vector<2x290xi1>
    %c15_i32_170 = arith.constant 15 : i32
    %325 = vector.broadcast %c15_i32_170 : i32 to vector<2x290xi32>
    %326 = arith.cmpi ne, %317, %325 : vector<2x290xi32>
    %c0_i32 = arith.constant 0 : i32
    %327 = vector.broadcast %c0_i32 : i32 to vector<2x290xi32>
    %328 = arith.cmpi ne, %317, %327 : vector<2x290xi32>
    %c15_i32_171 = arith.constant 15 : i32
    %329 = vector.broadcast %c15_i32_171 : i32 to vector<2x256xi32>
    %330 = arith.cmpi ne, %319, %329 : vector<2x256xi32>
    %c0_i32_172 = arith.constant 0 : i32
    %331 = vector.broadcast %c0_i32_172 : i32 to vector<2x256xi32>
    %332 = arith.cmpi ne, %319, %331 : vector<2x256xi32>
    %333 = vector.broadcast %288 : f32 to vector<2x290xf32>
    %334 = vector.broadcast %289 : f32 to vector<2x290xf32>
    %335 = vector.broadcast %290 : f32 to vector<2x290xf32>
    %336 = vector.broadcast %291 : f32 to vector<2x290xf32>
    %c0_173 = arith.constant 0 : index
    %c0_174 = arith.constant 0 : index
    %337 = vector.load %arg0[%c0_173, %c0_174] : memref<8x324xf32, #tpu.memory_space<vmem>>, vector<2x324xf32>
    %338 = vector.extract_strided_slice %337 {offsets = [0, 0], sizes = [2, 290], strides = [1, 1]} : vector<2x324xf32> to vector<2x290xf32>
    %cst = arith.constant 0.000000e+00 : f32
    %339 = vector.broadcast %cst : f32 to vector<2x290xf32>
    %340 = arith.select %328, %338, %339 : vector<2x290xi1>, vector<2x290xf32>
    %341 = vector.broadcast %0 : f32 to vector<2x290xf32>
    %342 = arith.mulf %340, %341 : vector<2x290xf32>
    %343 = arith.addf %333, %342 : vector<2x290xf32>
    %344 = vector.broadcast %36 : f32 to vector<2x290xf32>
    %345 = arith.mulf %340, %344 : vector<2x290xf32>
    %346 = arith.addf %334, %345 : vector<2x290xf32>
    %347 = vector.broadcast %72 : f32 to vector<2x290xf32>
    %348 = arith.mulf %340, %347 : vector<2x290xf32>
    %349 = arith.addf %335, %348 : vector<2x290xf32>
    %350 = vector.broadcast %108 : f32 to vector<2x290xf32>
    %351 = arith.mulf %340, %350 : vector<2x290xf32>
    %352 = arith.addf %336, %351 : vector<2x290xf32>
    %353 = vector.extract_strided_slice %337 {offsets = [0, 1], sizes = [2, 290], strides = [1, 1]} : vector<2x324xf32> to vector<2x290xf32>
    %354 = vector.broadcast %1 : f32 to vector<2x290xf32>
    %355 = arith.mulf %353, %354 : vector<2x290xf32>
    %356 = arith.addf %343, %355 : vector<2x290xf32>
    %357 = vector.broadcast %37 : f32 to vector<2x290xf32>
    %358 = arith.mulf %353, %357 : vector<2x290xf32>
    %359 = arith.addf %346, %358 : vector<2x290xf32>
    %360 = vector.broadcast %73 : f32 to vector<2x290xf32>
    %361 = arith.mulf %353, %360 : vector<2x290xf32>
    %362 = arith.addf %349, %361 : vector<2x290xf32>
    %363 = vector.broadcast %109 : f32 to vector<2x290xf32>
    %364 = arith.mulf %353, %363 : vector<2x290xf32>
    %365 = arith.addf %352, %364 : vector<2x290xf32>
    %366 = vector.extract_strided_slice %337 {offsets = [0, 2], sizes = [2, 290], strides = [1, 1]} : vector<2x324xf32> to vector<2x290xf32>
    %cst_175 = arith.constant 0.000000e+00 : f32
    %367 = vector.broadcast %cst_175 : f32 to vector<2x290xf32>
    %368 = arith.select %326, %366, %367 : vector<2x290xi1>, vector<2x290xf32>
    %369 = vector.broadcast %2 : f32 to vector<2x290xf32>
    %370 = arith.mulf %368, %369 : vector<2x290xf32>
    %371 = arith.addf %356, %370 : vector<2x290xf32>
    %372 = vector.broadcast %38 : f32 to vector<2x290xf32>
    %373 = arith.mulf %368, %372 : vector<2x290xf32>
    %374 = arith.addf %359, %373 : vector<2x290xf32>
    %375 = vector.broadcast %74 : f32 to vector<2x290xf32>
    %376 = arith.mulf %368, %375 : vector<2x290xf32>
    %377 = arith.addf %362, %376 : vector<2x290xf32>
    %378 = vector.broadcast %110 : f32 to vector<2x290xf32>
    %379 = arith.mulf %368, %378 : vector<2x290xf32>
    %380 = arith.addf %365, %379 : vector<2x290xf32>
    %381 = vector.extract_strided_slice %337 {offsets = [0, 16], sizes = [2, 290], strides = [1, 1]} : vector<2x324xf32> to vector<2x290xf32>
    %cst_176 = arith.constant 0.000000e+00 : f32
    %382 = vector.broadcast %cst_176 : f32 to vector<2x290xf32>
    %383 = arith.select %328, %381, %382 : vector<2x290xi1>, vector<2x290xf32>
    %384 = vector.broadcast %3 : f32 to vector<2x290xf32>
    %385 = arith.mulf %383, %384 : vector<2x290xf32>
    %386 = arith.addf %371, %385 : vector<2x290xf32>
    %387 = vector.broadcast %39 : f32 to vector<2x290xf32>
    %388 = arith.mulf %383, %387 : vector<2x290xf32>
    %389 = arith.addf %374, %388 : vector<2x290xf32>
    %390 = vector.broadcast %75 : f32 to vector<2x290xf32>
    %391 = arith.mulf %383, %390 : vector<2x290xf32>
    %392 = arith.addf %377, %391 : vector<2x290xf32>
    %393 = vector.broadcast %111 : f32 to vector<2x290xf32>
    %394 = arith.mulf %383, %393 : vector<2x290xf32>
    %395 = arith.addf %380, %394 : vector<2x290xf32>
    %396 = vector.extract_strided_slice %337 {offsets = [0, 17], sizes = [2, 290], strides = [1, 1]} : vector<2x324xf32> to vector<2x290xf32>
    %397 = vector.broadcast %4 : f32 to vector<2x290xf32>
    %398 = arith.mulf %396, %397 : vector<2x290xf32>
    %399 = arith.addf %386, %398 : vector<2x290xf32>
    %400 = vector.broadcast %40 : f32 to vector<2x290xf32>
    %401 = arith.mulf %396, %400 : vector<2x290xf32>
    %402 = arith.addf %389, %401 : vector<2x290xf32>
    %403 = vector.broadcast %76 : f32 to vector<2x290xf32>
    %404 = arith.mulf %396, %403 : vector<2x290xf32>
    %405 = arith.addf %392, %404 : vector<2x290xf32>
    %406 = vector.broadcast %112 : f32 to vector<2x290xf32>
    %407 = arith.mulf %396, %406 : vector<2x290xf32>
    %408 = arith.addf %395, %407 : vector<2x290xf32>
    %409 = vector.extract_strided_slice %337 {offsets = [0, 18], sizes = [2, 290], strides = [1, 1]} : vector<2x324xf32> to vector<2x290xf32>
    %cst_177 = arith.constant 0.000000e+00 : f32
    %410 = vector.broadcast %cst_177 : f32 to vector<2x290xf32>
    %411 = arith.select %326, %409, %410 : vector<2x290xi1>, vector<2x290xf32>
    %412 = vector.broadcast %5 : f32 to vector<2x290xf32>
    %413 = arith.mulf %411, %412 : vector<2x290xf32>
    %414 = arith.addf %399, %413 : vector<2x290xf32>
    %415 = vector.broadcast %41 : f32 to vector<2x290xf32>
    %416 = arith.mulf %411, %415 : vector<2x290xf32>
    %417 = arith.addf %402, %416 : vector<2x290xf32>
    %418 = vector.broadcast %77 : f32 to vector<2x290xf32>
    %419 = arith.mulf %411, %418 : vector<2x290xf32>
    %420 = arith.addf %405, %419 : vector<2x290xf32>
    %421 = vector.broadcast %113 : f32 to vector<2x290xf32>
    %422 = arith.mulf %411, %421 : vector<2x290xf32>
    %423 = arith.addf %408, %422 : vector<2x290xf32>
    %424 = vector.extract_strided_slice %337 {offsets = [0, 32], sizes = [2, 290], strides = [1, 1]} : vector<2x324xf32> to vector<2x290xf32>
    %cst_178 = arith.constant 0.000000e+00 : f32
    %425 = vector.broadcast %cst_178 : f32 to vector<2x290xf32>
    %426 = arith.select %328, %424, %425 : vector<2x290xi1>, vector<2x290xf32>
    %427 = vector.broadcast %6 : f32 to vector<2x290xf32>
    %428 = arith.mulf %426, %427 : vector<2x290xf32>
    %429 = arith.addf %414, %428 : vector<2x290xf32>
    %430 = vector.broadcast %42 : f32 to vector<2x290xf32>
    %431 = arith.mulf %426, %430 : vector<2x290xf32>
    %432 = arith.addf %417, %431 : vector<2x290xf32>
    %433 = vector.broadcast %78 : f32 to vector<2x290xf32>
    %434 = arith.mulf %426, %433 : vector<2x290xf32>
    %435 = arith.addf %420, %434 : vector<2x290xf32>
    %436 = vector.broadcast %114 : f32 to vector<2x290xf32>
    %437 = arith.mulf %426, %436 : vector<2x290xf32>
    %438 = arith.addf %423, %437 : vector<2x290xf32>
    %439 = vector.extract_strided_slice %337 {offsets = [0, 33], sizes = [2, 290], strides = [1, 1]} : vector<2x324xf32> to vector<2x290xf32>
    %440 = vector.broadcast %7 : f32 to vector<2x290xf32>
    %441 = arith.mulf %439, %440 : vector<2x290xf32>
    %442 = arith.addf %429, %441 : vector<2x290xf32>
    %443 = vector.broadcast %43 : f32 to vector<2x290xf32>
    %444 = arith.mulf %439, %443 : vector<2x290xf32>
    %445 = arith.addf %432, %444 : vector<2x290xf32>
    %446 = vector.broadcast %79 : f32 to vector<2x290xf32>
    %447 = arith.mulf %439, %446 : vector<2x290xf32>
    %448 = arith.addf %435, %447 : vector<2x290xf32>
    %449 = vector.broadcast %115 : f32 to vector<2x290xf32>
    %450 = arith.mulf %439, %449 : vector<2x290xf32>
    %451 = arith.addf %438, %450 : vector<2x290xf32>
    %452 = vector.extract_strided_slice %337 {offsets = [0, 34], sizes = [2, 290], strides = [1, 1]} : vector<2x324xf32> to vector<2x290xf32>
    %cst_179 = arith.constant 0.000000e+00 : f32
    %453 = vector.broadcast %cst_179 : f32 to vector<2x290xf32>
    %454 = arith.select %326, %452, %453 : vector<2x290xi1>, vector<2x290xf32>
    %455 = vector.broadcast %8 : f32 to vector<2x290xf32>
    %456 = arith.mulf %454, %455 : vector<2x290xf32>
    %457 = arith.addf %442, %456 : vector<2x290xf32>
    %458 = vector.broadcast %44 : f32 to vector<2x290xf32>
    %459 = arith.mulf %454, %458 : vector<2x290xf32>
    %460 = arith.addf %445, %459 : vector<2x290xf32>
    %461 = vector.broadcast %80 : f32 to vector<2x290xf32>
    %462 = arith.mulf %454, %461 : vector<2x290xf32>
    %463 = arith.addf %448, %462 : vector<2x290xf32>
    %464 = vector.broadcast %116 : f32 to vector<2x290xf32>
    %465 = arith.mulf %454, %464 : vector<2x290xf32>
    %466 = arith.addf %451, %465 : vector<2x290xf32>
    %c2_180 = arith.constant 2 : index
    %c0_181 = arith.constant 0 : index
    %467 = vector.load %arg0[%c2_180, %c0_181] : memref<8x324xf32, #tpu.memory_space<vmem>>, vector<2x324xf32>
    %468 = vector.extract_strided_slice %467 {offsets = [0, 0], sizes = [2, 290], strides = [1, 1]} : vector<2x324xf32> to vector<2x290xf32>
    %cst_182 = arith.constant 0.000000e+00 : f32
    %469 = vector.broadcast %cst_182 : f32 to vector<2x290xf32>
    %470 = arith.select %328, %468, %469 : vector<2x290xi1>, vector<2x290xf32>
    %471 = vector.broadcast %9 : f32 to vector<2x290xf32>
    %472 = arith.mulf %470, %471 : vector<2x290xf32>
    %473 = arith.addf %457, %472 : vector<2x290xf32>
    %474 = vector.broadcast %45 : f32 to vector<2x290xf32>
    %475 = arith.mulf %470, %474 : vector<2x290xf32>
    %476 = arith.addf %460, %475 : vector<2x290xf32>
    %477 = vector.broadcast %81 : f32 to vector<2x290xf32>
    %478 = arith.mulf %470, %477 : vector<2x290xf32>
    %479 = arith.addf %463, %478 : vector<2x290xf32>
    %480 = vector.broadcast %117 : f32 to vector<2x290xf32>
    %481 = arith.mulf %470, %480 : vector<2x290xf32>
    %482 = arith.addf %466, %481 : vector<2x290xf32>
    %483 = vector.extract_strided_slice %467 {offsets = [0, 1], sizes = [2, 290], strides = [1, 1]} : vector<2x324xf32> to vector<2x290xf32>
    %484 = vector.broadcast %10 : f32 to vector<2x290xf32>
    %485 = arith.mulf %483, %484 : vector<2x290xf32>
    %486 = arith.addf %473, %485 : vector<2x290xf32>
    %487 = vector.broadcast %46 : f32 to vector<2x290xf32>
    %488 = arith.mulf %483, %487 : vector<2x290xf32>
    %489 = arith.addf %476, %488 : vector<2x290xf32>
    %490 = vector.broadcast %82 : f32 to vector<2x290xf32>
    %491 = arith.mulf %483, %490 : vector<2x290xf32>
    %492 = arith.addf %479, %491 : vector<2x290xf32>
    %493 = vector.broadcast %118 : f32 to vector<2x290xf32>
    %494 = arith.mulf %483, %493 : vector<2x290xf32>
    %495 = arith.addf %482, %494 : vector<2x290xf32>
    %496 = vector.extract_strided_slice %467 {offsets = [0, 2], sizes = [2, 290], strides = [1, 1]} : vector<2x324xf32> to vector<2x290xf32>
    %cst_183 = arith.constant 0.000000e+00 : f32
    %497 = vector.broadcast %cst_183 : f32 to vector<2x290xf32>
    %498 = arith.select %326, %496, %497 : vector<2x290xi1>, vector<2x290xf32>
    %499 = vector.broadcast %11 : f32 to vector<2x290xf32>
    %500 = arith.mulf %498, %499 : vector<2x290xf32>
    %501 = arith.addf %486, %500 : vector<2x290xf32>
    %502 = vector.broadcast %47 : f32 to vector<2x290xf32>
    %503 = arith.mulf %498, %502 : vector<2x290xf32>
    %504 = arith.addf %489, %503 : vector<2x290xf32>
    %505 = vector.broadcast %83 : f32 to vector<2x290xf32>
    %506 = arith.mulf %498, %505 : vector<2x290xf32>
    %507 = arith.addf %492, %506 : vector<2x290xf32>
    %508 = vector.broadcast %119 : f32 to vector<2x290xf32>
    %509 = arith.mulf %498, %508 : vector<2x290xf32>
    %510 = arith.addf %495, %509 : vector<2x290xf32>
    %511 = vector.extract_strided_slice %467 {offsets = [0, 16], sizes = [2, 290], strides = [1, 1]} : vector<2x324xf32> to vector<2x290xf32>
    %cst_184 = arith.constant 0.000000e+00 : f32
    %512 = vector.broadcast %cst_184 : f32 to vector<2x290xf32>
    %513 = arith.select %328, %511, %512 : vector<2x290xi1>, vector<2x290xf32>
    %514 = vector.broadcast %12 : f32 to vector<2x290xf32>
    %515 = arith.mulf %513, %514 : vector<2x290xf32>
    %516 = arith.addf %501, %515 : vector<2x290xf32>
    %517 = vector.broadcast %48 : f32 to vector<2x290xf32>
    %518 = arith.mulf %513, %517 : vector<2x290xf32>
    %519 = arith.addf %504, %518 : vector<2x290xf32>
    %520 = vector.broadcast %84 : f32 to vector<2x290xf32>
    %521 = arith.mulf %513, %520 : vector<2x290xf32>
    %522 = arith.addf %507, %521 : vector<2x290xf32>
    %523 = vector.broadcast %120 : f32 to vector<2x290xf32>
    %524 = arith.mulf %513, %523 : vector<2x290xf32>
    %525 = arith.addf %510, %524 : vector<2x290xf32>
    %526 = vector.extract_strided_slice %467 {offsets = [0, 17], sizes = [2, 290], strides = [1, 1]} : vector<2x324xf32> to vector<2x290xf32>
    %527 = vector.broadcast %13 : f32 to vector<2x290xf32>
    %528 = arith.mulf %526, %527 : vector<2x290xf32>
    %529 = arith.addf %516, %528 : vector<2x290xf32>
    %530 = vector.broadcast %49 : f32 to vector<2x290xf32>
    %531 = arith.mulf %526, %530 : vector<2x290xf32>
    %532 = arith.addf %519, %531 : vector<2x290xf32>
    %533 = vector.broadcast %85 : f32 to vector<2x290xf32>
    %534 = arith.mulf %526, %533 : vector<2x290xf32>
    %535 = arith.addf %522, %534 : vector<2x290xf32>
    %536 = vector.broadcast %121 : f32 to vector<2x290xf32>
    %537 = arith.mulf %526, %536 : vector<2x290xf32>
    %538 = arith.addf %525, %537 : vector<2x290xf32>
    %539 = vector.extract_strided_slice %467 {offsets = [0, 18], sizes = [2, 290], strides = [1, 1]} : vector<2x324xf32> to vector<2x290xf32>
    %cst_185 = arith.constant 0.000000e+00 : f32
    %540 = vector.broadcast %cst_185 : f32 to vector<2x290xf32>
    %541 = arith.select %326, %539, %540 : vector<2x290xi1>, vector<2x290xf32>
    %542 = vector.broadcast %14 : f32 to vector<2x290xf32>
    %543 = arith.mulf %541, %542 : vector<2x290xf32>
    %544 = arith.addf %529, %543 : vector<2x290xf32>
    %545 = vector.broadcast %50 : f32 to vector<2x290xf32>
    %546 = arith.mulf %541, %545 : vector<2x290xf32>
    %547 = arith.addf %532, %546 : vector<2x290xf32>
    %548 = vector.broadcast %86 : f32 to vector<2x290xf32>
    %549 = arith.mulf %541, %548 : vector<2x290xf32>
    %550 = arith.addf %535, %549 : vector<2x290xf32>
    %551 = vector.broadcast %122 : f32 to vector<2x290xf32>
    %552 = arith.mulf %541, %551 : vector<2x290xf32>
    %553 = arith.addf %538, %552 : vector<2x290xf32>
    %554 = vector.extract_strided_slice %467 {offsets = [0, 32], sizes = [2, 290], strides = [1, 1]} : vector<2x324xf32> to vector<2x290xf32>
    %cst_186 = arith.constant 0.000000e+00 : f32
    %555 = vector.broadcast %cst_186 : f32 to vector<2x290xf32>
    %556 = arith.select %328, %554, %555 : vector<2x290xi1>, vector<2x290xf32>
    %557 = vector.broadcast %15 : f32 to vector<2x290xf32>
    %558 = arith.mulf %556, %557 : vector<2x290xf32>
    %559 = arith.addf %544, %558 : vector<2x290xf32>
    %560 = vector.broadcast %51 : f32 to vector<2x290xf32>
    %561 = arith.mulf %556, %560 : vector<2x290xf32>
    %562 = arith.addf %547, %561 : vector<2x290xf32>
    %563 = vector.broadcast %87 : f32 to vector<2x290xf32>
    %564 = arith.mulf %556, %563 : vector<2x290xf32>
    %565 = arith.addf %550, %564 : vector<2x290xf32>
    %566 = vector.broadcast %123 : f32 to vector<2x290xf32>
    %567 = arith.mulf %556, %566 : vector<2x290xf32>
    %568 = arith.addf %553, %567 : vector<2x290xf32>
    %569 = vector.extract_strided_slice %467 {offsets = [0, 33], sizes = [2, 290], strides = [1, 1]} : vector<2x324xf32> to vector<2x290xf32>
    %570 = vector.broadcast %16 : f32 to vector<2x290xf32>
    %571 = arith.mulf %569, %570 : vector<2x290xf32>
    %572 = arith.addf %559, %571 : vector<2x290xf32>
    %573 = vector.broadcast %52 : f32 to vector<2x290xf32>
    %574 = arith.mulf %569, %573 : vector<2x290xf32>
    %575 = arith.addf %562, %574 : vector<2x290xf32>
    %576 = vector.broadcast %88 : f32 to vector<2x290xf32>
    %577 = arith.mulf %569, %576 : vector<2x290xf32>
    %578 = arith.addf %565, %577 : vector<2x290xf32>
    %579 = vector.broadcast %124 : f32 to vector<2x290xf32>
    %580 = arith.mulf %569, %579 : vector<2x290xf32>
    %581 = arith.addf %568, %580 : vector<2x290xf32>
    %582 = vector.extract_strided_slice %467 {offsets = [0, 34], sizes = [2, 290], strides = [1, 1]} : vector<2x324xf32> to vector<2x290xf32>
    %cst_187 = arith.constant 0.000000e+00 : f32
    %583 = vector.broadcast %cst_187 : f32 to vector<2x290xf32>
    %584 = arith.select %326, %582, %583 : vector<2x290xi1>, vector<2x290xf32>
    %585 = vector.broadcast %17 : f32 to vector<2x290xf32>
    %586 = arith.mulf %584, %585 : vector<2x290xf32>
    %587 = arith.addf %572, %586 : vector<2x290xf32>
    %588 = vector.broadcast %53 : f32 to vector<2x290xf32>
    %589 = arith.mulf %584, %588 : vector<2x290xf32>
    %590 = arith.addf %575, %589 : vector<2x290xf32>
    %591 = vector.broadcast %89 : f32 to vector<2x290xf32>
    %592 = arith.mulf %584, %591 : vector<2x290xf32>
    %593 = arith.addf %578, %592 : vector<2x290xf32>
    %594 = vector.broadcast %125 : f32 to vector<2x290xf32>
    %595 = arith.mulf %584, %594 : vector<2x290xf32>
    %596 = arith.addf %581, %595 : vector<2x290xf32>
    %c4_188 = arith.constant 4 : index
    %c0_189 = arith.constant 0 : index
    %597 = vector.load %arg0[%c4_188, %c0_189] : memref<8x324xf32, #tpu.memory_space<vmem>>, vector<2x324xf32>
    %598 = vector.extract_strided_slice %597 {offsets = [0, 0], sizes = [2, 290], strides = [1, 1]} : vector<2x324xf32> to vector<2x290xf32>
    %cst_190 = arith.constant 0.000000e+00 : f32
    %599 = vector.broadcast %cst_190 : f32 to vector<2x290xf32>
    %600 = arith.select %328, %598, %599 : vector<2x290xi1>, vector<2x290xf32>
    %601 = vector.broadcast %18 : f32 to vector<2x290xf32>
    %602 = arith.mulf %600, %601 : vector<2x290xf32>
    %603 = arith.addf %587, %602 : vector<2x290xf32>
    %604 = vector.broadcast %54 : f32 to vector<2x290xf32>
    %605 = arith.mulf %600, %604 : vector<2x290xf32>
    %606 = arith.addf %590, %605 : vector<2x290xf32>
    %607 = vector.broadcast %90 : f32 to vector<2x290xf32>
    %608 = arith.mulf %600, %607 : vector<2x290xf32>
    %609 = arith.addf %593, %608 : vector<2x290xf32>
    %610 = vector.broadcast %126 : f32 to vector<2x290xf32>
    %611 = arith.mulf %600, %610 : vector<2x290xf32>
    %612 = arith.addf %596, %611 : vector<2x290xf32>
    %613 = vector.extract_strided_slice %597 {offsets = [0, 1], sizes = [2, 290], strides = [1, 1]} : vector<2x324xf32> to vector<2x290xf32>
    %614 = vector.broadcast %19 : f32 to vector<2x290xf32>
    %615 = arith.mulf %613, %614 : vector<2x290xf32>
    %616 = arith.addf %603, %615 : vector<2x290xf32>
    %617 = vector.broadcast %55 : f32 to vector<2x290xf32>
    %618 = arith.mulf %613, %617 : vector<2x290xf32>
    %619 = arith.addf %606, %618 : vector<2x290xf32>
    %620 = vector.broadcast %91 : f32 to vector<2x290xf32>
    %621 = arith.mulf %613, %620 : vector<2x290xf32>
    %622 = arith.addf %609, %621 : vector<2x290xf32>
    %623 = vector.broadcast %127 : f32 to vector<2x290xf32>
    %624 = arith.mulf %613, %623 : vector<2x290xf32>
    %625 = arith.addf %612, %624 : vector<2x290xf32>
    %626 = vector.extract_strided_slice %597 {offsets = [0, 2], sizes = [2, 290], strides = [1, 1]} : vector<2x324xf32> to vector<2x290xf32>
    %cst_191 = arith.constant 0.000000e+00 : f32
    %627 = vector.broadcast %cst_191 : f32 to vector<2x290xf32>
    %628 = arith.select %326, %626, %627 : vector<2x290xi1>, vector<2x290xf32>
    %629 = vector.broadcast %20 : f32 to vector<2x290xf32>
    %630 = arith.mulf %628, %629 : vector<2x290xf32>
    %631 = arith.addf %616, %630 : vector<2x290xf32>
    %632 = vector.broadcast %56 : f32 to vector<2x290xf32>
    %633 = arith.mulf %628, %632 : vector<2x290xf32>
    %634 = arith.addf %619, %633 : vector<2x290xf32>
    %635 = vector.broadcast %92 : f32 to vector<2x290xf32>
    %636 = arith.mulf %628, %635 : vector<2x290xf32>
    %637 = arith.addf %622, %636 : vector<2x290xf32>
    %638 = vector.broadcast %128 : f32 to vector<2x290xf32>
    %639 = arith.mulf %628, %638 : vector<2x290xf32>
    %640 = arith.addf %625, %639 : vector<2x290xf32>
    %641 = vector.extract_strided_slice %597 {offsets = [0, 16], sizes = [2, 290], strides = [1, 1]} : vector<2x324xf32> to vector<2x290xf32>
    %cst_192 = arith.constant 0.000000e+00 : f32
    %642 = vector.broadcast %cst_192 : f32 to vector<2x290xf32>
    %643 = arith.select %328, %641, %642 : vector<2x290xi1>, vector<2x290xf32>
    %644 = vector.broadcast %21 : f32 to vector<2x290xf32>
    %645 = arith.mulf %643, %644 : vector<2x290xf32>
    %646 = arith.addf %631, %645 : vector<2x290xf32>
    %647 = vector.broadcast %57 : f32 to vector<2x290xf32>
    %648 = arith.mulf %643, %647 : vector<2x290xf32>
    %649 = arith.addf %634, %648 : vector<2x290xf32>
    %650 = vector.broadcast %93 : f32 to vector<2x290xf32>
    %651 = arith.mulf %643, %650 : vector<2x290xf32>
    %652 = arith.addf %637, %651 : vector<2x290xf32>
    %653 = vector.broadcast %129 : f32 to vector<2x290xf32>
    %654 = arith.mulf %643, %653 : vector<2x290xf32>
    %655 = arith.addf %640, %654 : vector<2x290xf32>
    %656 = vector.extract_strided_slice %597 {offsets = [0, 17], sizes = [2, 290], strides = [1, 1]} : vector<2x324xf32> to vector<2x290xf32>
    %657 = vector.broadcast %22 : f32 to vector<2x290xf32>
    %658 = arith.mulf %656, %657 : vector<2x290xf32>
    %659 = arith.addf %646, %658 : vector<2x290xf32>
    %660 = vector.broadcast %58 : f32 to vector<2x290xf32>
    %661 = arith.mulf %656, %660 : vector<2x290xf32>
    %662 = arith.addf %649, %661 : vector<2x290xf32>
    %663 = vector.broadcast %94 : f32 to vector<2x290xf32>
    %664 = arith.mulf %656, %663 : vector<2x290xf32>
    %665 = arith.addf %652, %664 : vector<2x290xf32>
    %666 = vector.broadcast %130 : f32 to vector<2x290xf32>
    %667 = arith.mulf %656, %666 : vector<2x290xf32>
    %668 = arith.addf %655, %667 : vector<2x290xf32>
    %669 = vector.extract_strided_slice %597 {offsets = [0, 18], sizes = [2, 290], strides = [1, 1]} : vector<2x324xf32> to vector<2x290xf32>
    %cst_193 = arith.constant 0.000000e+00 : f32
    %670 = vector.broadcast %cst_193 : f32 to vector<2x290xf32>
    %671 = arith.select %326, %669, %670 : vector<2x290xi1>, vector<2x290xf32>
    %672 = vector.broadcast %23 : f32 to vector<2x290xf32>
    %673 = arith.mulf %671, %672 : vector<2x290xf32>
    %674 = arith.addf %659, %673 : vector<2x290xf32>
    %675 = vector.broadcast %59 : f32 to vector<2x290xf32>
    %676 = arith.mulf %671, %675 : vector<2x290xf32>
    %677 = arith.addf %662, %676 : vector<2x290xf32>
    %678 = vector.broadcast %95 : f32 to vector<2x290xf32>
    %679 = arith.mulf %671, %678 : vector<2x290xf32>
    %680 = arith.addf %665, %679 : vector<2x290xf32>
    %681 = vector.broadcast %131 : f32 to vector<2x290xf32>
    %682 = arith.mulf %671, %681 : vector<2x290xf32>
    %683 = arith.addf %668, %682 : vector<2x290xf32>
    %684 = vector.extract_strided_slice %597 {offsets = [0, 32], sizes = [2, 290], strides = [1, 1]} : vector<2x324xf32> to vector<2x290xf32>
    %cst_194 = arith.constant 0.000000e+00 : f32
    %685 = vector.broadcast %cst_194 : f32 to vector<2x290xf32>
    %686 = arith.select %328, %684, %685 : vector<2x290xi1>, vector<2x290xf32>
    %687 = vector.broadcast %24 : f32 to vector<2x290xf32>
    %688 = arith.mulf %686, %687 : vector<2x290xf32>
    %689 = arith.addf %674, %688 : vector<2x290xf32>
    %690 = vector.broadcast %60 : f32 to vector<2x290xf32>
    %691 = arith.mulf %686, %690 : vector<2x290xf32>
    %692 = arith.addf %677, %691 : vector<2x290xf32>
    %693 = vector.broadcast %96 : f32 to vector<2x290xf32>
    %694 = arith.mulf %686, %693 : vector<2x290xf32>
    %695 = arith.addf %680, %694 : vector<2x290xf32>
    %696 = vector.broadcast %132 : f32 to vector<2x290xf32>
    %697 = arith.mulf %686, %696 : vector<2x290xf32>
    %698 = arith.addf %683, %697 : vector<2x290xf32>
    %699 = vector.extract_strided_slice %597 {offsets = [0, 33], sizes = [2, 290], strides = [1, 1]} : vector<2x324xf32> to vector<2x290xf32>
    %700 = vector.broadcast %25 : f32 to vector<2x290xf32>
    %701 = arith.mulf %699, %700 : vector<2x290xf32>
    %702 = arith.addf %689, %701 : vector<2x290xf32>
    %703 = vector.broadcast %61 : f32 to vector<2x290xf32>
    %704 = arith.mulf %699, %703 : vector<2x290xf32>
    %705 = arith.addf %692, %704 : vector<2x290xf32>
    %706 = vector.broadcast %97 : f32 to vector<2x290xf32>
    %707 = arith.mulf %699, %706 : vector<2x290xf32>
    %708 = arith.addf %695, %707 : vector<2x290xf32>
    %709 = vector.broadcast %133 : f32 to vector<2x290xf32>
    %710 = arith.mulf %699, %709 : vector<2x290xf32>
    %711 = arith.addf %698, %710 : vector<2x290xf32>
    %712 = vector.extract_strided_slice %597 {offsets = [0, 34], sizes = [2, 290], strides = [1, 1]} : vector<2x324xf32> to vector<2x290xf32>
    %cst_195 = arith.constant 0.000000e+00 : f32
    %713 = vector.broadcast %cst_195 : f32 to vector<2x290xf32>
    %714 = arith.select %326, %712, %713 : vector<2x290xi1>, vector<2x290xf32>
    %715 = vector.broadcast %26 : f32 to vector<2x290xf32>
    %716 = arith.mulf %714, %715 : vector<2x290xf32>
    %717 = arith.addf %702, %716 : vector<2x290xf32>
    %718 = vector.broadcast %62 : f32 to vector<2x290xf32>
    %719 = arith.mulf %714, %718 : vector<2x290xf32>
    %720 = arith.addf %705, %719 : vector<2x290xf32>
    %721 = vector.broadcast %98 : f32 to vector<2x290xf32>
    %722 = arith.mulf %714, %721 : vector<2x290xf32>
    %723 = arith.addf %708, %722 : vector<2x290xf32>
    %724 = vector.broadcast %134 : f32 to vector<2x290xf32>
    %725 = arith.mulf %714, %724 : vector<2x290xf32>
    %726 = arith.addf %711, %725 : vector<2x290xf32>
    %c6_196 = arith.constant 6 : index
    %c0_197 = arith.constant 0 : index
    %727 = vector.load %arg0[%c6_196, %c0_197] : memref<8x324xf32, #tpu.memory_space<vmem>>, vector<2x324xf32>
    %728 = vector.extract_strided_slice %727 {offsets = [0, 0], sizes = [2, 290], strides = [1, 1]} : vector<2x324xf32> to vector<2x290xf32>
    %cst_198 = arith.constant 0.000000e+00 : f32
    %729 = vector.broadcast %cst_198 : f32 to vector<2x290xf32>
    %730 = arith.select %328, %728, %729 : vector<2x290xi1>, vector<2x290xf32>
    %731 = vector.broadcast %27 : f32 to vector<2x290xf32>
    %732 = arith.mulf %730, %731 : vector<2x290xf32>
    %733 = arith.addf %717, %732 : vector<2x290xf32>
    %734 = vector.broadcast %63 : f32 to vector<2x290xf32>
    %735 = arith.mulf %730, %734 : vector<2x290xf32>
    %736 = arith.addf %720, %735 : vector<2x290xf32>
    %737 = vector.broadcast %99 : f32 to vector<2x290xf32>
    %738 = arith.mulf %730, %737 : vector<2x290xf32>
    %739 = arith.addf %723, %738 : vector<2x290xf32>
    %740 = vector.broadcast %135 : f32 to vector<2x290xf32>
    %741 = arith.mulf %730, %740 : vector<2x290xf32>
    %742 = arith.addf %726, %741 : vector<2x290xf32>
    %743 = vector.extract_strided_slice %727 {offsets = [0, 1], sizes = [2, 290], strides = [1, 1]} : vector<2x324xf32> to vector<2x290xf32>
    %744 = vector.broadcast %28 : f32 to vector<2x290xf32>
    %745 = arith.mulf %743, %744 : vector<2x290xf32>
    %746 = arith.addf %733, %745 : vector<2x290xf32>
    %747 = vector.broadcast %64 : f32 to vector<2x290xf32>
    %748 = arith.mulf %743, %747 : vector<2x290xf32>
    %749 = arith.addf %736, %748 : vector<2x290xf32>
    %750 = vector.broadcast %100 : f32 to vector<2x290xf32>
    %751 = arith.mulf %743, %750 : vector<2x290xf32>
    %752 = arith.addf %739, %751 : vector<2x290xf32>
    %753 = vector.broadcast %136 : f32 to vector<2x290xf32>
    %754 = arith.mulf %743, %753 : vector<2x290xf32>
    %755 = arith.addf %742, %754 : vector<2x290xf32>
    %756 = vector.extract_strided_slice %727 {offsets = [0, 2], sizes = [2, 290], strides = [1, 1]} : vector<2x324xf32> to vector<2x290xf32>
    %cst_199 = arith.constant 0.000000e+00 : f32
    %757 = vector.broadcast %cst_199 : f32 to vector<2x290xf32>
    %758 = arith.select %326, %756, %757 : vector<2x290xi1>, vector<2x290xf32>
    %759 = vector.broadcast %29 : f32 to vector<2x290xf32>
    %760 = arith.mulf %758, %759 : vector<2x290xf32>
    %761 = arith.addf %746, %760 : vector<2x290xf32>
    %762 = vector.broadcast %65 : f32 to vector<2x290xf32>
    %763 = arith.mulf %758, %762 : vector<2x290xf32>
    %764 = arith.addf %749, %763 : vector<2x290xf32>
    %765 = vector.broadcast %101 : f32 to vector<2x290xf32>
    %766 = arith.mulf %758, %765 : vector<2x290xf32>
    %767 = arith.addf %752, %766 : vector<2x290xf32>
    %768 = vector.broadcast %137 : f32 to vector<2x290xf32>
    %769 = arith.mulf %758, %768 : vector<2x290xf32>
    %770 = arith.addf %755, %769 : vector<2x290xf32>
    %771 = vector.extract_strided_slice %727 {offsets = [0, 16], sizes = [2, 290], strides = [1, 1]} : vector<2x324xf32> to vector<2x290xf32>
    %cst_200 = arith.constant 0.000000e+00 : f32
    %772 = vector.broadcast %cst_200 : f32 to vector<2x290xf32>
    %773 = arith.select %328, %771, %772 : vector<2x290xi1>, vector<2x290xf32>
    %774 = vector.broadcast %30 : f32 to vector<2x290xf32>
    %775 = arith.mulf %773, %774 : vector<2x290xf32>
    %776 = arith.addf %761, %775 : vector<2x290xf32>
    %777 = vector.broadcast %66 : f32 to vector<2x290xf32>
    %778 = arith.mulf %773, %777 : vector<2x290xf32>
    %779 = arith.addf %764, %778 : vector<2x290xf32>
    %780 = vector.broadcast %102 : f32 to vector<2x290xf32>
    %781 = arith.mulf %773, %780 : vector<2x290xf32>
    %782 = arith.addf %767, %781 : vector<2x290xf32>
    %783 = vector.broadcast %138 : f32 to vector<2x290xf32>
    %784 = arith.mulf %773, %783 : vector<2x290xf32>
    %785 = arith.addf %770, %784 : vector<2x290xf32>
    %786 = vector.extract_strided_slice %727 {offsets = [0, 17], sizes = [2, 290], strides = [1, 1]} : vector<2x324xf32> to vector<2x290xf32>
    %787 = vector.broadcast %31 : f32 to vector<2x290xf32>
    %788 = arith.mulf %786, %787 : vector<2x290xf32>
    %789 = arith.addf %776, %788 : vector<2x290xf32>
    %790 = vector.broadcast %67 : f32 to vector<2x290xf32>
    %791 = arith.mulf %786, %790 : vector<2x290xf32>
    %792 = arith.addf %779, %791 : vector<2x290xf32>
    %793 = vector.broadcast %103 : f32 to vector<2x290xf32>
    %794 = arith.mulf %786, %793 : vector<2x290xf32>
    %795 = arith.addf %782, %794 : vector<2x290xf32>
    %796 = vector.broadcast %139 : f32 to vector<2x290xf32>
    %797 = arith.mulf %786, %796 : vector<2x290xf32>
    %798 = arith.addf %785, %797 : vector<2x290xf32>
    %799 = vector.extract_strided_slice %727 {offsets = [0, 18], sizes = [2, 290], strides = [1, 1]} : vector<2x324xf32> to vector<2x290xf32>
    %cst_201 = arith.constant 0.000000e+00 : f32
    %800 = vector.broadcast %cst_201 : f32 to vector<2x290xf32>
    %801 = arith.select %326, %799, %800 : vector<2x290xi1>, vector<2x290xf32>
    %802 = vector.broadcast %32 : f32 to vector<2x290xf32>
    %803 = arith.mulf %801, %802 : vector<2x290xf32>
    %804 = arith.addf %789, %803 : vector<2x290xf32>
    %805 = vector.broadcast %68 : f32 to vector<2x290xf32>
    %806 = arith.mulf %801, %805 : vector<2x290xf32>
    %807 = arith.addf %792, %806 : vector<2x290xf32>
    %808 = vector.broadcast %104 : f32 to vector<2x290xf32>
    %809 = arith.mulf %801, %808 : vector<2x290xf32>
    %810 = arith.addf %795, %809 : vector<2x290xf32>
    %811 = vector.broadcast %140 : f32 to vector<2x290xf32>
    %812 = arith.mulf %801, %811 : vector<2x290xf32>
    %813 = arith.addf %798, %812 : vector<2x290xf32>
    %814 = vector.extract_strided_slice %727 {offsets = [0, 32], sizes = [2, 290], strides = [1, 1]} : vector<2x324xf32> to vector<2x290xf32>
    %cst_202 = arith.constant 0.000000e+00 : f32
    %815 = vector.broadcast %cst_202 : f32 to vector<2x290xf32>
    %816 = arith.select %328, %814, %815 : vector<2x290xi1>, vector<2x290xf32>
    %817 = vector.broadcast %33 : f32 to vector<2x290xf32>
    %818 = arith.mulf %816, %817 : vector<2x290xf32>
    %819 = arith.addf %804, %818 : vector<2x290xf32>
    %820 = vector.broadcast %69 : f32 to vector<2x290xf32>
    %821 = arith.mulf %816, %820 : vector<2x290xf32>
    %822 = arith.addf %807, %821 : vector<2x290xf32>
    %823 = vector.broadcast %105 : f32 to vector<2x290xf32>
    %824 = arith.mulf %816, %823 : vector<2x290xf32>
    %825 = arith.addf %810, %824 : vector<2x290xf32>
    %826 = vector.broadcast %141 : f32 to vector<2x290xf32>
    %827 = arith.mulf %816, %826 : vector<2x290xf32>
    %828 = arith.addf %813, %827 : vector<2x290xf32>
    %829 = vector.extract_strided_slice %727 {offsets = [0, 33], sizes = [2, 290], strides = [1, 1]} : vector<2x324xf32> to vector<2x290xf32>
    %830 = vector.broadcast %34 : f32 to vector<2x290xf32>
    %831 = arith.mulf %829, %830 : vector<2x290xf32>
    %832 = arith.addf %819, %831 : vector<2x290xf32>
    %833 = vector.broadcast %70 : f32 to vector<2x290xf32>
    %834 = arith.mulf %829, %833 : vector<2x290xf32>
    %835 = arith.addf %822, %834 : vector<2x290xf32>
    %836 = vector.broadcast %106 : f32 to vector<2x290xf32>
    %837 = arith.mulf %829, %836 : vector<2x290xf32>
    %838 = arith.addf %825, %837 : vector<2x290xf32>
    %839 = vector.broadcast %142 : f32 to vector<2x290xf32>
    %840 = arith.mulf %829, %839 : vector<2x290xf32>
    %841 = arith.addf %828, %840 : vector<2x290xf32>
    %842 = vector.extract_strided_slice %727 {offsets = [0, 34], sizes = [2, 290], strides = [1, 1]} : vector<2x324xf32> to vector<2x290xf32>
    %cst_203 = arith.constant 0.000000e+00 : f32
    %843 = vector.broadcast %cst_203 : f32 to vector<2x290xf32>
    %844 = arith.select %326, %842, %843 : vector<2x290xi1>, vector<2x290xf32>
    %845 = vector.broadcast %35 : f32 to vector<2x290xf32>
    %846 = arith.mulf %844, %845 : vector<2x290xf32>
    %847 = arith.addf %832, %846 : vector<2x290xf32>
    %848 = vector.broadcast %71 : f32 to vector<2x290xf32>
    %849 = arith.mulf %844, %848 : vector<2x290xf32>
    %850 = arith.addf %835, %849 : vector<2x290xf32>
    %851 = vector.broadcast %107 : f32 to vector<2x290xf32>
    %852 = arith.mulf %844, %851 : vector<2x290xf32>
    %853 = arith.addf %838, %852 : vector<2x290xf32>
    %854 = vector.broadcast %143 : f32 to vector<2x290xf32>
    %855 = arith.mulf %844, %854 : vector<2x290xf32>
    %856 = arith.addf %841, %855 : vector<2x290xf32>
    %cst_204 = arith.constant 0.000000e+00 : f32
    %857 = vector.broadcast %cst_204 : f32 to vector<2x290xf32>
    %858 = arith.select %324, %847, %857 : vector<2x290xi1>, vector<2x290xf32>
    %859 = vector.shape_cast %858 : vector<2x290xf32> to vector<1x2x290xf32>
    %cst_205 = arith.constant dense<0.000000e+00> : vector<1xf32>
    %860 = vector.multi_reduction <add>, %859, %cst_205 [1, 2] : vector<1x2x290xf32> to vector<1xf32>
    %861 = vector.shape_cast %860 : vector<1xf32> to vector<1x1x1xf32>
    %862 = vector.extract %861[0, 0, 0] : f32 from vector<1x1x1xf32>
    %863 = arith.mulf %858, %858 : vector<2x290xf32>
    %864 = vector.shape_cast %863 : vector<2x290xf32> to vector<1x2x290xf32>
    %cst_206 = arith.constant dense<0.000000e+00> : vector<1xf32>
    %865 = vector.multi_reduction <add>, %864, %cst_206 [1, 2] : vector<1x2x290xf32> to vector<1xf32>
    %866 = vector.shape_cast %865 : vector<1xf32> to vector<1x1x1xf32>
    %867 = vector.extract %866[0, 0, 0] : f32 from vector<1x1x1xf32>
    %cst_207 = arith.constant 0.001953125 : f32
    %868 = arith.mulf %862, %cst_207 : f32
    %cst_208 = arith.constant 0.001953125 : f32
    %869 = arith.mulf %867, %cst_208 : f32
    %870 = arith.mulf %868, %868 : f32
    %871 = arith.subf %869, %870 : f32
    %cst_209 = arith.constant 8.000000e-01 : f32
    %872 = arith.addf %871, %cst_209 : f32
    %873 = math.rsqrt %872 : f32
    %874 = arith.mulf %296, %873 : f32
    %875 = vector.broadcast %868 : f32 to vector<2x290xf32>
    %876 = arith.subf %847, %875 : vector<2x290xf32>
    %877 = vector.broadcast %874 : f32 to vector<2x290xf32>
    %878 = arith.mulf %876, %877 : vector<2x290xf32>
    %879 = vector.broadcast %304 : f32 to vector<2x290xf32>
    %880 = arith.addf %878, %879 : vector<2x290xf32>
    %cst_210 = arith.constant 0.000000e+00 : f32
    %881 = vector.broadcast %cst_210 : f32 to vector<2x290xf32>
    %882 = arith.maximumf %880, %881 : vector<2x290xf32>
    %cst_211 = arith.constant 0.000000e+00 : f32
    %883 = vector.broadcast %cst_211 : f32 to vector<2x290xf32>
    %884 = arith.select %324, %882, %883 : vector<2x290xi1>, vector<2x290xf32>
    %cst_212 = arith.constant 0.000000e+00 : f32
    %885 = vector.broadcast %cst_212 : f32 to vector<2x290xf32>
    %886 = arith.select %324, %850, %885 : vector<2x290xi1>, vector<2x290xf32>
    %887 = vector.shape_cast %886 : vector<2x290xf32> to vector<1x2x290xf32>
    %cst_213 = arith.constant dense<0.000000e+00> : vector<1xf32>
    %888 = vector.multi_reduction <add>, %887, %cst_213 [1, 2] : vector<1x2x290xf32> to vector<1xf32>
    %889 = vector.shape_cast %888 : vector<1xf32> to vector<1x1x1xf32>
    %890 = vector.extract %889[0, 0, 0] : f32 from vector<1x1x1xf32>
    %891 = arith.mulf %886, %886 : vector<2x290xf32>
    %892 = vector.shape_cast %891 : vector<2x290xf32> to vector<1x2x290xf32>
    %cst_214 = arith.constant dense<0.000000e+00> : vector<1xf32>
    %893 = vector.multi_reduction <add>, %892, %cst_214 [1, 2] : vector<1x2x290xf32> to vector<1xf32>
    %894 = vector.shape_cast %893 : vector<1xf32> to vector<1x1x1xf32>
    %895 = vector.extract %894[0, 0, 0] : f32 from vector<1x1x1xf32>
    %cst_215 = arith.constant 0.001953125 : f32
    %896 = arith.mulf %890, %cst_215 : f32
    %cst_216 = arith.constant 0.001953125 : f32
    %897 = arith.mulf %895, %cst_216 : f32
    %898 = arith.mulf %896, %896 : f32
    %899 = arith.subf %897, %898 : f32
    %cst_217 = arith.constant 8.000000e-01 : f32
    %900 = arith.addf %899, %cst_217 : f32
    %901 = math.rsqrt %900 : f32
    %902 = arith.mulf %297, %901 : f32
    %903 = vector.broadcast %896 : f32 to vector<2x290xf32>
    %904 = arith.subf %850, %903 : vector<2x290xf32>
    %905 = vector.broadcast %902 : f32 to vector<2x290xf32>
    %906 = arith.mulf %904, %905 : vector<2x290xf32>
    %907 = vector.broadcast %305 : f32 to vector<2x290xf32>
    %908 = arith.addf %906, %907 : vector<2x290xf32>
    %cst_218 = arith.constant 0.000000e+00 : f32
    %909 = vector.broadcast %cst_218 : f32 to vector<2x290xf32>
    %910 = arith.maximumf %908, %909 : vector<2x290xf32>
    %cst_219 = arith.constant 0.000000e+00 : f32
    %911 = vector.broadcast %cst_219 : f32 to vector<2x290xf32>
    %912 = arith.select %324, %910, %911 : vector<2x290xi1>, vector<2x290xf32>
    %cst_220 = arith.constant 0.000000e+00 : f32
    %913 = vector.broadcast %cst_220 : f32 to vector<2x290xf32>
    %914 = arith.select %324, %853, %913 : vector<2x290xi1>, vector<2x290xf32>
    %915 = vector.shape_cast %914 : vector<2x290xf32> to vector<1x2x290xf32>
    %cst_221 = arith.constant dense<0.000000e+00> : vector<1xf32>
    %916 = vector.multi_reduction <add>, %915, %cst_221 [1, 2] : vector<1x2x290xf32> to vector<1xf32>
    %917 = vector.shape_cast %916 : vector<1xf32> to vector<1x1x1xf32>
    %918 = vector.extract %917[0, 0, 0] : f32 from vector<1x1x1xf32>
    %919 = arith.mulf %914, %914 : vector<2x290xf32>
    %920 = vector.shape_cast %919 : vector<2x290xf32> to vector<1x2x290xf32>
    %cst_222 = arith.constant dense<0.000000e+00> : vector<1xf32>
    %921 = vector.multi_reduction <add>, %920, %cst_222 [1, 2] : vector<1x2x290xf32> to vector<1xf32>
    %922 = vector.shape_cast %921 : vector<1xf32> to vector<1x1x1xf32>
    %923 = vector.extract %922[0, 0, 0] : f32 from vector<1x1x1xf32>
    %cst_223 = arith.constant 0.001953125 : f32
    %924 = arith.mulf %918, %cst_223 : f32
    %cst_224 = arith.constant 0.001953125 : f32
    %925 = arith.mulf %923, %cst_224 : f32
    %926 = arith.mulf %924, %924 : f32
    %927 = arith.subf %925, %926 : f32
    %cst_225 = arith.constant 8.000000e-01 : f32
    %928 = arith.addf %927, %cst_225 : f32
    %929 = math.rsqrt %928 : f32
    %930 = arith.mulf %298, %929 : f32
    %931 = vector.broadcast %924 : f32 to vector<2x290xf32>
    %932 = arith.subf %853, %931 : vector<2x290xf32>
    %933 = vector.broadcast %930 : f32 to vector<2x290xf32>
    %934 = arith.mulf %932, %933 : vector<2x290xf32>
    %935 = vector.broadcast %306 : f32 to vector<2x290xf32>
    %936 = arith.addf %934, %935 : vector<2x290xf32>
    %cst_226 = arith.constant 0.000000e+00 : f32
    %937 = vector.broadcast %cst_226 : f32 to vector<2x290xf32>
    %938 = arith.maximumf %936, %937 : vector<2x290xf32>
    %cst_227 = arith.constant 0.000000e+00 : f32
    %939 = vector.broadcast %cst_227 : f32 to vector<2x290xf32>
    %940 = arith.select %324, %938, %939 : vector<2x290xi1>, vector<2x290xf32>
    %cst_228 = arith.constant 0.000000e+00 : f32
    %941 = vector.broadcast %cst_228 : f32 to vector<2x290xf32>
    %942 = arith.select %324, %856, %941 : vector<2x290xi1>, vector<2x290xf32>
    %943 = vector.shape_cast %942 : vector<2x290xf32> to vector<1x2x290xf32>
    %cst_229 = arith.constant dense<0.000000e+00> : vector<1xf32>
    %944 = vector.multi_reduction <add>, %943, %cst_229 [1, 2] : vector<1x2x290xf32> to vector<1xf32>
    %945 = vector.shape_cast %944 : vector<1xf32> to vector<1x1x1xf32>
    %946 = vector.extract %945[0, 0, 0] : f32 from vector<1x1x1xf32>
    %947 = arith.mulf %942, %942 : vector<2x290xf32>
    %948 = vector.shape_cast %947 : vector<2x290xf32> to vector<1x2x290xf32>
    %cst_230 = arith.constant dense<0.000000e+00> : vector<1xf32>
    %949 = vector.multi_reduction <add>, %948, %cst_230 [1, 2] : vector<1x2x290xf32> to vector<1xf32>
    %950 = vector.shape_cast %949 : vector<1xf32> to vector<1x1x1xf32>
    %951 = vector.extract %950[0, 0, 0] : f32 from vector<1x1x1xf32>
    %cst_231 = arith.constant 0.001953125 : f32
    %952 = arith.mulf %946, %cst_231 : f32
    %cst_232 = arith.constant 0.001953125 : f32
    %953 = arith.mulf %951, %cst_232 : f32
    %954 = arith.mulf %952, %952 : f32
    %955 = arith.subf %953, %954 : f32
    %cst_233 = arith.constant 8.000000e-01 : f32
    %956 = arith.addf %955, %cst_233 : f32
    %957 = math.rsqrt %956 : f32
    %958 = arith.mulf %299, %957 : f32
    %959 = vector.broadcast %952 : f32 to vector<2x290xf32>
    %960 = arith.subf %856, %959 : vector<2x290xf32>
    %961 = vector.broadcast %958 : f32 to vector<2x290xf32>
    %962 = arith.mulf %960, %961 : vector<2x290xf32>
    %963 = vector.broadcast %307 : f32 to vector<2x290xf32>
    %964 = arith.addf %962, %963 : vector<2x290xf32>
    %cst_234 = arith.constant 0.000000e+00 : f32
    %965 = vector.broadcast %cst_234 : f32 to vector<2x290xf32>
    %966 = arith.maximumf %964, %965 : vector<2x290xf32>
    %cst_235 = arith.constant 0.000000e+00 : f32
    %967 = vector.broadcast %cst_235 : f32 to vector<2x290xf32>
    %968 = arith.select %324, %966, %967 : vector<2x290xi1>, vector<2x290xf32>
    %969 = vector.broadcast %292 : f32 to vector<2x256xf32>
    %970 = vector.broadcast %293 : f32 to vector<2x256xf32>
    %971 = vector.broadcast %294 : f32 to vector<2x256xf32>
    %972 = vector.broadcast %295 : f32 to vector<2x256xf32>
    %973 = vector.extract_strided_slice %884 {offsets = [0, 0], sizes = [2, 256], strides = [1, 1]} : vector<2x290xf32> to vector<2x256xf32>
    %cst_236 = arith.constant 0.000000e+00 : f32
    %974 = vector.broadcast %cst_236 : f32 to vector<2x256xf32>
    %975 = arith.select %332, %973, %974 : vector<2x256xi1>, vector<2x256xf32>
    %976 = vector.broadcast %144 : f32 to vector<2x256xf32>
    %977 = arith.mulf %975, %976 : vector<2x256xf32>
    %978 = arith.addf %969, %977 : vector<2x256xf32>
    %979 = vector.broadcast %180 : f32 to vector<2x256xf32>
    %980 = arith.mulf %975, %979 : vector<2x256xf32>
    %981 = arith.addf %970, %980 : vector<2x256xf32>
    %982 = vector.broadcast %216 : f32 to vector<2x256xf32>
    %983 = arith.mulf %975, %982 : vector<2x256xf32>
    %984 = arith.addf %971, %983 : vector<2x256xf32>
    %985 = vector.broadcast %252 : f32 to vector<2x256xf32>
    %986 = arith.mulf %975, %985 : vector<2x256xf32>
    %987 = arith.addf %972, %986 : vector<2x256xf32>
    %988 = vector.extract_strided_slice %884 {offsets = [0, 1], sizes = [2, 256], strides = [1, 1]} : vector<2x290xf32> to vector<2x256xf32>
    %989 = vector.broadcast %145 : f32 to vector<2x256xf32>
    %990 = arith.mulf %988, %989 : vector<2x256xf32>
    %991 = arith.addf %978, %990 : vector<2x256xf32>
    %992 = vector.broadcast %181 : f32 to vector<2x256xf32>
    %993 = arith.mulf %988, %992 : vector<2x256xf32>
    %994 = arith.addf %981, %993 : vector<2x256xf32>
    %995 = vector.broadcast %217 : f32 to vector<2x256xf32>
    %996 = arith.mulf %988, %995 : vector<2x256xf32>
    %997 = arith.addf %984, %996 : vector<2x256xf32>
    %998 = vector.broadcast %253 : f32 to vector<2x256xf32>
    %999 = arith.mulf %988, %998 : vector<2x256xf32>
    %1000 = arith.addf %987, %999 : vector<2x256xf32>
    %1001 = vector.extract_strided_slice %884 {offsets = [0, 2], sizes = [2, 256], strides = [1, 1]} : vector<2x290xf32> to vector<2x256xf32>
    %cst_237 = arith.constant 0.000000e+00 : f32
    %1002 = vector.broadcast %cst_237 : f32 to vector<2x256xf32>
    %1003 = arith.select %330, %1001, %1002 : vector<2x256xi1>, vector<2x256xf32>
    %1004 = vector.broadcast %146 : f32 to vector<2x256xf32>
    %1005 = arith.mulf %1003, %1004 : vector<2x256xf32>
    %1006 = arith.addf %991, %1005 : vector<2x256xf32>
    %1007 = vector.broadcast %182 : f32 to vector<2x256xf32>
    %1008 = arith.mulf %1003, %1007 : vector<2x256xf32>
    %1009 = arith.addf %994, %1008 : vector<2x256xf32>
    %1010 = vector.broadcast %218 : f32 to vector<2x256xf32>
    %1011 = arith.mulf %1003, %1010 : vector<2x256xf32>
    %1012 = arith.addf %997, %1011 : vector<2x256xf32>
    %1013 = vector.broadcast %254 : f32 to vector<2x256xf32>
    %1014 = arith.mulf %1003, %1013 : vector<2x256xf32>
    %1015 = arith.addf %1000, %1014 : vector<2x256xf32>
    %1016 = vector.extract_strided_slice %884 {offsets = [0, 16], sizes = [2, 256], strides = [1, 1]} : vector<2x290xf32> to vector<2x256xf32>
    %cst_238 = arith.constant 0.000000e+00 : f32
    %1017 = vector.broadcast %cst_238 : f32 to vector<2x256xf32>
    %1018 = arith.select %332, %1016, %1017 : vector<2x256xi1>, vector<2x256xf32>
    %1019 = vector.broadcast %147 : f32 to vector<2x256xf32>
    %1020 = arith.mulf %1018, %1019 : vector<2x256xf32>
    %1021 = arith.addf %1006, %1020 : vector<2x256xf32>
    %1022 = vector.broadcast %183 : f32 to vector<2x256xf32>
    %1023 = arith.mulf %1018, %1022 : vector<2x256xf32>
    %1024 = arith.addf %1009, %1023 : vector<2x256xf32>
    %1025 = vector.broadcast %219 : f32 to vector<2x256xf32>
    %1026 = arith.mulf %1018, %1025 : vector<2x256xf32>
    %1027 = arith.addf %1012, %1026 : vector<2x256xf32>
    %1028 = vector.broadcast %255 : f32 to vector<2x256xf32>
    %1029 = arith.mulf %1018, %1028 : vector<2x256xf32>
    %1030 = arith.addf %1015, %1029 : vector<2x256xf32>
    %1031 = vector.extract_strided_slice %884 {offsets = [0, 17], sizes = [2, 256], strides = [1, 1]} : vector<2x290xf32> to vector<2x256xf32>
    %1032 = vector.broadcast %148 : f32 to vector<2x256xf32>
    %1033 = arith.mulf %1031, %1032 : vector<2x256xf32>
    %1034 = arith.addf %1021, %1033 : vector<2x256xf32>
    %1035 = vector.broadcast %184 : f32 to vector<2x256xf32>
    %1036 = arith.mulf %1031, %1035 : vector<2x256xf32>
    %1037 = arith.addf %1024, %1036 : vector<2x256xf32>
    %1038 = vector.broadcast %220 : f32 to vector<2x256xf32>
    %1039 = arith.mulf %1031, %1038 : vector<2x256xf32>
    %1040 = arith.addf %1027, %1039 : vector<2x256xf32>
    %1041 = vector.broadcast %256 : f32 to vector<2x256xf32>
    %1042 = arith.mulf %1031, %1041 : vector<2x256xf32>
    %1043 = arith.addf %1030, %1042 : vector<2x256xf32>
    %1044 = vector.extract_strided_slice %884 {offsets = [0, 18], sizes = [2, 256], strides = [1, 1]} : vector<2x290xf32> to vector<2x256xf32>
    %cst_239 = arith.constant 0.000000e+00 : f32
    %1045 = vector.broadcast %cst_239 : f32 to vector<2x256xf32>
    %1046 = arith.select %330, %1044, %1045 : vector<2x256xi1>, vector<2x256xf32>
    %1047 = vector.broadcast %149 : f32 to vector<2x256xf32>
    %1048 = arith.mulf %1046, %1047 : vector<2x256xf32>
    %1049 = arith.addf %1034, %1048 : vector<2x256xf32>
    %1050 = vector.broadcast %185 : f32 to vector<2x256xf32>
    %1051 = arith.mulf %1046, %1050 : vector<2x256xf32>
    %1052 = arith.addf %1037, %1051 : vector<2x256xf32>
    %1053 = vector.broadcast %221 : f32 to vector<2x256xf32>
    %1054 = arith.mulf %1046, %1053 : vector<2x256xf32>
    %1055 = arith.addf %1040, %1054 : vector<2x256xf32>
    %1056 = vector.broadcast %257 : f32 to vector<2x256xf32>
    %1057 = arith.mulf %1046, %1056 : vector<2x256xf32>
    %1058 = arith.addf %1043, %1057 : vector<2x256xf32>
    %1059 = vector.extract_strided_slice %884 {offsets = [0, 32], sizes = [2, 256], strides = [1, 1]} : vector<2x290xf32> to vector<2x256xf32>
    %cst_240 = arith.constant 0.000000e+00 : f32
    %1060 = vector.broadcast %cst_240 : f32 to vector<2x256xf32>
    %1061 = arith.select %332, %1059, %1060 : vector<2x256xi1>, vector<2x256xf32>
    %1062 = vector.broadcast %150 : f32 to vector<2x256xf32>
    %1063 = arith.mulf %1061, %1062 : vector<2x256xf32>
    %1064 = arith.addf %1049, %1063 : vector<2x256xf32>
    %1065 = vector.broadcast %186 : f32 to vector<2x256xf32>
    %1066 = arith.mulf %1061, %1065 : vector<2x256xf32>
    %1067 = arith.addf %1052, %1066 : vector<2x256xf32>
    %1068 = vector.broadcast %222 : f32 to vector<2x256xf32>
    %1069 = arith.mulf %1061, %1068 : vector<2x256xf32>
    %1070 = arith.addf %1055, %1069 : vector<2x256xf32>
    %1071 = vector.broadcast %258 : f32 to vector<2x256xf32>
    %1072 = arith.mulf %1061, %1071 : vector<2x256xf32>
    %1073 = arith.addf %1058, %1072 : vector<2x256xf32>
    %1074 = vector.extract_strided_slice %884 {offsets = [0, 33], sizes = [2, 256], strides = [1, 1]} : vector<2x290xf32> to vector<2x256xf32>
    %1075 = vector.broadcast %151 : f32 to vector<2x256xf32>
    %1076 = arith.mulf %1074, %1075 : vector<2x256xf32>
    %1077 = arith.addf %1064, %1076 : vector<2x256xf32>
    %1078 = vector.broadcast %187 : f32 to vector<2x256xf32>
    %1079 = arith.mulf %1074, %1078 : vector<2x256xf32>
    %1080 = arith.addf %1067, %1079 : vector<2x256xf32>
    %1081 = vector.broadcast %223 : f32 to vector<2x256xf32>
    %1082 = arith.mulf %1074, %1081 : vector<2x256xf32>
    %1083 = arith.addf %1070, %1082 : vector<2x256xf32>
    %1084 = vector.broadcast %259 : f32 to vector<2x256xf32>
    %1085 = arith.mulf %1074, %1084 : vector<2x256xf32>
    %1086 = arith.addf %1073, %1085 : vector<2x256xf32>
    %1087 = vector.extract_strided_slice %884 {offsets = [0, 34], sizes = [2, 256], strides = [1, 1]} : vector<2x290xf32> to vector<2x256xf32>
    %cst_241 = arith.constant 0.000000e+00 : f32
    %1088 = vector.broadcast %cst_241 : f32 to vector<2x256xf32>
    %1089 = arith.select %330, %1087, %1088 : vector<2x256xi1>, vector<2x256xf32>
    %1090 = vector.broadcast %152 : f32 to vector<2x256xf32>
    %1091 = arith.mulf %1089, %1090 : vector<2x256xf32>
    %1092 = arith.addf %1077, %1091 : vector<2x256xf32>
    %1093 = vector.broadcast %188 : f32 to vector<2x256xf32>
    %1094 = arith.mulf %1089, %1093 : vector<2x256xf32>
    %1095 = arith.addf %1080, %1094 : vector<2x256xf32>
    %1096 = vector.broadcast %224 : f32 to vector<2x256xf32>
    %1097 = arith.mulf %1089, %1096 : vector<2x256xf32>
    %1098 = arith.addf %1083, %1097 : vector<2x256xf32>
    %1099 = vector.broadcast %260 : f32 to vector<2x256xf32>
    %1100 = arith.mulf %1089, %1099 : vector<2x256xf32>
    %1101 = arith.addf %1086, %1100 : vector<2x256xf32>
    %1102 = vector.extract_strided_slice %912 {offsets = [0, 0], sizes = [2, 256], strides = [1, 1]} : vector<2x290xf32> to vector<2x256xf32>
    %cst_242 = arith.constant 0.000000e+00 : f32
    %1103 = vector.broadcast %cst_242 : f32 to vector<2x256xf32>
    %1104 = arith.select %332, %1102, %1103 : vector<2x256xi1>, vector<2x256xf32>
    %1105 = vector.broadcast %153 : f32 to vector<2x256xf32>
    %1106 = arith.mulf %1104, %1105 : vector<2x256xf32>
    %1107 = arith.addf %1092, %1106 : vector<2x256xf32>
    %1108 = vector.broadcast %189 : f32 to vector<2x256xf32>
    %1109 = arith.mulf %1104, %1108 : vector<2x256xf32>
    %1110 = arith.addf %1095, %1109 : vector<2x256xf32>
    %1111 = vector.broadcast %225 : f32 to vector<2x256xf32>
    %1112 = arith.mulf %1104, %1111 : vector<2x256xf32>
    %1113 = arith.addf %1098, %1112 : vector<2x256xf32>
    %1114 = vector.broadcast %261 : f32 to vector<2x256xf32>
    %1115 = arith.mulf %1104, %1114 : vector<2x256xf32>
    %1116 = arith.addf %1101, %1115 : vector<2x256xf32>
    %1117 = vector.extract_strided_slice %912 {offsets = [0, 1], sizes = [2, 256], strides = [1, 1]} : vector<2x290xf32> to vector<2x256xf32>
    %1118 = vector.broadcast %154 : f32 to vector<2x256xf32>
    %1119 = arith.mulf %1117, %1118 : vector<2x256xf32>
    %1120 = arith.addf %1107, %1119 : vector<2x256xf32>
    %1121 = vector.broadcast %190 : f32 to vector<2x256xf32>
    %1122 = arith.mulf %1117, %1121 : vector<2x256xf32>
    %1123 = arith.addf %1110, %1122 : vector<2x256xf32>
    %1124 = vector.broadcast %226 : f32 to vector<2x256xf32>
    %1125 = arith.mulf %1117, %1124 : vector<2x256xf32>
    %1126 = arith.addf %1113, %1125 : vector<2x256xf32>
    %1127 = vector.broadcast %262 : f32 to vector<2x256xf32>
    %1128 = arith.mulf %1117, %1127 : vector<2x256xf32>
    %1129 = arith.addf %1116, %1128 : vector<2x256xf32>
    %1130 = vector.extract_strided_slice %912 {offsets = [0, 2], sizes = [2, 256], strides = [1, 1]} : vector<2x290xf32> to vector<2x256xf32>
    %cst_243 = arith.constant 0.000000e+00 : f32
    %1131 = vector.broadcast %cst_243 : f32 to vector<2x256xf32>
    %1132 = arith.select %330, %1130, %1131 : vector<2x256xi1>, vector<2x256xf32>
    %1133 = vector.broadcast %155 : f32 to vector<2x256xf32>
    %1134 = arith.mulf %1132, %1133 : vector<2x256xf32>
    %1135 = arith.addf %1120, %1134 : vector<2x256xf32>
    %1136 = vector.broadcast %191 : f32 to vector<2x256xf32>
    %1137 = arith.mulf %1132, %1136 : vector<2x256xf32>
    %1138 = arith.addf %1123, %1137 : vector<2x256xf32>
    %1139 = vector.broadcast %227 : f32 to vector<2x256xf32>
    %1140 = arith.mulf %1132, %1139 : vector<2x256xf32>
    %1141 = arith.addf %1126, %1140 : vector<2x256xf32>
    %1142 = vector.broadcast %263 : f32 to vector<2x256xf32>
    %1143 = arith.mulf %1132, %1142 : vector<2x256xf32>
    %1144 = arith.addf %1129, %1143 : vector<2x256xf32>
    %1145 = vector.extract_strided_slice %912 {offsets = [0, 16], sizes = [2, 256], strides = [1, 1]} : vector<2x290xf32> to vector<2x256xf32>
    %cst_244 = arith.constant 0.000000e+00 : f32
    %1146 = vector.broadcast %cst_244 : f32 to vector<2x256xf32>
    %1147 = arith.select %332, %1145, %1146 : vector<2x256xi1>, vector<2x256xf32>
    %1148 = vector.broadcast %156 : f32 to vector<2x256xf32>
    %1149 = arith.mulf %1147, %1148 : vector<2x256xf32>
    %1150 = arith.addf %1135, %1149 : vector<2x256xf32>
    %1151 = vector.broadcast %192 : f32 to vector<2x256xf32>
    %1152 = arith.mulf %1147, %1151 : vector<2x256xf32>
    %1153 = arith.addf %1138, %1152 : vector<2x256xf32>
    %1154 = vector.broadcast %228 : f32 to vector<2x256xf32>
    %1155 = arith.mulf %1147, %1154 : vector<2x256xf32>
    %1156 = arith.addf %1141, %1155 : vector<2x256xf32>
    %1157 = vector.broadcast %264 : f32 to vector<2x256xf32>
    %1158 = arith.mulf %1147, %1157 : vector<2x256xf32>
    %1159 = arith.addf %1144, %1158 : vector<2x256xf32>
    %1160 = vector.extract_strided_slice %912 {offsets = [0, 17], sizes = [2, 256], strides = [1, 1]} : vector<2x290xf32> to vector<2x256xf32>
    %1161 = vector.broadcast %157 : f32 to vector<2x256xf32>
    %1162 = arith.mulf %1160, %1161 : vector<2x256xf32>
    %1163 = arith.addf %1150, %1162 : vector<2x256xf32>
    %1164 = vector.broadcast %193 : f32 to vector<2x256xf32>
    %1165 = arith.mulf %1160, %1164 : vector<2x256xf32>
    %1166 = arith.addf %1153, %1165 : vector<2x256xf32>
    %1167 = vector.broadcast %229 : f32 to vector<2x256xf32>
    %1168 = arith.mulf %1160, %1167 : vector<2x256xf32>
    %1169 = arith.addf %1156, %1168 : vector<2x256xf32>
    %1170 = vector.broadcast %265 : f32 to vector<2x256xf32>
    %1171 = arith.mulf %1160, %1170 : vector<2x256xf32>
    %1172 = arith.addf %1159, %1171 : vector<2x256xf32>
    %1173 = vector.extract_strided_slice %912 {offsets = [0, 18], sizes = [2, 256], strides = [1, 1]} : vector<2x290xf32> to vector<2x256xf32>
    %cst_245 = arith.constant 0.000000e+00 : f32
    %1174 = vector.broadcast %cst_245 : f32 to vector<2x256xf32>
    %1175 = arith.select %330, %1173, %1174 : vector<2x256xi1>, vector<2x256xf32>
    %1176 = vector.broadcast %158 : f32 to vector<2x256xf32>
    %1177 = arith.mulf %1175, %1176 : vector<2x256xf32>
    %1178 = arith.addf %1163, %1177 : vector<2x256xf32>
    %1179 = vector.broadcast %194 : f32 to vector<2x256xf32>
    %1180 = arith.mulf %1175, %1179 : vector<2x256xf32>
    %1181 = arith.addf %1166, %1180 : vector<2x256xf32>
    %1182 = vector.broadcast %230 : f32 to vector<2x256xf32>
    %1183 = arith.mulf %1175, %1182 : vector<2x256xf32>
    %1184 = arith.addf %1169, %1183 : vector<2x256xf32>
    %1185 = vector.broadcast %266 : f32 to vector<2x256xf32>
    %1186 = arith.mulf %1175, %1185 : vector<2x256xf32>
    %1187 = arith.addf %1172, %1186 : vector<2x256xf32>
    %1188 = vector.extract_strided_slice %912 {offsets = [0, 32], sizes = [2, 256], strides = [1, 1]} : vector<2x290xf32> to vector<2x256xf32>
    %cst_246 = arith.constant 0.000000e+00 : f32
    %1189 = vector.broadcast %cst_246 : f32 to vector<2x256xf32>
    %1190 = arith.select %332, %1188, %1189 : vector<2x256xi1>, vector<2x256xf32>
    %1191 = vector.broadcast %159 : f32 to vector<2x256xf32>
    %1192 = arith.mulf %1190, %1191 : vector<2x256xf32>
    %1193 = arith.addf %1178, %1192 : vector<2x256xf32>
    %1194 = vector.broadcast %195 : f32 to vector<2x256xf32>
    %1195 = arith.mulf %1190, %1194 : vector<2x256xf32>
    %1196 = arith.addf %1181, %1195 : vector<2x256xf32>
    %1197 = vector.broadcast %231 : f32 to vector<2x256xf32>
    %1198 = arith.mulf %1190, %1197 : vector<2x256xf32>
    %1199 = arith.addf %1184, %1198 : vector<2x256xf32>
    %1200 = vector.broadcast %267 : f32 to vector<2x256xf32>
    %1201 = arith.mulf %1190, %1200 : vector<2x256xf32>
    %1202 = arith.addf %1187, %1201 : vector<2x256xf32>
    %1203 = vector.extract_strided_slice %912 {offsets = [0, 33], sizes = [2, 256], strides = [1, 1]} : vector<2x290xf32> to vector<2x256xf32>
    %1204 = vector.broadcast %160 : f32 to vector<2x256xf32>
    %1205 = arith.mulf %1203, %1204 : vector<2x256xf32>
    %1206 = arith.addf %1193, %1205 : vector<2x256xf32>
    %1207 = vector.broadcast %196 : f32 to vector<2x256xf32>
    %1208 = arith.mulf %1203, %1207 : vector<2x256xf32>
    %1209 = arith.addf %1196, %1208 : vector<2x256xf32>
    %1210 = vector.broadcast %232 : f32 to vector<2x256xf32>
    %1211 = arith.mulf %1203, %1210 : vector<2x256xf32>
    %1212 = arith.addf %1199, %1211 : vector<2x256xf32>
    %1213 = vector.broadcast %268 : f32 to vector<2x256xf32>
    %1214 = arith.mulf %1203, %1213 : vector<2x256xf32>
    %1215 = arith.addf %1202, %1214 : vector<2x256xf32>
    %1216 = vector.extract_strided_slice %912 {offsets = [0, 34], sizes = [2, 256], strides = [1, 1]} : vector<2x290xf32> to vector<2x256xf32>
    %cst_247 = arith.constant 0.000000e+00 : f32
    %1217 = vector.broadcast %cst_247 : f32 to vector<2x256xf32>
    %1218 = arith.select %330, %1216, %1217 : vector<2x256xi1>, vector<2x256xf32>
    %1219 = vector.broadcast %161 : f32 to vector<2x256xf32>
    %1220 = arith.mulf %1218, %1219 : vector<2x256xf32>
    %1221 = arith.addf %1206, %1220 : vector<2x256xf32>
    %1222 = vector.broadcast %197 : f32 to vector<2x256xf32>
    %1223 = arith.mulf %1218, %1222 : vector<2x256xf32>
    %1224 = arith.addf %1209, %1223 : vector<2x256xf32>
    %1225 = vector.broadcast %233 : f32 to vector<2x256xf32>
    %1226 = arith.mulf %1218, %1225 : vector<2x256xf32>
    %1227 = arith.addf %1212, %1226 : vector<2x256xf32>
    %1228 = vector.broadcast %269 : f32 to vector<2x256xf32>
    %1229 = arith.mulf %1218, %1228 : vector<2x256xf32>
    %1230 = arith.addf %1215, %1229 : vector<2x256xf32>
    %1231 = vector.extract_strided_slice %940 {offsets = [0, 0], sizes = [2, 256], strides = [1, 1]} : vector<2x290xf32> to vector<2x256xf32>
    %cst_248 = arith.constant 0.000000e+00 : f32
    %1232 = vector.broadcast %cst_248 : f32 to vector<2x256xf32>
    %1233 = arith.select %332, %1231, %1232 : vector<2x256xi1>, vector<2x256xf32>
    %1234 = vector.broadcast %162 : f32 to vector<2x256xf32>
    %1235 = arith.mulf %1233, %1234 : vector<2x256xf32>
    %1236 = arith.addf %1221, %1235 : vector<2x256xf32>
    %1237 = vector.broadcast %198 : f32 to vector<2x256xf32>
    %1238 = arith.mulf %1233, %1237 : vector<2x256xf32>
    %1239 = arith.addf %1224, %1238 : vector<2x256xf32>
    %1240 = vector.broadcast %234 : f32 to vector<2x256xf32>
    %1241 = arith.mulf %1233, %1240 : vector<2x256xf32>
    %1242 = arith.addf %1227, %1241 : vector<2x256xf32>
    %1243 = vector.broadcast %270 : f32 to vector<2x256xf32>
    %1244 = arith.mulf %1233, %1243 : vector<2x256xf32>
    %1245 = arith.addf %1230, %1244 : vector<2x256xf32>
    %1246 = vector.extract_strided_slice %940 {offsets = [0, 1], sizes = [2, 256], strides = [1, 1]} : vector<2x290xf32> to vector<2x256xf32>
    %1247 = vector.broadcast %163 : f32 to vector<2x256xf32>
    %1248 = arith.mulf %1246, %1247 : vector<2x256xf32>
    %1249 = arith.addf %1236, %1248 : vector<2x256xf32>
    %1250 = vector.broadcast %199 : f32 to vector<2x256xf32>
    %1251 = arith.mulf %1246, %1250 : vector<2x256xf32>
    %1252 = arith.addf %1239, %1251 : vector<2x256xf32>
    %1253 = vector.broadcast %235 : f32 to vector<2x256xf32>
    %1254 = arith.mulf %1246, %1253 : vector<2x256xf32>
    %1255 = arith.addf %1242, %1254 : vector<2x256xf32>
    %1256 = vector.broadcast %271 : f32 to vector<2x256xf32>
    %1257 = arith.mulf %1246, %1256 : vector<2x256xf32>
    %1258 = arith.addf %1245, %1257 : vector<2x256xf32>
    %1259 = vector.extract_strided_slice %940 {offsets = [0, 2], sizes = [2, 256], strides = [1, 1]} : vector<2x290xf32> to vector<2x256xf32>
    %cst_249 = arith.constant 0.000000e+00 : f32
    %1260 = vector.broadcast %cst_249 : f32 to vector<2x256xf32>
    %1261 = arith.select %330, %1259, %1260 : vector<2x256xi1>, vector<2x256xf32>
    %1262 = vector.broadcast %164 : f32 to vector<2x256xf32>
    %1263 = arith.mulf %1261, %1262 : vector<2x256xf32>
    %1264 = arith.addf %1249, %1263 : vector<2x256xf32>
    %1265 = vector.broadcast %200 : f32 to vector<2x256xf32>
    %1266 = arith.mulf %1261, %1265 : vector<2x256xf32>
    %1267 = arith.addf %1252, %1266 : vector<2x256xf32>
    %1268 = vector.broadcast %236 : f32 to vector<2x256xf32>
    %1269 = arith.mulf %1261, %1268 : vector<2x256xf32>
    %1270 = arith.addf %1255, %1269 : vector<2x256xf32>
    %1271 = vector.broadcast %272 : f32 to vector<2x256xf32>
    %1272 = arith.mulf %1261, %1271 : vector<2x256xf32>
    %1273 = arith.addf %1258, %1272 : vector<2x256xf32>
    %1274 = vector.extract_strided_slice %940 {offsets = [0, 16], sizes = [2, 256], strides = [1, 1]} : vector<2x290xf32> to vector<2x256xf32>
    %cst_250 = arith.constant 0.000000e+00 : f32
    %1275 = vector.broadcast %cst_250 : f32 to vector<2x256xf32>
    %1276 = arith.select %332, %1274, %1275 : vector<2x256xi1>, vector<2x256xf32>
    %1277 = vector.broadcast %165 : f32 to vector<2x256xf32>
    %1278 = arith.mulf %1276, %1277 : vector<2x256xf32>
    %1279 = arith.addf %1264, %1278 : vector<2x256xf32>
    %1280 = vector.broadcast %201 : f32 to vector<2x256xf32>
    %1281 = arith.mulf %1276, %1280 : vector<2x256xf32>
    %1282 = arith.addf %1267, %1281 : vector<2x256xf32>
    %1283 = vector.broadcast %237 : f32 to vector<2x256xf32>
    %1284 = arith.mulf %1276, %1283 : vector<2x256xf32>
    %1285 = arith.addf %1270, %1284 : vector<2x256xf32>
    %1286 = vector.broadcast %273 : f32 to vector<2x256xf32>
    %1287 = arith.mulf %1276, %1286 : vector<2x256xf32>
    %1288 = arith.addf %1273, %1287 : vector<2x256xf32>
    %1289 = vector.extract_strided_slice %940 {offsets = [0, 17], sizes = [2, 256], strides = [1, 1]} : vector<2x290xf32> to vector<2x256xf32>
    %1290 = vector.broadcast %166 : f32 to vector<2x256xf32>
    %1291 = arith.mulf %1289, %1290 : vector<2x256xf32>
    %1292 = arith.addf %1279, %1291 : vector<2x256xf32>
    %1293 = vector.broadcast %202 : f32 to vector<2x256xf32>
    %1294 = arith.mulf %1289, %1293 : vector<2x256xf32>
    %1295 = arith.addf %1282, %1294 : vector<2x256xf32>
    %1296 = vector.broadcast %238 : f32 to vector<2x256xf32>
    %1297 = arith.mulf %1289, %1296 : vector<2x256xf32>
    %1298 = arith.addf %1285, %1297 : vector<2x256xf32>
    %1299 = vector.broadcast %274 : f32 to vector<2x256xf32>
    %1300 = arith.mulf %1289, %1299 : vector<2x256xf32>
    %1301 = arith.addf %1288, %1300 : vector<2x256xf32>
    %1302 = vector.extract_strided_slice %940 {offsets = [0, 18], sizes = [2, 256], strides = [1, 1]} : vector<2x290xf32> to vector<2x256xf32>
    %cst_251 = arith.constant 0.000000e+00 : f32
    %1303 = vector.broadcast %cst_251 : f32 to vector<2x256xf32>
    %1304 = arith.select %330, %1302, %1303 : vector<2x256xi1>, vector<2x256xf32>
    %1305 = vector.broadcast %167 : f32 to vector<2x256xf32>
    %1306 = arith.mulf %1304, %1305 : vector<2x256xf32>
    %1307 = arith.addf %1292, %1306 : vector<2x256xf32>
    %1308 = vector.broadcast %203 : f32 to vector<2x256xf32>
    %1309 = arith.mulf %1304, %1308 : vector<2x256xf32>
    %1310 = arith.addf %1295, %1309 : vector<2x256xf32>
    %1311 = vector.broadcast %239 : f32 to vector<2x256xf32>
    %1312 = arith.mulf %1304, %1311 : vector<2x256xf32>
    %1313 = arith.addf %1298, %1312 : vector<2x256xf32>
    %1314 = vector.broadcast %275 : f32 to vector<2x256xf32>
    %1315 = arith.mulf %1304, %1314 : vector<2x256xf32>
    %1316 = arith.addf %1301, %1315 : vector<2x256xf32>
    %1317 = vector.extract_strided_slice %940 {offsets = [0, 32], sizes = [2, 256], strides = [1, 1]} : vector<2x290xf32> to vector<2x256xf32>
    %cst_252 = arith.constant 0.000000e+00 : f32
    %1318 = vector.broadcast %cst_252 : f32 to vector<2x256xf32>
    %1319 = arith.select %332, %1317, %1318 : vector<2x256xi1>, vector<2x256xf32>
    %1320 = vector.broadcast %168 : f32 to vector<2x256xf32>
    %1321 = arith.mulf %1319, %1320 : vector<2x256xf32>
    %1322 = arith.addf %1307, %1321 : vector<2x256xf32>
    %1323 = vector.broadcast %204 : f32 to vector<2x256xf32>
    %1324 = arith.mulf %1319, %1323 : vector<2x256xf32>
    %1325 = arith.addf %1310, %1324 : vector<2x256xf32>
    %1326 = vector.broadcast %240 : f32 to vector<2x256xf32>
    %1327 = arith.mulf %1319, %1326 : vector<2x256xf32>
    %1328 = arith.addf %1313, %1327 : vector<2x256xf32>
    %1329 = vector.broadcast %276 : f32 to vector<2x256xf32>
    %1330 = arith.mulf %1319, %1329 : vector<2x256xf32>
    %1331 = arith.addf %1316, %1330 : vector<2x256xf32>
    %1332 = vector.extract_strided_slice %940 {offsets = [0, 33], sizes = [2, 256], strides = [1, 1]} : vector<2x290xf32> to vector<2x256xf32>
    %1333 = vector.broadcast %169 : f32 to vector<2x256xf32>
    %1334 = arith.mulf %1332, %1333 : vector<2x256xf32>
    %1335 = arith.addf %1322, %1334 : vector<2x256xf32>
    %1336 = vector.broadcast %205 : f32 to vector<2x256xf32>
    %1337 = arith.mulf %1332, %1336 : vector<2x256xf32>
    %1338 = arith.addf %1325, %1337 : vector<2x256xf32>
    %1339 = vector.broadcast %241 : f32 to vector<2x256xf32>
    %1340 = arith.mulf %1332, %1339 : vector<2x256xf32>
    %1341 = arith.addf %1328, %1340 : vector<2x256xf32>
    %1342 = vector.broadcast %277 : f32 to vector<2x256xf32>
    %1343 = arith.mulf %1332, %1342 : vector<2x256xf32>
    %1344 = arith.addf %1331, %1343 : vector<2x256xf32>
    %1345 = vector.extract_strided_slice %940 {offsets = [0, 34], sizes = [2, 256], strides = [1, 1]} : vector<2x290xf32> to vector<2x256xf32>
    %cst_253 = arith.constant 0.000000e+00 : f32
    %1346 = vector.broadcast %cst_253 : f32 to vector<2x256xf32>
    %1347 = arith.select %330, %1345, %1346 : vector<2x256xi1>, vector<2x256xf32>
    %1348 = vector.broadcast %170 : f32 to vector<2x256xf32>
    %1349 = arith.mulf %1347, %1348 : vector<2x256xf32>
    %1350 = arith.addf %1335, %1349 : vector<2x256xf32>
    %1351 = vector.broadcast %206 : f32 to vector<2x256xf32>
    %1352 = arith.mulf %1347, %1351 : vector<2x256xf32>
    %1353 = arith.addf %1338, %1352 : vector<2x256xf32>
    %1354 = vector.broadcast %242 : f32 to vector<2x256xf32>
    %1355 = arith.mulf %1347, %1354 : vector<2x256xf32>
    %1356 = arith.addf %1341, %1355 : vector<2x256xf32>
    %1357 = vector.broadcast %278 : f32 to vector<2x256xf32>
    %1358 = arith.mulf %1347, %1357 : vector<2x256xf32>
    %1359 = arith.addf %1344, %1358 : vector<2x256xf32>
    %1360 = vector.extract_strided_slice %968 {offsets = [0, 0], sizes = [2, 256], strides = [1, 1]} : vector<2x290xf32> to vector<2x256xf32>
    %cst_254 = arith.constant 0.000000e+00 : f32
    %1361 = vector.broadcast %cst_254 : f32 to vector<2x256xf32>
    %1362 = arith.select %332, %1360, %1361 : vector<2x256xi1>, vector<2x256xf32>
    %1363 = vector.broadcast %171 : f32 to vector<2x256xf32>
    %1364 = arith.mulf %1362, %1363 : vector<2x256xf32>
    %1365 = arith.addf %1350, %1364 : vector<2x256xf32>
    %1366 = vector.broadcast %207 : f32 to vector<2x256xf32>
    %1367 = arith.mulf %1362, %1366 : vector<2x256xf32>
    %1368 = arith.addf %1353, %1367 : vector<2x256xf32>
    %1369 = vector.broadcast %243 : f32 to vector<2x256xf32>
    %1370 = arith.mulf %1362, %1369 : vector<2x256xf32>
    %1371 = arith.addf %1356, %1370 : vector<2x256xf32>
    %1372 = vector.broadcast %279 : f32 to vector<2x256xf32>
    %1373 = arith.mulf %1362, %1372 : vector<2x256xf32>
    %1374 = arith.addf %1359, %1373 : vector<2x256xf32>
    %1375 = vector.extract_strided_slice %968 {offsets = [0, 1], sizes = [2, 256], strides = [1, 1]} : vector<2x290xf32> to vector<2x256xf32>
    %1376 = vector.broadcast %172 : f32 to vector<2x256xf32>
    %1377 = arith.mulf %1375, %1376 : vector<2x256xf32>
    %1378 = arith.addf %1365, %1377 : vector<2x256xf32>
    %1379 = vector.broadcast %208 : f32 to vector<2x256xf32>
    %1380 = arith.mulf %1375, %1379 : vector<2x256xf32>
    %1381 = arith.addf %1368, %1380 : vector<2x256xf32>
    %1382 = vector.broadcast %244 : f32 to vector<2x256xf32>
    %1383 = arith.mulf %1375, %1382 : vector<2x256xf32>
    %1384 = arith.addf %1371, %1383 : vector<2x256xf32>
    %1385 = vector.broadcast %280 : f32 to vector<2x256xf32>
    %1386 = arith.mulf %1375, %1385 : vector<2x256xf32>
    %1387 = arith.addf %1374, %1386 : vector<2x256xf32>
    %1388 = vector.extract_strided_slice %968 {offsets = [0, 2], sizes = [2, 256], strides = [1, 1]} : vector<2x290xf32> to vector<2x256xf32>
    %cst_255 = arith.constant 0.000000e+00 : f32
    %1389 = vector.broadcast %cst_255 : f32 to vector<2x256xf32>
    %1390 = arith.select %330, %1388, %1389 : vector<2x256xi1>, vector<2x256xf32>
    %1391 = vector.broadcast %173 : f32 to vector<2x256xf32>
    %1392 = arith.mulf %1390, %1391 : vector<2x256xf32>
    %1393 = arith.addf %1378, %1392 : vector<2x256xf32>
    %1394 = vector.broadcast %209 : f32 to vector<2x256xf32>
    %1395 = arith.mulf %1390, %1394 : vector<2x256xf32>
    %1396 = arith.addf %1381, %1395 : vector<2x256xf32>
    %1397 = vector.broadcast %245 : f32 to vector<2x256xf32>
    %1398 = arith.mulf %1390, %1397 : vector<2x256xf32>
    %1399 = arith.addf %1384, %1398 : vector<2x256xf32>
    %1400 = vector.broadcast %281 : f32 to vector<2x256xf32>
    %1401 = arith.mulf %1390, %1400 : vector<2x256xf32>
    %1402 = arith.addf %1387, %1401 : vector<2x256xf32>
    %1403 = vector.extract_strided_slice %968 {offsets = [0, 16], sizes = [2, 256], strides = [1, 1]} : vector<2x290xf32> to vector<2x256xf32>
    %cst_256 = arith.constant 0.000000e+00 : f32
    %1404 = vector.broadcast %cst_256 : f32 to vector<2x256xf32>
    %1405 = arith.select %332, %1403, %1404 : vector<2x256xi1>, vector<2x256xf32>
    %1406 = vector.broadcast %174 : f32 to vector<2x256xf32>
    %1407 = arith.mulf %1405, %1406 : vector<2x256xf32>
    %1408 = arith.addf %1393, %1407 : vector<2x256xf32>
    %1409 = vector.broadcast %210 : f32 to vector<2x256xf32>
    %1410 = arith.mulf %1405, %1409 : vector<2x256xf32>
    %1411 = arith.addf %1396, %1410 : vector<2x256xf32>
    %1412 = vector.broadcast %246 : f32 to vector<2x256xf32>
    %1413 = arith.mulf %1405, %1412 : vector<2x256xf32>
    %1414 = arith.addf %1399, %1413 : vector<2x256xf32>
    %1415 = vector.broadcast %282 : f32 to vector<2x256xf32>
    %1416 = arith.mulf %1405, %1415 : vector<2x256xf32>
    %1417 = arith.addf %1402, %1416 : vector<2x256xf32>
    %1418 = vector.extract_strided_slice %968 {offsets = [0, 17], sizes = [2, 256], strides = [1, 1]} : vector<2x290xf32> to vector<2x256xf32>
    %1419 = vector.broadcast %175 : f32 to vector<2x256xf32>
    %1420 = arith.mulf %1418, %1419 : vector<2x256xf32>
    %1421 = arith.addf %1408, %1420 : vector<2x256xf32>
    %1422 = vector.broadcast %211 : f32 to vector<2x256xf32>
    %1423 = arith.mulf %1418, %1422 : vector<2x256xf32>
    %1424 = arith.addf %1411, %1423 : vector<2x256xf32>
    %1425 = vector.broadcast %247 : f32 to vector<2x256xf32>
    %1426 = arith.mulf %1418, %1425 : vector<2x256xf32>
    %1427 = arith.addf %1414, %1426 : vector<2x256xf32>
    %1428 = vector.broadcast %283 : f32 to vector<2x256xf32>
    %1429 = arith.mulf %1418, %1428 : vector<2x256xf32>
    %1430 = arith.addf %1417, %1429 : vector<2x256xf32>
    %1431 = vector.extract_strided_slice %968 {offsets = [0, 18], sizes = [2, 256], strides = [1, 1]} : vector<2x290xf32> to vector<2x256xf32>
    %cst_257 = arith.constant 0.000000e+00 : f32
    %1432 = vector.broadcast %cst_257 : f32 to vector<2x256xf32>
    %1433 = arith.select %330, %1431, %1432 : vector<2x256xi1>, vector<2x256xf32>
    %1434 = vector.broadcast %176 : f32 to vector<2x256xf32>
    %1435 = arith.mulf %1433, %1434 : vector<2x256xf32>
    %1436 = arith.addf %1421, %1435 : vector<2x256xf32>
    %1437 = vector.broadcast %212 : f32 to vector<2x256xf32>
    %1438 = arith.mulf %1433, %1437 : vector<2x256xf32>
    %1439 = arith.addf %1424, %1438 : vector<2x256xf32>
    %1440 = vector.broadcast %248 : f32 to vector<2x256xf32>
    %1441 = arith.mulf %1433, %1440 : vector<2x256xf32>
    %1442 = arith.addf %1427, %1441 : vector<2x256xf32>
    %1443 = vector.broadcast %284 : f32 to vector<2x256xf32>
    %1444 = arith.mulf %1433, %1443 : vector<2x256xf32>
    %1445 = arith.addf %1430, %1444 : vector<2x256xf32>
    %1446 = vector.extract_strided_slice %968 {offsets = [0, 32], sizes = [2, 256], strides = [1, 1]} : vector<2x290xf32> to vector<2x256xf32>
    %cst_258 = arith.constant 0.000000e+00 : f32
    %1447 = vector.broadcast %cst_258 : f32 to vector<2x256xf32>
    %1448 = arith.select %332, %1446, %1447 : vector<2x256xi1>, vector<2x256xf32>
    %1449 = vector.broadcast %177 : f32 to vector<2x256xf32>
    %1450 = arith.mulf %1448, %1449 : vector<2x256xf32>
    %1451 = arith.addf %1436, %1450 : vector<2x256xf32>
    %1452 = vector.broadcast %213 : f32 to vector<2x256xf32>
    %1453 = arith.mulf %1448, %1452 : vector<2x256xf32>
    %1454 = arith.addf %1439, %1453 : vector<2x256xf32>
    %1455 = vector.broadcast %249 : f32 to vector<2x256xf32>
    %1456 = arith.mulf %1448, %1455 : vector<2x256xf32>
    %1457 = arith.addf %1442, %1456 : vector<2x256xf32>
    %1458 = vector.broadcast %285 : f32 to vector<2x256xf32>
    %1459 = arith.mulf %1448, %1458 : vector<2x256xf32>
    %1460 = arith.addf %1445, %1459 : vector<2x256xf32>
    %1461 = vector.extract_strided_slice %968 {offsets = [0, 33], sizes = [2, 256], strides = [1, 1]} : vector<2x290xf32> to vector<2x256xf32>
    %1462 = vector.broadcast %178 : f32 to vector<2x256xf32>
    %1463 = arith.mulf %1461, %1462 : vector<2x256xf32>
    %1464 = arith.addf %1451, %1463 : vector<2x256xf32>
    %1465 = vector.broadcast %214 : f32 to vector<2x256xf32>
    %1466 = arith.mulf %1461, %1465 : vector<2x256xf32>
    %1467 = arith.addf %1454, %1466 : vector<2x256xf32>
    %1468 = vector.broadcast %250 : f32 to vector<2x256xf32>
    %1469 = arith.mulf %1461, %1468 : vector<2x256xf32>
    %1470 = arith.addf %1457, %1469 : vector<2x256xf32>
    %1471 = vector.broadcast %286 : f32 to vector<2x256xf32>
    %1472 = arith.mulf %1461, %1471 : vector<2x256xf32>
    %1473 = arith.addf %1460, %1472 : vector<2x256xf32>
    %1474 = vector.extract_strided_slice %968 {offsets = [0, 34], sizes = [2, 256], strides = [1, 1]} : vector<2x290xf32> to vector<2x256xf32>
    %cst_259 = arith.constant 0.000000e+00 : f32
    %1475 = vector.broadcast %cst_259 : f32 to vector<2x256xf32>
    %1476 = arith.select %330, %1474, %1475 : vector<2x256xi1>, vector<2x256xf32>
    %1477 = vector.broadcast %179 : f32 to vector<2x256xf32>
    %1478 = arith.mulf %1476, %1477 : vector<2x256xf32>
    %1479 = arith.addf %1464, %1478 : vector<2x256xf32>
    %1480 = vector.broadcast %215 : f32 to vector<2x256xf32>
    %1481 = arith.mulf %1476, %1480 : vector<2x256xf32>
    %1482 = arith.addf %1467, %1481 : vector<2x256xf32>
    %1483 = vector.broadcast %251 : f32 to vector<2x256xf32>
    %1484 = arith.mulf %1476, %1483 : vector<2x256xf32>
    %1485 = arith.addf %1470, %1484 : vector<2x256xf32>
    %1486 = vector.broadcast %287 : f32 to vector<2x256xf32>
    %1487 = arith.mulf %1476, %1486 : vector<2x256xf32>
    %1488 = arith.addf %1473, %1487 : vector<2x256xf32>
    %1489 = vector.shape_cast %1479 : vector<2x256xf32> to vector<1x2x256xf32>
    %cst_260 = arith.constant dense<0.000000e+00> : vector<1xf32>
    %1490 = vector.multi_reduction <add>, %1489, %cst_260 [1, 2] : vector<1x2x256xf32> to vector<1xf32>
    %1491 = vector.shape_cast %1490 : vector<1xf32> to vector<1x1x1xf32>
    %1492 = vector.extract %1491[0, 0, 0] : f32 from vector<1x1x1xf32>
    %1493 = arith.mulf %1479, %1479 : vector<2x256xf32>
    %1494 = vector.shape_cast %1493 : vector<2x256xf32> to vector<1x2x256xf32>
    %cst_261 = arith.constant dense<0.000000e+00> : vector<1xf32>
    %1495 = vector.multi_reduction <add>, %1494, %cst_261 [1, 2] : vector<1x2x256xf32> to vector<1xf32>
    %1496 = vector.shape_cast %1495 : vector<1xf32> to vector<1x1x1xf32>
    %1497 = vector.extract %1496[0, 0, 0] : f32 from vector<1x1x1xf32>
    %cst_262 = arith.constant 0.001953125 : f32
    %1498 = arith.mulf %1492, %cst_262 : f32
    %cst_263 = arith.constant 0.001953125 : f32
    %1499 = arith.mulf %1497, %cst_263 : f32
    %1500 = arith.mulf %1498, %1498 : f32
    %1501 = arith.subf %1499, %1500 : f32
    %cst_264 = arith.constant 8.000000e-01 : f32
    %1502 = arith.addf %1501, %cst_264 : f32
    %1503 = math.rsqrt %1502 : f32
    %1504 = arith.mulf %300, %1503 : f32
    %1505 = vector.broadcast %1498 : f32 to vector<2x256xf32>
    %1506 = arith.subf %1479, %1505 : vector<2x256xf32>
    %1507 = vector.broadcast %1504 : f32 to vector<2x256xf32>
    %1508 = arith.mulf %1506, %1507 : vector<2x256xf32>
    %1509 = vector.broadcast %308 : f32 to vector<2x256xf32>
    %1510 = arith.addf %1508, %1509 : vector<2x256xf32>
    %1511 = vector.shape_cast %1482 : vector<2x256xf32> to vector<1x2x256xf32>
    %cst_265 = arith.constant dense<0.000000e+00> : vector<1xf32>
    %1512 = vector.multi_reduction <add>, %1511, %cst_265 [1, 2] : vector<1x2x256xf32> to vector<1xf32>
    %1513 = vector.shape_cast %1512 : vector<1xf32> to vector<1x1x1xf32>
    %1514 = vector.extract %1513[0, 0, 0] : f32 from vector<1x1x1xf32>
    %1515 = arith.mulf %1482, %1482 : vector<2x256xf32>
    %1516 = vector.shape_cast %1515 : vector<2x256xf32> to vector<1x2x256xf32>
    %cst_266 = arith.constant dense<0.000000e+00> : vector<1xf32>
    %1517 = vector.multi_reduction <add>, %1516, %cst_266 [1, 2] : vector<1x2x256xf32> to vector<1xf32>
    %1518 = vector.shape_cast %1517 : vector<1xf32> to vector<1x1x1xf32>
    %1519 = vector.extract %1518[0, 0, 0] : f32 from vector<1x1x1xf32>
    %cst_267 = arith.constant 0.001953125 : f32
    %1520 = arith.mulf %1514, %cst_267 : f32
    %cst_268 = arith.constant 0.001953125 : f32
    %1521 = arith.mulf %1519, %cst_268 : f32
    %1522 = arith.mulf %1520, %1520 : f32
    %1523 = arith.subf %1521, %1522 : f32
    %cst_269 = arith.constant 8.000000e-01 : f32
    %1524 = arith.addf %1523, %cst_269 : f32
    %1525 = math.rsqrt %1524 : f32
    %1526 = arith.mulf %301, %1525 : f32
    %1527 = vector.broadcast %1520 : f32 to vector<2x256xf32>
    %1528 = arith.subf %1482, %1527 : vector<2x256xf32>
    %1529 = vector.broadcast %1526 : f32 to vector<2x256xf32>
    %1530 = arith.mulf %1528, %1529 : vector<2x256xf32>
    %1531 = vector.broadcast %309 : f32 to vector<2x256xf32>
    %1532 = arith.addf %1530, %1531 : vector<2x256xf32>
    %1533 = vector.shape_cast %1485 : vector<2x256xf32> to vector<1x2x256xf32>
    %cst_270 = arith.constant dense<0.000000e+00> : vector<1xf32>
    %1534 = vector.multi_reduction <add>, %1533, %cst_270 [1, 2] : vector<1x2x256xf32> to vector<1xf32>
    %1535 = vector.shape_cast %1534 : vector<1xf32> to vector<1x1x1xf32>
    %1536 = vector.extract %1535[0, 0, 0] : f32 from vector<1x1x1xf32>
    %1537 = arith.mulf %1485, %1485 : vector<2x256xf32>
    %1538 = vector.shape_cast %1537 : vector<2x256xf32> to vector<1x2x256xf32>
    %cst_271 = arith.constant dense<0.000000e+00> : vector<1xf32>
    %1539 = vector.multi_reduction <add>, %1538, %cst_271 [1, 2] : vector<1x2x256xf32> to vector<1xf32>
    %1540 = vector.shape_cast %1539 : vector<1xf32> to vector<1x1x1xf32>
    %1541 = vector.extract %1540[0, 0, 0] : f32 from vector<1x1x1xf32>
    %cst_272 = arith.constant 0.001953125 : f32
    %1542 = arith.mulf %1536, %cst_272 : f32
    %cst_273 = arith.constant 0.001953125 : f32
    %1543 = arith.mulf %1541, %cst_273 : f32
    %1544 = arith.mulf %1542, %1542 : f32
    %1545 = arith.subf %1543, %1544 : f32
    %cst_274 = arith.constant 8.000000e-01 : f32
    %1546 = arith.addf %1545, %cst_274 : f32
    %1547 = math.rsqrt %1546 : f32
    %1548 = arith.mulf %302, %1547 : f32
    %1549 = vector.broadcast %1542 : f32 to vector<2x256xf32>
    %1550 = arith.subf %1485, %1549 : vector<2x256xf32>
    %1551 = vector.broadcast %1548 : f32 to vector<2x256xf32>
    %1552 = arith.mulf %1550, %1551 : vector<2x256xf32>
    %1553 = vector.broadcast %310 : f32 to vector<2x256xf32>
    %1554 = arith.addf %1552, %1553 : vector<2x256xf32>
    %1555 = vector.shape_cast %1488 : vector<2x256xf32> to vector<1x2x256xf32>
    %cst_275 = arith.constant dense<0.000000e+00> : vector<1xf32>
    %1556 = vector.multi_reduction <add>, %1555, %cst_275 [1, 2] : vector<1x2x256xf32> to vector<1xf32>
    %1557 = vector.shape_cast %1556 : vector<1xf32> to vector<1x1x1xf32>
    %1558 = vector.extract %1557[0, 0, 0] : f32 from vector<1x1x1xf32>
    %1559 = arith.mulf %1488, %1488 : vector<2x256xf32>
    %1560 = vector.shape_cast %1559 : vector<2x256xf32> to vector<1x2x256xf32>
    %cst_276 = arith.constant dense<0.000000e+00> : vector<1xf32>
    %1561 = vector.multi_reduction <add>, %1560, %cst_276 [1, 2] : vector<1x2x256xf32> to vector<1xf32>
    %1562 = vector.shape_cast %1561 : vector<1xf32> to vector<1x1x1xf32>
    %1563 = vector.extract %1562[0, 0, 0] : f32 from vector<1x1x1xf32>
    %cst_277 = arith.constant 0.001953125 : f32
    %1564 = arith.mulf %1558, %cst_277 : f32
    %cst_278 = arith.constant 0.001953125 : f32
    %1565 = arith.mulf %1563, %cst_278 : f32
    %1566 = arith.mulf %1564, %1564 : f32
    %1567 = arith.subf %1565, %1566 : f32
    %cst_279 = arith.constant 8.000000e-01 : f32
    %1568 = arith.addf %1567, %cst_279 : f32
    %1569 = math.rsqrt %1568 : f32
    %1570 = arith.mulf %303, %1569 : f32
    %1571 = vector.broadcast %1564 : f32 to vector<2x256xf32>
    %1572 = arith.subf %1488, %1571 : vector<2x256xf32>
    %1573 = vector.broadcast %1570 : f32 to vector<2x256xf32>
    %1574 = arith.mulf %1572, %1573 : vector<2x256xf32>
    %1575 = vector.broadcast %311 : f32 to vector<2x256xf32>
    %1576 = arith.addf %1574, %1575 : vector<2x256xf32>
    %c0_280 = arith.constant 0 : index
    %c0_281 = arith.constant 0 : index
    %1577 = vector.load %arg1[%c0_280, %c0_281] : memref<8x256xf32, #tpu.memory_space<vmem>>, vector<2x256xf32>
    %1578 = arith.addf %1577, %1510 : vector<2x256xf32>
    %c0_282 = arith.constant 0 : index
    %c0_283 = arith.constant 0 : index
    %1579 = vector.load %arg10[%c0_282, %c0_283] : memref<8x256xf32, #tpu.memory_space<vmem>>, vector<2x256xf32>
    tpu.vector_store %arg10[%c0_282, %c0_283], %1578 {strides = array<i32>} : memref<8x256xf32, #tpu.memory_space<vmem>>, vector<2x256xf32>,
    %c2_284 = arith.constant 2 : index
    %c0_285 = arith.constant 0 : index
    %1580 = vector.load %arg1[%c2_284, %c0_285] : memref<8x256xf32, #tpu.memory_space<vmem>>, vector<2x256xf32>
    %1581 = arith.addf %1580, %1532 : vector<2x256xf32>
    %c2_286 = arith.constant 2 : index
    %c0_287 = arith.constant 0 : index
    %1582 = vector.load %arg10[%c2_286, %c0_287] : memref<8x256xf32, #tpu.memory_space<vmem>>, vector<2x256xf32>
    tpu.vector_store %arg10[%c2_286, %c0_287], %1581 {strides = array<i32>} : memref<8x256xf32, #tpu.memory_space<vmem>>, vector<2x256xf32>,
    %c4_288 = arith.constant 4 : index
    %c0_289 = arith.constant 0 : index
    %1583 = vector.load %arg1[%c4_288, %c0_289] : memref<8x256xf32, #tpu.memory_space<vmem>>, vector<2x256xf32>
    %1584 = arith.addf %1583, %1554 : vector<2x256xf32>
    %c4_290 = arith.constant 4 : index
    %c0_291 = arith.constant 0 : index
    %1585 = vector.load %arg10[%c4_290, %c0_291] : memref<8x256xf32, #tpu.memory_space<vmem>>, vector<2x256xf32>
    tpu.vector_store %arg10[%c4_290, %c0_291], %1584 {strides = array<i32>} : memref<8x256xf32, #tpu.memory_space<vmem>>, vector<2x256xf32>,
    %c6_292 = arith.constant 6 : index
    %c0_293 = arith.constant 0 : index
    %1586 = vector.load %arg1[%c6_292, %c0_293] : memref<8x256xf32, #tpu.memory_space<vmem>>, vector<2x256xf32>
    %1587 = arith.addf %1586, %1576 : vector<2x256xf32>
    %c6_294 = arith.constant 6 : index
    %c0_295 = arith.constant 0 : index
    %1588 = vector.load %arg10[%c6_294, %c0_295] : memref<8x256xf32, #tpu.memory_space<vmem>>, vector<2x256xf32>
    tpu.vector_store %arg10[%c6_294, %c0_295], %1587 {strides = array<i32>} : memref<8x256xf32, #tpu.memory_space<vmem>>, vector<2x256xf32>,
    return
  }
}

</mosaic_0001>

<llo_original>
// kernel: residual_block.1
$region0: #{residual_block.1}
  #allocation0 [shape = 'u32[]', space=smem, size = 0x4, offset = 0x4, fixed_abs, tag = 'smem constant byte address 0x4 - core index']
  #allocation1 [shape = 'u32[144,128]{1,0:T(1,128)}', space=vmem, size = 0x12000, scoped, tag = 'internal scratch']
  %s0 = inlined_call_operand.vmem [shape: f32[8,324], index: 0, kind: input, shape index: {}]
  %s1 = inlined_call_operand.vmem [shape: f32[8,256], index: 1, kind: input, shape index: {}]
  %s2 = inlined_call_operand.vmem [shape: f32[144], index: 2, kind: input, shape index: {}]
  %s3 = inlined_call_operand.vmem [shape: f32[4], index: 3, kind: input, shape index: {}]
  %s4 = inlined_call_operand.vmem [shape: f32[4], index: 4, kind: input, shape index: {}]
  %s5 = inlined_call_operand.vmem [shape: f32[4], index: 5, kind: input, shape index: {}]
  %s6 = inlined_call_operand.vmem [shape: f32[144], index: 6, kind: input, shape index: {}]
  %s7 = inlined_call_operand.vmem [shape: f32[4], index: 7, kind: input, shape index: {}]
  %s8 = inlined_call_operand.vmem [shape: f32[4], index: 8, kind: input, shape index: {}]
  %s9 = inlined_call_operand.vmem [shape: f32[4], index: 9, kind: input, shape index: {}]
  %s10 = inlined_call_operand.vmem [shape: f32[8,256], index: 10, kind: output, shape index: {}]
  %s11 = sld [smem:[#allocation0]]
  $region82: #{residual_block.1} parent=0
    _
  %s13 = ssub.s32 1, %s11
  %s14 = scalar_select 0, %s13, %s11
  $region1: #{residual_block.1} parent=0
    #allocation2 [shape = 'u8[1024]{0}', space=smem, size = 0x400, scoped, tag = 'input window, operand 2, single buffered']
    #allocation3 [shape = 's32[1]{0}', space=sflag, size = 0x4, scoped, tag = 'scoped memory for residual_block.1']
    #allocation4 [shape = 'u8[512]{0}', space=smem, size = 0x200, scoped, tag = 'input window, operand 3, single buffered']
    #allocation5 [shape = 's32[1]{0}', space=sflag, size = 0x4, scoped, tag = 'scoped memory for residual_block.1']
    #allocation6 [shape = 'u8[512]{0}', space=smem, size = 0x200, scoped, tag = 'input window, operand 4, single buffered']
    #allocation7 [shape = 'u8[512]{0}', space=smem, size = 0x200, scoped, tag = 'input window, operand 5, single buffered']
    #allocation8 [shape = 's32[1]{0}', space=sflag, size = 0x4, scoped, tag = 'scoped memory for residual_block.1']
    #allocation9 [shape = 'u8[1024]{0}', space=smem, size = 0x400, scoped, tag = 'input window, operand 6, single buffered']
    #allocation10 [shape = 'u8[512]{0}', space=smem, size = 0x200, scoped, tag = 'input window, operand 7, single buffered']
    #allocation11 [shape = 's32[1]{0}', space=sflag, size = 0x4, scoped, tag = 'scoped memory for residual_block.1']
    #allocation12 [shape = 'u8[512]{0}', space=smem, size = 0x200, scoped, tag = 'input window, operand 8, single buffered']
    #allocation13 [shape = 'u8[512]{0}', space=smem, size = 0x200, scoped, tag = 'input window, operand 9, single buffered']
    #allocation14 [shape = 's32[1]{0}', space=sflag, size = 0x4, scoped, tag = 'scoped memory for residual_block.1']
    %15 = vsyncpa [#allocation3], 0
    %16 = vsyncpa [#allocation5], 0
    %17 = vsyncpa [#allocation8], 0
    %18 = vsyncpa [#allocation11], 0
    %19 = vsyncpa [#allocation14], 0
    // Predicated region
    $region2: #{residual_block.1} parent=1 // pred_check
      _
    $region3: #{residual_block.1} parent=1 // pred_check_branch
      %21 = sbr.rel (0) target = $region5
    $region4: #{residual_block.1} parent=1 // pred_region
      _
    $region5: #{residual_block.1} parent=1 // pred_fallthru
      _
    // Predicated region
    $region6: #{residual_block.1} parent=1 // pred_check
      _
    $region7: #{residual_block.1} parent=1 // pred_check_branch
      %23 = sbr.rel (0) target = $region9
    $region8: #{residual_block.1} parent=1 // pred_region
      _
    $region9: #{residual_block.1} parent=1 // pred_fallthru
      _
    // Predicated region
    $region10: #{residual_block.1} parent=1 // pred_check
      _
    $region11: #{residual_block.1} parent=1 // pred_check_branch
      %25 = sbr.rel (0) target = $region13
    $region12: #{residual_block.1} parent=1 // pred_region
      %s27 = ssub.s32 32, 32
      %28 = vsyncadd [#allocation3], %s27
      %s30 = sshll.u32 %s2, 4
      %s31 = int_to_ptr.vmem [resolvable:$true] %s30
      %33 = dma.vmem_to_smem %s31, 32, [#allocation2], [#allocation3]
    $region13: #{residual_block.1} parent=1 // pred_fallthru
      _
    // Predicated region
    $region14: #{residual_block.1} parent=1 // pred_check
      _
    $region15: #{residual_block.1} parent=1 // pred_check_branch
      %35 = sbr.rel (0) target = $region17
    $region16: #{residual_block.1} parent=1 // pred_region
      %s37 = ssub.s32 16, 16
      %38 = vsyncadd [#allocation5], %s37
      %s40 = sshll.u32 %s3, 4
      %s41 = int_to_ptr.vmem [resolvable:$true] %s40
      %43 = dma.vmem_to_smem %s41, 16, [#allocation4], [#allocation5]
    $region17: #{residual_block.1} parent=1 // pred_fallthru
      _
    // Predicated region
    $region18: #{residual_block.1} parent=1 // pred_check
      _
    $region19: #{residual_block.1} parent=1 // pred_check_branch
      %45 = sbr.rel (0) target = $region21
    $region20: #{residual_block.1} parent=1 // pred_region
      %s47 = ssub.s32 16, 16
      %48 = vsyncadd [#allocation5], %s47
      %s50 = sshll.u32 %s4, 4
      %s51 = int_to_ptr.vmem [resolvable:$true] %s50
      %53 = dma.vmem_to_smem %s51, 16, [#allocation6], [#allocation5]
    $region21: #{residual_block.1} parent=1 // pred_fallthru
      _
    // Predicated region
    $region22: #{residual_block.1} parent=1 // pred_check
      _
    $region23: #{residual_block.1} parent=1 // pred_check_branch
      %55 = sbr.rel (0) target = $region25
    $region24: #{residual_block.1} parent=1 // pred_region
      %s57 = ssub.s32 16, 16
      %58 = vsyncadd [#allocation8], %s57
      %s60 = sshll.u32 %s5, 4
      %s61 = int_to_ptr.vmem [resolvable:$true] %s60
      %63 = dma.vmem_to_smem %s61, 16, [#allocation7], [#allocation8]
    $region25: #{residual_block.1} parent=1 // pred_fallthru
      _
    // Predicated region
    $region26: #{residual_block.1} parent=1 // pred_check
      _
    $region27: #{residual_block.1} parent=1 // pred_check_branch
      %65 = sbr.rel (0) target = $region29
    $region28: #{residual_block.1} parent=1 // pred_region
      %s67 = ssub.s32 32, 32
      %68 = vsyncadd [#allocation8], %s67
      %s70 = sshll.u32 %s6, 4
      %s71 = int_to_ptr.vmem [resolvable:$true] %s70
      %73 = dma.vmem_to_smem %s71, 32, [#allocation9], [#allocation8]
    $region29: #{residual_block.1} parent=1 // pred_fallthru
      _
    // Predicated region
    $region30: #{residual_block.1} parent=1 // pred_check
      _
    $region31: #{residual_block.1} parent=1 // pred_check_branch
      %75 = sbr.rel (0) target = $region33
    $region32: #{residual_block.1} parent=1 // pred_region
      %s77 = ssub.s32 16, 16
      %78 = vsyncadd [#allocation11], %s77
      %s80 = sshll.u32 %s7, 4
      %s81 = int_to_ptr.vmem [resolvable:$true] %s80
      %83 = dma.vmem_to_smem %s81, 16, [#allocation10], [#allocation11]
    $region33: #{residual_block.1} parent=1 // pred_fallthru
      _
    // Predicated region
    $region34: #{residual_block.1} parent=1 // pred_check
      _
    $region35: #{residual_block.1} parent=1 // pred_check_branch
      %85 = sbr.rel (0) target = $region37
    $region36: #{residual_block.1} parent=1 // pred_region
      %s87 = ssub.s32 16, 16
      %88 = vsyncadd [#allocation11], %s87
      %s90 = sshll.u32 %s8, 4
      %s91 = int_to_ptr.vmem [resolvable:$true] %s90
      %93 = dma.vmem_to_smem %s91, 16, [#allocation12], [#allocation11]
    $region37: #{residual_block.1} parent=1 // pred_fallthru
      _
    // Predicated region
    $region38: #{residual_block.1} parent=1 // pred_check
      _
    $region39: #{residual_block.1} parent=1 // pred_check_branch
      %95 = sbr.rel (0) target = $region41
    $region40: #{residual_block.1} parent=1 // pred_region
      %s97 = ssub.s32 16, 16
      %98 = vsyncadd [#allocation14], %s97
      %s100 = sshll.u32 %s9, 4
      %s101 = int_to_ptr.vmem [resolvable:$true] %s100
      %103 = dma.vmem_to_smem %s101, 16, [#allocation13], [#allocation14]
    $region41: #{residual_block.1} parent=1 // pred_fallthru
      _
    // Predicated region
    $region42: #{residual_block.1} parent=1 // pred_check
      _
    $region43: #{residual_block.1} parent=1 // pred_check_branch
      %105 = sbr.rel (0) target = $region45
    $region44: #{residual_block.1} parent=1 // pred_region
      %106 = dma.done [#allocation3], 32
    $region45: #{residual_block.1} parent=1 // pred_fallthru
      _
    // Predicated region
    $region46: #{residual_block.1} parent=1 // pred_check
      _
    $region47: #{residual_block.1} parent=1 // pred_check_branch
      %108 = sbr.rel (0) target = $region49
    $region48: #{residual_block.1} parent=1 // pred_region
      %109 = dma.done [#allocation5], 16
    $region49: #{residual_block.1} parent=1 // pred_fallthru
      _
    // Predicated region
    $region50: #{residual_block.1} parent=1 // pred_check
      _
    $region51: #{residual_block.1} parent=1 // pred_check_branch
      %111 = sbr.rel (0) target = $region53
    $region52: #{residual_block.1} parent=1 // pred_region
      %112 = dma.done [#allocation5], 16
    $region53: #{residual_block.1} parent=1 // pred_fallthru
      _
    // Predicated region
    $region54: #{residual_block.1} parent=1 // pred_check
      _
    $region55: #{residual_block.1} parent=1 // pred_check_branch
      %114 = sbr.rel (0) target = $region57
    $region56: #{residual_block.1} parent=1 // pred_region
      %115 = dma.done [#allocation8], 16
    $region57: #{residual_block.1} parent=1 // pred_fallthru
      _
    // Predicated region
    $region58: #{residual_block.1} parent=1 // pred_check
      _
    $region59: #{residual_block.1} parent=1 // pred_check_branch
      %117 = sbr.rel (0) target = $region61
    $region60: #{residual_block.1} parent=1 // pred_region
      %118 = dma.done [#allocation8], 32
    $region61: #{residual_block.1} parent=1 // pred_fallthru
      _
    // Predicated region
    $region62: #{residual_block.1} parent=1 // pred_check
      _
    $region63: #{residual_block.1} parent=1 // pred_check_branch
      %120 = sbr.rel (0) target = $region65
    $region64: #{residual_block.1} parent=1 // pred_region
      %121 = dma.done [#allocation11], 16
    $region65: #{residual_block.1} parent=1 // pred_fallthru
      _
    // Predicated region
    $region66: #{residual_block.1} parent=1 // pred_check
      _
    $region67: #{residual_block.1} parent=1 // pred_check_branch
      %123 = sbr.rel (0) target = $region69
    $region68: #{residual_block.1} parent=1 // pred_region
      %124 = dma.done [#allocation11], 16
    $region69: #{residual_block.1} parent=1 // pred_fallthru
      _
    // Predicated region
    $region70: #{residual_block.1} parent=1 // pred_check
      _
    $region71: #{residual_block.1} parent=1 // pred_check_branch
      %126 = sbr.rel (0) target = $region73
    $region72: #{residual_block.1} parent=1 // pred_region
      %127 = dma.done [#allocation14], 16
    $region73: #{residual_block.1} parent=1 // pred_fallthru
      _
    %128 = sfence
    %s129 = sld [smem:[#allocation2]]
    %s130 = sld [smem:[#allocation2 + $0x1]]
    %s131 = sld [smem:[#allocation2 + $0x2]]
    %s132 = sld [smem:[#allocation2 + $0x3]]
    %s133 = sld [smem:[#allocation2 + $0x4]]
    %s134 = sld [smem:[#allocation2 + $0x5]]
    %s135 = sld [smem:[#allocation2 + $0x6]]
    %s136 = sld [smem:[#allocation2 + $0x7]]
    %s137 = sld [smem:[#allocation2 + $0x8]]
    %s138 = sld [smem:[#allocation2 + $0x9]]
    %s139 = sld [smem:[#allocation2 + $0xa]]
    %s140 = sld [smem:[#allocation2 + $0xb]]
    %s141 = sld [smem:[#allocation2 + $0xc]]
    %s142 = sld [smem:[#allocation2 + $0xd]]
    %s143 = sld [smem:[#allocation2 + $0xe]]
    %s144 = sld [smem:[#allocation2 + $0xf]]
    %s145 = sld [smem:[#allocation2 + $0x10]]
    %s146 = sld [smem:[#allocation2 + $0x11]]
    %s147 = sld [smem:[#allocation2 + $0x12]]
    %s148 = sld [smem:[#allocation2 + $0x13]]
    %s149 = sld [smem:[#allocation2 + $0x14]]
    %s150 = sld [smem:[#allocation2 + $0x15]]
    %s151 = sld [smem:[#allocation2 + $0x16]]
    %s152 = sld [smem:[#allocation2 + $0x17]]
    %s153 = sld [smem:[#allocation2 + $0x18]]
    %s154 = sld [smem:[#allocation2 + $0x19]]
    %s155 = sld [smem:[#allocation2 + $0x1a]]
    %s156 = sld [smem:[#allocation2 + $0x1b]]
    %s157 = sld [smem:[#allocation2 + $0x1c]]
    %s158 = sld [smem:[#allocation2 + $0x1d]]
    %s159 = sld [smem:[#allocation2 + $0x1e]]
    %s160 = sld [smem:[#allocation2 + $0x1f]]
    %s161 = sld [smem:[#allocation2 + $0x20]]
    %s162 = sld [smem:[#allocation2 + $0x21]]
    %s163 = sld [smem:[#allocation2 + $0x22]]
    %s164 = sld [smem:[#allocation2 + $0x23]]
    %s165 = sld [smem:[#allocation2 + $0x24]]
    %s166 = sld [smem:[#allocation2 + $0x25]]
    %s167 = sld [smem:[#allocation2 + $0x26]]
    %s168 = sld [smem:[#allocation2 + $0x27]]
    %s169 = sld [smem:[#allocation2 + $0x28]]
    %s170 = sld [smem:[#allocation2 + $0x29]]
    %s171 = sld [smem:[#allocation2 + $0x2a]]
    %s172 = sld [smem:[#allocation2 + $0x2b]]
    %s173 = sld [smem:[#allocation2 + $0x2c]]
    %s174 = sld [smem:[#allocation2 + $0x2d]]
    %s175 = sld [smem:[#allocation2 + $0x2e]]
    %s176 = sld [smem:[#allocation2 + $0x2f]]
    %s177 = sld [smem:[#allocation2 + $0x30]]
    %s178 = sld [smem:[#allocation2 + $0x31]]
    %s179 = sld [smem:[#allocation2 + $0x32]]
    %s180 = sld [smem:[#allocation2 + $0x33]]
    %s181 = sld [smem:[#allocation2 + $0x34]]
    %s182 = sld [smem:[#allocation2 + $0x35]]
    %s183 = sld [smem:[#allocation2 + $0x36]]
    %s184 = sld [smem:[#allocation2 + $0x37]]
    %s185 = sld [smem:[#allocation2 + $0x38]]
    %s186 = sld [smem:[#allocation2 + $0x39]]
    %s187 = sld [smem:[#allocation2 + $0x3a]]
    %s188 = sld [smem:[#allocation2 + $0x3b]]
    %s189 = sld [smem:[#allocation2 + $0x3c]]
    %s190 = sld [smem:[#allocation2 + $0x3d]]
    %s191 = sld [smem:[#allocation2 + $0x3e]]
    %s192 = sld [smem:[#allocation2 + $0x3f]]
    %s193 = sld [smem:[#allocation2 + $0x40]]
    %s194 = sld [smem:[#allocation2 + $0x41]]
    %s195 = sld [smem:[#allocation2 + $0x42]]
    %s196 = sld [smem:[#allocation2 + $0x43]]
    %s197 = sld [smem:[#allocation2 + $0x44]]
    %s198 = sld [smem:[#allocation2 + $0x45]]
    %s199 = sld [smem:[#allocation2 + $0x46]]
    %s200 = sld [smem:[#allocation2 + $0x47]]
    %s201 = sld [smem:[#allocation2 + $0x48]]
    %s202 = sld [smem:[#allocation2 + $0x49]]
    %s203 = sld [smem:[#allocation2 + $0x4a]]
    %s204 = sld [smem:[#allocation2 + $0x4b]]
    %s205 = sld [smem:[#allocation2 + $0x4c]]
    %s206 = sld [smem:[#allocation2 + $0x4d]]
    %s207 = sld [smem:[#allocation2 + $0x4e]]
    %s208 = sld [smem:[#allocation2 + $0x4f]]
    %s209 = sld [smem:[#allocation2 + $0x50]]
    %s210 = sld [smem:[#allocation2 + $0x51]]
    %s211 = sld [smem:[#allocation2 + $0x52]]
    %s212 = sld [smem:[#allocation2 + $0x53]]
    %s213 = sld [smem:[#allocation2 + $0x54]]
    %s214 = sld [smem:[#allocation2 + $0x55]]
    %s215 = sld [smem:[#allocation2 + $0x56]]
    %s216 = sld [smem:[#allocation2 + $0x57]]
    %s217 = sld [smem:[#allocation2 + $0x58]]
    %s218 = sld [smem:[#allocation2 + $0x59]]
    %s219 = sld [smem:[#allocation2 + $0x5a]]
    %s220 = sld [smem:[#allocation2 + $0x5b]]
    %s221 = sld [smem:[#allocation2 + $0x5c]]
    %s222 = sld [smem:[#allocation2 + $0x5d]]
    %s223 = sld [smem:[#allocation2 + $0x5e]]
    %s224 = sld [smem:[#allocation2 + $0x5f]]
    %s225 = sld [smem:[#allocation2 + $0x60]]
    %s226 = sld [smem:[#allocation2 + $0x61]]
    %s227 = sld [smem:[#allocation2 + $0x62]]
    %s228 = sld [smem:[#allocation2 + $0x63]]
    %s229 = sld [smem:[#allocation2 + $0x64]]
    %s230 = sld [smem:[#allocation2 + $0x65]]
    %s231 = sld [smem:[#allocation2 + $0x66]]
    %s232 = sld [smem:[#allocation2 + $0x67]]
    %s233 = sld [smem:[#allocation2 + $0x68]]
    %s234 = sld [smem:[#allocation2 + $0x69]]
    %s235 = sld [smem:[#allocation2 + $0x6a]]
    %s236 = sld [smem:[#allocation2 + $0x6b]]
    %s237 = sld [smem:[#allocation2 + $0x6c]]
    %s238 = sld [smem:[#allocation2 + $0x6d]]
    %s239 = sld [smem:[#allocation2 + $0x6e]]
    %s240 = sld [smem:[#allocation2 + $0x6f]]
    %s241 = sld [smem:[#allocation2 + $0x70]]
    %s242 = sld [smem:[#allocation2 + $0x71]]
    %s243 = sld [smem:[#allocation2 + $0x72]]
    %s244 = sld [smem:[#allocation2 + $0x73]]
    %s245 = sld [smem:[#allocation2 + $0x74]]
    %s246 = sld [smem:[#allocation2 + $0x75]]
    %s247 = sld [smem:[#allocation2 + $0x76]]
    %s248 = sld [smem:[#allocation2 + $0x77]]
    %s249 = sld [smem:[#allocation2 + $0x78]]
    %s250 = sld [smem:[#allocation2 + $0x79]]
    %s251 = sld [smem:[#allocation2 + $0x7a]]
    %s252 = sld [smem:[#allocation2 + $0x7b]]
    %s253 = sld [smem:[#allocation2 + $0x7c]]
    %s254 = sld [smem:[#allocation2 + $0x7d]]
    %s255 = sld [smem:[#allocation2 + $0x7e]]
    %s256 = sld [smem:[#allocation2 + $0x7f]]
    %s257 = sld [smem:[#allocation2 + $0x80]]
    %s258 = sld [smem:[#allocation2 + $0x81]]
    %s259 = sld [smem:[#allocation2 + $0x82]]
    %s260 = sld [smem:[#allocation2 + $0x83]]
    %s261 = sld [smem:[#allocation2 + $0x84]]
    %s262 = sld [smem:[#allocation2 + $0x85]]
    %s263 = sld [smem:[#allocation2 + $0x86]]
    %s264 = sld [smem:[#allocation2 + $0x87]]
    %s265 = sld [smem:[#allocation2 + $0x88]]
    %s266 = sld [smem:[#allocation2 + $0x89]]
    %s267 = sld [smem:[#allocation2 + $0x8a]]
    %s268 = sld [smem:[#allocation2 + $0x8b]]
    %s269 = sld [smem:[#allocation2 + $0x8c]]
    %s270 = sld [smem:[#allocation2 + $0x8d]]
    %s271 = sld [smem:[#allocation2 + $0x8e]]
    %s272 = sld [smem:[#allocation2 + $0x8f]]
    %s273 = sld [smem:[#allocation9]]
    %s274 = sld [smem:[#allocation9 + $0x1]]
    %s275 = sld [smem:[#allocation9 + $0x2]]
    %s276 = sld [smem:[#allocation9 + $0x3]]
    %s277 = sld [smem:[#allocation9 + $0x4]]
    %s278 = sld [smem:[#allocation9 + $0x5]]
    %s279 = sld [smem:[#allocation9 + $0x6]]
    %s280 = sld [smem:[#allocation9 + $0x7]]
    %s281 = sld [smem:[#allocation9 + $0x8]]
    %s282 = sld [smem:[#allocation9 + $0x9]]
    %s283 = sld [smem:[#allocation9 + $0xa]]
    %s284 = sld [smem:[#allocation9 + $0xb]]
    %s285 = sld [smem:[#allocation9 + $0xc]]
    %s286 = sld [smem:[#allocation9 + $0xd]]
    %s287 = sld [smem:[#allocation9 + $0xe]]
    %s288 = sld [smem:[#allocation9 + $0xf]]
    %s289 = sld [smem:[#allocation9 + $0x10]]
    %s290 = sld [smem:[#allocation9 + $0x11]]
    %s291 = sld [smem:[#allocation9 + $0x12]]
    %s292 = sld [smem:[#allocation9 + $0x13]]
    %s293 = sld [smem:[#allocation9 + $0x14]]
    %s294 = sld [smem:[#allocation9 + $0x15]]
    %s295 = sld [smem:[#allocation9 + $0x16]]
    %s296 = sld [smem:[#allocation9 + $0x17]]
    %s297 = sld [smem:[#allocation9 + $0x18]]
    %s298 = sld [smem:[#allocation9 + $0x19]]
    %s299 = sld [smem:[#allocation9 + $0x1a]]
    %s300 = sld [smem:[#allocation9 + $0x1b]]
    %s301 = sld [smem:[#allocation9 + $0x1c]]
    %s302 = sld [smem:[#allocation9 + $0x1d]]
    %s303 = sld [smem:[#allocation9 + $0x1e]]
    %s304 = sld [smem:[#allocation9 + $0x1f]]
    %s305 = sld [smem:[#allocation9 + $0x20]]
    %s306 = sld [smem:[#allocation9 + $0x21]]
    %s307 = sld [smem:[#allocation9 + $0x22]]
    %s308 = sld [smem:[#allocation9 + $0x23]]
    %s309 = sld [smem:[#allocation9 + $0x24]]
    %s310 = sld [smem:[#allocation9 + $0x25]]
    %s311 = sld [smem:[#allocation9 + $0x26]]
    %s312 = sld [smem:[#allocation9 + $0x27]]
    %s313 = sld [smem:[#allocation9 + $0x28]]
    %s314 = sld [smem:[#allocation9 + $0x29]]
    %s315 = sld [smem:[#allocation9 + $0x2a]]
    %s316 = sld [smem:[#allocation9 + $0x2b]]
    %s317 = sld [smem:[#allocation9 + $0x2c]]
    %s318 = sld [smem:[#allocation9 + $0x2d]]
    %s319 = sld [smem:[#allocation9 + $0x2e]]
    %s320 = sld [smem:[#allocation9 + $0x2f]]
    %s321 = sld [smem:[#allocation9 + $0x30]]
    %s322 = sld [smem:[#allocation9 + $0x31]]
    %s323 = sld [smem:[#allocation9 + $0x32]]
    %s324 = sld [smem:[#allocation9 + $0x33]]
    %s325 = sld [smem:[#allocation9 + $0x34]]
    %s326 = sld [smem:[#allocation9 + $0x35]]
    %s327 = sld [smem:[#allocation9 + $0x36]]
    %s328 = sld [smem:[#allocation9 + $0x37]]
    %s329 = sld [smem:[#allocation9 + $0x38]]
    %s330 = sld [smem:[#allocation9 + $0x39]]
    %s331 = sld [smem:[#allocation9 + $0x3a]]
    %s332 = sld [smem:[#allocation9 + $0x3b]]
    %s333 = sld [smem:[#allocation9 + $0x3c]]
    %s334 = sld [smem:[#allocation9 + $0x3d]]
    %s335 = sld [smem:[#allocation9 + $0x3e]]
    %s336 = sld [smem:[#allocation9 + $0x3f]]
    %s337 = sld [smem:[#allocation9 + $0x40]]
    %s338 = sld [smem:[#allocation9 + $0x41]]
    %s339 = sld [smem:[#allocation9 + $0x42]]
    %s340 = sld [smem:[#allocation9 + $0x43]]
    %s341 = sld [smem:[#allocation9 + $0x44]]
    %s342 = sld [smem:[#allocation9 + $0x45]]
    %s343 = sld [smem:[#allocation9 + $0x46]]
    %s344 = sld [smem:[#allocation9 + $0x47]]
    %s345 = sld [smem:[#allocation9 + $0x48]]
    %s346 = sld [smem:[#allocation9 + $0x49]]
    %s347 = sld [smem:[#allocation9 + $0x4a]]
    %s348 = sld [smem:[#allocation9 + $0x4b]]
    %s349 = sld [smem:[#allocation9 + $0x4c]]
    %s350 = sld [smem:[#allocation9 + $0x4d]]
    %s351 = sld [smem:[#allocation9 + $0x4e]]
    %s352 = sld [smem:[#allocation9 + $0x4f]]
    %s353 = sld [smem:[#allocation9 + $0x50]]
    %s354 = sld [smem:[#allocation9 + $0x51]]
    %s355 = sld [smem:[#allocation9 + $0x52]]
    %s356 = sld [smem:[#allocation9 + $0x53]]
    %s357 = sld [smem:[#allocation9 + $0x54]]
    %s358 = sld [smem:[#allocation9 + $0x55]]
    %s359 = sld [smem:[#allocation9 + $0x56]]
    %s360 = sld [smem:[#allocation9 + $0x57]]
    %s361 = sld [smem:[#allocation9 + $0x58]]
    %s362 = sld [smem:[#allocation9 + $0x59]]
    %s363 = sld [smem:[#allocation9 + $0x5a]]
    %s364 = sld [smem:[#allocation9 + $0x5b]]
    %s365 = sld [smem:[#allocation9 + $0x5c]]
    %s366 = sld [smem:[#allocation9 + $0x5d]]
    %s367 = sld [smem:[#allocation9 + $0x5e]]
    %s368 = sld [smem:[#allocation9 + $0x5f]]
    %s369 = sld [smem:[#allocation9 + $0x60]]
    %s370 = sld [smem:[#allocation9 + $0x61]]
    %s371 = sld [smem:[#allocation9 + $0x62]]
    %s372 = sld [smem:[#allocation9 + $0x63]]
    %s373 = sld [smem:[#allocation9 + $0x64]]
    %s374 = sld [smem:[#allocation9 + $0x65]]
    %s375 = sld [smem:[#allocation9 + $0x66]]
    %s376 = sld [smem:[#allocation9 + $0x67]]
    %s377 = sld [smem:[#allocation9 + $0x68]]
    %s378 = sld [smem:[#allocation9 + $0x69]]
    %s379 = sld [smem:[#allocation9 + $0x6a]]
    %s380 = sld [smem:[#allocation9 + $0x6b]]
    %s381 = sld [smem:[#allocation9 + $0x6c]]
    %s382 = sld [smem:[#allocation9 + $0x6d]]
    %s383 = sld [smem:[#allocation9 + $0x6e]]
    %s384 = sld [smem:[#allocation9 + $0x6f]]
    %s385 = sld [smem:[#allocation9 + $0x70]]
    %s386 = sld [smem:[#allocation9 + $0x71]]
    %s387 = sld [smem:[#allocation9 + $0x72]]
    %s388 = sld [smem:[#allocation9 + $0x73]]
    %s389 = sld [smem:[#allocation9 + $0x74]]
    %s390 = sld [smem:[#allocation9 + $0x75]]
    %s391 = sld [smem:[#allocation9 + $0x76]]
    %s392 = sld [smem:[#allocation9 + $0x77]]
    %s393 = sld [smem:[#allocation9 + $0x78]]
    %s394 = sld [smem:[#allocation9 + $0x79]]
    %s395 = sld [smem:[#allocation9 + $0x7a]]
    %s396 = sld [smem:[#allocation9 + $0x7b]]
    %s397 = sld [smem:[#allocation9 + $0x7c]]
    %s398 = sld [smem:[#allocation9 + $0x7d]]
    %s399 = sld [smem:[#allocation9 + $0x7e]]
    %s400 = sld [smem:[#allocation9 + $0x7f]]
    %s401 = sld [smem:[#allocation9 + $0x80]]
    %s402 = sld [smem:[#allocation9 + $0x81]]
    %s403 = sld [smem:[#allocation9 + $0x82]]
    %s404 = sld [smem:[#allocation9 + $0x83]]
    %s405 = sld [smem:[#allocation9 + $0x84]]
    %s406 = sld [smem:[#allocation9 + $0x85]]
    %s407 = sld [smem:[#allocation9 + $0x86]]
    %s408 = sld [smem:[#allocation9 + $0x87]]
    %s409 = sld [smem:[#allocation9 + $0x88]]
    %s410 = sld [smem:[#allocation9 + $0x89]]
    %s411 = sld [smem:[#allocation9 + $0x8a]]
    %s412 = sld [smem:[#allocation9 + $0x8b]]
    %s413 = sld [smem:[#allocation9 + $0x8c]]
    %s414 = sld [smem:[#allocation9 + $0x8d]]
    %s415 = sld [smem:[#allocation9 + $0x8e]]
    %s416 = sld [smem:[#allocation9 + $0x8f]]
    %s417 = sld [smem:[#allocation4]]
    %s418 = sld [smem:[#allocation4 + $0x1]]
    %s419 = sld [smem:[#allocation4 + $0x2]]
    %s420 = sld [smem:[#allocation4 + $0x3]]
    %s421 = sld [smem:[#allocation10]]
    %s422 = sld [smem:[#allocation10 + $0x1]]
    %s423 = sld [smem:[#allocation10 + $0x2]]
    %s424 = sld [smem:[#allocation10 + $0x3]]
    %s425 = sld [smem:[#allocation6]]
    %s426 = sld [smem:[#allocation6 + $0x1]]
    %s427 = sld [smem:[#allocation6 + $0x2]]
    %s428 = sld [smem:[#allocation6 + $0x3]]
    %s429 = sld [smem:[#allocation12]]
    %s430 = sld [smem:[#allocation12 + $0x1]]
    %s431 = sld [smem:[#allocation12 + $0x2]]
    %s432 = sld [smem:[#allocation12 + $0x3]]
    %s433 = sld [smem:[#allocation7]]
    %s434 = sld [smem:[#allocation7 + $0x1]]
    %s435 = sld [smem:[#allocation7 + $0x2]]
    %s436 = sld [smem:[#allocation7 + $0x3]]
    %s437 = sld [smem:[#allocation13]]
    %s438 = sld [smem:[#allocation13 + $0x1]]
    %s439 = sld [smem:[#allocation13 + $0x2]]
    %s440 = sld [smem:[#allocation13 + $0x3]]
    %v441 = vlaneseq
    %v442 = vand.u32 %v441, 127
    %v443 = vadd.s32 %v442, 128
    %v444 = vadd.s32 %v442, 256
    %v445 = vadd.s32 %v442, 15
    %v446 = vadd.s32 %v443, 15
    %v447 = vadd.s32 %v444, 15
    %v448 = vand.u32 %v445, 15
    %v449 = vand.u32 %v446, 15
    %v450 = vand.u32 %v447, 15
    %v451 = vand.u32 %v442, 15
    %v452 = vand.u32 %v443, 15
    %vm453 = vcmp.ge.s32.totalorder %v442, 17
    %vm454 = vcmp.ge.s32.totalorder %v443, 17
    %vm455 = vcmp.ge.s32.totalorder %v444, 17
    %vm456 = vcmp.lt.s32.totalorder %v442, 273
    %vm457 = vcmp.lt.s32.totalorder %v443, 273
    %vm458 = vcmp.lt.s32.totalorder %v444, 273
    %vm459 = vmand %vm453, %vm456
    %vm460 = vmand %vm454, %vm457
    %vm461 = vmand %vm455, %vm458
    %vm462 = vcmp.ne.s32.totalorder %v448, 15
    %vm463 = vcmp.ne.s32.totalorder %v449, 15
    %vm464 = vcmp.ne.s32.totalorder %v450, 15
    %vm465 = vcmp.ne.s32.totalorder %v448, 0
    %vm466 = vcmp.ne.s32.totalorder %v449, 0
    %vm467 = vcmp.ne.s32.totalorder %v450, 0
    %vm468 = vcmp.ne.s32.totalorder %v451, 15
    %vm469 = vcmp.ne.s32.totalorder %v452, 15
    %vm470 = vcmp.ne.s32.totalorder %v451, 0
    %vm471 = vcmp.ne.s32.totalorder %v452, 0
    %v472 = vstv %s417
    %v473 = vstv %s418
    %v474 = vstv %s419
    %v475 = vstv %s420
    %v476 = vld [vmem:[%s0] sm:$0x3]
    %v477 = vld [vmem:[%s0 + $0x8] sm:$0x3]
    %v478 = vld [vmem:[%s0 + $0x10] sm:$0x3]
    %v479 = vsel %vm465, %v476, 0.0
    %v480 = vsel %vm466, %v477, 0.0
    %v481 = vsel %vm467, %v478, 0.0
    %v482 = vstv %s129
    %v483 = vmul.f32 %v479, %v482
    %v484 = vmul.f32 %v480, %v482
    %v485 = vmul.f32 %v481, %v482
    %v486 = vadd.f32 %v472, %v483
    %v487 = vadd.f32 %v472, %v484
    %v488 = vadd.f32 %v472, %v485
    %v489 = vstv %s165
    %v490 = vmul.f32 %v479, %v489
    %v491 = vmul.f32 %v480, %v489
    %v492 = vmul.f32 %v481, %v489
    %v493 = vadd.f32 %v473, %v490
    %v494 = vadd.f32 %v473, %v491
    %v495 = vadd.f32 %v473, %v492
    %v496 = vstv %s201
    %v497 = vmul.f32 %v479, %v496
    %v498 = vmul.f32 %v480, %v496
    %v499 = vmul.f32 %v481, %v496
    %v500 = vadd.f32 %v474, %v497
    %v501 = vadd.f32 %v474, %v498
    %v502 = vadd.f32 %v474, %v499
    %v503 = vstv %s237
    %v504 = vmul.f32 %v479, %v503
    %v505 = vmul.f32 %v480, %v503
    %v506 = vmul.f32 %v481, %v503
    %v507 = vadd.f32 %v475, %v504
    %v508 = vadd.f32 %v475, %v505
    %v509 = vadd.f32 %v475, %v506
    %v510 = vstv %s130
    %v511 = vmul.f32 %v476, %v510
    %v512 = vmul.f32 %v477, %v510
    %v513 = vmul.f32 %v478, %v510
    %517 = vrot.lane.b32.xlu0 %v511, 127
    %v518 = vpop.permute.xlu0 %517
    %519 = vrot.lane.b32.xlu0 %v512, 127
    %v520 = vpop.permute.xlu0 %519
    %521 = vrot.lane.b32.xlu0 %v513, 127
    %v522 = vpop.permute.xlu0 %521
    %vm523 = vcmask 1039360
    %v524 = vsel %vm523, %v518, %v520
    %v525 = vsel %vm523, %v520, %v522
    %v529 = vadd.f32 %v486, %v524
    %v530 = vadd.f32 %v487, %v525
    %v531 = vadd.f32 %v488, %v522
    %v532 = vstv %s166
    %v533 = vmul.f32 %v476, %v532
    %v534 = vmul.f32 %v477, %v532
    %v535 = vmul.f32 %v478, %v532
    %539 = vrot.lane.b32.xlu0 %v533, 127
    %v540 = vpop.permute.xlu0 %539
    %541 = vrot.lane.b32.xlu0 %v534, 127
    %v542 = vpop.permute.xlu0 %541
    %543 = vrot.lane.b32.xlu0 %v535, 127
    %v544 = vpop.permute.xlu0 %543
    %v545 = vsel %vm523, %v540, %v542
    %v546 = vsel %vm523, %v542, %v544
    %v550 = vadd.f32 %v493, %v545
    %v551 = vadd.f32 %v494, %v546
    %v552 = vadd.f32 %v495, %v544
    %v553 = vstv %s202
    %v554 = vmul.f32 %v476, %v553
    %v555 = vmul.f32 %v477, %v553
    %v556 = vmul.f32 %v478, %v553
    %560 = vrot.lane.b32.xlu0 %v554, 127
    %v561 = vpop.permute.xlu0 %560
    %562 = vrot.lane.b32.xlu0 %v555, 127
    %v563 = vpop.permute.xlu0 %562
    %564 = vrot.lane.b32.xlu0 %v556, 127
    %v565 = vpop.permute.xlu0 %564
    %v566 = vsel %vm523, %v561, %v563
    %v567 = vsel %vm523, %v563, %v565
    %v571 = vadd.f32 %v500, %v566
    %v572 = vadd.f32 %v501, %v567
    %v573 = vadd.f32 %v502, %v565
    %v574 = vstv %s238
    %v575 = vmul.f32 %v476, %v574
    %v576 = vmul.f32 %v477, %v574
    %v577 = vmul.f32 %v478, %v574
    %581 = vrot.lane.b32.xlu0 %v575, 127
    %v582 = vpop.permute.xlu0 %581
    %583 = vrot.lane.b32.xlu0 %v576, 127
    %v584 = vpop.permute.xlu0 %583
    %585 = vrot.lane.b32.xlu0 %v577, 127
    %v586 = vpop.permute.xlu0 %585
    %v587 = vsel %vm523, %v582, %v584
    %v588 = vsel %vm523, %v584, %v586
    %v592 = vadd.f32 %v507, %v587
    %v593 = vadd.f32 %v508, %v588
    %v594 = vadd.f32 %v509, %v586
    %598 = vrot.lane.b32.xlu0 %v476, 126
    %v599 = vpop.permute.xlu0 %598
    %600 = vrot.lane.b32.xlu0 %v477, 126
    %v601 = vpop.permute.xlu0 %600
    %602 = vrot.lane.b32.xlu0 %v478, 126
    %v603 = vpop.permute.xlu0 %602
    %vm604 = vcmask 1031168
    %v605 = vsel %vm604, %v599, %v601
    %v606 = vsel %vm604, %v601, %v603
    %v610 = vsel %vm462, %v605, 0.0
    %v611 = vsel %vm463, %v606, 0.0
    %v612 = vsel %vm464, %v603, 0.0
    %v613 = vstv %s131
    %v614 = vmul.f32 %v610, %v613
    %v615 = vmul.f32 %v611, %v613
    %v616 = vmul.f32 %v612, %v613
    %v617 = vadd.f32 %v529, %v614
    %v618 = vadd.f32 %v530, %v615
    %v619 = vadd.f32 %v531, %v616
    %v620 = vstv %s167
    %v621 = vmul.f32 %v610, %v620
    %v622 = vmul.f32 %v611, %v620
    %v623 = vmul.f32 %v612, %v620
    %v624 = vadd.f32 %v550, %v621
    %v625 = vadd.f32 %v551, %v622
    %v626 = vadd.f32 %v552, %v623
    %v627 = vstv %s203
    %v628 = vmul.f32 %v610, %v627
    %v629 = vmul.f32 %v611, %v627
    %v630 = vmul.f32 %v612, %v627
    %v631 = vadd.f32 %v571, %v628
    %v632 = vadd.f32 %v572, %v629
    %v633 = vadd.f32 %v573, %v630
    %v634 = vstv %s239
    %v635 = vmul.f32 %v610, %v634
    %v636 = vmul.f32 %v611, %v634
    %v637 = vmul.f32 %v612, %v634
    %v638 = vadd.f32 %v592, %v635
    %v639 = vadd.f32 %v593, %v636
    %v640 = vadd.f32 %v594, %v637
    %641 = vrot.lane.b32.xlu0 %v476, 112
    %v642 = vpop.permute.xlu0 %641
    %643 = vrot.lane.b32.xlu0 %v477, 112
    %v644 = vpop.permute.xlu0 %643
    %645 = vrot.lane.b32.xlu0 %v478, 112
    %v646 = vpop.permute.xlu0 %645
    %vm647 = vcmask 916480
    %v648 = vsel %vm647, %v642, %v644
    %v649 = vsel %vm647, %v644, %v646
    %v653 = vsel %vm465, %v648, 0.0
    %v654 = vsel %vm466, %v649, 0.0
    %v655 = vsel %vm467, %v646, 0.0
    %v656 = vstv %s132
    %v657 = vmul.f32 %v653, %v656
    %v658 = vmul.f32 %v654, %v656
    %v659 = vmul.f32 %v655, %v656
    %v660 = vadd.f32 %v617, %v657
    %v661 = vadd.f32 %v618, %v658
    %v662 = vadd.f32 %v619, %v659
    %v663 = vstv %s168
    %v664 = vmul.f32 %v653, %v663
    %v665 = vmul.f32 %v654, %v663
    %v666 = vmul.f32 %v655, %v663
    %v667 = vadd.f32 %v624, %v664
    %v668 = vadd.f32 %v625, %v665
    %v669 = vadd.f32 %v626, %v666
    %v670 = vstv %s204
    %v671 = vmul.f32 %v653, %v670
    %v672 = vmul.f32 %v654, %v670
    %v673 = vmul.f32 %v655, %v670
    %v674 = vadd.f32 %v631, %v671
    %v675 = vadd.f32 %v632, %v672
    %v676 = vadd.f32 %v633, %v673
    %v677 = vstv %s240
    %v678 = vmul.f32 %v653, %v677
    %v679 = vmul.f32 %v654, %v677
    %v680 = vmul.f32 %v655, %v677
    %v681 = vadd.f32 %v638, %v678
    %v682 = vadd.f32 %v639, %v679
    %v683 = vadd.f32 %v640, %v680
    %v684 = vstv %s133
    %v685 = vmul.f32 %v476, %v684
    %v686 = vmul.f32 %v477, %v684
    %v687 = vmul.f32 %v478, %v684
    %691 = vrot.lane.b32.xlu0 %v685, 111
    %v692 = vpop.permute.xlu0 %691
    %693 = vrot.lane.b32.xlu0 %v686, 111
    %v694 = vpop.permute.xlu0 %693
    %695 = vrot.lane.b32.xlu0 %v687, 111
    %v696 = vpop.permute.xlu0 %695
    %vm697 = vcmask 908288
    %v698 = vsel %vm697, %v692, %v694
    %v699 = vsel %vm697, %v694, %v696
    %v703 = vadd.f32 %v660, %v698
    %v704 = vadd.f32 %v661, %v699
    %v705 = vadd.f32 %v662, %v696
    %v706 = vstv %s169
    %v707 = vmul.f32 %v476, %v706
    %v708 = vmul.f32 %v477, %v706
    %v709 = vmul.f32 %v478, %v706
    %713 = vrot.lane.b32.xlu0 %v707, 111
    %v714 = vpop.permute.xlu0 %713
    %715 = vrot.lane.b32.xlu0 %v708, 111
    %v716 = vpop.permute.xlu0 %715
    %717 = vrot.lane.b32.xlu0 %v709, 111
    %v718 = vpop.permute.xlu0 %717
    %v719 = vsel %vm697, %v714, %v716
    %v720 = vsel %vm697, %v716, %v718
    %v724 = vadd.f32 %v667, %v719
    %v725 = vadd.f32 %v668, %v720
    %v726 = vadd.f32 %v669, %v718
    %v727 = vstv %s205
    %v728 = vmul.f32 %v476, %v727
    %v729 = vmul.f32 %v477, %v727
    %v730 = vmul.f32 %v478, %v727
    %734 = vrot.lane.b32.xlu0 %v728, 111
    %v735 = vpop.permute.xlu0 %734
    %736 = vrot.lane.b32.xlu0 %v729, 111
    %v737 = vpop.permute.xlu0 %736
    %738 = vrot.lane.b32.xlu0 %v730, 111
    %v739 = vpop.permute.xlu0 %738
    %v740 = vsel %vm697, %v735, %v737
    %v741 = vsel %vm697, %v737, %v739
    %v745 = vadd.f32 %v674, %v740
    %v746 = vadd.f32 %v675, %v741
    %v747 = vadd.f32 %v676, %v739
    %v748 = vstv %s241
    %v749 = vmul.f32 %v476, %v748
    %v750 = vmul.f32 %v477, %v748
    %v751 = vmul.f32 %v478, %v748
    %755 = vrot.lane.b32.xlu0 %v749, 111
    %v756 = vpop.permute.xlu0 %755
    %757 = vrot.lane.b32.xlu0 %v750, 111
    %v758 = vpop.permute.xlu0 %757
    %759 = vrot.lane.b32.xlu0 %v751, 111
    %v760 = vpop.permute.xlu0 %759
    %v761 = vsel %vm697, %v756, %v758
    %v762 = vsel %vm697, %v758, %v760
    %v766 = vadd.f32 %v681, %v761
    %v767 = vadd.f32 %v682, %v762
    %v768 = vadd.f32 %v683, %v760
    %769 = vrot.lane.b32.xlu0 %v476, 110
    %v770 = vpop.permute.xlu0 %769
    %771 = vrot.lane.b32.xlu0 %v477, 110
    %v772 = vpop.permute.xlu0 %771
    %773 = vrot.lane.b32.xlu0 %v478, 110
    %v774 = vpop.permute.xlu0 %773
    %vm775 = vcmask 900096
    %v776 = vsel %vm775, %v770, %v772
    %v777 = vsel %vm775, %v772, %v774
    %v781 = vsel %vm462, %v776, 0.0
    %v782 = vsel %vm463, %v777, 0.0
    %v783 = vsel %vm464, %v774, 0.0
    %v784 = vstv %s134
    %v785 = vmul.f32 %v781, %v784
    %v786 = vmul.f32 %v782, %v784
    %v787 = vmul.f32 %v783, %v784
    %v788 = vadd.f32 %v703, %v785
    %v789 = vadd.f32 %v704, %v786
    %v790 = vadd.f32 %v705, %v787
    %v791 = vstv %s170
    %v792 = vmul.f32 %v781, %v791
    %v793 = vmul.f32 %v782, %v791
    %v794 = vmul.f32 %v783, %v791
    %v795 = vadd.f32 %v724, %v792
    %v796 = vadd.f32 %v725, %v793
    %v797 = vadd.f32 %v726, %v794
    %v798 = vstv %s206
    %v799 = vmul.f32 %v781, %v798
    %v800 = vmul.f32 %v782, %v798
    %v801 = vmul.f32 %v783, %v798
    %v802 = vadd.f32 %v745, %v799
    %v803 = vadd.f32 %v746, %v800
    %v804 = vadd.f32 %v747, %v801
    %v805 = vstv %s242
    %v806 = vmul.f32 %v781, %v805
    %v807 = vmul.f32 %v782, %v805
    %v808 = vmul.f32 %v783, %v805
    %v809 = vadd.f32 %v766, %v806
    %v810 = vadd.f32 %v767, %v807
    %v811 = vadd.f32 %v768, %v808
    %812 = vrot.lane.b32.xlu0 %v476, 96
    %v813 = vpop.permute.xlu0 %812
    %814 = vrot.lane.b32.xlu0 %v477, 96
    %v815 = vpop.permute.xlu0 %814
    %816 = vrot.lane.b32.xlu0 %v478, 96
    %v817 = vpop.permute.xlu0 %816
    %vm818 = vcmask 785408
    %v819 = vsel %vm818, %v813, %v815
    %v820 = vsel %vm818, %v815, %v817
    %v824 = vsel %vm465, %v819, 0.0
    %v825 = vsel %vm466, %v820, 0.0
    %v826 = vsel %vm467, %v817, 0.0
    %v827 = vstv %s135
    %v828 = vmul.f32 %v824, %v827
    %v829 = vmul.f32 %v825, %v827
    %v830 = vmul.f32 %v826, %v827
    %v831 = vadd.f32 %v788, %v828
    %v832 = vadd.f32 %v789, %v829
    %v833 = vadd.f32 %v790, %v830
    %v834 = vstv %s171
    %v835 = vmul.f32 %v824, %v834
    %v836 = vmul.f32 %v825, %v834
    %v837 = vmul.f32 %v826, %v834
    %v838 = vadd.f32 %v795, %v835
    %v839 = vadd.f32 %v796, %v836
    %v840 = vadd.f32 %v797, %v837
    %v841 = vstv %s207
    %v842 = vmul.f32 %v824, %v841
    %v843 = vmul.f32 %v825, %v841
    %v844 = vmul.f32 %v826, %v841
    %v845 = vadd.f32 %v802, %v842
    %v846 = vadd.f32 %v803, %v843
    %v847 = vadd.f32 %v804, %v844
    %v848 = vstv %s243
    %v849 = vmul.f32 %v824, %v848
    %v850 = vmul.f32 %v825, %v848
    %v851 = vmul.f32 %v826, %v848
    %v852 = vadd.f32 %v809, %v849
    %v853 = vadd.f32 %v810, %v850
    %v854 = vadd.f32 %v811, %v851
    %v855 = vstv %s136
    %v856 = vmul.f32 %v476, %v855
    %v857 = vmul.f32 %v477, %v855
    %v858 = vmul.f32 %v478, %v855
    %862 = vrot.lane.b32.xlu0 %v856, 95
    %v863 = vpop.permute.xlu0 %862
    %864 = vrot.lane.b32.xlu0 %v857, 95
    %v865 = vpop.permute.xlu0 %864
    %866 = vrot.lane.b32.xlu0 %v858, 95
    %v867 = vpop.permute.xlu0 %866
    %vm868 = vcmask 777216
    %v869 = vsel %vm868, %v863, %v865
    %v870 = vsel %vm868, %v865, %v867
    %v874 = vadd.f32 %v831, %v869
    %v875 = vadd.f32 %v832, %v870
    %v876 = vadd.f32 %v833, %v867
    %v877 = vstv %s172
    %v878 = vmul.f32 %v476, %v877
    %v879 = vmul.f32 %v477, %v877
    %v880 = vmul.f32 %v478, %v877
    %884 = vrot.lane.b32.xlu0 %v878, 95
    %v885 = vpop.permute.xlu0 %884
    %886 = vrot.lane.b32.xlu0 %v879, 95
    %v887 = vpop.permute.xlu0 %886
    %888 = vrot.lane.b32.xlu0 %v880, 95
    %v889 = vpop.permute.xlu0 %888
    %v890 = vsel %vm868, %v885, %v887
    %v891 = vsel %vm868, %v887, %v889
    %v895 = vadd.f32 %v838, %v890
    %v896 = vadd.f32 %v839, %v891
    %v897 = vadd.f32 %v840, %v889
    %v898 = vstv %s208
    %v899 = vmul.f32 %v476, %v898
    %v900 = vmul.f32 %v477, %v898
    %v901 = vmul.f32 %v478, %v898
    %905 = vrot.lane.b32.xlu0 %v899, 95
    %v906 = vpop.permute.xlu0 %905
    %907 = vrot.lane.b32.xlu0 %v900, 95
    %v908 = vpop.permute.xlu0 %907
    %909 = vrot.lane.b32.xlu0 %v901, 95
    %v910 = vpop.permute.xlu0 %909
    %v911 = vsel %vm868, %v906, %v908
    %v912 = vsel %vm868, %v908, %v910
    %v916 = vadd.f32 %v845, %v911
    %v917 = vadd.f32 %v846, %v912
    %v918 = vadd.f32 %v847, %v910
    %v919 = vstv %s244
    %v920 = vmul.f32 %v476, %v919
    %v921 = vmul.f32 %v477, %v919
    %v922 = vmul.f32 %v478, %v919
    %926 = vrot.lane.b32.xlu0 %v920, 95
    %v927 = vpop.permute.xlu0 %926
    %928 = vrot.lane.b32.xlu0 %v921, 95
    %v929 = vpop.permute.xlu0 %928
    %930 = vrot.lane.b32.xlu0 %v922, 95
    %v931 = vpop.permute.xlu0 %930
    %v932 = vsel %vm868, %v927, %v929
    %v933 = vsel %vm868, %v929, %v931
    %v937 = vadd.f32 %v852, %v932
    %v938 = vadd.f32 %v853, %v933
    %v939 = vadd.f32 %v854, %v931
    %940 = vrot.lane.b32.xlu0 %v476, 94
    %v941 = vpop.permute.xlu0 %940
    %942 = vrot.lane.b32.xlu0 %v477, 94
    %v943 = vpop.permute.xlu0 %942
    %944 = vrot.lane.b32.xlu0 %v478, 94
    %v945 = vpop.permute.xlu0 %944
    %vm946 = vcmask 769024
    %v947 = vsel %vm946, %v941, %v943
    %v948 = vsel %vm946, %v943, %v945
    %v952 = vsel %vm462, %v947, 0.0
    %v953 = vsel %vm463, %v948, 0.0
    %v954 = vsel %vm464, %v945, 0.0
    %v955 = vstv %s137
    %v956 = vmul.f32 %v952, %v955
    %v957 = vmul.f32 %v953, %v955
    %v958 = vmul.f32 %v954, %v955
    %v959 = vadd.f32 %v874, %v956
    %v960 = vadd.f32 %v875, %v957
    %v961 = vadd.f32 %v876, %v958
    %v962 = vstv %s173
    %v963 = vmul.f32 %v952, %v962
    %v964 = vmul.f32 %v953, %v962
    %v965 = vmul.f32 %v954, %v962
    %v966 = vadd.f32 %v895, %v963
    %v967 = vadd.f32 %v896, %v964
    %v968 = vadd.f32 %v897, %v965
    %v969 = vstv %s209
    %v970 = vmul.f32 %v952, %v969
    %v971 = vmul.f32 %v953, %v969
    %v972 = vmul.f32 %v954, %v969
    %v973 = vadd.f32 %v916, %v970
    %v974 = vadd.f32 %v917, %v971
    %v975 = vadd.f32 %v918, %v972
    %v976 = vstv %s245
    %v977 = vmul.f32 %v952, %v976
    %v978 = vmul.f32 %v953, %v976
    %v979 = vmul.f32 %v954, %v976
    %v980 = vadd.f32 %v937, %v977
    %v981 = vadd.f32 %v938, %v978
    %v982 = vadd.f32 %v939, %v979
    %v983 = vld [vmem:[%s0] sm:$0xc]
    %v984 = vld [vmem:[%s0 + $0x8] sm:$0xc]
    %v985 = vld [vmem:[%s0 + $0x10] sm:$0xc]
    %v986 = vsel %vm465, %v983, 0.0
    %v987 = vsel %vm466, %v984, 0.0
    %v988 = vsel %vm467, %v985, 0.0
    %v989 = vstv %s138
    %v990 = vmul.f32 %v986, %v989
    %v991 = vmul.f32 %v987, %v989
    %v992 = vmul.f32 %v988, %v989
    %v996 = vrot.slane %v990, 2
    %v997 = vrot.slane %v991, 2
    %v998 = vrot.slane %v992, 2
    %v1002 = vadd.f32 %v959, %v996
    %v1003 = vadd.f32 %v960, %v997
    %v1004 = vadd.f32 %v961, %v998
    %v1005 = vstv %s174
    %v1006 = vmul.f32 %v986, %v1005
    %v1007 = vmul.f32 %v987, %v1005
    %v1008 = vmul.f32 %v988, %v1005
    %v1012 = vrot.slane %v1006, 2
    %v1013 = vrot.slane %v1007, 2
    %v1014 = vrot.slane %v1008, 2
    %v1018 = vadd.f32 %v966, %v1012
    %v1019 = vadd.f32 %v967, %v1013
    %v1020 = vadd.f32 %v968, %v1014
    %v1021 = vstv %s210
    %v1022 = vmul.f32 %v986, %v1021
    %v1023 = vmul.f32 %v987, %v1021
    %v1024 = vmul.f32 %v988, %v1021
    %v1028 = vrot.slane %v1022, 2
    %v1029 = vrot.slane %v1023, 2
    %v1030 = vrot.slane %v1024, 2
    %v1034 = vadd.f32 %v973, %v1028
    %v1035 = vadd.f32 %v974, %v1029
    %v1036 = vadd.f32 %v975, %v1030
    %v1037 = vstv %s246
    %v1038 = vmul.f32 %v986, %v1037
    %v1039 = vmul.f32 %v987, %v1037
    %v1040 = vmul.f32 %v988, %v1037
    %v1044 = vrot.slane %v1038, 2
    %v1045 = vrot.slane %v1039, 2
    %v1046 = vrot.slane %v1040, 2
    %v1050 = vadd.f32 %v980, %v1044
    %v1051 = vadd.f32 %v981, %v1045
    %v1052 = vadd.f32 %v982, %v1046
    %v1053 = vstv %s139
    %v1054 = vmul.f32 %v983, %v1053
    %v1055 = vmul.f32 %v984, %v1053
    %v1056 = vmul.f32 %v985, %v1053
    %v1060 = vrot.slane %v1054, 2
    %v1061 = vrot.slane %v1055, 2
    %v1062 = vrot.slane %v1056, 2
    %1063 = vrot.lane.b32.xlu0 %v1060, 127
    %v1064 = vpop.permute.xlu0 %1063
    %1065 = vrot.lane.b32.xlu0 %v1061, 127
    %v1066 = vpop.permute.xlu0 %1065
    %1067 = vrot.lane.b32.xlu0 %v1062, 127
    %v1068 = vpop.permute.xlu0 %1067
    %v1069 = vsel %vm523, %v1064, %v1066
    %v1070 = vsel %vm523, %v1066, %v1068
    %v1074 = vadd.f32 %v1002, %v1069
    %v1075 = vadd.f32 %v1003, %v1070
    %v1076 = vadd.f32 %v1004, %v1068
    %v1077 = vstv %s175
    %v1078 = vmul.f32 %v983, %v1077
    %v1079 = vmul.f32 %v984, %v1077
    %v1080 = vmul.f32 %v985, %v1077
    %v1084 = vrot.slane %v1078, 2
    %v1085 = vrot.slane %v1079, 2
    %v1086 = vrot.slane %v1080, 2
    %1087 = vrot.lane.b32.xlu0 %v1084, 127
    %v1088 = vpop.permute.xlu0 %1087
    %1089 = vrot.lane.b32.xlu0 %v1085, 127
    %v1090 = vpop.permute.xlu0 %1089
    %1091 = vrot.lane.b32.xlu0 %v1086, 127
    %v1092 = vpop.permute.xlu0 %1091
    %v1093 = vsel %vm523, %v1088, %v1090
    %v1094 = vsel %vm523, %v1090, %v1092
    %v1098 = vadd.f32 %v1018, %v1093
    %v1099 = vadd.f32 %v1019, %v1094
    %v1100 = vadd.f32 %v1020, %v1092
    %v1101 = vstv %s211
    %v1102 = vmul.f32 %v983, %v1101
    %v1103 = vmul.f32 %v984, %v1101
    %v1104 = vmul.f32 %v985, %v1101
    %v1108 = vrot.slane %v1102, 2
    %v1109 = vrot.slane %v1103, 2
    %v1110 = vrot.slane %v1104, 2
    %1111 = vrot.lane.b32.xlu0 %v1108, 127
    %v1112 = vpop.permute.xlu0 %1111
    %1113 = vrot.lane.b32.xlu0 %v1109, 127
    %v1114 = vpop.permute.xlu0 %1113
    %1115 = vrot.lane.b32.xlu0 %v1110, 127
    %v1116 = vpop.permute.xlu0 %1115
    %v1117 = vsel %vm523, %v1112, %v1114
    %v1118 = vsel %vm523, %v1114, %v1116
    %v1122 = vadd.f32 %v1034, %v1117
    %v1123 = vadd.f32 %v1035, %v1118
    %v1124 = vadd.f32 %v1036, %v1116
    %v1125 = vstv %s247
    %v1126 = vmul.f32 %v983, %v1125
    %v1127 = vmul.f32 %v984, %v1125
    %v1128 = vmul.f32 %v985, %v1125
    %v1132 = vrot.slane %v1126, 2
    %v1133 = vrot.slane %v1127, 2
    %v1134 = vrot.slane %v1128, 2
    %1135 = vrot.lane.b32.xlu0 %v1132, 127
    %v1136 = vpop.permute.xlu0 %1135
    %1137 = vrot.lane.b32.xlu0 %v1133, 127
    %v1138 = vpop.permute.xlu0 %1137
    %1139 = vrot.lane.b32.xlu0 %v1134, 127
    %v1140 = vpop.permute.xlu0 %1139
    %v1141 = vsel %vm523, %v1136, %v1138
    %v1142 = vsel %vm523, %v1138, %v1140
    %v1146 = vadd.f32 %v1050, %v1141
    %v1147 = vadd.f32 %v1051, %v1142
    %v1148 = vadd.f32 %v1052, %v1140
    %v1152 = vrot.slane %v983, 2
    %v1153 = vrot.slane %v984, 2
    %v1154 = vrot.slane %v985, 2
    %1155 = vrot.lane.b32.xlu0 %v1152, 126
    %v1156 = vpop.permute.xlu0 %1155
    %1157 = vrot.lane.b32.xlu0 %v1153, 126
    %v1158 = vpop.permute.xlu0 %1157
    %1159 = vrot.lane.b32.xlu0 %v1154, 126
    %v1160 = vpop.permute.xlu0 %1159
    %v1161 = vsel %vm604, %v1156, %v1158
    %v1162 = vsel %vm604, %v1158, %v1160
    %v1166 = vsel %vm462, %v1161, 0.0
    %v1167 = vsel %vm463, %v1162, 0.0
    %v1168 = vsel %vm464, %v1160, 0.0
    %v1169 = vstv %s140
    %v1170 = vmul.f32 %v1166, %v1169
    %v1171 = vmul.f32 %v1167, %v1169
    %v1172 = vmul.f32 %v1168, %v1169
    %v1173 = vadd.f32 %v1074, %v1170
    %v1174 = vadd.f32 %v1075, %v1171
    %v1175 = vadd.f32 %v1076, %v1172
    %v1176 = vstv %s176
    %v1177 = vmul.f32 %v1166, %v1176
    %v1178 = vmul.f32 %v1167, %v1176
    %v1179 = vmul.f32 %v1168, %v1176
    %v1180 = vadd.f32 %v1098, %v1177
    %v1181 = vadd.f32 %v1099, %v1178
    %v1182 = vadd.f32 %v1100, %v1179
    %v1183 = vstv %s212
    %v1184 = vmul.f32 %v1166, %v1183
    %v1185 = vmul.f32 %v1167, %v1183
    %v1186 = vmul.f32 %v1168, %v1183
    %v1187 = vadd.f32 %v1122, %v1184
    %v1188 = vadd.f32 %v1123, %v1185
    %v1189 = vadd.f32 %v1124, %v1186
    %v1190 = vstv %s248
    %v1191 = vmul.f32 %v1166, %v1190
    %v1192 = vmul.f32 %v1167, %v1190
    %v1193 = vmul.f32 %v1168, %v1190
    %v1194 = vadd.f32 %v1146, %v1191
    %v1195 = vadd.f32 %v1147, %v1192
    %v1196 = vadd.f32 %v1148, %v1193
    %1197 = vrot.lane.b32.xlu0 %v1152, 112
    %v1198 = vpop.permute.xlu0 %1197
    %1199 = vrot.lane.b32.xlu0 %v1153, 112
    %v1200 = vpop.permute.xlu0 %1199
    %1201 = vrot.lane.b32.xlu0 %v1154, 112
    %v1202 = vpop.permute.xlu0 %1201
    %v1203 = vsel %vm647, %v1198, %v1200
    %v1204 = vsel %vm647, %v1200, %v1202
    %v1208 = vsel %vm465, %v1203, 0.0
    %v1209 = vsel %vm466, %v1204, 0.0
    %v1210 = vsel %vm467, %v1202, 0.0
    %v1211 = vstv %s141
    %v1212 = vmul.f32 %v1208, %v1211
    %v1213 = vmul.f32 %v1209, %v1211
    %v1214 = vmul.f32 %v1210, %v1211
    %v1215 = vadd.f32 %v1173, %v1212
    %v1216 = vadd.f32 %v1174, %v1213
    %v1217 = vadd.f32 %v1175, %v1214
    %v1218 = vstv %s177
    %v1219 = vmul.f32 %v1208, %v1218
    %v1220 = vmul.f32 %v1209, %v1218
    %v1221 = vmul.f32 %v1210, %v1218
    %v1222 = vadd.f32 %v1180, %v1219
    %v1223 = vadd.f32 %v1181, %v1220
    %v1224 = vadd.f32 %v1182, %v1221
    %v1225 = vstv %s213
    %v1226 = vmul.f32 %v1208, %v1225
    %v1227 = vmul.f32 %v1209, %v1225
    %v1228 = vmul.f32 %v1210, %v1225
    %v1229 = vadd.f32 %v1187, %v1226
    %v1230 = vadd.f32 %v1188, %v1227
    %v1231 = vadd.f32 %v1189, %v1228
    %v1232 = vstv %s249
    %v1233 = vmul.f32 %v1208, %v1232
    %v1234 = vmul.f32 %v1209, %v1232
    %v1235 = vmul.f32 %v1210, %v1232
    %v1236 = vadd.f32 %v1194, %v1233
    %v1237 = vadd.f32 %v1195, %v1234
    %v1238 = vadd.f32 %v1196, %v1235
    %v1239 = vstv %s142
    %v1240 = vmul.f32 %v983, %v1239
    %v1241 = vmul.f32 %v984, %v1239
    %v1242 = vmul.f32 %v985, %v1239
    %v1246 = vrot.slane %v1240, 2
    %v1247 = vrot.slane %v1241, 2
    %v1248 = vrot.slane %v1242, 2
    %1249 = vrot.lane.b32.xlu0 %v1246, 111
    %v1250 = vpop.permute.xlu0 %1249
    %1251 = vrot.lane.b32.xlu0 %v1247, 111
    %v1252 = vpop.permute.xlu0 %1251
    %1253 = vrot.lane.b32.xlu0 %v1248, 111
    %v1254 = vpop.permute.xlu0 %1253
    %v1255 = vsel %vm697, %v1250, %v1252
    %v1256 = vsel %vm697, %v1252, %v1254
    %v1260 = vadd.f32 %v1215, %v1255
    %v1261 = vadd.f32 %v1216, %v1256
    %v1262 = vadd.f32 %v1217, %v1254
    %v1263 = vstv %s178
    %v1264 = vmul.f32 %v983, %v1263
    %v1265 = vmul.f32 %v984, %v1263
    %v1266 = vmul.f32 %v985, %v1263
    %v1270 = vrot.slane %v1264, 2
    %v1271 = vrot.slane %v1265, 2
    %v1272 = vrot.slane %v1266, 2
    %1273 = vrot.lane.b32.xlu0 %v1270, 111
    %v1274 = vpop.permute.xlu0 %1273
    %1275 = vrot.lane.b32.xlu0 %v1271, 111
    %v1276 = vpop.permute.xlu0 %1275
    %1277 = vrot.lane.b32.xlu0 %v1272, 111
    %v1278 = vpop.permute.xlu0 %1277
    %v1279 = vsel %vm697, %v1274, %v1276
    %v1280 = vsel %vm697, %v1276, %v1278
    %v1284 = vadd.f32 %v1222, %v1279
    %v1285 = vadd.f32 %v1223, %v1280
    %v1286 = vadd.f32 %v1224, %v1278
    %v1287 = vstv %s214
    %v1288 = vmul.f32 %v983, %v1287
    %v1289 = vmul.f32 %v984, %v1287
    %v1290 = vmul.f32 %v985, %v1287
    %v1294 = vrot.slane %v1288, 2
    %v1295 = vrot.slane %v1289, 2
    %v1296 = vrot.slane %v1290, 2
    %1297 = vrot.lane.b32.xlu0 %v1294, 111
    %v1298 = vpop.permute.xlu0 %1297
    %1299 = vrot.lane.b32.xlu0 %v1295, 111
    %v1300 = vpop.permute.xlu0 %1299
    %1301 = vrot.lane.b32.xlu0 %v1296, 111
    %v1302 = vpop.permute.xlu0 %1301
    %v1303 = vsel %vm697, %v1298, %v1300
    %v1304 = vsel %vm697, %v1300, %v1302
    %v1308 = vadd.f32 %v1229, %v1303
    %v1309 = vadd.f32 %v1230, %v1304
    %v1310 = vadd.f32 %v1231, %v1302
    %v1311 = vstv %s250
    %v1312 = vmul.f32 %v983, %v1311
    %v1313 = vmul.f32 %v984, %v1311
    %v1314 = vmul.f32 %v985, %v1311
    %v1318 = vrot.slane %v1312, 2
    %v1319 = vrot.slane %v1313, 2
    %v1320 = vrot.slane %v1314, 2
    %1321 = vrot.lane.b32.xlu0 %v1318, 111
    %v1322 = vpop.permute.xlu0 %1321
    %1323 = vrot.lane.b32.xlu0 %v1319, 111
    %v1324 = vpop.permute.xlu0 %1323
    %1325 = vrot.lane.b32.xlu0 %v1320, 111
    %v1326 = vpop.permute.xlu0 %1325
    %v1327 = vsel %vm697, %v1322, %v1324
    %v1328 = vsel %vm697, %v1324, %v1326
    %v1332 = vadd.f32 %v1236, %v1327
    %v1333 = vadd.f32 %v1237, %v1328
    %v1334 = vadd.f32 %v1238, %v1326
    %1335 = vrot.lane.b32.xlu0 %v1152, 110
    %v1336 = vpop.permute.xlu0 %1335
    %1337 = vrot.lane.b32.xlu0 %v1153, 110
    %v1338 = vpop.permute.xlu0 %1337
    %1339 = vrot.lane.b32.xlu0 %v1154, 110
    %v1340 = vpop.permute.xlu0 %1339
    %v1341 = vsel %vm775, %v1336, %v1338
    %v1342 = vsel %vm775, %v1338, %v1340
    %v1346 = vsel %vm462, %v1341, 0.0
    %v1347 = vsel %vm463, %v1342, 0.0
    %v1348 = vsel %vm464, %v1340, 0.0
    %v1349 = vstv %s143
    %v1350 = vmul.f32 %v1346, %v1349
    %v1351 = vmul.f32 %v1347, %v1349
    %v1352 = vmul.f32 %v1348, %v1349
    %v1353 = vadd.f32 %v1260, %v1350
    %v1354 = vadd.f32 %v1261, %v1351
    %v1355 = vadd.f32 %v1262, %v1352
    %v1356 = vstv %s179
    %v1357 = vmul.f32 %v1346, %v1356
    %v1358 = vmul.f32 %v1347, %v1356
    %v1359 = vmul.f32 %v1348, %v1356
    %v1360 = vadd.f32 %v1284, %v1357
    %v1361 = vadd.f32 %v1285, %v1358
    %v1362 = vadd.f32 %v1286, %v1359
    %v1363 = vstv %s215
    %v1364 = vmul.f32 %v1346, %v1363
    %v1365 = vmul.f32 %v1347, %v1363
    %v1366 = vmul.f32 %v1348, %v1363
    %v1367 = vadd.f32 %v1308, %v1364
    %v1368 = vadd.f32 %v1309, %v1365
    %v1369 = vadd.f32 %v1310, %v1366
    %v1370 = vstv %s251
    %v1371 = vmul.f32 %v1346, %v1370
    %v1372 = vmul.f32 %v1347, %v1370
    %v1373 = vmul.f32 %v1348, %v1370
    %v1374 = vadd.f32 %v1332, %v1371
    %v1375 = vadd.f32 %v1333, %v1372
    %v1376 = vadd.f32 %v1334, %v1373
    %1377 = vrot.lane.b32.xlu0 %v1152, 96
    %v1378 = vpop.permute.xlu0 %1377
    %1379 = vrot.lane.b32.xlu0 %v1153, 96
    %v1380 = vpop.permute.xlu0 %1379
    %1381 = vrot.lane.b32.xlu0 %v1154, 96
    %v1382 = vpop.permute.xlu0 %1381
    %v1383 = vsel %vm818, %v1378, %v1380
    %v1384 = vsel %vm818, %v1380, %v1382
    %v1388 = vsel %vm465, %v1383, 0.0
    %v1389 = vsel %vm466, %v1384, 0.0
    %v1390 = vsel %vm467, %v1382, 0.0
    %v1391 = vstv %s144
    %v1392 = vmul.f32 %v1388, %v1391
    %v1393 = vmul.f32 %v1389, %v1391
    %v1394 = vmul.f32 %v1390, %v1391
    %v1395 = vadd.f32 %v1353, %v1392
    %v1396 = vadd.f32 %v1354, %v1393
    %v1397 = vadd.f32 %v1355, %v1394
    %v1398 = vstv %s180
    %v1399 = vmul.f32 %v1388, %v1398
    %v1400 = vmul.f32 %v1389, %v1398
    %v1401 = vmul.f32 %v1390, %v1398
    %v1402 = vadd.f32 %v1360, %v1399
    %v1403 = vadd.f32 %v1361, %v1400
    %v1404 = vadd.f32 %v1362, %v1401
    %v1405 = vstv %s216
    %v1406 = vmul.f32 %v1388, %v1405
    %v1407 = vmul.f32 %v1389, %v1405
    %v1408 = vmul.f32 %v1390, %v1405
    %v1409 = vadd.f32 %v1367, %v1406
    %v1410 = vadd.f32 %v1368, %v1407
    %v1411 = vadd.f32 %v1369, %v1408
    %v1412 = vstv %s252
    %v1413 = vmul.f32 %v1388, %v1412
    %v1414 = vmul.f32 %v1389, %v1412
    %v1415 = vmul.f32 %v1390, %v1412
    %v1416 = vadd.f32 %v1374, %v1413
    %v1417 = vadd.f32 %v1375, %v1414
    %v1418 = vadd.f32 %v1376, %v1415
    %v1419 = vstv %s145
    %v1420 = vmul.f32 %v983, %v1419
    %v1421 = vmul.f32 %v984, %v1419
    %v1422 = vmul.f32 %v985, %v1419
    %v1426 = vrot.slane %v1420, 2
    %v1427 = vrot.slane %v1421, 2
    %v1428 = vrot.slane %v1422, 2
    %1429 = vrot.lane.b32.xlu0 %v1426, 95
    %v1430 = vpop.permute.xlu0 %1429
    %1431 = vrot.lane.b32.xlu0 %v1427, 95
    %v1432 = vpop.permute.xlu0 %1431
    %1433 = vrot.lane.b32.xlu0 %v1428, 95
    %v1434 = vpop.permute.xlu0 %1433
    %v1435 = vsel %vm868, %v1430, %v1432
    %v1436 = vsel %vm868, %v1432, %v1434
    %v1440 = vadd.f32 %v1395, %v1435
    %v1441 = vadd.f32 %v1396, %v1436
    %v1442 = vadd.f32 %v1397, %v1434
    %v1443 = vstv %s181
    %v1444 = vmul.f32 %v983, %v1443
    %v1445 = vmul.f32 %v984, %v1443
    %v1446 = vmul.f32 %v985, %v1443
    %v1450 = vrot.slane %v1444, 2
    %v1451 = vrot.slane %v1445, 2
    %v1452 = vrot.slane %v1446, 2
    %1453 = vrot.lane.b32.xlu0 %v1450, 95
    %v1454 = vpop.permute.xlu0 %1453
    %1455 = vrot.lane.b32.xlu0 %v1451, 95
    %v1456 = vpop.permute.xlu0 %1455
    %1457 = vrot.lane.b32.xlu0 %v1452, 95
    %v1458 = vpop.permute.xlu0 %1457
    %v1459 = vsel %vm868, %v1454, %v1456
    %v1460 = vsel %vm868, %v1456, %v1458
    %v1464 = vadd.f32 %v1402, %v1459
    %v1465 = vadd.f32 %v1403, %v1460
    %v1466 = vadd.f32 %v1404, %v1458
    %v1467 = vstv %s217
    %v1468 = vmul.f32 %v983, %v1467
    %v1469 = vmul.f32 %v984, %v1467
    %v1470 = vmul.f32 %v985, %v1467
    %v1474 = vrot.slane %v1468, 2
    %v1475 = vrot.slane %v1469, 2
    %v1476 = vrot.slane %v1470, 2
    %1477 = vrot.lane.b32.xlu0 %v1474, 95
    %v1478 = vpop.permute.xlu0 %1477
    %1479 = vrot.lane.b32.xlu0 %v1475, 95
    %v1480 = vpop.permute.xlu0 %1479
    %1481 = vrot.lane.b32.xlu0 %v1476, 95
    %v1482 = vpop.permute.xlu0 %1481
    %v1483 = vsel %vm868, %v1478, %v1480
    %v1484 = vsel %vm868, %v1480, %v1482
    %v1488 = vadd.f32 %v1409, %v1483
    %v1489 = vadd.f32 %v1410, %v1484
    %v1490 = vadd.f32 %v1411, %v1482
    %v1491 = vstv %s253
    %v1492 = vmul.f32 %v983, %v1491
    %v1493 = vmul.f32 %v984, %v1491
    %v1494 = vmul.f32 %v985, %v1491
    %v1498 = vrot.slane %v1492, 2
    %v1499 = vrot.slane %v1493, 2
    %v1500 = vrot.slane %v1494, 2
    %1501 = vrot.lane.b32.xlu0 %v1498, 95
    %v1502 = vpop.permute.xlu0 %1501
    %1503 = vrot.lane.b32.xlu0 %v1499, 95
    %v1504 = vpop.permute.xlu0 %1503
    %1505 = vrot.lane.b32.xlu0 %v1500, 95
    %v1506 = vpop.permute.xlu0 %1505
    %v1507 = vsel %vm868, %v1502, %v1504
    %v1508 = vsel %vm868, %v1504, %v1506
    %v1512 = vadd.f32 %v1416, %v1507
    %v1513 = vadd.f32 %v1417, %v1508
    %v1514 = vadd.f32 %v1418, %v1506
    %1515 = vrot.lane.b32.xlu0 %v1152, 94
    %v1516 = vpop.permute.xlu0 %1515
    %1517 = vrot.lane.b32.xlu0 %v1153, 94
    %v1518 = vpop.permute.xlu0 %1517
    %1519 = vrot.lane.b32.xlu0 %v1154, 94
    %v1520 = vpop.permute.xlu0 %1519
    %v1521 = vsel %vm946, %v1516, %v1518
    %v1522 = vsel %vm946, %v1518, %v1520
    %v1526 = vsel %vm462, %v1521, 0.0
    %v1527 = vsel %vm463, %v1522, 0.0
    %v1528 = vsel %vm464, %v1520, 0.0
    %v1529 = vstv %s146
    %v1530 = vmul.f32 %v1526, %v1529
    %v1531 = vmul.f32 %v1527, %v1529
    %v1532 = vmul.f32 %v1528, %v1529
    %v1533 = vadd.f32 %v1440, %v1530
    %v1534 = vadd.f32 %v1441, %v1531
    %v1535 = vadd.f32 %v1442, %v1532
    %v1536 = vstv %s182
    %v1537 = vmul.f32 %v1526, %v1536
    %v1538 = vmul.f32 %v1527, %v1536
    %v1539 = vmul.f32 %v1528, %v1536
    %v1540 = vadd.f32 %v1464, %v1537
    %v1541 = vadd.f32 %v1465, %v1538
    %v1542 = vadd.f32 %v1466, %v1539
    %v1543 = vstv %s218
    %v1544 = vmul.f32 %v1526, %v1543
    %v1545 = vmul.f32 %v1527, %v1543
    %v1546 = vmul.f32 %v1528, %v1543
    %v1547 = vadd.f32 %v1488, %v1544
    %v1548 = vadd.f32 %v1489, %v1545
    %v1549 = vadd.f32 %v1490, %v1546
    %v1550 = vstv %s254
    %v1551 = vmul.f32 %v1526, %v1550
    %v1552 = vmul.f32 %v1527, %v1550
    %v1553 = vmul.f32 %v1528, %v1550
    %v1554 = vadd.f32 %v1512, %v1551
    %v1555 = vadd.f32 %v1513, %v1552
    %v1556 = vadd.f32 %v1514, %v1553
    %v1557 = vld [vmem:[%s0] sm:$0x30]
    %v1558 = vld [vmem:[%s0 + $0x8] sm:$0x30]
    %v1559 = vld [vmem:[%s0 + $0x10] sm:$0x30]
    %v1560 = vsel %vm465, %v1557, 0.0
    %v1561 = vsel %vm466, %v1558, 0.0
    %v1562 = vsel %vm467, %v1559, 0.0
    %v1563 = vstv %s147
    %v1564 = vmul.f32 %v1560, %v1563
    %v1565 = vmul.f32 %v1561, %v1563
    %v1566 = vmul.f32 %v1562, %v1563
    %v1570 = vrot.slane %v1564, 4
    %v1571 = vrot.slane %v1565, 4
    %v1572 = vrot.slane %v1566, 4
    %v1576 = vadd.f32 %v1533, %v1570
    %v1577 = vadd.f32 %v1534, %v1571
    %v1578 = vadd.f32 %v1535, %v1572
    %v1579 = vstv %s183
    %v1580 = vmul.f32 %v1560, %v1579
    %v1581 = vmul.f32 %v1561, %v1579
    %v1582 = vmul.f32 %v1562, %v1579
    %v1586 = vrot.slane %v1580, 4
    %v1587 = vrot.slane %v1581, 4
    %v1588 = vrot.slane %v1582, 4
    %v1592 = vadd.f32 %v1540, %v1586
    %v1593 = vadd.f32 %v1541, %v1587
    %v1594 = vadd.f32 %v1542, %v1588
    %v1595 = vstv %s219
    %v1596 = vmul.f32 %v1560, %v1595
    %v1597 = vmul.f32 %v1561, %v1595
    %v1598 = vmul.f32 %v1562, %v1595
    %v1602 = vrot.slane %v1596, 4
    %v1603 = vrot.slane %v1597, 4
    %v1604 = vrot.slane %v1598, 4
    %v1608 = vadd.f32 %v1547, %v1602
    %v1609 = vadd.f32 %v1548, %v1603
    %v1610 = vadd.f32 %v1549, %v1604
    %v1611 = vstv %s255
    %v1612 = vmul.f32 %v1560, %v1611
    %v1613 = vmul.f32 %v1561, %v1611
    %v1614 = vmul.f32 %v1562, %v1611
    %v1618 = vrot.slane %v1612, 4
    %v1619 = vrot.slane %v1613, 4
    %v1620 = vrot.slane %v1614, 4
    %v1624 = vadd.f32 %v1554, %v1618
    %v1625 = vadd.f32 %v1555, %v1619
    %v1626 = vadd.f32 %v1556, %v1620
    %v1627 = vstv %s148
    %v1628 = vmul.f32 %v1557, %v1627
    %v1629 = vmul.f32 %v1558, %v1627
    %v1630 = vmul.f32 %v1559, %v1627
    %v1634 = vrot.slane %v1628, 4
    %v1635 = vrot.slane %v1629, 4
    %v1636 = vrot.slane %v1630, 4
    %1637 = vrot.lane.b32.xlu0 %v1634, 127
    %v1638 = vpop.permute.xlu0 %1637
    %1639 = vrot.lane.b32.xlu0 %v1635, 127
    %v1640 = vpop.permute.xlu0 %1639
    %1641 = vrot.lane.b32.xlu0 %v1636, 127
    %v1642 = vpop.permute.xlu0 %1641
    %v1643 = vsel %vm523, %v1638, %v1640
    %v1644 = vsel %vm523, %v1640, %v1642
    %v1648 = vadd.f32 %v1576, %v1643
    %v1649 = vadd.f32 %v1577, %v1644
    %v1650 = vadd.f32 %v1578, %v1642
    %v1651 = vstv %s184
    %v1652 = vmul.f32 %v1557, %v1651
    %v1653 = vmul.f32 %v1558, %v1651
    %v1654 = vmul.f32 %v1559, %v1651
    %v1658 = vrot.slane %v1652, 4
    %v1659 = vrot.slane %v1653, 4
    %v1660 = vrot.slane %v1654, 4
    %1661 = vrot.lane.b32.xlu0 %v1658, 127
    %v1662 = vpop.permute.xlu0 %1661
    %1663 = vrot.lane.b32.xlu0 %v1659, 127
    %v1664 = vpop.permute.xlu0 %1663
    %1665 = vrot.lane.b32.xlu0 %v1660, 127
    %v1666 = vpop.permute.xlu0 %1665
    %v1667 = vsel %vm523, %v1662, %v1664
    %v1668 = vsel %vm523, %v1664, %v1666
    %v1672 = vadd.f32 %v1592, %v1667
    %v1673 = vadd.f32 %v1593, %v1668
    %v1674 = vadd.f32 %v1594, %v1666
    %v1675 = vstv %s220
    %v1676 = vmul.f32 %v1557, %v1675
    %v1677 = vmul.f32 %v1558, %v1675
    %v1678 = vmul.f32 %v1559, %v1675
    %v1682 = vrot.slane %v1676, 4
    %v1683 = vrot.slane %v1677, 4
    %v1684 = vrot.slane %v1678, 4
    %1685 = vrot.lane.b32.xlu0 %v1682, 127
    %v1686 = vpop.permute.xlu0 %1685
    %1687 = vrot.lane.b32.xlu0 %v1683, 127
    %v1688 = vpop.permute.xlu0 %1687
    %1689 = vrot.lane.b32.xlu0 %v1684, 127
    %v1690 = vpop.permute.xlu0 %1689
    %v1691 = vsel %vm523, %v1686, %v1688
    %v1692 = vsel %vm523, %v1688, %v1690
    %v1696 = vadd.f32 %v1608, %v1691
    %v1697 = vadd.f32 %v1609, %v1692
    %v1698 = vadd.f32 %v1610, %v1690
    %v1699 = vstv %s256
    %v1700 = vmul.f32 %v1557, %v1699
    %v1701 = vmul.f32 %v1558, %v1699
    %v1702 = vmul.f32 %v1559, %v1699
    %v1706 = vrot.slane %v1700, 4
    %v1707 = vrot.slane %v1701, 4
    %v1708 = vrot.slane %v1702, 4
    %1709 = vrot.lane.b32.xlu0 %v1706, 127
    %v1710 = vpop.permute.xlu0 %1709
    %1711 = vrot.lane.b32.xlu0 %v1707, 127
    %v1712 = vpop.permute.xlu0 %1711
    %1713 = vrot.lane.b32.xlu0 %v1708, 127
    %v1714 = vpop.permute.xlu0 %1713
    %v1715 = vsel %vm523, %v1710, %v1712
    %v1716 = vsel %vm523, %v1712, %v1714
    %v1720 = vadd.f32 %v1624, %v1715
    %v1721 = vadd.f32 %v1625, %v1716
    %v1722 = vadd.f32 %v1626, %v1714
    %v1726 = vrot.slane %v1557, 4
    %v1727 = vrot.slane %v1558, 4
    %v1728 = vrot.slane %v1559, 4
    %1729 = vrot.lane.b32.xlu0 %v1726, 126
    %v1730 = vpop.permute.xlu0 %1729
    %1731 = vrot.lane.b32.xlu0 %v1727, 126
    %v1732 = vpop.permute.xlu0 %1731
    %1733 = vrot.lane.b32.xlu0 %v1728, 126
    %v1734 = vpop.permute.xlu0 %1733
    %v1735 = vsel %vm604, %v1730, %v1732
    %v1736 = vsel %vm604, %v1732, %v1734
    %v1740 = vsel %vm462, %v1735, 0.0
    %v1741 = vsel %vm463, %v1736, 0.0
    %v1742 = vsel %vm464, %v1734, 0.0
    %v1743 = vstv %s149
    %v1744 = vmul.f32 %v1740, %v1743
    %v1745 = vmul.f32 %v1741, %v1743
    %v1746 = vmul.f32 %v1742, %v1743
    %v1747 = vadd.f32 %v1648, %v1744
    %v1748 = vadd.f32 %v1649, %v1745
    %v1749 = vadd.f32 %v1650, %v1746
    %v1750 = vstv %s185
    %v1751 = vmul.f32 %v1740, %v1750
    %v1752 = vmul.f32 %v1741, %v1750
    %v1753 = vmul.f32 %v1742, %v1750
    %v1754 = vadd.f32 %v1672, %v1751
    %v1755 = vadd.f32 %v1673, %v1752
    %v1756 = vadd.f32 %v1674, %v1753
    %v1757 = vstv %s221
    %v1758 = vmul.f32 %v1740, %v1757
    %v1759 = vmul.f32 %v1741, %v1757
    %v1760 = vmul.f32 %v1742, %v1757
    %v1761 = vadd.f32 %v1696, %v1758
    %v1762 = vadd.f32 %v1697, %v1759
    %v1763 = vadd.f32 %v1698, %v1760
    %v1764 = vstv %s257
    %v1765 = vmul.f32 %v1740, %v1764
    %v1766 = vmul.f32 %v1741, %v1764
    %v1767 = vmul.f32 %v1742, %v1764
    %v1768 = vadd.f32 %v1720, %v1765
    %v1769 = vadd.f32 %v1721, %v1766
    %v1770 = vadd.f32 %v1722, %v1767
    %1771 = vrot.lane.b32.xlu0 %v1726, 112
    %v1772 = vpop.permute.xlu0 %1771
    %1773 = vrot.lane.b32.xlu0 %v1727, 112
    %v1774 = vpop.permute.xlu0 %1773
    %1775 = vrot.lane.b32.xlu0 %v1728, 112
    %v1776 = vpop.permute.xlu0 %1775
    %v1777 = vsel %vm647, %v1772, %v1774
    %v1778 = vsel %vm647, %v1774, %v1776
    %v1782 = vsel %vm465, %v1777, 0.0
    %v1783 = vsel %vm466, %v1778, 0.0
    %v1784 = vsel %vm467, %v1776, 0.0
    %v1785 = vstv %s150
    %v1786 = vmul.f32 %v1782, %v1785
    %v1787 = vmul.f32 %v1783, %v1785
    %v1788 = vmul.f32 %v1784, %v1785
    %v1789 = vadd.f32 %v1747, %v1786
    %v1790 = vadd.f32 %v1748, %v1787
    %v1791 = vadd.f32 %v1749, %v1788
    %v1792 = vstv %s186
    %v1793 = vmul.f32 %v1782, %v1792
    %v1794 = vmul.f32 %v1783, %v1792
    %v1795 = vmul.f32 %v1784, %v1792
    %v1796 = vadd.f32 %v1754, %v1793
    %v1797 = vadd.f32 %v1755, %v1794
    %v1798 = vadd.f32 %v1756, %v1795
    %v1799 = vstv %s222
    %v1800 = vmul.f32 %v1782, %v1799
    %v1801 = vmul.f32 %v1783, %v1799
    %v1802 = vmul.f32 %v1784, %v1799
    %v1803 = vadd.f32 %v1761, %v1800
    %v1804 = vadd.f32 %v1762, %v1801
    %v1805 = vadd.f32 %v1763, %v1802
    %v1806 = vstv %s258
    %v1807 = vmul.f32 %v1782, %v1806
    %v1808 = vmul.f32 %v1783, %v1806
    %v1809 = vmul.f32 %v1784, %v1806
    %v1810 = vadd.f32 %v1768, %v1807
    %v1811 = vadd.f32 %v1769, %v1808
    %v1812 = vadd.f32 %v1770, %v1809
    %v1813 = vstv %s151
    %v1814 = vmul.f32 %v1557, %v1813
    %v1815 = vmul.f32 %v1558, %v1813
    %v1816 = vmul.f32 %v1559, %v1813
    %v1820 = vrot.slane %v1814, 4
    %v1821 = vrot.slane %v1815, 4
    %v1822 = vrot.slane %v1816, 4
    %1823 = vrot.lane.b32.xlu0 %v1820, 111
    %v1824 = vpop.permute.xlu0 %1823
    %1825 = vrot.lane.b32.xlu0 %v1821, 111
    %v1826 = vpop.permute.xlu0 %1825
    %1827 = vrot.lane.b32.xlu0 %v1822, 111
    %v1828 = vpop.permute.xlu0 %1827
    %v1829 = vsel %vm697, %v1824, %v1826
    %v1830 = vsel %vm697, %v1826, %v1828
    %v1834 = vadd.f32 %v1789, %v1829
    %v1835 = vadd.f32 %v1790, %v1830
    %v1836 = vadd.f32 %v1791, %v1828
    %v1837 = vstv %s187
    %v1838 = vmul.f32 %v1557, %v1837
    %v1839 = vmul.f32 %v1558, %v1837
    %v1840 = vmul.f32 %v1559, %v1837
    %v1844 = vrot.slane %v1838, 4
    %v1845 = vrot.slane %v1839, 4
    %v1846 = vrot.slane %v1840, 4
    %1847 = vrot.lane.b32.xlu0 %v1844, 111
    %v1848 = vpop.permute.xlu0 %1847
    %1849 = vrot.lane.b32.xlu0 %v1845, 111
    %v1850 = vpop.permute.xlu0 %1849
    %1851 = vrot.lane.b32.xlu0 %v1846, 111
    %v1852 = vpop.permute.xlu0 %1851
    %v1853 = vsel %vm697, %v1848, %v1850
    %v1854 = vsel %vm697, %v1850, %v1852
    %v1858 = vadd.f32 %v1796, %v1853
    %v1859 = vadd.f32 %v1797, %v1854
    %v1860 = vadd.f32 %v1798, %v1852
    %v1861 = vstv %s223
    %v1862 = vmul.f32 %v1557, %v1861
    %v1863 = vmul.f32 %v1558, %v1861
    %v1864 = vmul.f32 %v1559, %v1861
    %v1868 = vrot.slane %v1862, 4
    %v1869 = vrot.slane %v1863, 4
    %v1870 = vrot.slane %v1864, 4
    %1871 = vrot.lane.b32.xlu0 %v1868, 111
    %v1872 = vpop.permute.xlu0 %1871
    %1873 = vrot.lane.b32.xlu0 %v1869, 111
    %v1874 = vpop.permute.xlu0 %1873
    %1875 = vrot.lane.b32.xlu0 %v1870, 111
    %v1876 = vpop.permute.xlu0 %1875
    %v1877 = vsel %vm697, %v1872, %v1874
    %v1878 = vsel %vm697, %v1874, %v1876
    %v1882 = vadd.f32 %v1803, %v1877
    %v1883 = vadd.f32 %v1804, %v1878
    %v1884 = vadd.f32 %v1805, %v1876
    %v1885 = vstv %s259
    %v1886 = vmul.f32 %v1557, %v1885
    %v1887 = vmul.f32 %v1558, %v1885
    %v1888 = vmul.f32 %v1559, %v1885
    %v1892 = vrot.slane %v1886, 4
    %v1893 = vrot.slane %v1887, 4
    %v1894 = vrot.slane %v1888, 4
    %1895 = vrot.lane.b32.xlu0 %v1892, 111
    %v1896 = vpop.permute.xlu0 %1895
    %1897 = vrot.lane.b32.xlu0 %v1893, 111
    %v1898 = vpop.permute.xlu0 %1897
    %1899 = vrot.lane.b32.xlu0 %v1894, 111
    %v1900 = vpop.permute.xlu0 %1899
    %v1901 = vsel %vm697, %v1896, %v1898
    %v1902 = vsel %vm697, %v1898, %v1900
    %v1906 = vadd.f32 %v1810, %v1901
    %v1907 = vadd.f32 %v1811, %v1902
    %v1908 = vadd.f32 %v1812, %v1900
    %1909 = vrot.lane.b32.xlu0 %v1726, 110
    %v1910 = vpop.permute.xlu0 %1909
    %1911 = vrot.lane.b32.xlu0 %v1727, 110
    %v1912 = vpop.permute.xlu0 %1911
    %1913 = vrot.lane.b32.xlu0 %v1728, 110
    %v1914 = vpop.permute.xlu0 %1913
    %v1915 = vsel %vm775, %v1910, %v1912
    %v1916 = vsel %vm775, %v1912, %v1914
    %v1920 = vsel %vm462, %v1915, 0.0
    %v1921 = vsel %vm463, %v1916, 0.0
    %v1922 = vsel %vm464, %v1914, 0.0
    %v1923 = vstv %s152
    %v1924 = vmul.f32 %v1920, %v1923
    %v1925 = vmul.f32 %v1921, %v1923
    %v1926 = vmul.f32 %v1922, %v1923
    %v1927 = vadd.f32 %v1834, %v1924
    %v1928 = vadd.f32 %v1835, %v1925
    %v1929 = vadd.f32 %v1836, %v1926
    %v1930 = vstv %s188
    %v1931 = vmul.f32 %v1920, %v1930
    %v1932 = vmul.f32 %v1921, %v1930
    %v1933 = vmul.f32 %v1922, %v1930
    %v1934 = vadd.f32 %v1858, %v1931
    %v1935 = vadd.f32 %v1859, %v1932
    %v1936 = vadd.f32 %v1860, %v1933
    %v1937 = vstv %s224
    %v1938 = vmul.f32 %v1920, %v1937
    %v1939 = vmul.f32 %v1921, %v1937
    %v1940 = vmul.f32 %v1922, %v1937
    %v1941 = vadd.f32 %v1882, %v1938
    %v1942 = vadd.f32 %v1883, %v1939
    %v1943 = vadd.f32 %v1884, %v1940
    %v1944 = vstv %s260
    %v1945 = vmul.f32 %v1920, %v1944
    %v1946 = vmul.f32 %v1921, %v1944
    %v1947 = vmul.f32 %v1922, %v1944
    %v1948 = vadd.f32 %v1906, %v1945
    %v1949 = vadd.f32 %v1907, %v1946
    %v1950 = vadd.f32 %v1908, %v1947
    %1951 = vrot.lane.b32.xlu0 %v1726, 96
    %v1952 = vpop.permute.xlu0 %1951
    %1953 = vrot.lane.b32.xlu0 %v1727, 96
    %v1954 = vpop.permute.xlu0 %1953
    %1955 = vrot.lane.b32.xlu0 %v1728, 96
    %v1956 = vpop.permute.xlu0 %1955
    %v1957 = vsel %vm818, %v1952, %v1954
    %v1958 = vsel %vm818, %v1954, %v1956
    %v1962 = vsel %vm465, %v1957, 0.0
    %v1963 = vsel %vm466, %v1958, 0.0
    %v1964 = vsel %vm467, %v1956, 0.0
    %v1965 = vstv %s153
    %v1966 = vmul.f32 %v1962, %v1965
    %v1967 = vmul.f32 %v1963, %v1965
    %v1968 = vmul.f32 %v1964, %v1965
    %v1969 = vadd.f32 %v1927, %v1966
    %v1970 = vadd.f32 %v1928, %v1967
    %v1971 = vadd.f32 %v1929, %v1968
    %v1972 = vstv %s189
    %v1973 = vmul.f32 %v1962, %v1972
    %v1974 = vmul.f32 %v1963, %v1972
    %v1975 = vmul.f32 %v1964, %v1972
    %v1976 = vadd.f32 %v1934, %v1973
    %v1977 = vadd.f32 %v1935, %v1974
    %v1978 = vadd.f32 %v1936, %v1975
    %v1979 = vstv %s225
    %v1980 = vmul.f32 %v1962, %v1979
    %v1981 = vmul.f32 %v1963, %v1979
    %v1982 = vmul.f32 %v1964, %v1979
    %v1983 = vadd.f32 %v1941, %v1980
    %v1984 = vadd.f32 %v1942, %v1981
    %v1985 = vadd.f32 %v1943, %v1982
    %v1986 = vstv %s261
    %v1987 = vmul.f32 %v1962, %v1986
    %v1988 = vmul.f32 %v1963, %v1986
    %v1989 = vmul.f32 %v1964, %v1986
    %v1990 = vadd.f32 %v1948, %v1987
    %v1991 = vadd.f32 %v1949, %v1988
    %v1992 = vadd.f32 %v1950, %v1989
    %v1993 = vstv %s154
    %v1994 = vmul.f32 %v1557, %v1993
    %v1995 = vmul.f32 %v1558, %v1993
    %v1996 = vmul.f32 %v1559, %v1993
    %v2000 = vrot.slane %v1994, 4
    %v2001 = vrot.slane %v1995, 4
    %v2002 = vrot.slane %v1996, 4
    %2003 = vrot.lane.b32.xlu0 %v2000, 95
    %v2004 = vpop.permute.xlu0 %2003
    %2005 = vrot.lane.b32.xlu0 %v2001, 95
    %v2006 = vpop.permute.xlu0 %2005
    %2007 = vrot.lane.b32.xlu0 %v2002, 95
    %v2008 = vpop.permute.xlu0 %2007
    %v2009 = vsel %vm868, %v2004, %v2006
    %v2010 = vsel %vm868, %v2006, %v2008
    %v2014 = vadd.f32 %v1969, %v2009
    %v2015 = vadd.f32 %v1970, %v2010
    %v2016 = vadd.f32 %v1971, %v2008
    %v2017 = vstv %s190
    %v2018 = vmul.f32 %v1557, %v2017
    %v2019 = vmul.f32 %v1558, %v2017
    %v2020 = vmul.f32 %v1559, %v2017
    %v2024 = vrot.slane %v2018, 4
    %v2025 = vrot.slane %v2019, 4
    %v2026 = vrot.slane %v2020, 4
    %2027 = vrot.lane.b32.xlu0 %v2024, 95
    %v2028 = vpop.permute.xlu0 %2027
    %2029 = vrot.lane.b32.xlu0 %v2025, 95
    %v2030 = vpop.permute.xlu0 %2029
    %2031 = vrot.lane.b32.xlu0 %v2026, 95
    %v2032 = vpop.permute.xlu0 %2031
    %v2033 = vsel %vm868, %v2028, %v2030
    %v2034 = vsel %vm868, %v2030, %v2032
    %v2038 = vadd.f32 %v1976, %v2033
    %v2039 = vadd.f32 %v1977, %v2034
    %v2040 = vadd.f32 %v1978, %v2032
    %v2041 = vstv %s226
    %v2042 = vmul.f32 %v1557, %v2041
    %v2043 = vmul.f32 %v1558, %v2041
    %v2044 = vmul.f32 %v1559, %v2041
    %v2048 = vrot.slane %v2042, 4
    %v2049 = vrot.slane %v2043, 4
    %v2050 = vrot.slane %v2044, 4
    %2051 = vrot.lane.b32.xlu0 %v2048, 95
    %v2052 = vpop.permute.xlu0 %2051
    %2053 = vrot.lane.b32.xlu0 %v2049, 95
    %v2054 = vpop.permute.xlu0 %2053
    %2055 = vrot.lane.b32.xlu0 %v2050, 95
    %v2056 = vpop.permute.xlu0 %2055
    %v2057 = vsel %vm868, %v2052, %v2054
    %v2058 = vsel %vm868, %v2054, %v2056
    %v2062 = vadd.f32 %v1983, %v2057
    %v2063 = vadd.f32 %v1984, %v2058
    %v2064 = vadd.f32 %v1985, %v2056
    %v2065 = vstv %s262
    %v2066 = vmul.f32 %v1557, %v2065
    %v2067 = vmul.f32 %v1558, %v2065
    %v2068 = vmul.f32 %v1559, %v2065
    %v2072 = vrot.slane %v2066, 4
    %v2073 = vrot.slane %v2067, 4
    %v2074 = vrot.slane %v2068, 4
    %2075 = vrot.lane.b32.xlu0 %v2072, 95
    %v2076 = vpop.permute.xlu0 %2075
    %2077 = vrot.lane.b32.xlu0 %v2073, 95
    %v2078 = vpop.permute.xlu0 %2077
    %2079 = vrot.lane.b32.xlu0 %v2074, 95
    %v2080 = vpop.permute.xlu0 %2079
    %v2081 = vsel %vm868, %v2076, %v2078
    %v2082 = vsel %vm868, %v2078, %v2080
    %v2086 = vadd.f32 %v1990, %v2081
    %v2087 = vadd.f32 %v1991, %v2082
    %v2088 = vadd.f32 %v1992, %v2080
    %2089 = vrot.lane.b32.xlu0 %v1726, 94
    %v2090 = vpop.permute.xlu0 %2089
    %2091 = vrot.lane.b32.xlu0 %v1727, 94
    %v2092 = vpop.permute.xlu0 %2091
    %2093 = vrot.lane.b32.xlu0 %v1728, 94
    %v2094 = vpop.permute.xlu0 %2093
    %v2095 = vsel %vm946, %v2090, %v2092
    %v2096 = vsel %vm946, %v2092, %v2094
    %v2100 = vsel %vm462, %v2095, 0.0
    %v2101 = vsel %vm463, %v2096, 0.0
    %v2102 = vsel %vm464, %v2094, 0.0
    %v2103 = vstv %s155
    %v2104 = vmul.f32 %v2100, %v2103
    %v2105 = vmul.f32 %v2101, %v2103
    %v2106 = vmul.f32 %v2102, %v2103
    %v2107 = vadd.f32 %v2014, %v2104
    %v2108 = vadd.f32 %v2015, %v2105
    %v2109 = vadd.f32 %v2016, %v2106
    %v2110 = vstv %s191
    %v2111 = vmul.f32 %v2100, %v2110
    %v2112 = vmul.f32 %v2101, %v2110
    %v2113 = vmul.f32 %v2102, %v2110
    %v2114 = vadd.f32 %v2038, %v2111
    %v2115 = vadd.f32 %v2039, %v2112
    %v2116 = vadd.f32 %v2040, %v2113
    %v2117 = vstv %s227
    %v2118 = vmul.f32 %v2100, %v2117
    %v2119 = vmul.f32 %v2101, %v2117
    %v2120 = vmul.f32 %v2102, %v2117
    %v2121 = vadd.f32 %v2062, %v2118
    %v2122 = vadd.f32 %v2063, %v2119
    %v2123 = vadd.f32 %v2064, %v2120
    %v2124 = vstv %s263
    %v2125 = vmul.f32 %v2100, %v2124
    %v2126 = vmul.f32 %v2101, %v2124
    %v2127 = vmul.f32 %v2102, %v2124
    %v2128 = vadd.f32 %v2086, %v2125
    %v2129 = vadd.f32 %v2087, %v2126
    %v2130 = vadd.f32 %v2088, %v2127
    %v2131 = vld [vmem:[%s0] sm:$0xc0]
    %v2132 = vld [vmem:[%s0 + $0x8] sm:$0xc0]
    %v2133 = vld [vmem:[%s0 + $0x10] sm:$0xc0]
    %v2134 = vsel %vm465, %v2131, 0.0
    %v2135 = vsel %vm466, %v2132, 0.0
    %v2136 = vsel %vm467, %v2133, 0.0
    %v2137 = vstv %s156
    %v2138 = vmul.f32 %v2134, %v2137
    %v2139 = vmul.f32 %v2135, %v2137
    %v2140 = vmul.f32 %v2136, %v2137
    %v2144 = vrot.slane %v2138, 6
    %v2145 = vrot.slane %v2139, 6
    %v2146 = vrot.slane %v2140, 6
    %v2150 = vadd.f32 %v2107, %v2144
    %v2151 = vadd.f32 %v2108, %v2145
    %v2152 = vadd.f32 %v2109, %v2146
    %v2153 = vstv %s192
    %v2154 = vmul.f32 %v2134, %v2153
    %v2155 = vmul.f32 %v2135, %v2153
    %v2156 = vmul.f32 %v2136, %v2153
    %v2160 = vrot.slane %v2154, 6
    %v2161 = vrot.slane %v2155, 6
    %v2162 = vrot.slane %v2156, 6
    %v2166 = vadd.f32 %v2114, %v2160
    %v2167 = vadd.f32 %v2115, %v2161
    %v2168 = vadd.f32 %v2116, %v2162
    %v2169 = vstv %s228
    %v2170 = vmul.f32 %v2134, %v2169
    %v2171 = vmul.f32 %v2135, %v2169
    %v2172 = vmul.f32 %v2136, %v2169
    %v2176 = vrot.slane %v2170, 6
    %v2177 = vrot.slane %v2171, 6
    %v2178 = vrot.slane %v2172, 6
    %v2182 = vadd.f32 %v2121, %v2176
    %v2183 = vadd.f32 %v2122, %v2177
    %v2184 = vadd.f32 %v2123, %v2178
    %v2185 = vstv %s264
    %v2186 = vmul.f32 %v2134, %v2185
    %v2187 = vmul.f32 %v2135, %v2185
    %v2188 = vmul.f32 %v2136, %v2185
    %v2192 = vrot.slane %v2186, 6
    %v2193 = vrot.slane %v2187, 6
    %v2194 = vrot.slane %v2188, 6
    %v2198 = vadd.f32 %v2128, %v2192
    %v2199 = vadd.f32 %v2129, %v2193
    %v2200 = vadd.f32 %v2130, %v2194
    %v2201 = vstv %s157
    %v2202 = vmul.f32 %v2131, %v2201
    %v2203 = vmul.f32 %v2132, %v2201
    %v2204 = vmul.f32 %v2133, %v2201
    %v2208 = vrot.slane %v2202, 6
    %v2209 = vrot.slane %v2203, 6
    %v2210 = vrot.slane %v2204, 6
    %2211 = vrot.lane.b32.xlu0 %v2208, 127
    %v2212 = vpop.permute.xlu0 %2211
    %2213 = vrot.lane.b32.xlu0 %v2209, 127
    %v2214 = vpop.permute.xlu0 %2213
    %2215 = vrot.lane.b32.xlu0 %v2210, 127
    %v2216 = vpop.permute.xlu0 %2215
    %v2217 = vsel %vm523, %v2212, %v2214
    %v2218 = vsel %vm523, %v2214, %v2216
    %v2222 = vadd.f32 %v2150, %v2217
    %v2223 = vadd.f32 %v2151, %v2218
    %v2224 = vadd.f32 %v2152, %v2216
    %v2225 = vstv %s193
    %v2226 = vmul.f32 %v2131, %v2225
    %v2227 = vmul.f32 %v2132, %v2225
    %v2228 = vmul.f32 %v2133, %v2225
    %v2232 = vrot.slane %v2226, 6
    %v2233 = vrot.slane %v2227, 6
    %v2234 = vrot.slane %v2228, 6
    %2235 = vrot.lane.b32.xlu0 %v2232, 127
    %v2236 = vpop.permute.xlu0 %2235
    %2237 = vrot.lane.b32.xlu0 %v2233, 127
    %v2238 = vpop.permute.xlu0 %2237
    %2239 = vrot.lane.b32.xlu0 %v2234, 127
    %v2240 = vpop.permute.xlu0 %2239
    %v2241 = vsel %vm523, %v2236, %v2238
    %v2242 = vsel %vm523, %v2238, %v2240
    %v2246 = vadd.f32 %v2166, %v2241
    %v2247 = vadd.f32 %v2167, %v2242
    %v2248 = vadd.f32 %v2168, %v2240
    %v2249 = vstv %s229
    %v2250 = vmul.f32 %v2131, %v2249
    %v2251 = vmul.f32 %v2132, %v2249
    %v2252 = vmul.f32 %v2133, %v2249
    %v2256 = vrot.slane %v2250, 6
    %v2257 = vrot.slane %v2251, 6
    %v2258 = vrot.slane %v2252, 6
    %2259 = vrot.lane.b32.xlu0 %v2256, 127
    %v2260 = vpop.permute.xlu0 %2259
    %2261 = vrot.lane.b32.xlu0 %v2257, 127
    %v2262 = vpop.permute.xlu0 %2261
    %2263 = vrot.lane.b32.xlu0 %v2258, 127
    %v2264 = vpop.permute.xlu0 %2263
    %v2265 = vsel %vm523, %v2260, %v2262
    %v2266 = vsel %vm523, %v2262, %v2264
    %v2270 = vadd.f32 %v2182, %v2265
    %v2271 = vadd.f32 %v2183, %v2266
    %v2272 = vadd.f32 %v2184, %v2264
    %v2273 = vstv %s265
    %v2274 = vmul.f32 %v2131, %v2273
    %v2275 = vmul.f32 %v2132, %v2273
    %v2276 = vmul.f32 %v2133, %v2273
    %v2280 = vrot.slane %v2274, 6
    %v2281 = vrot.slane %v2275, 6
    %v2282 = vrot.slane %v2276, 6
    %2283 = vrot.lane.b32.xlu0 %v2280, 127
    %v2284 = vpop.permute.xlu0 %2283
    %2285 = vrot.lane.b32.xlu0 %v2281, 127
    %v2286 = vpop.permute.xlu0 %2285
    %2287 = vrot.lane.b32.xlu0 %v2282, 127
    %v2288 = vpop.permute.xlu0 %2287
    %v2289 = vsel %vm523, %v2284, %v2286
    %v2290 = vsel %vm523, %v2286, %v2288
    %v2294 = vadd.f32 %v2198, %v2289
    %v2295 = vadd.f32 %v2199, %v2290
    %v2296 = vadd.f32 %v2200, %v2288
    %v2300 = vrot.slane %v2131, 6
    %v2301 = vrot.slane %v2132, 6
    %v2302 = vrot.slane %v2133, 6
    %2303 = vrot.lane.b32.xlu0 %v2300, 126
    %v2304 = vpop.permute.xlu0 %2303
    %2305 = vrot.lane.b32.xlu0 %v2301, 126
    %v2306 = vpop.permute.xlu0 %2305
    %2307 = vrot.lane.b32.xlu0 %v2302, 126
    %v2308 = vpop.permute.xlu0 %2307
    %v2309 = vsel %vm604, %v2304, %v2306
    %v2310 = vsel %vm604, %v2306, %v2308
    %v2314 = vsel %vm462, %v2309, 0.0
    %v2315 = vsel %vm463, %v2310, 0.0
    %v2316 = vsel %vm464, %v2308, 0.0
    %v2317 = vstv %s158
    %v2318 = vmul.f32 %v2314, %v2317
    %v2319 = vmul.f32 %v2315, %v2317
    %v2320 = vmul.f32 %v2316, %v2317
    %v2321 = vadd.f32 %v2222, %v2318
    %v2322 = vadd.f32 %v2223, %v2319
    %v2323 = vadd.f32 %v2224, %v2320
    %v2324 = vstv %s194
    %v2325 = vmul.f32 %v2314, %v2324
    %v2326 = vmul.f32 %v2315, %v2324
    %v2327 = vmul.f32 %v2316, %v2324
    %v2328 = vadd.f32 %v2246, %v2325
    %v2329 = vadd.f32 %v2247, %v2326
    %v2330 = vadd.f32 %v2248, %v2327
    %v2331 = vstv %s230
    %v2332 = vmul.f32 %v2314, %v2331
    %v2333 = vmul.f32 %v2315, %v2331
    %v2334 = vmul.f32 %v2316, %v2331
    %v2335 = vadd.f32 %v2270, %v2332
    %v2336 = vadd.f32 %v2271, %v2333
    %v2337 = vadd.f32 %v2272, %v2334
    %v2338 = vstv %s266
    %v2339 = vmul.f32 %v2314, %v2338
    %v2340 = vmul.f32 %v2315, %v2338
    %v2341 = vmul.f32 %v2316, %v2338
    %v2342 = vadd.f32 %v2294, %v2339
    %v2343 = vadd.f32 %v2295, %v2340
    %v2344 = vadd.f32 %v2296, %v2341
    %2345 = vrot.lane.b32.xlu0 %v2300, 112
    %v2346 = vpop.permute.xlu0 %2345
    %2347 = vrot.lane.b32.xlu0 %v2301, 112
    %v2348 = vpop.permute.xlu0 %2347
    %2349 = vrot.lane.b32.xlu0 %v2302, 112
    %v2350 = vpop.permute.xlu0 %2349
    %v2351 = vsel %vm647, %v2346, %v2348
    %v2352 = vsel %vm647, %v2348, %v2350
    %v2356 = vsel %vm465, %v2351, 0.0
    %v2357 = vsel %vm466, %v2352, 0.0
    %v2358 = vsel %vm467, %v2350, 0.0
    %v2359 = vstv %s159
    %v2360 = vmul.f32 %v2356, %v2359
    %v2361 = vmul.f32 %v2357, %v2359
    %v2362 = vmul.f32 %v2358, %v2359
    %v2363 = vadd.f32 %v2321, %v2360
    %v2364 = vadd.f32 %v2322, %v2361
    %v2365 = vadd.f32 %v2323, %v2362
    %v2366 = vstv %s195
    %v2367 = vmul.f32 %v2356, %v2366
    %v2368 = vmul.f32 %v2357, %v2366
    %v2369 = vmul.f32 %v2358, %v2366
    %v2370 = vadd.f32 %v2328, %v2367
    %v2371 = vadd.f32 %v2329, %v2368
    %v2372 = vadd.f32 %v2330, %v2369
    %v2373 = vstv %s231
    %v2374 = vmul.f32 %v2356, %v2373
    %v2375 = vmul.f32 %v2357, %v2373
    %v2376 = vmul.f32 %v2358, %v2373
    %v2377 = vadd.f32 %v2335, %v2374
    %v2378 = vadd.f32 %v2336, %v2375
    %v2379 = vadd.f32 %v2337, %v2376
    %v2380 = vstv %s267
    %v2381 = vmul.f32 %v2356, %v2380
    %v2382 = vmul.f32 %v2357, %v2380
    %v2383 = vmul.f32 %v2358, %v2380
    %v2384 = vadd.f32 %v2342, %v2381
    %v2385 = vadd.f32 %v2343, %v2382
    %v2386 = vadd.f32 %v2344, %v2383
    %v2387 = vstv %s160
    %v2388 = vmul.f32 %v2131, %v2387
    %v2389 = vmul.f32 %v2132, %v2387
    %v2390 = vmul.f32 %v2133, %v2387
    %v2394 = vrot.slane %v2388, 6
    %v2395 = vrot.slane %v2389, 6
    %v2396 = vrot.slane %v2390, 6
    %2397 = vrot.lane.b32.xlu0 %v2394, 111
    %v2398 = vpop.permute.xlu0 %2397
    %2399 = vrot.lane.b32.xlu0 %v2395, 111
    %v2400 = vpop.permute.xlu0 %2399
    %2401 = vrot.lane.b32.xlu0 %v2396, 111
    %v2402 = vpop.permute.xlu0 %2401
    %v2403 = vsel %vm697, %v2398, %v2400
    %v2404 = vsel %vm697, %v2400, %v2402
    %v2408 = vadd.f32 %v2363, %v2403
    %v2409 = vadd.f32 %v2364, %v2404
    %v2410 = vadd.f32 %v2365, %v2402
    %v2411 = vstv %s196
    %v2412 = vmul.f32 %v2131, %v2411
    %v2413 = vmul.f32 %v2132, %v2411
    %v2414 = vmul.f32 %v2133, %v2411
    %v2418 = vrot.slane %v2412, 6
    %v2419 = vrot.slane %v2413, 6
    %v2420 = vrot.slane %v2414, 6
    %2421 = vrot.lane.b32.xlu0 %v2418, 111
    %v2422 = vpop.permute.xlu0 %2421
    %2423 = vrot.lane.b32.xlu0 %v2419, 111
    %v2424 = vpop.permute.xlu0 %2423
    %2425 = vrot.lane.b32.xlu0 %v2420, 111
    %v2426 = vpop.permute.xlu0 %2425
    %v2427 = vsel %vm697, %v2422, %v2424
    %v2428 = vsel %vm697, %v2424, %v2426
    %v2432 = vadd.f32 %v2370, %v2427
    %v2433 = vadd.f32 %v2371, %v2428
    %v2434 = vadd.f32 %v2372, %v2426
    %v2435 = vstv %s232
    %v2436 = vmul.f32 %v2131, %v2435
    %v2437 = vmul.f32 %v2132, %v2435
    %v2438 = vmul.f32 %v2133, %v2435
    %v2442 = vrot.slane %v2436, 6
    %v2443 = vrot.slane %v2437, 6
    %v2444 = vrot.slane %v2438, 6
    %2445 = vrot.lane.b32.xlu0 %v2442, 111
    %v2446 = vpop.permute.xlu0 %2445
    %2447 = vrot.lane.b32.xlu0 %v2443, 111
    %v2448 = vpop.permute.xlu0 %2447
    %2449 = vrot.lane.b32.xlu0 %v2444, 111
    %v2450 = vpop.permute.xlu0 %2449
    %v2451 = vsel %vm697, %v2446, %v2448
    %v2452 = vsel %vm697, %v2448, %v2450
    %v2456 = vadd.f32 %v2377, %v2451
    %v2457 = vadd.f32 %v2378, %v2452
    %v2458 = vadd.f32 %v2379, %v2450
    %v2459 = vstv %s268
    %v2460 = vmul.f32 %v2131, %v2459
    %v2461 = vmul.f32 %v2132, %v2459
    %v2462 = vmul.f32 %v2133, %v2459
    %v2466 = vrot.slane %v2460, 6
    %v2467 = vrot.slane %v2461, 6
    %v2468 = vrot.slane %v2462, 6
    %2469 = vrot.lane.b32.xlu0 %v2466, 111
    %v2470 = vpop.permute.xlu0 %2469
    %2471 = vrot.lane.b32.xlu0 %v2467, 111
    %v2472 = vpop.permute.xlu0 %2471
    %2473 = vrot.lane.b32.xlu0 %v2468, 111
    %v2474 = vpop.permute.xlu0 %2473
    %v2475 = vsel %vm697, %v2470, %v2472
    %v2476 = vsel %vm697, %v2472, %v2474
    %v2480 = vadd.f32 %v2384, %v2475
    %v2481 = vadd.f32 %v2385, %v2476
    %v2482 = vadd.f32 %v2386, %v2474
    %2483 = vrot.lane.b32.xlu0 %v2300, 110
    %v2484 = vpop.permute.xlu0 %2483
    %2485 = vrot.lane.b32.xlu0 %v2301, 110
    %v2486 = vpop.permute.xlu0 %2485
    %2487 = vrot.lane.b32.xlu0 %v2302, 110
    %v2488 = vpop.permute.xlu0 %2487
    %v2489 = vsel %vm775, %v2484, %v2486
    %v2490 = vsel %vm775, %v2486, %v2488
    %v2494 = vsel %vm462, %v2489, 0.0
    %v2495 = vsel %vm463, %v2490, 0.0
    %v2496 = vsel %vm464, %v2488, 0.0
    %v2497 = vstv %s161
    %v2498 = vmul.f32 %v2494, %v2497
    %v2499 = vmul.f32 %v2495, %v2497
    %v2500 = vmul.f32 %v2496, %v2497
    %v2501 = vadd.f32 %v2408, %v2498
    %v2502 = vadd.f32 %v2409, %v2499
    %v2503 = vadd.f32 %v2410, %v2500
    %v2504 = vstv %s197
    %v2505 = vmul.f32 %v2494, %v2504
    %v2506 = vmul.f32 %v2495, %v2504
    %v2507 = vmul.f32 %v2496, %v2504
    %v2508 = vadd.f32 %v2432, %v2505
    %v2509 = vadd.f32 %v2433, %v2506
    %v2510 = vadd.f32 %v2434, %v2507
    %v2511 = vstv %s233
    %v2512 = vmul.f32 %v2494, %v2511
    %v2513 = vmul.f32 %v2495, %v2511
    %v2514 = vmul.f32 %v2496, %v2511
    %v2515 = vadd.f32 %v2456, %v2512
    %v2516 = vadd.f32 %v2457, %v2513
    %v2517 = vadd.f32 %v2458, %v2514
    %v2518 = vstv %s269
    %v2519 = vmul.f32 %v2494, %v2518
    %v2520 = vmul.f32 %v2495, %v2518
    %v2521 = vmul.f32 %v2496, %v2518
    %v2522 = vadd.f32 %v2480, %v2519
    %v2523 = vadd.f32 %v2481, %v2520
    %v2524 = vadd.f32 %v2482, %v2521
    %2525 = vrot.lane.b32.xlu0 %v2300, 96
    %v2526 = vpop.permute.xlu0 %2525
    %2527 = vrot.lane.b32.xlu0 %v2301, 96
    %v2528 = vpop.permute.xlu0 %2527
    %2529 = vrot.lane.b32.xlu0 %v2302, 96
    %v2530 = vpop.permute.xlu0 %2529
    %v2531 = vsel %vm818, %v2526, %v2528
    %v2532 = vsel %vm818, %v2528, %v2530
    %v2536 = vsel %vm465, %v2531, 0.0
    %v2537 = vsel %vm466, %v2532, 0.0
    %v2538 = vsel %vm467, %v2530, 0.0
    %v2539 = vstv %s162
    %v2540 = vmul.f32 %v2536, %v2539
    %v2541 = vmul.f32 %v2537, %v2539
    %v2542 = vmul.f32 %v2538, %v2539
    %v2543 = vadd.f32 %v2501, %v2540
    %v2544 = vadd.f32 %v2502, %v2541
    %v2545 = vadd.f32 %v2503, %v2542
    %v2546 = vstv %s198
    %v2547 = vmul.f32 %v2536, %v2546
    %v2548 = vmul.f32 %v2537, %v2546
    %v2549 = vmul.f32 %v2538, %v2546
    %v2550 = vadd.f32 %v2508, %v2547
    %v2551 = vadd.f32 %v2509, %v2548
    %v2552 = vadd.f32 %v2510, %v2549
    %v2553 = vstv %s234
    %v2554 = vmul.f32 %v2536, %v2553
    %v2555 = vmul.f32 %v2537, %v2553
    %v2556 = vmul.f32 %v2538, %v2553
    %v2557 = vadd.f32 %v2515, %v2554
    %v2558 = vadd.f32 %v2516, %v2555
    %v2559 = vadd.f32 %v2517, %v2556
    %v2560 = vstv %s270
    %v2561 = vmul.f32 %v2536, %v2560
    %v2562 = vmul.f32 %v2537, %v2560
    %v2563 = vmul.f32 %v2538, %v2560
    %v2564 = vadd.f32 %v2522, %v2561
    %v2565 = vadd.f32 %v2523, %v2562
    %v2566 = vadd.f32 %v2524, %v2563
    %v2567 = vstv %s163
    %v2568 = vmul.f32 %v2131, %v2567
    %v2569 = vmul.f32 %v2132, %v2567
    %v2570 = vmul.f32 %v2133, %v2567
    %v2574 = vrot.slane %v2568, 6
    %v2575 = vrot.slane %v2569, 6
    %v2576 = vrot.slane %v2570, 6
    %2577 = vrot.lane.b32.xlu0 %v2574, 95
    %v2578 = vpop.permute.xlu0 %2577
    %2579 = vrot.lane.b32.xlu0 %v2575, 95
    %v2580 = vpop.permute.xlu0 %2579
    %2581 = vrot.lane.b32.xlu0 %v2576, 95
    %v2582 = vpop.permute.xlu0 %2581
    %v2583 = vsel %vm868, %v2578, %v2580
    %v2584 = vsel %vm868, %v2580, %v2582
    %v2588 = vadd.f32 %v2543, %v2583
    %v2589 = vadd.f32 %v2544, %v2584
    %v2590 = vadd.f32 %v2545, %v2582
    %v2591 = vstv %s199
    %v2592 = vmul.f32 %v2131, %v2591
    %v2593 = vmul.f32 %v2132, %v2591
    %v2594 = vmul.f32 %v2133, %v2591
    %v2598 = vrot.slane %v2592, 6
    %v2599 = vrot.slane %v2593, 6
    %v2600 = vrot.slane %v2594, 6
    %2601 = vrot.lane.b32.xlu0 %v2598, 95
    %v2602 = vpop.permute.xlu0 %2601
    %2603 = vrot.lane.b32.xlu0 %v2599, 95
    %v2604 = vpop.permute.xlu0 %2603
    %2605 = vrot.lane.b32.xlu0 %v2600, 95
    %v2606 = vpop.permute.xlu0 %2605
    %v2607 = vsel %vm868, %v2602, %v2604
    %v2608 = vsel %vm868, %v2604, %v2606
    %v2612 = vadd.f32 %v2550, %v2607
    %v2613 = vadd.f32 %v2551, %v2608
    %v2614 = vadd.f32 %v2552, %v2606
    %v2615 = vstv %s235
    %v2616 = vmul.f32 %v2131, %v2615
    %v2617 = vmul.f32 %v2132, %v2615
    %v2618 = vmul.f32 %v2133, %v2615
    %v2622 = vrot.slane %v2616, 6
    %v2623 = vrot.slane %v2617, 6
    %v2624 = vrot.slane %v2618, 6
    %2625 = vrot.lane.b32.xlu0 %v2622, 95
    %v2626 = vpop.permute.xlu0 %2625
    %2627 = vrot.lane.b32.xlu0 %v2623, 95
    %v2628 = vpop.permute.xlu0 %2627
    %2629 = vrot.lane.b32.xlu0 %v2624, 95
    %v2630 = vpop.permute.xlu0 %2629
    %v2631 = vsel %vm868, %v2626, %v2628
    %v2632 = vsel %vm868, %v2628, %v2630
    %v2636 = vadd.f32 %v2557, %v2631
    %v2637 = vadd.f32 %v2558, %v2632
    %v2638 = vadd.f32 %v2559, %v2630
    %v2639 = vstv %s271
    %v2640 = vmul.f32 %v2131, %v2639
    %v2641 = vmul.f32 %v2132, %v2639
    %v2642 = vmul.f32 %v2133, %v2639
    %v2646 = vrot.slane %v2640, 6
    %v2647 = vrot.slane %v2641, 6
    %v2648 = vrot.slane %v2642, 6
    %2649 = vrot.lane.b32.xlu0 %v2646, 95
    %v2650 = vpop.permute.xlu0 %2649
    %2651 = vrot.lane.b32.xlu0 %v2647, 95
    %v2652 = vpop.permute.xlu0 %2651
    %2653 = vrot.lane.b32.xlu0 %v2648, 95
    %v2654 = vpop.permute.xlu0 %2653
    %v2655 = vsel %vm868, %v2650, %v2652
    %v2656 = vsel %vm868, %v2652, %v2654
    %v2660 = vadd.f32 %v2564, %v2655
    %v2661 = vadd.f32 %v2565, %v2656
    %v2662 = vadd.f32 %v2566, %v2654
    %2663 = vrot.lane.b32.xlu0 %v2300, 94
    %v2664 = vpop.permute.xlu0 %2663
    %2665 = vrot.lane.b32.xlu0 %v2301, 94
    %v2666 = vpop.permute.xlu0 %2665
    %2667 = vrot.lane.b32.xlu0 %v2302, 94
    %v2668 = vpop.permute.xlu0 %2667
    %v2669 = vsel %vm946, %v2664, %v2666
    %v2670 = vsel %vm946, %v2666, %v2668
    %v2674 = vsel %vm462, %v2669, 0.0
    %v2675 = vsel %vm463, %v2670, 0.0
    %v2676 = vsel %vm464, %v2668, 0.0
    %v2677 = vstv %s164
    %v2678 = vmul.f32 %v2674, %v2677
    %v2679 = vmul.f32 %v2675, %v2677
    %v2680 = vmul.f32 %v2676, %v2677
    %v2681 = vadd.f32 %v2588, %v2678
    %v2682 = vadd.f32 %v2589, %v2679
    %v2683 = vadd.f32 %v2590, %v2680
    %v2684 = vstv %s200
    %v2685 = vmul.f32 %v2674, %v2684
    %v2686 = vmul.f32 %v2675, %v2684
    %v2687 = vmul.f32 %v2676, %v2684
    %v2688 = vadd.f32 %v2612, %v2685
    %v2689 = vadd.f32 %v2613, %v2686
    %v2690 = vadd.f32 %v2614, %v2687
    %v2691 = vstv %s236
    %v2692 = vmul.f32 %v2674, %v2691
    %v2693 = vmul.f32 %v2675, %v2691
    %v2694 = vmul.f32 %v2676, %v2691
    %v2695 = vadd.f32 %v2636, %v2692
    %v2696 = vadd.f32 %v2637, %v2693
    %v2697 = vadd.f32 %v2638, %v2694
    %v2698 = vstv %s272
    %v2699 = vmul.f32 %v2674, %v2698
    %v2700 = vmul.f32 %v2675, %v2698
    %v2701 = vmul.f32 %v2676, %v2698
    %v2702 = vadd.f32 %v2660, %v2699
    %v2703 = vadd.f32 %v2661, %v2700
    %v2704 = vadd.f32 %v2662, %v2701
    %v2705 = vsel %vm459, %v2681, 0.0
    %v2706 = vsel %vm460, %v2682, 0.0
    %v2707 = vsel %vm461, %v2683, 0.0
    %vm2708 = vcmask 1041408
    %v2709 = vsel %vm2708, %v2705, 0.0
    %v2710 = vsel %vm2708, %v2706, 0.0
    %v2711 = vadd.f32 %v2709, %v2710
    %vm2712 = vcmask 271360
    %v2713 = vsel %vm2712, %v2707, 0.0
    %v2714 = vadd.f32 %v2711, %v2713
    %2715 = vadd.xlane.f32.xlu0 %v2714
    %v2716 = vpop.xlane.xlu0 %2715
    %v2717 = vrot.slane %v2716, 4
    %v2718 = vadd.f32 %v2716, %v2717
    %v2719 = vrot.slane %v2718, 2
    %v2720 = vadd.f32 %v2718, %v2719
    %v2721 = vrot.slane %v2720, 1
    %v2722 = vadd.f32 %v2720, %v2721
    %s2723 = vtos %v2722
    %v2724 = vmul.f32 %v2705, %v2705
    %v2725 = vmul.f32 %v2706, %v2706
    %v2726 = vmul.f32 %v2707, %v2707
    %v2727 = vsel %vm2708, %v2724, 0.0
    %v2728 = vsel %vm2708, %v2725, 0.0
    %v2729 = vadd.f32 %v2727, %v2728
    %v2730 = vsel %vm2712, %v2726, 0.0
    %v2731 = vadd.f32 %v2729, %v2730
    %2732 = vadd.xlane.f32.xlu0 %v2731
    %v2733 = vpop.xlane.xlu0 %2732
    %v2734 = vrot.slane %v2733, 4
    %v2735 = vadd.f32 %v2733, %v2734
    %v2736 = vrot.slane %v2735, 2
    %v2737 = vadd.f32 %v2735, %v2736
    %v2738 = vrot.slane %v2737, 1
    %v2739 = vadd.f32 %v2737, %v2738
    %s2740 = vtos %v2739
    %s2741 = smul.f32 %s2723, 0.001953125
    %s2742 = smul.f32 %s2740, 0.001953125
    %s2743 = smul.f32 %s2741, %s2741
    %s2744 = ssub.f32 %s2742, %s2743
    %s2745 = sadd.f32 %s2744, 0.8
    %v2746 = vstv %s2745
    %v2747 = vrsqrt.pop %v2746
    %s2748 = vtos %v2747
    %s2749 = smul.f32 %s425, %s2748
    %v2750 = vstv %s2741
    %v2751 = vsub.f32 %v2681, %v2750
    %v2752 = vsub.f32 %v2682, %v2750
    %v2753 = vsub.f32 %v2683, %v2750
    %v2754 = vstv %s2749
    %v2755 = vmul.f32 %v2751, %v2754
    %v2756 = vmul.f32 %v2752, %v2754
    %v2757 = vmul.f32 %v2753, %v2754
    %v2758 = vstv %s433
    %v2759 = vadd.f32 %v2755, %v2758
    %v2760 = vadd.f32 %v2756, %v2758
    %v2761 = vadd.f32 %v2757, %v2758
    %v2762 = vmax.f32 %v2759, 0.0
    %v2763 = vmax.f32 %v2760, 0.0
    %v2764 = vmax.f32 %v2761, 0.0
    %v2765 = vsel %vm459, %v2762, 0.0
    %v2766 = vsel %vm460, %v2763, 0.0
    %v2767 = vsel %vm461, %v2764, 0.0
    %v2768 = vsel %vm459, %v2688, 0.0
    %v2769 = vsel %vm460, %v2689, 0.0
    %v2770 = vsel %vm461, %v2690, 0.0
    %v2771 = vsel %vm2708, %v2768, 0.0
    %v2772 = vsel %vm2708, %v2769, 0.0
    %v2773 = vadd.f32 %v2771, %v2772
    %v2774 = vsel %vm2712, %v2770, 0.0
    %v2775 = vadd.f32 %v2773, %v2774
    %2776 = vadd.xlane.f32.xlu0 %v2775
    %v2777 = vpop.xlane.xlu0 %2776
    %v2778 = vrot.slane %v2777, 4
    %v2779 = vadd.f32 %v2777, %v2778
    %v2780 = vrot.slane %v2779, 2
    %v2781 = vadd.f32 %v2779, %v2780
    %v2782 = vrot.slane %v2781, 1
    %v2783 = vadd.f32 %v2781, %v2782
    %s2784 = vtos %v2783
    %v2785 = vmul.f32 %v2768, %v2768
    %v2786 = vmul.f32 %v2769, %v2769
    %v2787 = vmul.f32 %v2770, %v2770
    %v2788 = vsel %vm2708, %v2785, 0.0
    %v2789 = vsel %vm2708, %v2786, 0.0
    %v2790 = vadd.f32 %v2788, %v2789
    %v2791 = vsel %vm2712, %v2787, 0.0
    %v2792 = vadd.f32 %v2790, %v2791
    %2793 = vadd.xlane.f32.xlu0 %v2792
    %v2794 = vpop.xlane.xlu0 %2793
    %v2795 = vrot.slane %v2794, 4
    %v2796 = vadd.f32 %v2794, %v2795
    %v2797 = vrot.slane %v2796, 2
    %v2798 = vadd.f32 %v2796, %v2797
    %v2799 = vrot.slane %v2798, 1
    %v2800 = vadd.f32 %v2798, %v2799
    %s2801 = vtos %v2800
    %s2802 = smul.f32 %s2784, 0.001953125
    %s2803 = smul.f32 %s2801, 0.001953125
    %s2804 = smul.f32 %s2802, %s2802
    %s2805 = ssub.f32 %s2803, %s2804
    %s2806 = sadd.f32 %s2805, 0.8
    %v2807 = vstv %s2806
    %v2808 = vrsqrt.pop %v2807
    %s2809 = vtos %v2808
    %s2810 = smul.f32 %s426, %s2809
    %v2811 = vstv %s2802
    %v2812 = vsub.f32 %v2688, %v2811
    %v2813 = vsub.f32 %v2689, %v2811
    %v2814 = vsub.f32 %v2690, %v2811
    %v2815 = vstv %s2810
    %v2816 = vmul.f32 %v2812, %v2815
    %v2817 = vmul.f32 %v2813, %v2815
    %v2818 = vmul.f32 %v2814, %v2815
    %v2819 = vstv %s434
    %v2820 = vadd.f32 %v2816, %v2819
    %v2821 = vadd.f32 %v2817, %v2819
    %v2822 = vadd.f32 %v2818, %v2819
    %v2823 = vmax.f32 %v2820, 0.0
    %v2824 = vmax.f32 %v2821, 0.0
    %v2825 = vmax.f32 %v2822, 0.0
    %v2826 = vsel %vm459, %v2823, 0.0
    %v2827 = vsel %vm460, %v2824, 0.0
    %v2828 = vsel %vm461, %v2825, 0.0
    %v2829 = vsel %vm459, %v2695, 0.0
    %v2830 = vsel %vm460, %v2696, 0.0
    %v2831 = vsel %vm461, %v2697, 0.0
    %v2832 = vsel %vm2708, %v2829, 0.0
    %v2833 = vsel %vm2708, %v2830, 0.0
    %v2834 = vadd.f32 %v2832, %v2833
    %v2835 = vsel %vm2712, %v2831, 0.0
    %v2836 = vadd.f32 %v2834, %v2835
    %2837 = vadd.xlane.f32.xlu0 %v2836
    %v2838 = vpop.xlane.xlu0 %2837
    %v2839 = vrot.slane %v2838, 4
    %v2840 = vadd.f32 %v2838, %v2839
    %v2841 = vrot.slane %v2840, 2
    %v2842 = vadd.f32 %v2840, %v2841
    %v2843 = vrot.slane %v2842, 1
    %v2844 = vadd.f32 %v2842, %v2843
    %s2845 = vtos %v2844
    %v2846 = vmul.f32 %v2829, %v2829
    %v2847 = vmul.f32 %v2830, %v2830
    %v2848 = vmul.f32 %v2831, %v2831
    %v2849 = vsel %vm2708, %v2846, 0.0
    %v2850 = vsel %vm2708, %v2847, 0.0
    %v2851 = vadd.f32 %v2849, %v2850
    %v2852 = vsel %vm2712, %v2848, 0.0
    %v2853 = vadd.f32 %v2851, %v2852
    %2854 = vadd.xlane.f32.xlu0 %v2853
    %v2855 = vpop.xlane.xlu0 %2854
    %v2856 = vrot.slane %v2855, 4
    %v2857 = vadd.f32 %v2855, %v2856
    %v2858 = vrot.slane %v2857, 2
    %v2859 = vadd.f32 %v2857, %v2858
    %v2860 = vrot.slane %v2859, 1
    %v2861 = vadd.f32 %v2859, %v2860
    %s2862 = vtos %v2861
    %s2863 = smul.f32 %s2845, 0.001953125
    %s2864 = smul.f32 %s2862, 0.001953125
    %s2865 = smul.f32 %s2863, %s2863
    %s2866 = ssub.f32 %s2864, %s2865
    %s2867 = sadd.f32 %s2866, 0.8
    %v2868 = vstv %s2867
    %v2869 = vrsqrt.pop %v2868
    %s2870 = vtos %v2869
    %s2871 = smul.f32 %s427, %s2870
    %v2872 = vstv %s2863
    %v2873 = vsub.f32 %v2695, %v2872
    %v2874 = vsub.f32 %v2696, %v2872
    %v2875 = vsub.f32 %v2697, %v2872
    %v2876 = vstv %s2871
    %v2877 = vmul.f32 %v2873, %v2876
    %v2878 = vmul.f32 %v2874, %v2876
    %v2879 = vmul.f32 %v2875, %v2876
    %v2880 = vstv %s435
    %v2881 = vadd.f32 %v2877, %v2880
    %v2882 = vadd.f32 %v2878, %v2880
    %v2883 = vadd.f32 %v2879, %v2880
    %v2884 = vmax.f32 %v2881, 0.0
    %v2885 = vmax.f32 %v2882, 0.0
    %v2886 = vmax.f32 %v2883, 0.0
    %v2887 = vsel %vm459, %v2884, 0.0
    %v2888 = vsel %vm460, %v2885, 0.0
    %v2889 = vsel %vm461, %v2886, 0.0
    %v2890 = vsel %vm459, %v2702, 0.0
    %v2891 = vsel %vm460, %v2703, 0.0
    %v2892 = vsel %vm461, %v2704, 0.0
    %v2893 = vsel %vm2708, %v2890, 0.0
    %v2894 = vsel %vm2708, %v2891, 0.0
    %v2895 = vadd.f32 %v2893, %v2894
    %v2896 = vsel %vm2712, %v2892, 0.0
    %v2897 = vadd.f32 %v2895, %v2896
    %2898 = vadd.xlane.f32.xlu0 %v2897
    %v2899 = vpop.xlane.xlu0 %2898
    %v2900 = vrot.slane %v2899, 4
    %v2901 = vadd.f32 %v2899, %v2900
    %v2902 = vrot.slane %v2901, 2
    %v2903 = vadd.f32 %v2901, %v2902
    %v2904 = vrot.slane %v2903, 1
    %v2905 = vadd.f32 %v2903, %v2904
    %s2906 = vtos %v2905
    %v2907 = vmul.f32 %v2890, %v2890
    %v2908 = vmul.f32 %v2891, %v2891
    %v2909 = vmul.f32 %v2892, %v2892
    %v2910 = vsel %vm2708, %v2907, 0.0
    %v2911 = vsel %vm2708, %v2908, 0.0
    %v2912 = vadd.f32 %v2910, %v2911
    %v2913 = vsel %vm2712, %v2909, 0.0
    %v2914 = vadd.f32 %v2912, %v2913
    %2915 = vadd.xlane.f32.xlu0 %v2914
    %v2916 = vpop.xlane.xlu0 %2915
    %v2917 = vrot.slane %v2916, 4
    %v2918 = vadd.f32 %v2916, %v2917
    %v2919 = vrot.slane %v2918, 2
    %v2920 = vadd.f32 %v2918, %v2919
    %v2921 = vrot.slane %v2920, 1
    %v2922 = vadd.f32 %v2920, %v2921
    %s2923 = vtos %v2922
    %s2924 = smul.f32 %s2906, 0.001953125
    %s2925 = smul.f32 %s2923, 0.001953125
    %s2926 = smul.f32 %s2924, %s2924
    %s2927 = ssub.f32 %s2925, %s2926
    %s2928 = sadd.f32 %s2927, 0.8
    %v2929 = vstv %s2928
    %v2930 = vrsqrt.pop %v2929
    %s2931 = vtos %v2930
    %s2932 = smul.f32 %s428, %s2931
    %v2933 = vstv %s2924
    %v2934 = vsub.f32 %v2702, %v2933
    %v2935 = vsub.f32 %v2703, %v2933
    %v2936 = vsub.f32 %v2704, %v2933
    %v2937 = vstv %s2932
    %v2938 = vmul.f32 %v2934, %v2937
    %v2939 = vmul.f32 %v2935, %v2937
    %v2940 = vmul.f32 %v2936, %v2937
    %v2941 = vstv %s436
    %v2942 = vadd.f32 %v2938, %v2941
    %v2943 = vadd.f32 %v2939, %v2941
    %v2944 = vadd.f32 %v2940, %v2941
    %v2945 = vmax.f32 %v2942, 0.0
    %v2946 = vmax.f32 %v2943, 0.0
    %v2947 = vmax.f32 %v2944, 0.0
    %v2948 = vsel %vm459, %v2945, 0.0
    %v2949 = vsel %vm460, %v2946, 0.0
    %v2950 = vsel %vm461, %v2947, 0.0
    %v2951 = vstv %s421
    %v2952 = vstv %s422
    %v2953 = vstv %s423
    %v2954 = vstv %s424
    %v2955 = vsel %vm470, %v2765, 0.0
    %v2956 = vsel %vm471, %v2766, 0.0
    %v2957 = vstv %s273
    %v2958 = vmul.f32 %v2955, %v2957
    %v2959 = vmul.f32 %v2956, %v2957
    %v2960 = vadd.f32 %v2951, %v2958
    %v2961 = vadd.f32 %v2951, %v2959
    %v2962 = vstv %s309
    %v2963 = vmul.f32 %v2955, %v2962
    %v2964 = vmul.f32 %v2956, %v2962
    %v2965 = vadd.f32 %v2952, %v2963
    %v2966 = vadd.f32 %v2952, %v2964
    %v2967 = vstv %s345
    %v2968 = vmul.f32 %v2955, %v2967
    %v2969 = vmul.f32 %v2956, %v2967
    %v2970 = vadd.f32 %v2953, %v2968
    %v2971 = vadd.f32 %v2953, %v2969
    %v2972 = vstv %s381
    %v2973 = vmul.f32 %v2955, %v2972
    %v2974 = vmul.f32 %v2956, %v2972
    %v2975 = vadd.f32 %v2954, %v2973
    %v2976 = vadd.f32 %v2954, %v2974
    %v2977 = vstv %s274
    %v2978 = vmul.f32 %v2765, %v2977
    %v2979 = vmul.f32 %v2766, %v2977
    %v2980 = vmul.f32 %v2767, %v2977
    %2984 = vrot.lane.b32.xlu0 %v2978, 127
    %v2985 = vpop.permute.xlu0 %2984
    %2986 = vrot.lane.b32.xlu0 %v2979, 127
    %v2987 = vpop.permute.xlu0 %2986
    %2988 = vrot.lane.b32.xlu0 %v2980, 127
    %v2989 = vpop.permute.xlu0 %2988
    %v2990 = vsel %vm523, %v2985, %v2987
    %v2991 = vsel %vm523, %v2987, %v2989
    %v2994 = vadd.f32 %v2960, %v2990
    %v2995 = vadd.f32 %v2961, %v2991
    %v2996 = vstv %s310
    %v2997 = vmul.f32 %v2765, %v2996
    %v2998 = vmul.f32 %v2766, %v2996
    %v2999 = vmul.f32 %v2767, %v2996
    %3003 = vrot.lane.b32.xlu0 %v2997, 127
    %v3004 = vpop.permute.xlu0 %3003
    %3005 = vrot.lane.b32.xlu0 %v2998, 127
    %v3006 = vpop.permute.xlu0 %3005
    %3007 = vrot.lane.b32.xlu0 %v2999, 127
    %v3008 = vpop.permute.xlu0 %3007
    %v3009 = vsel %vm523, %v3004, %v3006
    %v3010 = vsel %vm523, %v3006, %v3008
    %v3013 = vadd.f32 %v2965, %v3009
    %v3014 = vadd.f32 %v2966, %v3010
    %v3015 = vstv %s346
    %v3016 = vmul.f32 %v2765, %v3015
    %v3017 = vmul.f32 %v2766, %v3015
    %v3018 = vmul.f32 %v2767, %v3015
    %3022 = vrot.lane.b32.xlu0 %v3016, 127
    %v3023 = vpop.permute.xlu0 %3022
    %3024 = vrot.lane.b32.xlu0 %v3017, 127
    %v3025 = vpop.permute.xlu0 %3024
    %3026 = vrot.lane.b32.xlu0 %v3018, 127
    %v3027 = vpop.permute.xlu0 %3026
    %v3028 = vsel %vm523, %v3023, %v3025
    %v3029 = vsel %vm523, %v3025, %v3027
    %v3032 = vadd.f32 %v2970, %v3028
    %v3033 = vadd.f32 %v2971, %v3029
    %v3034 = vstv %s382
    %v3035 = vmul.f32 %v2765, %v3034
    %v3036 = vmul.f32 %v2766, %v3034
    %v3037 = vmul.f32 %v2767, %v3034
    %3041 = vrot.lane.b32.xlu0 %v3035, 127
    %v3042 = vpop.permute.xlu0 %3041
    %3043 = vrot.lane.b32.xlu0 %v3036, 127
    %v3044 = vpop.permute.xlu0 %3043
    %3045 = vrot.lane.b32.xlu0 %v3037, 127
    %v3046 = vpop.permute.xlu0 %3045
    %v3047 = vsel %vm523, %v3042, %v3044
    %v3048 = vsel %vm523, %v3044, %v3046
    %v3051 = vadd.f32 %v2975, %v3047
    %v3052 = vadd.f32 %v2976, %v3048
    %3056 = vrot.lane.b32.xlu0 %v2765, 126
    %v3057 = vpop.permute.xlu0 %3056
    %3058 = vrot.lane.b32.xlu0 %v2766, 126
    %v3059 = vpop.permute.xlu0 %3058
    %3060 = vrot.lane.b32.xlu0 %v2767, 126
    %v3061 = vpop.permute.xlu0 %3060
    %v3062 = vsel %vm604, %v3057, %v3059
    %v3063 = vsel %vm604, %v3059, %v3061
    %v3066 = vsel %vm468, %v3062, 0.0
    %v3067 = vsel %vm469, %v3063, 0.0
    %v3068 = vstv %s275
    %v3069 = vmul.f32 %v3066, %v3068
    %v3070 = vmul.f32 %v3067, %v3068
    %v3071 = vadd.f32 %v2994, %v3069
    %v3072 = vadd.f32 %v2995, %v3070
    %v3073 = vstv %s311
    %v3074 = vmul.f32 %v3066, %v3073
    %v3075 = vmul.f32 %v3067, %v3073
    %v3076 = vadd.f32 %v3013, %v3074
    %v3077 = vadd.f32 %v3014, %v3075
    %v3078 = vstv %s347
    %v3079 = vmul.f32 %v3066, %v3078
    %v3080 = vmul.f32 %v3067, %v3078
    %v3081 = vadd.f32 %v3032, %v3079
    %v3082 = vadd.f32 %v3033, %v3080
    %v3083 = vstv %s383
    %v3084 = vmul.f32 %v3066, %v3083
    %v3085 = vmul.f32 %v3067, %v3083
    %v3086 = vadd.f32 %v3051, %v3084
    %v3087 = vadd.f32 %v3052, %v3085
    %3088 = vrot.lane.b32.xlu0 %v2765, 112
    %v3089 = vpop.permute.xlu0 %3088
    %3090 = vrot.lane.b32.xlu0 %v2766, 112
    %v3091 = vpop.permute.xlu0 %3090
    %3092 = vrot.lane.b32.xlu0 %v2767, 112
    %v3093 = vpop.permute.xlu0 %3092
    %v3094 = vsel %vm647, %v3089, %v3091
    %v3095 = vsel %vm647, %v3091, %v3093
    %v3098 = vsel %vm470, %v3094, 0.0
    %v3099 = vsel %vm471, %v3095, 0.0
    %v3100 = vstv %s276
    %v3101 = vmul.f32 %v3098, %v3100
    %v3102 = vmul.f32 %v3099, %v3100
    %v3103 = vadd.f32 %v3071, %v3101
    %v3104 = vadd.f32 %v3072, %v3102
    %v3105 = vstv %s312
    %v3106 = vmul.f32 %v3098, %v3105
    %v3107 = vmul.f32 %v3099, %v3105
    %v3108 = vadd.f32 %v3076, %v3106
    %v3109 = vadd.f32 %v3077, %v3107
    %v3110 = vstv %s348
    %v3111 = vmul.f32 %v3098, %v3110
    %v3112 = vmul.f32 %v3099, %v3110
    %v3113 = vadd.f32 %v3081, %v3111
    %v3114 = vadd.f32 %v3082, %v3112
    %v3115 = vstv %s384
    %v3116 = vmul.f32 %v3098, %v3115
    %v3117 = vmul.f32 %v3099, %v3115
    %v3118 = vadd.f32 %v3086, %v3116
    %v3119 = vadd.f32 %v3087, %v3117
    %v3120 = vstv %s277
    %v3121 = vmul.f32 %v2765, %v3120
    %v3122 = vmul.f32 %v2766, %v3120
    %v3123 = vmul.f32 %v2767, %v3120
    %3127 = vrot.lane.b32.xlu0 %v3121, 111
    %v3128 = vpop.permute.xlu0 %3127
    %3129 = vrot.lane.b32.xlu0 %v3122, 111
    %v3130 = vpop.permute.xlu0 %3129
    %3131 = vrot.lane.b32.xlu0 %v3123, 111
    %v3132 = vpop.permute.xlu0 %3131
    %v3133 = vsel %vm697, %v3128, %v3130
    %v3134 = vsel %vm697, %v3130, %v3132
    %v3137 = vadd.f32 %v3103, %v3133
    %v3138 = vadd.f32 %v3104, %v3134
    %v3139 = vstv %s313
    %v3140 = vmul.f32 %v2765, %v3139
    %v3141 = vmul.f32 %v2766, %v3139
    %v3142 = vmul.f32 %v2767, %v3139
    %3146 = vrot.lane.b32.xlu0 %v3140, 111
    %v3147 = vpop.permute.xlu0 %3146
    %3148 = vrot.lane.b32.xlu0 %v3141, 111
    %v3149 = vpop.permute.xlu0 %3148
    %3150 = vrot.lane.b32.xlu0 %v3142, 111
    %v3151 = vpop.permute.xlu0 %3150
    %v3152 = vsel %vm697, %v3147, %v3149
    %v3153 = vsel %vm697, %v3149, %v3151
    %v3156 = vadd.f32 %v3108, %v3152
    %v3157 = vadd.f32 %v3109, %v3153
    %v3158 = vstv %s349
    %v3159 = vmul.f32 %v2765, %v3158
    %v3160 = vmul.f32 %v2766, %v3158
    %v3161 = vmul.f32 %v2767, %v3158
    %3165 = vrot.lane.b32.xlu0 %v3159, 111
    %v3166 = vpop.permute.xlu0 %3165
    %3167 = vrot.lane.b32.xlu0 %v3160, 111
    %v3168 = vpop.permute.xlu0 %3167
    %3169 = vrot.lane.b32.xlu0 %v3161, 111
    %v3170 = vpop.permute.xlu0 %3169
    %v3171 = vsel %vm697, %v3166, %v3168
    %v3172 = vsel %vm697, %v3168, %v3170
    %v3175 = vadd.f32 %v3113, %v3171
    %v3176 = vadd.f32 %v3114, %v3172
    %v3177 = vstv %s385
    %v3178 = vmul.f32 %v2765, %v3177
    %v3179 = vmul.f32 %v2766, %v3177
    %v3180 = vmul.f32 %v2767, %v3177
    %3184 = vrot.lane.b32.xlu0 %v3178, 111
    %v3185 = vpop.permute.xlu0 %3184
    %3186 = vrot.lane.b32.xlu0 %v3179, 111
    %v3187 = vpop.permute.xlu0 %3186
    %3188 = vrot.lane.b32.xlu0 %v3180, 111
    %v3189 = vpop.permute.xlu0 %3188
    %v3190 = vsel %vm697, %v3185, %v3187
    %v3191 = vsel %vm697, %v3187, %v3189
    %v3194 = vadd.f32 %v3118, %v3190
    %v3195 = vadd.f32 %v3119, %v3191
    %3196 = vrot.lane.b32.xlu0 %v2765, 110
    %v3197 = vpop.permute.xlu0 %3196
    %3198 = vrot.lane.b32.xlu0 %v2766, 110
    %v3199 = vpop.permute.xlu0 %3198
    %3200 = vrot.lane.b32.xlu0 %v2767, 110
    %v3201 = vpop.permute.xlu0 %3200
    %v3202 = vsel %vm775, %v3197, %v3199
    %v3203 = vsel %vm775, %v3199, %v3201
    %v3206 = vsel %vm468, %v3202, 0.0
    %v3207 = vsel %vm469, %v3203, 0.0
    %v3208 = vstv %s278
    %v3209 = vmul.f32 %v3206, %v3208
    %v3210 = vmul.f32 %v3207, %v3208
    %v3211 = vadd.f32 %v3137, %v3209
    %v3212 = vadd.f32 %v3138, %v3210
    %v3213 = vstv %s314
    %v3214 = vmul.f32 %v3206, %v3213
    %v3215 = vmul.f32 %v3207, %v3213
    %v3216 = vadd.f32 %v3156, %v3214
    %v3217 = vadd.f32 %v3157, %v3215
    %v3218 = vstv %s350
    %v3219 = vmul.f32 %v3206, %v3218
    %v3220 = vmul.f32 %v3207, %v3218
    %v3221 = vadd.f32 %v3175, %v3219
    %v3222 = vadd.f32 %v3176, %v3220
    %v3223 = vstv %s386
    %v3224 = vmul.f32 %v3206, %v3223
    %v3225 = vmul.f32 %v3207, %v3223
    %v3226 = vadd.f32 %v3194, %v3224
    %v3227 = vadd.f32 %v3195, %v3225
    %3228 = vrot.lane.b32.xlu0 %v2765, 96
    %v3229 = vpop.permute.xlu0 %3228
    %3230 = vrot.lane.b32.xlu0 %v2766, 96
    %v3231 = vpop.permute.xlu0 %3230
    %3232 = vrot.lane.b32.xlu0 %v2767, 96
    %v3233 = vpop.permute.xlu0 %3232
    %v3234 = vsel %vm818, %v3229, %v3231
    %v3235 = vsel %vm818, %v3231, %v3233
    %v3238 = vsel %vm470, %v3234, 0.0
    %v3239 = vsel %vm471, %v3235, 0.0
    %v3240 = vstv %s279
    %v3241 = vmul.f32 %v3238, %v3240
    %v3242 = vmul.f32 %v3239, %v3240
    %v3243 = vadd.f32 %v3211, %v3241
    %v3244 = vadd.f32 %v3212, %v3242
    %v3245 = vstv %s315
    %v3246 = vmul.f32 %v3238, %v3245
    %v3247 = vmul.f32 %v3239, %v3245
    %v3248 = vadd.f32 %v3216, %v3246
    %v3249 = vadd.f32 %v3217, %v3247
    %v3250 = vstv %s351
    %v3251 = vmul.f32 %v3238, %v3250
    %v3252 = vmul.f32 %v3239, %v3250
    %v3253 = vadd.f32 %v3221, %v3251
    %v3254 = vadd.f32 %v3222, %v3252
    %v3255 = vstv %s387
    %v3256 = vmul.f32 %v3238, %v3255
    %v3257 = vmul.f32 %v3239, %v3255
    %v3258 = vadd.f32 %v3226, %v3256
    %v3259 = vadd.f32 %v3227, %v3257
    %v3260 = vstv %s280
    %v3261 = vmul.f32 %v2765, %v3260
    %v3262 = vmul.f32 %v2766, %v3260
    %v3263 = vmul.f32 %v2767, %v3260
    %3267 = vrot.lane.b32.xlu0 %v3261, 95
    %v3268 = vpop.permute.xlu0 %3267
    %3269 = vrot.lane.b32.xlu0 %v3262, 95
    %v3270 = vpop.permute.xlu0 %3269
    %3271 = vrot.lane.b32.xlu0 %v3263, 95
    %v3272 = vpop.permute.xlu0 %3271
    %v3273 = vsel %vm868, %v3268, %v3270
    %v3274 = vsel %vm868, %v3270, %v3272
    %v3277 = vadd.f32 %v3243, %v3273
    %v3278 = vadd.f32 %v3244, %v3274
    %v3279 = vstv %s316
    %v3280 = vmul.f32 %v2765, %v3279
    %v3281 = vmul.f32 %v2766, %v3279
    %v3282 = vmul.f32 %v2767, %v3279
    %3286 = vrot.lane.b32.xlu0 %v3280, 95
    %v3287 = vpop.permute.xlu0 %3286
    %3288 = vrot.lane.b32.xlu0 %v3281, 95
    %v3289 = vpop.permute.xlu0 %3288
    %3290 = vrot.lane.b32.xlu0 %v3282, 95
    %v3291 = vpop.permute.xlu0 %3290
    %v3292 = vsel %vm868, %v3287, %v3289
    %v3293 = vsel %vm868, %v3289, %v3291
    %v3296 = vadd.f32 %v3248, %v3292
    %v3297 = vadd.f32 %v3249, %v3293
    %v3298 = vstv %s352
    %v3299 = vmul.f32 %v2765, %v3298
    %v3300 = vmul.f32 %v2766, %v3298
    %v3301 = vmul.f32 %v2767, %v3298
    %3305 = vrot.lane.b32.xlu0 %v3299, 95
    %v3306 = vpop.permute.xlu0 %3305
    %3307 = vrot.lane.b32.xlu0 %v3300, 95
    %v3308 = vpop.permute.xlu0 %3307
    %3309 = vrot.lane.b32.xlu0 %v3301, 95
    %v3310 = vpop.permute.xlu0 %3309
    %v3311 = vsel %vm868, %v3306, %v3308
    %v3312 = vsel %vm868, %v3308, %v3310
    %v3315 = vadd.f32 %v3253, %v3311
    %v3316 = vadd.f32 %v3254, %v3312
    %v3317 = vstv %s388
    %v3318 = vmul.f32 %v2765, %v3317
    %v3319 = vmul.f32 %v2766, %v3317
    %v3320 = vmul.f32 %v2767, %v3317
    %3324 = vrot.lane.b32.xlu0 %v3318, 95
    %v3325 = vpop.permute.xlu0 %3324
    %3326 = vrot.lane.b32.xlu0 %v3319, 95
    %v3327 = vpop.permute.xlu0 %3326
    %3328 = vrot.lane.b32.xlu0 %v3320, 95
    %v3329 = vpop.permute.xlu0 %3328
    %v3330 = vsel %vm868, %v3325, %v3327
    %v3331 = vsel %vm868, %v3327, %v3329
    %v3334 = vadd.f32 %v3258, %v3330
    %v3335 = vadd.f32 %v3259, %v3331
    %3336 = vrot.lane.b32.xlu0 %v2765, 94
    %v3337 = vpop.permute.xlu0 %3336
    %3338 = vrot.lane.b32.xlu0 %v2766, 94
    %v3339 = vpop.permute.xlu0 %3338
    %3340 = vrot.lane.b32.xlu0 %v2767, 94
    %v3341 = vpop.permute.xlu0 %3340
    %v3342 = vsel %vm946, %v3337, %v3339
    %v3343 = vsel %vm946, %v3339, %v3341
    %v3346 = vsel %vm468, %v3342, 0.0
    %v3347 = vsel %vm469, %v3343, 0.0
    %v3348 = vstv %s281
    %v3349 = vmul.f32 %v3346, %v3348
    %v3350 = vmul.f32 %v3347, %v3348
    %v3351 = vadd.f32 %v3277, %v3349
    %v3352 = vadd.f32 %v3278, %v3350
    %v3353 = vstv %s317
    %v3354 = vmul.f32 %v3346, %v3353
    %v3355 = vmul.f32 %v3347, %v3353
    %v3356 = vadd.f32 %v3296, %v3354
    %v3357 = vadd.f32 %v3297, %v3355
    %v3358 = vstv %s353
    %v3359 = vmul.f32 %v3346, %v3358
    %v3360 = vmul.f32 %v3347, %v3358
    %v3361 = vadd.f32 %v3315, %v3359
    %v3362 = vadd.f32 %v3316, %v3360
    %v3363 = vstv %s389
    %v3364 = vmul.f32 %v3346, %v3363
    %v3365 = vmul.f32 %v3347, %v3363
    %v3366 = vadd.f32 %v3334, %v3364
    %v3367 = vadd.f32 %v3335, %v3365
    %v3368 = vsel %vm470, %v2826, 0.0
    %v3369 = vsel %vm471, %v2827, 0.0
    %v3370 = vstv %s282
    %v3371 = vmul.f32 %v3368, %v3370
    %v3372 = vmul.f32 %v3369, %v3370
    %v3373 = vadd.f32 %v3351, %v3371
    %v3374 = vadd.f32 %v3352, %v3372
    %v3375 = vstv %s318
    %v3376 = vmul.f32 %v3368, %v3375
    %v3377 = vmul.f32 %v3369, %v3375
    %v3378 = vadd.f32 %v3356, %v3376
    %v3379 = vadd.f32 %v3357, %v3377
    %v3380 = vstv %s354
    %v3381 = vmul.f32 %v3368, %v3380
    %v3382 = vmul.f32 %v3369, %v3380
    %v3383 = vadd.f32 %v3361, %v3381
    %v3384 = vadd.f32 %v3362, %v3382
    %v3385 = vstv %s390
    %v3386 = vmul.f32 %v3368, %v3385
    %v3387 = vmul.f32 %v3369, %v3385
    %v3388 = vadd.f32 %v3366, %v3386
    %v3389 = vadd.f32 %v3367, %v3387
    %v3390 = vstv %s283
    %v3391 = vmul.f32 %v2826, %v3390
    %v3392 = vmul.f32 %v2827, %v3390
    %v3393 = vmul.f32 %v2828, %v3390
    %3397 = vrot.lane.b32.xlu0 %v3391, 127
    %v3398 = vpop.permute.xlu0 %3397
    %3399 = vrot.lane.b32.xlu0 %v3392, 127
    %v3400 = vpop.permute.xlu0 %3399
    %3401 = vrot.lane.b32.xlu0 %v3393, 127
    %v3402 = vpop.permute.xlu0 %3401
    %v3403 = vsel %vm523, %v3398, %v3400
    %v3404 = vsel %vm523, %v3400, %v3402
    %v3407 = vadd.f32 %v3373, %v3403
    %v3408 = vadd.f32 %v3374, %v3404
    %v3409 = vstv %s319
    %v3410 = vmul.f32 %v2826, %v3409
    %v3411 = vmul.f32 %v2827, %v3409
    %v3412 = vmul.f32 %v2828, %v3409
    %3416 = vrot.lane.b32.xlu0 %v3410, 127
    %v3417 = vpop.permute.xlu0 %3416
    %3418 = vrot.lane.b32.xlu0 %v3411, 127
    %v3419 = vpop.permute.xlu0 %3418
    %3420 = vrot.lane.b32.xlu0 %v3412, 127
    %v3421 = vpop.permute.xlu0 %3420
    %v3422 = vsel %vm523, %v3417, %v3419
    %v3423 = vsel %vm523, %v3419, %v3421
    %v3426 = vadd.f32 %v3378, %v3422
    %v3427 = vadd.f32 %v3379, %v3423
    %v3428 = vstv %s355
    %v3429 = vmul.f32 %v2826, %v3428
    %v3430 = vmul.f32 %v2827, %v3428
    %v3431 = vmul.f32 %v2828, %v3428
    %3435 = vrot.lane.b32.xlu0 %v3429, 127
    %v3436 = vpop.permute.xlu0 %3435
    %3437 = vrot.lane.b32.xlu0 %v3430, 127
    %v3438 = vpop.permute.xlu0 %3437
    %3439 = vrot.lane.b32.xlu0 %v3431, 127
    %v3440 = vpop.permute.xlu0 %3439
    %v3441 = vsel %vm523, %v3436, %v3438
    %v3442 = vsel %vm523, %v3438, %v3440
    %v3445 = vadd.f32 %v3383, %v3441
    %v3446 = vadd.f32 %v3384, %v3442
    %v3447 = vstv %s391
    %v3448 = vmul.f32 %v2826, %v3447
    %v3449 = vmul.f32 %v2827, %v3447
    %v3450 = vmul.f32 %v2828, %v3447
    %3454 = vrot.lane.b32.xlu0 %v3448, 127
    %v3455 = vpop.permute.xlu0 %3454
    %3456 = vrot.lane.b32.xlu0 %v3449, 127
    %v3457 = vpop.permute.xlu0 %3456
    %3458 = vrot.lane.b32.xlu0 %v3450, 127
    %v3459 = vpop.permute.xlu0 %3458
    %v3460 = vsel %vm523, %v3455, %v3457
    %v3461 = vsel %vm523, %v3457, %v3459
    %v3464 = vadd.f32 %v3388, %v3460
    %v3465 = vadd.f32 %v3389, %v3461
    %3469 = vrot.lane.b32.xlu0 %v2826, 126
    %v3470 = vpop.permute.xlu0 %3469
    %3471 = vrot.lane.b32.xlu0 %v2827, 126
    %v3472 = vpop.permute.xlu0 %3471
    %3473 = vrot.lane.b32.xlu0 %v2828, 126
    %v3474 = vpop.permute.xlu0 %3473
    %v3475 = vsel %vm604, %v3470, %v3472
    %v3476 = vsel %vm604, %v3472, %v3474
    %v3479 = vsel %vm468, %v3475, 0.0
    %v3480 = vsel %vm469, %v3476, 0.0
    %v3481 = vstv %s284
    %v3482 = vmul.f32 %v3479, %v3481
    %v3483 = vmul.f32 %v3480, %v3481
    %v3484 = vadd.f32 %v3407, %v3482
    %v3485 = vadd.f32 %v3408, %v3483
    %v3486 = vstv %s320
    %v3487 = vmul.f32 %v3479, %v3486
    %v3488 = vmul.f32 %v3480, %v3486
    %v3489 = vadd.f32 %v3426, %v3487
    %v3490 = vadd.f32 %v3427, %v3488
    %v3491 = vstv %s356
    %v3492 = vmul.f32 %v3479, %v3491
    %v3493 = vmul.f32 %v3480, %v3491
    %v3494 = vadd.f32 %v3445, %v3492
    %v3495 = vadd.f32 %v3446, %v3493
    %v3496 = vstv %s392
    %v3497 = vmul.f32 %v3479, %v3496
    %v3498 = vmul.f32 %v3480, %v3496
    %v3499 = vadd.f32 %v3464, %v3497
    %v3500 = vadd.f32 %v3465, %v3498
    %3501 = vrot.lane.b32.xlu0 %v2826, 112
    %v3502 = vpop.permute.xlu0 %3501
    %3503 = vrot.lane.b32.xlu0 %v2827, 112
    %v3504 = vpop.permute.xlu0 %3503
    %3505 = vrot.lane.b32.xlu0 %v2828, 112
    %v3506 = vpop.permute.xlu0 %3505
    %v3507 = vsel %vm647, %v3502, %v3504
    %v3508 = vsel %vm647, %v3504, %v3506
    %v3511 = vsel %vm470, %v3507, 0.0
    %v3512 = vsel %vm471, %v3508, 0.0
    %v3513 = vstv %s285
    %v3514 = vmul.f32 %v3511, %v3513
    %v3515 = vmul.f32 %v3512, %v3513
    %v3516 = vadd.f32 %v3484, %v3514
    %v3517 = vadd.f32 %v3485, %v3515
    %v3518 = vstv %s321
    %v3519 = vmul.f32 %v3511, %v3518
    %v3520 = vmul.f32 %v3512, %v3518
    %v3521 = vadd.f32 %v3489, %v3519
    %v3522 = vadd.f32 %v3490, %v3520
    %v3523 = vstv %s357
    %v3524 = vmul.f32 %v3511, %v3523
    %v3525 = vmul.f32 %v3512, %v3523
    %v3526 = vadd.f32 %v3494, %v3524
    %v3527 = vadd.f32 %v3495, %v3525
    %v3528 = vstv %s393
    %v3529 = vmul.f32 %v3511, %v3528
    %v3530 = vmul.f32 %v3512, %v3528
    %v3531 = vadd.f32 %v3499, %v3529
    %v3532 = vadd.f32 %v3500, %v3530
    %v3533 = vstv %s286
    %v3534 = vmul.f32 %v2826, %v3533
    %v3535 = vmul.f32 %v2827, %v3533
    %v3536 = vmul.f32 %v2828, %v3533
    %3540 = vrot.lane.b32.xlu0 %v3534, 111
    %v3541 = vpop.permute.xlu0 %3540
    %3542 = vrot.lane.b32.xlu0 %v3535, 111
    %v3543 = vpop.permute.xlu0 %3542
    %3544 = vrot.lane.b32.xlu0 %v3536, 111
    %v3545 = vpop.permute.xlu0 %3544
    %v3546 = vsel %vm697, %v3541, %v3543
    %v3547 = vsel %vm697, %v3543, %v3545
    %v3550 = vadd.f32 %v3516, %v3546
    %v3551 = vadd.f32 %v3517, %v3547
    %v3552 = vstv %s322
    %v3553 = vmul.f32 %v2826, %v3552
    %v3554 = vmul.f32 %v2827, %v3552
    %v3555 = vmul.f32 %v2828, %v3552
    %3559 = vrot.lane.b32.xlu0 %v3553, 111
    %v3560 = vpop.permute.xlu0 %3559
    %3561 = vrot.lane.b32.xlu0 %v3554, 111
    %v3562 = vpop.permute.xlu0 %3561
    %3563 = vrot.lane.b32.xlu0 %v3555, 111
    %v3564 = vpop.permute.xlu0 %3563
    %v3565 = vsel %vm697, %v3560, %v3562
    %v3566 = vsel %vm697, %v3562, %v3564
    %v3569 = vadd.f32 %v3521, %v3565
    %v3570 = vadd.f32 %v3522, %v3566
    %v3571 = vstv %s358
    %v3572 = vmul.f32 %v2826, %v3571
    %v3573 = vmul.f32 %v2827, %v3571
    %v3574 = vmul.f32 %v2828, %v3571
    %3578 = vrot.lane.b32.xlu0 %v3572, 111
    %v3579 = vpop.permute.xlu0 %3578
    %3580 = vrot.lane.b32.xlu0 %v3573, 111
    %v3581 = vpop.permute.xlu0 %3580
    %3582 = vrot.lane.b32.xlu0 %v3574, 111
    %v3583 = vpop.permute.xlu0 %3582
    %v3584 = vsel %vm697, %v3579, %v3581
    %v3585 = vsel %vm697, %v3581, %v3583
    %v3588 = vadd.f32 %v3526, %v3584
    %v3589 = vadd.f32 %v3527, %v3585
    %v3590 = vstv %s394
    %v3591 = vmul.f32 %v2826, %v3590
    %v3592 = vmul.f32 %v2827, %v3590
    %v3593 = vmul.f32 %v2828, %v3590
    %3597 = vrot.lane.b32.xlu0 %v3591, 111
    %v3598 = vpop.permute.xlu0 %3597
    %3599 = vrot.lane.b32.xlu0 %v3592, 111
    %v3600 = vpop.permute.xlu0 %3599
    %3601 = vrot.lane.b32.xlu0 %v3593, 111
    %v3602 = vpop.permute.xlu0 %3601
    %v3603 = vsel %vm697, %v3598, %v3600
    %v3604 = vsel %vm697, %v3600, %v3602
    %v3607 = vadd.f32 %v3531, %v3603
    %v3608 = vadd.f32 %v3532, %v3604
    %3609 = vrot.lane.b32.xlu0 %v2826, 110
    %v3610 = vpop.permute.xlu0 %3609
    %3611 = vrot.lane.b32.xlu0 %v2827, 110
    %v3612 = vpop.permute.xlu0 %3611
    %3613 = vrot.lane.b32.xlu0 %v2828, 110
    %v3614 = vpop.permute.xlu0 %3613
    %v3615 = vsel %vm775, %v3610, %v3612
    %v3616 = vsel %vm775, %v3612, %v3614
    %v3619 = vsel %vm468, %v3615, 0.0
    %v3620 = vsel %vm469, %v3616, 0.0
    %v3621 = vstv %s287
    %v3622 = vmul.f32 %v3619, %v3621
    %v3623 = vmul.f32 %v3620, %v3621
    %v3624 = vadd.f32 %v3550, %v3622
    %v3625 = vadd.f32 %v3551, %v3623
    %v3626 = vstv %s323
    %v3627 = vmul.f32 %v3619, %v3626
    %v3628 = vmul.f32 %v3620, %v3626
    %v3629 = vadd.f32 %v3569, %v3627
    %v3630 = vadd.f32 %v3570, %v3628
    %v3631 = vstv %s359
    %v3632 = vmul.f32 %v3619, %v3631
    %v3633 = vmul.f32 %v3620, %v3631
    %v3634 = vadd.f32 %v3588, %v3632
    %v3635 = vadd.f32 %v3589, %v3633
    %v3636 = vstv %s395
    %v3637 = vmul.f32 %v3619, %v3636
    %v3638 = vmul.f32 %v3620, %v3636
    %v3639 = vadd.f32 %v3607, %v3637
    %v3640 = vadd.f32 %v3608, %v3638
    %3641 = vrot.lane.b32.xlu0 %v2826, 96
    %v3642 = vpop.permute.xlu0 %3641
    %3643 = vrot.lane.b32.xlu0 %v2827, 96
    %v3644 = vpop.permute.xlu0 %3643
    %3645 = vrot.lane.b32.xlu0 %v2828, 96
    %v3646 = vpop.permute.xlu0 %3645
    %v3647 = vsel %vm818, %v3642, %v3644
    %v3648 = vsel %vm818, %v3644, %v3646
    %v3651 = vsel %vm470, %v3647, 0.0
    %v3652 = vsel %vm471, %v3648, 0.0
    %v3653 = vstv %s288
    %v3654 = vmul.f32 %v3651, %v3653
    %v3655 = vmul.f32 %v3652, %v3653
    %v3656 = vadd.f32 %v3624, %v3654
    %v3657 = vadd.f32 %v3625, %v3655
    %v3658 = vstv %s324
    %v3659 = vmul.f32 %v3651, %v3658
    %v3660 = vmul.f32 %v3652, %v3658
    %v3661 = vadd.f32 %v3629, %v3659
    %v3662 = vadd.f32 %v3630, %v3660
    %v3663 = vstv %s360
    %v3664 = vmul.f32 %v3651, %v3663
    %v3665 = vmul.f32 %v3652, %v3663
    %v3666 = vadd.f32 %v3634, %v3664
    %v3667 = vadd.f32 %v3635, %v3665
    %v3668 = vstv %s396
    %v3669 = vmul.f32 %v3651, %v3668
    %v3670 = vmul.f32 %v3652, %v3668
    %v3671 = vadd.f32 %v3639, %v3669
    %v3672 = vadd.f32 %v3640, %v3670
    %v3673 = vstv %s289
    %v3674 = vmul.f32 %v2826, %v3673
    %v3675 = vmul.f32 %v2827, %v3673
    %v3676 = vmul.f32 %v2828, %v3673
    %3680 = vrot.lane.b32.xlu0 %v3674, 95
    %v3681 = vpop.permute.xlu0 %3680
    %3682 = vrot.lane.b32.xlu0 %v3675, 95
    %v3683 = vpop.permute.xlu0 %3682
    %3684 = vrot.lane.b32.xlu0 %v3676, 95
    %v3685 = vpop.permute.xlu0 %3684
    %v3686 = vsel %vm868, %v3681, %v3683
    %v3687 = vsel %vm868, %v3683, %v3685
    %v3690 = vadd.f32 %v3656, %v3686
    %v3691 = vadd.f32 %v3657, %v3687
    %v3692 = vstv %s325
    %v3693 = vmul.f32 %v2826, %v3692
    %v3694 = vmul.f32 %v2827, %v3692
    %v3695 = vmul.f32 %v2828, %v3692
    %3699 = vrot.lane.b32.xlu0 %v3693, 95
    %v3700 = vpop.permute.xlu0 %3699
    %3701 = vrot.lane.b32.xlu0 %v3694, 95
    %v3702 = vpop.permute.xlu0 %3701
    %3703 = vrot.lane.b32.xlu0 %v3695, 95
    %v3704 = vpop.permute.xlu0 %3703
    %v3705 = vsel %vm868, %v3700, %v3702
    %v3706 = vsel %vm868, %v3702, %v3704
    %v3709 = vadd.f32 %v3661, %v3705
    %v3710 = vadd.f32 %v3662, %v3706
    %v3711 = vstv %s361
    %v3712 = vmul.f32 %v2826, %v3711
    %v3713 = vmul.f32 %v2827, %v3711
    %v3714 = vmul.f32 %v2828, %v3711
    %3718 = vrot.lane.b32.xlu0 %v3712, 95
    %v3719 = vpop.permute.xlu0 %3718
    %3720 = vrot.lane.b32.xlu0 %v3713, 95
    %v3721 = vpop.permute.xlu0 %3720
    %3722 = vrot.lane.b32.xlu0 %v3714, 95
    %v3723 = vpop.permute.xlu0 %3722
    %v3724 = vsel %vm868, %v3719, %v3721
    %v3725 = vsel %vm868, %v3721, %v3723
    %v3728 = vadd.f32 %v3666, %v3724
    %v3729 = vadd.f32 %v3667, %v3725
    %v3730 = vstv %s397
    %v3731 = vmul.f32 %v2826, %v3730
    %v3732 = vmul.f32 %v2827, %v3730
    %v3733 = vmul.f32 %v2828, %v3730
    %3737 = vrot.lane.b32.xlu0 %v3731, 95
    %v3738 = vpop.permute.xlu0 %3737
    %3739 = vrot.lane.b32.xlu0 %v3732, 95
    %v3740 = vpop.permute.xlu0 %3739
    %3741 = vrot.lane.b32.xlu0 %v3733, 95
    %v3742 = vpop.permute.xlu0 %3741
    %v3743 = vsel %vm868, %v3738, %v3740
    %v3744 = vsel %vm868, %v3740, %v3742
    %v3747 = vadd.f32 %v3671, %v3743
    %v3748 = vadd.f32 %v3672, %v3744
    %3749 = vrot.lane.b32.xlu0 %v2826, 94
    %v3750 = vpop.permute.xlu0 %3749
    %3751 = vrot.lane.b32.xlu0 %v2827, 94
    %v3752 = vpop.permute.xlu0 %3751
    %3753 = vrot.lane.b32.xlu0 %v2828, 94
    %v3754 = vpop.permute.xlu0 %3753
    %v3755 = vsel %vm946, %v3750, %v3752
    %v3756 = vsel %vm946, %v3752, %v3754
    %v3759 = vsel %vm468, %v3755, 0.0
    %v3760 = vsel %vm469, %v3756, 0.0
    %v3761 = vstv %s290
    %v3762 = vmul.f32 %v3759, %v3761
    %v3763 = vmul.f32 %v3760, %v3761
    %v3764 = vadd.f32 %v3690, %v3762
    %v3765 = vadd.f32 %v3691, %v3763
    %v3766 = vstv %s326
    %v3767 = vmul.f32 %v3759, %v3766
    %v3768 = vmul.f32 %v3760, %v3766
    %v3769 = vadd.f32 %v3709, %v3767
    %v3770 = vadd.f32 %v3710, %v3768
    %v3771 = vstv %s362
    %v3772 = vmul.f32 %v3759, %v3771
    %v3773 = vmul.f32 %v3760, %v3771
    %v3774 = vadd.f32 %v3728, %v3772
    %v3775 = vadd.f32 %v3729, %v3773
    %v3776 = vstv %s398
    %v3777 = vmul.f32 %v3759, %v3776
    %v3778 = vmul.f32 %v3760, %v3776
    %v3779 = vadd.f32 %v3747, %v3777
    %v3780 = vadd.f32 %v3748, %v3778
    %v3781 = vsel %vm470, %v2887, 0.0
    %v3782 = vsel %vm471, %v2888, 0.0
    %v3783 = vstv %s291
    %v3784 = vmul.f32 %v3781, %v3783
    %v3785 = vmul.f32 %v3782, %v3783
    %v3786 = vadd.f32 %v3764, %v3784
    %v3787 = vadd.f32 %v3765, %v3785
    %v3788 = vstv %s327
    %v3789 = vmul.f32 %v3781, %v3788
    %v3790 = vmul.f32 %v3782, %v3788
    %v3791 = vadd.f32 %v3769, %v3789
    %v3792 = vadd.f32 %v3770, %v3790
    %v3793 = vstv %s363
    %v3794 = vmul.f32 %v3781, %v3793
    %v3795 = vmul.f32 %v3782, %v3793
    %v3796 = vadd.f32 %v3774, %v3794
    %v3797 = vadd.f32 %v3775, %v3795
    %v3798 = vstv %s399
    %v3799 = vmul.f32 %v3781, %v3798
    %v3800 = vmul.f32 %v3782, %v3798
    %v3801 = vadd.f32 %v3779, %v3799
    %v3802 = vadd.f32 %v3780, %v3800
    %v3803 = vstv %s292
    %v3804 = vmul.f32 %v2887, %v3803
    %v3805 = vmul.f32 %v2888, %v3803
    %v3806 = vmul.f32 %v2889, %v3803
    %3810 = vrot.lane.b32.xlu0 %v3804, 127
    %v3811 = vpop.permute.xlu0 %3810
    %3812 = vrot.lane.b32.xlu0 %v3805, 127
    %v3813 = vpop.permute.xlu0 %3812
    %3814 = vrot.lane.b32.xlu0 %v3806, 127
    %v3815 = vpop.permute.xlu0 %3814
    %v3816 = vsel %vm523, %v3811, %v3813
    %v3817 = vsel %vm523, %v3813, %v3815
    %v3820 = vadd.f32 %v3786, %v3816
    %v3821 = vadd.f32 %v3787, %v3817
    %v3822 = vstv %s328
    %v3823 = vmul.f32 %v2887, %v3822
    %v3824 = vmul.f32 %v2888, %v3822
    %v3825 = vmul.f32 %v2889, %v3822
    %3829 = vrot.lane.b32.xlu0 %v3823, 127
    %v3830 = vpop.permute.xlu0 %3829
    %3831 = vrot.lane.b32.xlu0 %v3824, 127
    %v3832 = vpop.permute.xlu0 %3831
    %3833 = vrot.lane.b32.xlu0 %v3825, 127
    %v3834 = vpop.permute.xlu0 %3833
    %v3835 = vsel %vm523, %v3830, %v3832
    %v3836 = vsel %vm523, %v3832, %v3834
    %v3839 = vadd.f32 %v3791, %v3835
    %v3840 = vadd.f32 %v3792, %v3836
    %v3841 = vstv %s364
    %v3842 = vmul.f32 %v2887, %v3841
    %v3843 = vmul.f32 %v2888, %v3841
    %v3844 = vmul.f32 %v2889, %v3841
    %3848 = vrot.lane.b32.xlu0 %v3842, 127
    %v3849 = vpop.permute.xlu0 %3848
    %3850 = vrot.lane.b32.xlu0 %v3843, 127
    %v3851 = vpop.permute.xlu0 %3850
    %3852 = vrot.lane.b32.xlu0 %v3844, 127
    %v3853 = vpop.permute.xlu0 %3852
    %v3854 = vsel %vm523, %v3849, %v3851
    %v3855 = vsel %vm523, %v3851, %v3853
    %v3858 = vadd.f32 %v3796, %v3854
    %v3859 = vadd.f32 %v3797, %v3855
    %v3860 = vstv %s400
    %v3861 = vmul.f32 %v2887, %v3860
    %v3862 = vmul.f32 %v2888, %v3860
    %v3863 = vmul.f32 %v2889, %v3860
    %3867 = vrot.lane.b32.xlu0 %v3861, 127
    %v3868 = vpop.permute.xlu0 %3867
    %3869 = vrot.lane.b32.xlu0 %v3862, 127
    %v3870 = vpop.permute.xlu0 %3869
    %3871 = vrot.lane.b32.xlu0 %v3863, 127
    %v3872 = vpop.permute.xlu0 %3871
    %v3873 = vsel %vm523, %v3868, %v3870
    %v3874 = vsel %vm523, %v3870, %v3872
    %v3877 = vadd.f32 %v3801, %v3873
    %v3878 = vadd.f32 %v3802, %v3874
    %3882 = vrot.lane.b32.xlu0 %v2887, 126
    %v3883 = vpop.permute.xlu0 %3882
    %3884 = vrot.lane.b32.xlu0 %v2888, 126
    %v3885 = vpop.permute.xlu0 %3884
    %3886 = vrot.lane.b32.xlu0 %v2889, 126
    %v3887 = vpop.permute.xlu0 %3886
    %v3888 = vsel %vm604, %v3883, %v3885
    %v3889 = vsel %vm604, %v3885, %v3887
    %v3892 = vsel %vm468, %v3888, 0.0
    %v3893 = vsel %vm469, %v3889, 0.0
    %v3894 = vstv %s293
    %v3895 = vmul.f32 %v3892, %v3894
    %v3896 = vmul.f32 %v3893, %v3894
    %v3897 = vadd.f32 %v3820, %v3895
    %v3898 = vadd.f32 %v3821, %v3896
    %v3899 = vstv %s329
    %v3900 = vmul.f32 %v3892, %v3899
    %v3901 = vmul.f32 %v3893, %v3899
    %v3902 = vadd.f32 %v3839, %v3900
    %v3903 = vadd.f32 %v3840, %v3901
    %v3904 = vstv %s365
    %v3905 = vmul.f32 %v3892, %v3904
    %v3906 = vmul.f32 %v3893, %v3904
    %v3907 = vadd.f32 %v3858, %v3905
    %v3908 = vadd.f32 %v3859, %v3906
    %v3909 = vstv %s401
    %v3910 = vmul.f32 %v3892, %v3909
    %v3911 = vmul.f32 %v3893, %v3909
    %v3912 = vadd.f32 %v3877, %v3910
    %v3913 = vadd.f32 %v3878, %v3911
    %3914 = vrot.lane.b32.xlu0 %v2887, 112
    %v3915 = vpop.permute.xlu0 %3914
    %3916 = vrot.lane.b32.xlu0 %v2888, 112
    %v3917 = vpop.permute.xlu0 %3916
    %3918 = vrot.lane.b32.xlu0 %v2889, 112
    %v3919 = vpop.permute.xlu0 %3918
    %v3920 = vsel %vm647, %v3915, %v3917
    %v3921 = vsel %vm647, %v3917, %v3919
    %v3924 = vsel %vm470, %v3920, 0.0
    %v3925 = vsel %vm471, %v3921, 0.0
    %v3926 = vstv %s294
    %v3927 = vmul.f32 %v3924, %v3926
    %v3928 = vmul.f32 %v3925, %v3926
    %v3929 = vadd.f32 %v3897, %v3927
    %v3930 = vadd.f32 %v3898, %v3928
    %v3931 = vstv %s330
    %v3932 = vmul.f32 %v3924, %v3931
    %v3933 = vmul.f32 %v3925, %v3931
    %v3934 = vadd.f32 %v3902, %v3932
    %v3935 = vadd.f32 %v3903, %v3933
    %v3936 = vstv %s366
    %v3937 = vmul.f32 %v3924, %v3936
    %v3938 = vmul.f32 %v3925, %v3936
    %v3939 = vadd.f32 %v3907, %v3937
    %v3940 = vadd.f32 %v3908, %v3938
    %v3941 = vstv %s402
    %v3942 = vmul.f32 %v3924, %v3941
    %v3943 = vmul.f32 %v3925, %v3941
    %v3944 = vadd.f32 %v3912, %v3942
    %v3945 = vadd.f32 %v3913, %v3943
    %v3946 = vstv %s295
    %v3947 = vmul.f32 %v2887, %v3946
    %v3948 = vmul.f32 %v2888, %v3946
    %v3949 = vmul.f32 %v2889, %v3946
    %3953 = vrot.lane.b32.xlu0 %v3947, 111
    %v3954 = vpop.permute.xlu0 %3953
    %3955 = vrot.lane.b32.xlu0 %v3948, 111
    %v3956 = vpop.permute.xlu0 %3955
    %3957 = vrot.lane.b32.xlu0 %v3949, 111
    %v3958 = vpop.permute.xlu0 %3957
    %v3959 = vsel %vm697, %v3954, %v3956
    %v3960 = vsel %vm697, %v3956, %v3958
    %v3963 = vadd.f32 %v3929, %v3959
    %v3964 = vadd.f32 %v3930, %v3960
    %v3965 = vstv %s331
    %v3966 = vmul.f32 %v2887, %v3965
    %v3967 = vmul.f32 %v2888, %v3965
    %v3968 = vmul.f32 %v2889, %v3965
    %3972 = vrot.lane.b32.xlu0 %v3966, 111
    %v3973 = vpop.permute.xlu0 %3972
    %3974 = vrot.lane.b32.xlu0 %v3967, 111
    %v3975 = vpop.permute.xlu0 %3974
    %3976 = vrot.lane.b32.xlu0 %v3968, 111
    %v3977 = vpop.permute.xlu0 %3976
    %v3978 = vsel %vm697, %v3973, %v3975
    %v3979 = vsel %vm697, %v3975, %v3977
    %v3982 = vadd.f32 %v3934, %v3978
    %v3983 = vadd.f32 %v3935, %v3979
    %v3984 = vstv %s367
    %v3985 = vmul.f32 %v2887, %v3984
    %v3986 = vmul.f32 %v2888, %v3984
    %v3987 = vmul.f32 %v2889, %v3984
    %3991 = vrot.lane.b32.xlu0 %v3985, 111
    %v3992 = vpop.permute.xlu0 %3991
    %3993 = vrot.lane.b32.xlu0 %v3986, 111
    %v3994 = vpop.permute.xlu0 %3993
    %3995 = vrot.lane.b32.xlu0 %v3987, 111
    %v3996 = vpop.permute.xlu0 %3995
    %v3997 = vsel %vm697, %v3992, %v3994
    %v3998 = vsel %vm697, %v3994, %v3996
    %v4001 = vadd.f32 %v3939, %v3997
    %v4002 = vadd.f32 %v3940, %v3998
    %v4003 = vstv %s403
    %v4004 = vmul.f32 %v2887, %v4003
    %v4005 = vmul.f32 %v2888, %v4003
    %v4006 = vmul.f32 %v2889, %v4003
    %4010 = vrot.lane.b32.xlu0 %v4004, 111
    %v4011 = vpop.permute.xlu0 %4010
    %4012 = vrot.lane.b32.xlu0 %v4005, 111
    %v4013 = vpop.permute.xlu0 %4012
    %4014 = vrot.lane.b32.xlu0 %v4006, 111
    %v4015 = vpop.permute.xlu0 %4014
    %v4016 = vsel %vm697, %v4011, %v4013
    %v4017 = vsel %vm697, %v4013, %v4015
    %v4020 = vadd.f32 %v3944, %v4016
    %v4021 = vadd.f32 %v3945, %v4017
    %4022 = vrot.lane.b32.xlu0 %v2887, 110
    %v4023 = vpop.permute.xlu0 %4022
    %4024 = vrot.lane.b32.xlu0 %v2888, 110
    %v4025 = vpop.permute.xlu0 %4024
    %4026 = vrot.lane.b32.xlu0 %v2889, 110
    %v4027 = vpop.permute.xlu0 %4026
    %v4028 = vsel %vm775, %v4023, %v4025
    %v4029 = vsel %vm775, %v4025, %v4027
    %v4032 = vsel %vm468, %v4028, 0.0
    %v4033 = vsel %vm469, %v4029, 0.0
    %v4034 = vstv %s296
    %v4035 = vmul.f32 %v4032, %v4034
    %v4036 = vmul.f32 %v4033, %v4034
    %v4037 = vadd.f32 %v3963, %v4035
    %v4038 = vadd.f32 %v3964, %v4036
    %v4039 = vstv %s332
    %v4040 = vmul.f32 %v4032, %v4039
    %v4041 = vmul.f32 %v4033, %v4039
    %v4042 = vadd.f32 %v3982, %v4040
    %v4043 = vadd.f32 %v3983, %v4041
    %v4044 = vstv %s368
    %v4045 = vmul.f32 %v4032, %v4044
    %v4046 = vmul.f32 %v4033, %v4044
    %v4047 = vadd.f32 %v4001, %v4045
    %v4048 = vadd.f32 %v4002, %v4046
    %v4049 = vstv %s404
    %v4050 = vmul.f32 %v4032, %v4049
    %v4051 = vmul.f32 %v4033, %v4049
    %v4052 = vadd.f32 %v4020, %v4050
    %v4053 = vadd.f32 %v4021, %v4051
    %4054 = vrot.lane.b32.xlu0 %v2887, 96
    %v4055 = vpop.permute.xlu0 %4054
    %4056 = vrot.lane.b32.xlu0 %v2888, 96
    %v4057 = vpop.permute.xlu0 %4056
    %4058 = vrot.lane.b32.xlu0 %v2889, 96
    %v4059 = vpop.permute.xlu0 %4058
    %v4060 = vsel %vm818, %v4055, %v4057
    %v4061 = vsel %vm818, %v4057, %v4059
    %v4064 = vsel %vm470, %v4060, 0.0
    %v4065 = vsel %vm471, %v4061, 0.0
    %v4066 = vstv %s297
    %v4067 = vmul.f32 %v4064, %v4066
    %v4068 = vmul.f32 %v4065, %v4066
    %v4069 = vadd.f32 %v4037, %v4067
    %v4070 = vadd.f32 %v4038, %v4068
    %v4071 = vstv %s333
    %v4072 = vmul.f32 %v4064, %v4071
    %v4073 = vmul.f32 %v4065, %v4071
    %v4074 = vadd.f32 %v4042, %v4072
    %v4075 = vadd.f32 %v4043, %v4073
    %v4076 = vstv %s369
    %v4077 = vmul.f32 %v4064, %v4076
    %v4078 = vmul.f32 %v4065, %v4076
    %v4079 = vadd.f32 %v4047, %v4077
    %v4080 = vadd.f32 %v4048, %v4078
    %v4081 = vstv %s405
    %v4082 = vmul.f32 %v4064, %v4081
    %v4083 = vmul.f32 %v4065, %v4081
    %v4084 = vadd.f32 %v4052, %v4082
    %v4085 = vadd.f32 %v4053, %v4083
    %v4086 = vstv %s298
    %v4087 = vmul.f32 %v2887, %v4086
    %v4088 = vmul.f32 %v2888, %v4086
    %v4089 = vmul.f32 %v2889, %v4086
    %4093 = vrot.lane.b32.xlu0 %v4087, 95
    %v4094 = vpop.permute.xlu0 %4093
    %4095 = vrot.lane.b32.xlu0 %v4088, 95
    %v4096 = vpop.permute.xlu0 %4095
    %4097 = vrot.lane.b32.xlu0 %v4089, 95
    %v4098 = vpop.permute.xlu0 %4097
    %v4099 = vsel %vm868, %v4094, %v4096
    %v4100 = vsel %vm868, %v4096, %v4098
    %v4103 = vadd.f32 %v4069, %v4099
    %v4104 = vadd.f32 %v4070, %v4100
    %v4105 = vstv %s334
    %v4106 = vmul.f32 %v2887, %v4105
    %v4107 = vmul.f32 %v2888, %v4105
    %v4108 = vmul.f32 %v2889, %v4105
    %4112 = vrot.lane.b32.xlu0 %v4106, 95
    %v4113 = vpop.permute.xlu0 %4112
    %4114 = vrot.lane.b32.xlu0 %v4107, 95
    %v4115 = vpop.permute.xlu0 %4114
    %4116 = vrot.lane.b32.xlu0 %v4108, 95
    %v4117 = vpop.permute.xlu0 %4116
    %v4118 = vsel %vm868, %v4113, %v4115
    %v4119 = vsel %vm868, %v4115, %v4117
    %v4122 = vadd.f32 %v4074, %v4118
    %v4123 = vadd.f32 %v4075, %v4119
    %v4124 = vstv %s370
    %v4125 = vmul.f32 %v2887, %v4124
    %v4126 = vmul.f32 %v2888, %v4124
    %v4127 = vmul.f32 %v2889, %v4124
    %4131 = vrot.lane.b32.xlu0 %v4125, 95
    %v4132 = vpop.permute.xlu0 %4131
    %4133 = vrot.lane.b32.xlu0 %v4126, 95
    %v4134 = vpop.permute.xlu0 %4133
    %4135 = vrot.lane.b32.xlu0 %v4127, 95
    %v4136 = vpop.permute.xlu0 %4135
    %v4137 = vsel %vm868, %v4132, %v4134
    %v4138 = vsel %vm868, %v4134, %v4136
    %v4141 = vadd.f32 %v4079, %v4137
    %v4142 = vadd.f32 %v4080, %v4138
    %v4143 = vstv %s406
    %v4144 = vmul.f32 %v2887, %v4143
    %v4145 = vmul.f32 %v2888, %v4143
    %v4146 = vmul.f32 %v2889, %v4143
    %4150 = vrot.lane.b32.xlu0 %v4144, 95
    %v4151 = vpop.permute.xlu0 %4150
    %4152 = vrot.lane.b32.xlu0 %v4145, 95
    %v4153 = vpop.permute.xlu0 %4152
    %4154 = vrot.lane.b32.xlu0 %v4146, 95
    %v4155 = vpop.permute.xlu0 %4154
    %v4156 = vsel %vm868, %v4151, %v4153
    %v4157 = vsel %vm868, %v4153, %v4155
    %v4160 = vadd.f32 %v4084, %v4156
    %v4161 = vadd.f32 %v4085, %v4157
    %4162 = vrot.lane.b32.xlu0 %v2887, 94
    %v4163 = vpop.permute.xlu0 %4162
    %4164 = vrot.lane.b32.xlu0 %v2888, 94
    %v4165 = vpop.permute.xlu0 %4164
    %4166 = vrot.lane.b32.xlu0 %v2889, 94
    %v4167 = vpop.permute.xlu0 %4166
    %v4168 = vsel %vm946, %v4163, %v4165
    %v4169 = vsel %vm946, %v4165, %v4167
    %v4172 = vsel %vm468, %v4168, 0.0
    %v4173 = vsel %vm469, %v4169, 0.0
    %v4174 = vstv %s299
    %v4175 = vmul.f32 %v4172, %v4174
    %v4176 = vmul.f32 %v4173, %v4174
    %v4177 = vadd.f32 %v4103, %v4175
    %v4178 = vadd.f32 %v4104, %v4176
    %v4179 = vstv %s335
    %v4180 = vmul.f32 %v4172, %v4179
    %v4181 = vmul.f32 %v4173, %v4179
    %v4182 = vadd.f32 %v4122, %v4180
    %v4183 = vadd.f32 %v4123, %v4181
    %v4184 = vstv %s371
    %v4185 = vmul.f32 %v4172, %v4184
    %v4186 = vmul.f32 %v4173, %v4184
    %v4187 = vadd.f32 %v4141, %v4185
    %v4188 = vadd.f32 %v4142, %v4186
    %v4189 = vstv %s407
    %v4190 = vmul.f32 %v4172, %v4189
    %v4191 = vmul.f32 %v4173, %v4189
    %v4192 = vadd.f32 %v4160, %v4190
    %v4193 = vadd.f32 %v4161, %v4191
    %v4194 = vsel %vm470, %v2948, 0.0
    %v4195 = vsel %vm471, %v2949, 0.0
    %v4196 = vstv %s300
    %v4197 = vmul.f32 %v4194, %v4196
    %v4198 = vmul.f32 %v4195, %v4196
    %v4199 = vadd.f32 %v4177, %v4197
    %v4200 = vadd.f32 %v4178, %v4198
    %v4201 = vstv %s336
    %v4202 = vmul.f32 %v4194, %v4201
    %v4203 = vmul.f32 %v4195, %v4201
    %v4204 = vadd.f32 %v4182, %v4202
    %v4205 = vadd.f32 %v4183, %v4203
    %v4206 = vstv %s372
    %v4207 = vmul.f32 %v4194, %v4206
    %v4208 = vmul.f32 %v4195, %v4206
    %v4209 = vadd.f32 %v4187, %v4207
    %v4210 = vadd.f32 %v4188, %v4208
    %v4211 = vstv %s408
    %v4212 = vmul.f32 %v4194, %v4211
    %v4213 = vmul.f32 %v4195, %v4211
    %v4214 = vadd.f32 %v4192, %v4212
    %v4215 = vadd.f32 %v4193, %v4213
    %v4216 = vstv %s301
    %v4217 = vmul.f32 %v2948, %v4216
    %v4218 = vmul.f32 %v2949, %v4216
    %v4219 = vmul.f32 %v2950, %v4216
    %4223 = vrot.lane.b32.xlu0 %v4217, 127
    %v4224 = vpop.permute.xlu0 %4223
    %4225 = vrot.lane.b32.xlu0 %v4218, 127
    %v4226 = vpop.permute.xlu0 %4225
    %4227 = vrot.lane.b32.xlu0 %v4219, 127
    %v4228 = vpop.permute.xlu0 %4227
    %v4229 = vsel %vm523, %v4224, %v4226
    %v4230 = vsel %vm523, %v4226, %v4228
    %v4233 = vadd.f32 %v4199, %v4229
    %v4234 = vadd.f32 %v4200, %v4230
    %v4235 = vstv %s337
    %v4236 = vmul.f32 %v2948, %v4235
    %v4237 = vmul.f32 %v2949, %v4235
    %v4238 = vmul.f32 %v2950, %v4235
    %4242 = vrot.lane.b32.xlu0 %v4236, 127
    %v4243 = vpop.permute.xlu0 %4242
    %4244 = vrot.lane.b32.xlu0 %v4237, 127
    %v4245 = vpop.permute.xlu0 %4244
    %4246 = vrot.lane.b32.xlu0 %v4238, 127
    %v4247 = vpop.permute.xlu0 %4246
    %v4248 = vsel %vm523, %v4243, %v4245
    %v4249 = vsel %vm523, %v4245, %v4247
    %v4252 = vadd.f32 %v4204, %v4248
    %v4253 = vadd.f32 %v4205, %v4249
    %v4254 = vstv %s373
    %v4255 = vmul.f32 %v2948, %v4254
    %v4256 = vmul.f32 %v2949, %v4254
    %v4257 = vmul.f32 %v2950, %v4254
    %4261 = vrot.lane.b32.xlu0 %v4255, 127
    %v4262 = vpop.permute.xlu0 %4261
    %4263 = vrot.lane.b32.xlu0 %v4256, 127
    %v4264 = vpop.permute.xlu0 %4263
    %4265 = vrot.lane.b32.xlu0 %v4257, 127
    %v4266 = vpop.permute.xlu0 %4265
    %v4267 = vsel %vm523, %v4262, %v4264
    %v4268 = vsel %vm523, %v4264, %v4266
    %v4271 = vadd.f32 %v4209, %v4267
    %v4272 = vadd.f32 %v4210, %v4268
    %v4273 = vstv %s409
    %v4274 = vmul.f32 %v2948, %v4273
    %v4275 = vmul.f32 %v2949, %v4273
    %v4276 = vmul.f32 %v2950, %v4273
    %4280 = vrot.lane.b32.xlu0 %v4274, 127
    %v4281 = vpop.permute.xlu0 %4280
    %4282 = vrot.lane.b32.xlu0 %v4275, 127
    %v4283 = vpop.permute.xlu0 %4282
    %4284 = vrot.lane.b32.xlu0 %v4276, 127
    %v4285 = vpop.permute.xlu0 %4284
    %v4286 = vsel %vm523, %v4281, %v4283
    %v4287 = vsel %vm523, %v4283, %v4285
    %v4290 = vadd.f32 %v4214, %v4286
    %v4291 = vadd.f32 %v4215, %v4287
    %4295 = vrot.lane.b32.xlu0 %v2948, 126
    %v4296 = vpop.permute.xlu0 %4295
    %4297 = vrot.lane.b32.xlu0 %v2949, 126
    %v4298 = vpop.permute.xlu0 %4297
    %4299 = vrot.lane.b32.xlu0 %v2950, 126
    %v4300 = vpop.permute.xlu0 %4299
    %v4301 = vsel %vm604, %v4296, %v4298
    %v4302 = vsel %vm604, %v4298, %v4300
    %v4305 = vsel %vm468, %v4301, 0.0
    %v4306 = vsel %vm469, %v4302, 0.0
    %v4307 = vstv %s302
    %v4308 = vmul.f32 %v4305, %v4307
    %v4309 = vmul.f32 %v4306, %v4307
    %v4310 = vadd.f32 %v4233, %v4308
    %v4311 = vadd.f32 %v4234, %v4309
    %v4312 = vstv %s338
    %v4313 = vmul.f32 %v4305, %v4312
    %v4314 = vmul.f32 %v4306, %v4312
    %v4315 = vadd.f32 %v4252, %v4313
    %v4316 = vadd.f32 %v4253, %v4314
    %v4317 = vstv %s374
    %v4318 = vmul.f32 %v4305, %v4317
    %v4319 = vmul.f32 %v4306, %v4317
    %v4320 = vadd.f32 %v4271, %v4318
    %v4321 = vadd.f32 %v4272, %v4319
    %v4322 = vstv %s410
    %v4323 = vmul.f32 %v4305, %v4322
    %v4324 = vmul.f32 %v4306, %v4322
    %v4325 = vadd.f32 %v4290, %v4323
    %v4326 = vadd.f32 %v4291, %v4324
    %4327 = vrot.lane.b32.xlu0 %v2948, 112
    %v4328 = vpop.permute.xlu0 %4327
    %4329 = vrot.lane.b32.xlu0 %v2949, 112
    %v4330 = vpop.permute.xlu0 %4329
    %4331 = vrot.lane.b32.xlu0 %v2950, 112
    %v4332 = vpop.permute.xlu0 %4331
    %v4333 = vsel %vm647, %v4328, %v4330
    %v4334 = vsel %vm647, %v4330, %v4332
    %v4337 = vsel %vm470, %v4333, 0.0
    %v4338 = vsel %vm471, %v4334, 0.0
    %v4339 = vstv %s303
    %v4340 = vmul.f32 %v4337, %v4339
    %v4341 = vmul.f32 %v4338, %v4339
    %v4342 = vadd.f32 %v4310, %v4340
    %v4343 = vadd.f32 %v4311, %v4341
    %v4344 = vstv %s339
    %v4345 = vmul.f32 %v4337, %v4344
    %v4346 = vmul.f32 %v4338, %v4344
    %v4347 = vadd.f32 %v4315, %v4345
    %v4348 = vadd.f32 %v4316, %v4346
    %v4349 = vstv %s375
    %v4350 = vmul.f32 %v4337, %v4349
    %v4351 = vmul.f32 %v4338, %v4349
    %v4352 = vadd.f32 %v4320, %v4350
    %v4353 = vadd.f32 %v4321, %v4351
    %v4354 = vstv %s411
    %v4355 = vmul.f32 %v4337, %v4354
    %v4356 = vmul.f32 %v4338, %v4354
    %v4357 = vadd.f32 %v4325, %v4355
    %v4358 = vadd.f32 %v4326, %v4356
    %v4359 = vstv %s304
    %v4360 = vmul.f32 %v2948, %v4359
    %v4361 = vmul.f32 %v2949, %v4359
    %v4362 = vmul.f32 %v2950, %v4359
    %4366 = vrot.lane.b32.xlu0 %v4360, 111
    %v4367 = vpop.permute.xlu0 %4366
    %4368 = vrot.lane.b32.xlu0 %v4361, 111
    %v4369 = vpop.permute.xlu0 %4368
    %4370 = vrot.lane.b32.xlu0 %v4362, 111
    %v4371 = vpop.permute.xlu0 %4370
    %v4372 = vsel %vm697, %v4367, %v4369
    %v4373 = vsel %vm697, %v4369, %v4371
    %v4376 = vadd.f32 %v4342, %v4372
    %v4377 = vadd.f32 %v4343, %v4373
    %v4378 = vstv %s340
    %v4379 = vmul.f32 %v2948, %v4378
    %v4380 = vmul.f32 %v2949, %v4378
    %v4381 = vmul.f32 %v2950, %v4378
    %4385 = vrot.lane.b32.xlu0 %v4379, 111
    %v4386 = vpop.permute.xlu0 %4385
    %4387 = vrot.lane.b32.xlu0 %v4380, 111
    %v4388 = vpop.permute.xlu0 %4387
    %4389 = vrot.lane.b32.xlu0 %v4381, 111
    %v4390 = vpop.permute.xlu0 %4389
    %v4391 = vsel %vm697, %v4386, %v4388
    %v4392 = vsel %vm697, %v4388, %v4390
    %v4395 = vadd.f32 %v4347, %v4391
    %v4396 = vadd.f32 %v4348, %v4392
    %v4397 = vstv %s376
    %v4398 = vmul.f32 %v2948, %v4397
    %v4399 = vmul.f32 %v2949, %v4397
    %v4400 = vmul.f32 %v2950, %v4397
    %4404 = vrot.lane.b32.xlu0 %v4398, 111
    %v4405 = vpop.permute.xlu0 %4404
    %4406 = vrot.lane.b32.xlu0 %v4399, 111
    %v4407 = vpop.permute.xlu0 %4406
    %4408 = vrot.lane.b32.xlu0 %v4400, 111
    %v4409 = vpop.permute.xlu0 %4408
    %v4410 = vsel %vm697, %v4405, %v4407
    %v4411 = vsel %vm697, %v4407, %v4409
    %v4414 = vadd.f32 %v4352, %v4410
    %v4415 = vadd.f32 %v4353, %v4411
    %v4416 = vstv %s412
    %v4417 = vmul.f32 %v2948, %v4416
    %v4418 = vmul.f32 %v2949, %v4416
    %v4419 = vmul.f32 %v2950, %v4416
    %4423 = vrot.lane.b32.xlu0 %v4417, 111
    %v4424 = vpop.permute.xlu0 %4423
    %4425 = vrot.lane.b32.xlu0 %v4418, 111
    %v4426 = vpop.permute.xlu0 %4425
    %4427 = vrot.lane.b32.xlu0 %v4419, 111
    %v4428 = vpop.permute.xlu0 %4427
    %v4429 = vsel %vm697, %v4424, %v4426
    %v4430 = vsel %vm697, %v4426, %v4428
    %v4433 = vadd.f32 %v4357, %v4429
    %v4434 = vadd.f32 %v4358, %v4430
    %4435 = vrot.lane.b32.xlu0 %v2948, 110
    %v4436 = vpop.permute.xlu0 %4435
    %4437 = vrot.lane.b32.xlu0 %v2949, 110
    %v4438 = vpop.permute.xlu0 %4437
    %4439 = vrot.lane.b32.xlu0 %v2950, 110
    %v4440 = vpop.permute.xlu0 %4439
    %v4441 = vsel %vm775, %v4436, %v4438
    %v4442 = vsel %vm775, %v4438, %v4440
    %v4445 = vsel %vm468, %v4441, 0.0
    %v4446 = vsel %vm469, %v4442, 0.0
    %v4447 = vstv %s305
    %v4448 = vmul.f32 %v4445, %v4447
    %v4449 = vmul.f32 %v4446, %v4447
    %v4450 = vadd.f32 %v4376, %v4448
    %v4451 = vadd.f32 %v4377, %v4449
    %v4452 = vstv %s341
    %v4453 = vmul.f32 %v4445, %v4452
    %v4454 = vmul.f32 %v4446, %v4452
    %v4455 = vadd.f32 %v4395, %v4453
    %v4456 = vadd.f32 %v4396, %v4454
    %v4457 = vstv %s377
    %v4458 = vmul.f32 %v4445, %v4457
    %v4459 = vmul.f32 %v4446, %v4457
    %v4460 = vadd.f32 %v4414, %v4458
    %v4461 = vadd.f32 %v4415, %v4459
    %v4462 = vstv %s413
    %v4463 = vmul.f32 %v4445, %v4462
    %v4464 = vmul.f32 %v4446, %v4462
    %v4465 = vadd.f32 %v4433, %v4463
    %v4466 = vadd.f32 %v4434, %v4464
    %4467 = vrot.lane.b32.xlu0 %v2948, 96
    %v4468 = vpop.permute.xlu0 %4467
    %4469 = vrot.lane.b32.xlu0 %v2949, 96
    %v4470 = vpop.permute.xlu0 %4469
    %4471 = vrot.lane.b32.xlu0 %v2950, 96
    %v4472 = vpop.permute.xlu0 %4471
    %v4473 = vsel %vm818, %v4468, %v4470
    %v4474 = vsel %vm818, %v4470, %v4472
    %v4477 = vsel %vm470, %v4473, 0.0
    %v4478 = vsel %vm471, %v4474, 0.0
    %v4479 = vstv %s306
    %v4480 = vmul.f32 %v4477, %v4479
    %v4481 = vmul.f32 %v4478, %v4479
    %v4482 = vadd.f32 %v4450, %v4480
    %v4483 = vadd.f32 %v4451, %v4481
    %v4484 = vstv %s342
    %v4485 = vmul.f32 %v4477, %v4484
    %v4486 = vmul.f32 %v4478, %v4484
    %v4487 = vadd.f32 %v4455, %v4485
    %v4488 = vadd.f32 %v4456, %v4486
    %v4489 = vstv %s378
    %v4490 = vmul.f32 %v4477, %v4489
    %v4491 = vmul.f32 %v4478, %v4489
    %v4492 = vadd.f32 %v4460, %v4490
    %v4493 = vadd.f32 %v4461, %v4491
    %v4494 = vstv %s414
    %v4495 = vmul.f32 %v4477, %v4494
    %v4496 = vmul.f32 %v4478, %v4494
    %v4497 = vadd.f32 %v4465, %v4495
    %v4498 = vadd.f32 %v4466, %v4496
    %v4499 = vstv %s307
    %v4500 = vmul.f32 %v2948, %v4499
    %v4501 = vmul.f32 %v2949, %v4499
    %v4502 = vmul.f32 %v2950, %v4499
    %4506 = vrot.lane.b32.xlu0 %v4500, 95
    %v4507 = vpop.permute.xlu0 %4506
    %4508 = vrot.lane.b32.xlu0 %v4501, 95
    %v4509 = vpop.permute.xlu0 %4508
    %4510 = vrot.lane.b32.xlu0 %v4502, 95
    %v4511 = vpop.permute.xlu0 %4510
    %v4512 = vsel %vm868, %v4507, %v4509
    %v4513 = vsel %vm868, %v4509, %v4511
    %v4516 = vadd.f32 %v4482, %v4512
    %v4517 = vadd.f32 %v4483, %v4513
    %v4518 = vstv %s343
    %v4519 = vmul.f32 %v2948, %v4518
    %v4520 = vmul.f32 %v2949, %v4518
    %v4521 = vmul.f32 %v2950, %v4518
    %4525 = vrot.lane.b32.xlu0 %v4519, 95
    %v4526 = vpop.permute.xlu0 %4525
    %4527 = vrot.lane.b32.xlu0 %v4520, 95
    %v4528 = vpop.permute.xlu0 %4527
    %4529 = vrot.lane.b32.xlu0 %v4521, 95
    %v4530 = vpop.permute.xlu0 %4529
    %v4531 = vsel %vm868, %v4526, %v4528
    %v4532 = vsel %vm868, %v4528, %v4530
    %v4535 = vadd.f32 %v4487, %v4531
    %v4536 = vadd.f32 %v4488, %v4532
    %v4537 = vstv %s379
    %v4538 = vmul.f32 %v2948, %v4537
    %v4539 = vmul.f32 %v2949, %v4537
    %v4540 = vmul.f32 %v2950, %v4537
    %4544 = vrot.lane.b32.xlu0 %v4538, 95
    %v4545 = vpop.permute.xlu0 %4544
    %4546 = vrot.lane.b32.xlu0 %v4539, 95
    %v4547 = vpop.permute.xlu0 %4546
    %4548 = vrot.lane.b32.xlu0 %v4540, 95
    %v4549 = vpop.permute.xlu0 %4548
    %v4550 = vsel %vm868, %v4545, %v4547
    %v4551 = vsel %vm868, %v4547, %v4549
    %v4554 = vadd.f32 %v4492, %v4550
    %v4555 = vadd.f32 %v4493, %v4551
    %v4556 = vstv %s415
    %v4557 = vmul.f32 %v2948, %v4556
    %v4558 = vmul.f32 %v2949, %v4556
    %v4559 = vmul.f32 %v2950, %v4556
    %4563 = vrot.lane.b32.xlu0 %v4557, 95
    %v4564 = vpop.permute.xlu0 %4563
    %4565 = vrot.lane.b32.xlu0 %v4558, 95
    %v4566 = vpop.permute.xlu0 %4565
    %4567 = vrot.lane.b32.xlu0 %v4559, 95
    %v4568 = vpop.permute.xlu0 %4567
    %v4569 = vsel %vm868, %v4564, %v4566
    %v4570 = vsel %vm868, %v4566, %v4568
    %v4573 = vadd.f32 %v4497, %v4569
    %v4574 = vadd.f32 %v4498, %v4570
    %4575 = vrot.lane.b32.xlu0 %v2948, 94
    %v4576 = vpop.permute.xlu0 %4575
    %4577 = vrot.lane.b32.xlu0 %v2949, 94
    %v4578 = vpop.permute.xlu0 %4577
    %4579 = vrot.lane.b32.xlu0 %v2950, 94
    %v4580 = vpop.permute.xlu0 %4579
    %v4581 = vsel %vm946, %v4576, %v4578
    %v4582 = vsel %vm946, %v4578, %v4580
    %v4585 = vsel %vm468, %v4581, 0.0
    %v4586 = vsel %vm469, %v4582, 0.0
    %v4587 = vstv %s308
    %v4588 = vmul.f32 %v4585, %v4587
    %v4589 = vmul.f32 %v4586, %v4587
    %v4590 = vadd.f32 %v4516, %v4588
    %v4591 = vadd.f32 %v4517, %v4589
    %v4592 = vstv %s344
    %v4593 = vmul.f32 %v4585, %v4592
    %v4594 = vmul.f32 %v4586, %v4592
    %v4595 = vadd.f32 %v4535, %v4593
    %v4596 = vadd.f32 %v4536, %v4594
    %v4597 = vstv %s380
    %v4598 = vmul.f32 %v4585, %v4597
    %v4599 = vmul.f32 %v4586, %v4597
    %v4600 = vadd.f32 %v4554, %v4598
    %v4601 = vadd.f32 %v4555, %v4599
    %v4602 = vstv %s416
    %v4603 = vmul.f32 %v4585, %v4602
    %v4604 = vmul.f32 %v4586, %v4602
    %v4605 = vadd.f32 %v4573, %v4603
    %v4606 = vadd.f32 %v4574, %v4604
    %v4607 = vsel %vm2708, %v4590, 0.0
    %v4608 = vsel %vm2708, %v4591, 0.0
    %v4609 = vadd.f32 %v4607, %v4608
    %4610 = vadd.xlane.f32.xlu0 %v4609
    %v4611 = vpop.xlane.xlu0 %4610
    %v4612 = vrot.slane %v4611, 4
    %v4613 = vadd.f32 %v4611, %v4612
    %v4614 = vrot.slane %v4613, 2
    %v4615 = vadd.f32 %v4613, %v4614
    %v4616 = vrot.slane %v4615, 1
    %v4617 = vadd.f32 %v4615, %v4616
    %s4618 = vtos %v4617
    %v4619 = vmul.f32 %v4590, %v4590
    %v4620 = vmul.f32 %v4591, %v4591
    %v4621 = vsel %vm2708, %v4619, 0.0
    %v4622 = vsel %vm2708, %v4620, 0.0
    %v4623 = vadd.f32 %v4621, %v4622
    %4624 = vadd.xlane.f32.xlu0 %v4623
    %v4625 = vpop.xlane.xlu0 %4624
    %v4626 = vrot.slane %v4625, 4
    %v4627 = vadd.f32 %v4625, %v4626
    %v4628 = vrot.slane %v4627, 2
    %v4629 = vadd.f32 %v4627, %v4628
    %v4630 = vrot.slane %v4629, 1
    %v4631 = vadd.f32 %v4629, %v4630
    %s4632 = vtos %v4631
    %s4633 = smul.f32 %s4618, 0.001953125
    %s4634 = smul.f32 %s4632, 0.001953125
    %s4635 = smul.f32 %s4633, %s4633
    %s4636 = ssub.f32 %s4634, %s4635
    %s4637 = sadd.f32 %s4636, 0.8
    %v4638 = vstv %s4637
    %v4639 = vrsqrt.pop %v4638
    %s4640 = vtos %v4639
    %s4641 = smul.f32 %s429, %s4640
    %v4642 = vstv %s4633
    %v4643 = vsub.f32 %v4590, %v4642
    %v4644 = vsub.f32 %v4591, %v4642
    %v4645 = vstv %s4641
    %v4646 = vmul.f32 %v4643, %v4645
    %v4647 = vmul.f32 %v4644, %v4645
    %v4648 = vstv %s437
    %v4649 = vadd.f32 %v4646, %v4648
    %v4650 = vadd.f32 %v4647, %v4648
    %v4651 = vsel %vm2708, %v4595, 0.0
    %v4652 = vsel %vm2708, %v4596, 0.0
    %v4653 = vadd.f32 %v4651, %v4652
    %4654 = vadd.xlane.f32.xlu0 %v4653
    %v4655 = vpop.xlane.xlu0 %4654
    %v4656 = vrot.slane %v4655, 4
    %v4657 = vadd.f32 %v4655, %v4656
    %v4658 = vrot.slane %v4657, 2
    %v4659 = vadd.f32 %v4657, %v4658
    %v4660 = vrot.slane %v4659, 1
    %v4661 = vadd.f32 %v4659, %v4660
    %s4662 = vtos %v4661
    %v4663 = vmul.f32 %v4595, %v4595
    %v4664 = vmul.f32 %v4596, %v4596
    %v4665 = vsel %vm2708, %v4663, 0.0
    %v4666 = vsel %vm2708, %v4664, 0.0
    %v4667 = vadd.f32 %v4665, %v4666
    %4668 = vadd.xlane.f32.xlu0 %v4667
    %v4669 = vpop.xlane.xlu0 %4668
    %v4670 = vrot.slane %v4669, 4
    %v4671 = vadd.f32 %v4669, %v4670
    %v4672 = vrot.slane %v4671, 2
    %v4673 = vadd.f32 %v4671, %v4672
    %v4674 = vrot.slane %v4673, 1
    %v4675 = vadd.f32 %v4673, %v4674
    %s4676 = vtos %v4675
    %s4677 = smul.f32 %s4662, 0.001953125
    %s4678 = smul.f32 %s4676, 0.001953125
    %s4679 = smul.f32 %s4677, %s4677
    %s4680 = ssub.f32 %s4678, %s4679
    %s4681 = sadd.f32 %s4680, 0.8
    %v4682 = vstv %s4681
    %v4683 = vrsqrt.pop %v4682
    %s4684 = vtos %v4683
    %s4685 = smul.f32 %s430, %s4684
    %v4686 = vstv %s4677
    %v4687 = vsub.f32 %v4595, %v4686
    %v4688 = vsub.f32 %v4596, %v4686
    %v4689 = vstv %s4685
    %v4690 = vmul.f32 %v4687, %v4689
    %v4691 = vmul.f32 %v4688, %v4689
    %v4692 = vstv %s438
    %v4693 = vadd.f32 %v4690, %v4692
    %v4694 = vadd.f32 %v4691, %v4692
    %v4695 = vsel %vm2708, %v4600, 0.0
    %v4696 = vsel %vm2708, %v4601, 0.0
    %v4697 = vadd.f32 %v4695, %v4696
    %4698 = vadd.xlane.f32.xlu0 %v4697
    %v4699 = vpop.xlane.xlu0 %4698
    %v4700 = vrot.slane %v4699, 4
    %v4701 = vadd.f32 %v4699, %v4700
    %v4702 = vrot.slane %v4701, 2
    %v4703 = vadd.f32 %v4701, %v4702
    %v4704 = vrot.slane %v4703, 1
    %v4705 = vadd.f32 %v4703, %v4704
    %s4706 = vtos %v4705
    %v4707 = vmul.f32 %v4600, %v4600
    %v4708 = vmul.f32 %v4601, %v4601
    %v4709 = vsel %vm2708, %v4707, 0.0
    %v4710 = vsel %vm2708, %v4708, 0.0
    %v4711 = vadd.f32 %v4709, %v4710
    %4712 = vadd.xlane.f32.xlu0 %v4711
    %v4713 = vpop.xlane.xlu0 %4712
    %v4714 = vrot.slane %v4713, 4
    %v4715 = vadd.f32 %v4713, %v4714
    %v4716 = vrot.slane %v4715, 2
    %v4717 = vadd.f32 %v4715, %v4716
    %v4718 = vrot.slane %v4717, 1
    %v4719 = vadd.f32 %v4717, %v4718
    %s4720 = vtos %v4719
    %s4721 = smul.f32 %s4706, 0.001953125
    %s4722 = smul.f32 %s4720, 0.001953125
    %s4723 = smul.f32 %s4721, %s4721
    %s4724 = ssub.f32 %s4722, %s4723
    %s4725 = sadd.f32 %s4724, 0.8
    %v4726 = vstv %s4725
    %v4727 = vrsqrt.pop %v4726
    %s4728 = vtos %v4727
    %s4729 = smul.f32 %s431, %s4728
    %v4730 = vstv %s4721
    %v4731 = vsub.f32 %v4600, %v4730
    %v4732 = vsub.f32 %v4601, %v4730
    %v4733 = vstv %s4729
    %v4734 = vmul.f32 %v4731, %v4733
    %v4735 = vmul.f32 %v4732, %v4733
    %v4736 = vstv %s439
    %v4737 = vadd.f32 %v4734, %v4736
    %v4738 = vadd.f32 %v4735, %v4736
    %v4739 = vsel %vm2708, %v4605, 0.0
    %v4740 = vsel %vm2708, %v4606, 0.0
    %v4741 = vadd.f32 %v4739, %v4740
    %4742 = vadd.xlane.f32.xlu0 %v4741
    %v4743 = vpop.xlane.xlu0 %4742
    %v4744 = vrot.slane %v4743, 4
    %v4745 = vadd.f32 %v4743, %v4744
    %v4746 = vrot.slane %v4745, 2
    %v4747 = vadd.f32 %v4745, %v4746
    %v4748 = vrot.slane %v4747, 1
    %v4749 = vadd.f32 %v4747, %v4748
    %s4750 = vtos %v4749
    %v4751 = vmul.f32 %v4605, %v4605
    %v4752 = vmul.f32 %v4606, %v4606
    %v4753 = vsel %vm2708, %v4751, 0.0
    %v4754 = vsel %vm2708, %v4752, 0.0
    %v4755 = vadd.f32 %v4753, %v4754
    %4756 = vadd.xlane.f32.xlu0 %v4755
    %v4757 = vpop.xlane.xlu0 %4756
    %v4758 = vrot.slane %v4757, 4
    %v4759 = vadd.f32 %v4757, %v4758
    %v4760 = vrot.slane %v4759, 2
    %v4761 = vadd.f32 %v4759, %v4760
    %v4762 = vrot.slane %v4761, 1
    %v4763 = vadd.f32 %v4761, %v4762
    %s4764 = vtos %v4763
    %s4765 = smul.f32 %s4750, 0.001953125
    %s4766 = smul.f32 %s4764, 0.001953125
    %s4767 = smul.f32 %s4765, %s4765
    %s4768 = ssub.f32 %s4766, %s4767
    %s4769 = sadd.f32 %s4768, 0.8
    %v4770 = vstv %s4769
    %v4771 = vrsqrt.pop %v4770
    %s4772 = vtos %v4771
    %s4773 = smul.f32 %s432, %s4772
    %v4774 = vstv %s4765
    %v4775 = vsub.f32 %v4605, %v4774
    %v4776 = vsub.f32 %v4606, %v4774
    %v4777 = vstv %s4773
    %v4778 = vmul.f32 %v4775, %v4777
    %v4779 = vmul.f32 %v4776, %v4777
    %v4780 = vstv %s440
    %v4781 = vadd.f32 %v4778, %v4780
    %v4782 = vadd.f32 %v4779, %v4780
    %v4783 = vld [vmem:[%s1] sm:$0x3]
    %v4784 = vld [vmem:[%s1 + $0x8] sm:$0x3]
    %v4785 = vadd.f32 %v4783, %v4649
    %v4786 = vadd.f32 %v4784, %v4650
    %4787 = vst [vmem:[%s10] sm:$0x3] %v4785
    %4788 = vst [vmem:[%s10 + $0x8] sm:$0x3] %v4786
    %v4789 = vld [vmem:[%s1] sm:$0xc]
    %v4790 = vld [vmem:[%s1 + $0x8] sm:$0xc]
    %v4793 = vrot.slane %v4693, 6
    %v4794 = vrot.slane %v4694, 6
    %v4797 = vadd.f32 %v4789, %v4793
    %v4798 = vadd.f32 %v4790, %v4794
    %4799 = vst [vmem:[%s10] sm:$0xc] %v4797
    %4800 = vst [vmem:[%s10 + $0x8] sm:$0xc] %v4798
    %v4801 = vld [vmem:[%s1] sm:$0x30]
    %v4802 = vld [vmem:[%s1 + $0x8] sm:$0x30]
    %v4805 = vrot.slane %v4737, 4
    %v4806 = vrot.slane %v4738, 4
    %v4809 = vadd.f32 %v4801, %v4805
    %v4810 = vadd.f32 %v4802, %v4806
    %4811 = vst [vmem:[%s10] sm:$0x30] %v4809
    %4812 = vst [vmem:[%s10 + $0x8] sm:$0x30] %v4810
    %v4813 = vld [vmem:[%s1] sm:$0xc0]
    %v4814 = vld [vmem:[%s1 + $0x8] sm:$0xc0]
    %v4817 = vrot.slane %v4781, 2
    %v4818 = vrot.slane %v4782, 2
    %v4821 = vadd.f32 %v4813, %v4817
    %v4822 = vadd.f32 %v4814, %v4818
    %4823 = vst [vmem:[%s10] sm:$0xc0] %v4821
    %4824 = vst [vmem:[%s10 + $0x8] sm:$0xc0] %v4822
    // Predicated region
    $region74: #{residual_block.1} parent=1 // pred_check
      _
    $region75: #{residual_block.1} parent=1 // pred_check_branch
      %4826 = sbr.rel (0) target = $region77
    $region76: #{residual_block.1} parent=1 // pred_region
      _
    $region77: #{residual_block.1} parent=1 // pred_fallthru
      _
    // Predicated region
    $region78: #{residual_block.1} parent=1 // pred_check
      _
    $region79: #{residual_block.1} parent=1 // pred_check_branch
      %4828 = sbr.rel (0) target = $region81
    $region80: #{residual_block.1} parent=1 // pred_region
      _
    $region81: #{residual_block.1} parent=1 // pred_fallthru
      _
    %4829 = vsyncpa [#allocation3], 1
    %4830 = vsyncpa [#allocation5], 1
    %4831 = vsyncpa [#allocation8], 1
    %4832 = vsyncpa [#allocation11], 1
    %4833 = vsyncpa [#allocation14], 1

</llo_original>
